<compile_context>
chip_gen: v7x
topology: tpu7x:2x2x1
jax: 0.10.0
libtpu: 0.0.40
codegen_flags: <defaults>
</compile_context>

<pallas_src>
import jax
import jax.numpy as jnp
from jax.experimental import pallas as pl
from jax.experimental.pallas import tpu as pltpu

# ---- problem sizes (small, consistent with the module) ----
N = 128          # number of nodes
D_IN = 32        # in_feats
D_OUT = 16       # out_feats
H = 4            # num_heads
HD = H * D_OUT   # flattened head*feature width
TM = 64          # destination-row tile (grid of N // TM, "parallel")
NEG_SLOPE = 0.2
NEG_INF = -1e30

_PREC = jax.lax.Precision.HIGHEST   # keep every matmul in true f32


def gat_kernel(xs_ref, xt_ref, xd_ref, w_ref, wal_ref, war_ref,
               bias_ref, mask_ref, out_ref):
    # Projected features for ALL source nodes: (N, HD)
    feat = jnp.dot(xs_ref[...], w_ref[...],
                   preferred_element_type=jnp.float32, precision=_PREC)
    # Source attention scores, lane-major per head: (H, N) = wa_l^T @ x^T
    el_t = jnp.dot(wal_ref[...], xt_ref[...],
                   preferred_element_type=jnp.float32, precision=_PREC)
    # Destination attention scores for this row tile: (TM, H)
    er = jnp.dot(xd_ref[...], war_ref[...],
                 preferred_element_type=jnp.float32, precision=_PREC)

    # Additive edge mask for this tile (0 on edges, -1e30 elsewhere).
    neg_mask = mask_ref[...].astype(jnp.float32)                 # (TM, N)
    bias = bias_ref[...]                                         # (1, HD)

    for h in range(H):                                           # H is static
        lo = h * D_OUT
        # e[v, u] = leaky_relu(el[u] + er[v]);   rows = dst, cols = src
        e = er[:, h:h + 1] + el_t[h:h + 1, :]                    # (TM, N)
        e = jnp.maximum(e, NEG_SLOPE * e)                        # leaky relu
        e = e + neg_mask                                         # mask non-edges
        m = jnp.max(e, axis=1, keepdims=True)                    # finite (self-loops)
        p = jnp.exp(e - m)                                       # masked -> exactly 0
        s = jnp.sum(p, axis=1, keepdims=True)                    # (TM, 1)
        # Aggregate UNNORMALISED, then normalise the small output.
        out_h = jnp.dot(p, feat[:, lo:lo + D_OUT],
                        preferred_element_type=jnp.float32, precision=_PREC)
        out_ref[:, lo:lo + D_OUT] = out_h / s + bias[:, lo:lo + D_OUT]


def gatconv_no_residual(x, w_t, attn_l, attn_r, bias, adj):
    # Fold the attention-vector reductions into the projection weight:
    #   wa_l[k, h] = sum_d W^T[k, h*D+d] * attn_l[h, d]   (likewise wa_r)
    wt3 = w_t.reshape(D_IN, H, D_OUT)
    wa_l_t = jnp.einsum('khd,hd->hk', wt3, attn_l, precision=_PREC)  # (H, D_IN)
    wa_r = jnp.einsum('khd,hd->kh', wt3, attn_r, precision=_PREC)    # (D_IN, H)
    x_t = x.T                                                        # (D_IN, N)
    bias_flat = bias.reshape(1, HD).astype(jnp.float32)
    # Additive mask computed once in the wrapper; bf16 halves the DMA.
    neg_mask = jnp.where(adj > 0, 0.0, NEG_INF).astype(jnp.bfloat16)  # (N, N)

    n_tiles = N // TM
    flops = (n_tiles * 2 * N * D_IN * HD        # projection (recomputed per tile)
             + n_tiles * 2 * H * D_IN * N       # el
             + 2 * N * D_IN * H                 # er
             + 2 * N * N * HD                   # aggregation matmuls
             + 5 * H * N * N)                   # elementwise attention pipeline
    cost = pl.CostEstimate(
        flops=flops,
        transcendentals=H * N * N,
        bytes_accessed=(4 * (3 * N * D_IN + D_IN * HD + 2 * H * D_IN + HD + N * HD)
                        + 2 * N * N))

    out = pl.pallas_call(
        gat_kernel,
        out_shape=jax.ShapeDtypeStruct((N, HD), jnp.float32),
        grid=(n_tiles,),
        in_specs=[
            pl.BlockSpec((N, D_IN), lambda i: (0, 0)),     # x  (all src rows)
            pl.BlockSpec((D_IN, N), lambda i: (0, 0)),     # x^T (lane-major src)
            pl.BlockSpec((TM, D_IN), lambda i: (i, 0)),    # x  (dst row tile)
            pl.BlockSpec((D_IN, HD), lambda i: (0, 0)),    # W^T
            pl.BlockSpec((H, D_IN), lambda i: (0, 0)),     # folded attn_l (transposed)
            pl.BlockSpec((D_IN, H), lambda i: (0, 0)),     # folded attn_r
            pl.BlockSpec((1, HD), lambda i: (0, 0)),       # bias
            pl.BlockSpec((TM, N), lambda i: (i, 0)),       # additive mask tile
        ],
        out_specs=pl.BlockSpec((TM, HD), lambda i: (i, 0)),
        compiler_params=pltpu.CompilerParams(
            dimension_semantics=("parallel",),
            vmem_limit_bytes=32 * 1024 * 1024),
        cost_estimate=cost,
    )(x, x_t, x, w_t, wa_l_t, wa_r, bias_flat, neg_mask)

    # match DGL output shape (N, H, D_out)
    return out.reshape(N, H, D_OUT)


def reference(x, w_t, attn_l, attn_r, bias, adj):
    feat = jnp.dot(x, w_t, precision=_PREC).reshape(N, H, D_OUT)
    el = jnp.sum(feat * attn_l[None], axis=-1)                   # (N, H) src
    er = jnp.sum(feat * attn_r[None], axis=-1)                   # (N, H) dst
    e = er[:, None, :] + el[None, :, :]                          # (dst, src, H)
    e = jnp.where(e > 0, e, NEG_SLOPE * e)
    mask = (adj > 0)[:, :, None]
    e = jnp.where(mask, e, NEG_INF)
    e = e - jnp.max(e, axis=1, keepdims=True)
    p = jnp.exp(e) * mask
    a = p / jnp.sum(p, axis=1, keepdims=True)
    out = jnp.einsum('vuh,uhd->vhd', a, feat, precision=_PREC)
    return out + bias.reshape(1, H, D_OUT)


if __name__ == "__main__":
    key = jax.random.PRNGKey(0)
    k_x, k_w, k_al, k_ar, k_adj = jax.random.split(key, 5)

    # node features
    x = jax.random.normal(k_x, (N, D_IN), dtype=jnp.float32)

    # fc weight: torch shape (H*D_out, D_in), xavier_normal gain=sqrt(2)
    gain = jnp.sqrt(2.0)
    std_w = gain * jnp.sqrt(2.0 / (D_IN + H * D_OUT))
    w = std_w * jax.random.normal(k_w, (H * D_OUT, D_IN), dtype=jnp.float32)
    w_t = w.T                                                    # (D_in, H*D_out)

    # attention parameters (1, H, D_out) flattened to (H, D_out)
    std_a = gain * jnp.sqrt(2.0 / (H * D_OUT + D_OUT))
    attn_l = std_a * jax.random.normal(k_al, (H, D_OUT), dtype=jnp.float32)
    attn_r = std_a * jax.random.normal(k_ar, (H, D_OUT), dtype=jnp.float32)

    # explicit bias (has_explicit_bias=True since residual=False, bias=True),
    # initialized to zero as in reset_parameters
    bias = jnp.zeros((H, D_OUT), dtype=jnp.float32)

    # random dense adjacency with self-loops (no zero in-degree nodes; the
    # module raises on zero in-degree, so this mirrors valid inputs)
    adj = (jax.random.uniform(k_adj, (N, N)) < 0.2).astype(jnp.float32)
    adj = jnp.maximum(adj, jnp.eye(N, dtype=jnp.float32))

    out = gatconv_no_residual(x, w_t, attn_l, attn_r, bias, adj)
    out = jax.block_until_ready(out)

    ref = reference(x, w_t, attn_l, attn_r, bias, adj)
    assert out.shape == (N, H, D_OUT)
    assert jnp.allclose(out, ref, atol=2e-3, rtol=2e-3), "mismatch vs JAX reference"

    print("KERNEL_OK")
</pallas_src>

<mosaic_0001>
module attributes {stable_mosaic.version = 11 : i64} {
  func.func @gat_kernel(%arg0: i32, %arg1: memref<128x32xf32, #tpu.memory_space<vmem>>, %arg2: memref<32x128xf32, #tpu.memory_space<vmem>>, %arg3: memref<64x32xf32, #tpu.memory_space<vmem>>, %arg4: memref<32x64xf32, #tpu.memory_space<vmem>>, %arg5: memref<4x32xf32, #tpu.memory_space<vmem>>, %arg6: memref<32x4xf32, #tpu.memory_space<vmem>>, %arg7: memref<1x64xf32, #tpu.memory_space<vmem>>, %arg8: memref<64x128xbf16, #tpu.memory_space<vmem>>, %arg9: memref<64x64xf32, #tpu.memory_space<vmem>>) attributes {dimension_semantics = [#tpu.dimension_semantics<parallel>], iteration_bounds = array<i64: 2>, scalar_prefetch = 0 : i64, scratch_operands = 0 : i64, tpu.core_type = #tpu.core_type<tc>, window_params = [{pipeline_mode = #tpu.pipeline_mode<synchronous>, transform_indices = @transform_0, window_bounds = array<i64: 128, 32>}, {pipeline_mode = #tpu.pipeline_mode<synchronous>, transform_indices = @transform_1, window_bounds = array<i64: 32, 128>}, {transform_indices = @transform_2, window_bounds = array<i64: 64, 32>}, {pipeline_mode = #tpu.pipeline_mode<synchronous>, transform_indices = @transform_3, window_bounds = array<i64: 32, 64>}, {pipeline_mode = #tpu.pipeline_mode<synchronous>, transform_indices = @transform_4, window_bounds = array<i64: 4, 32>}, {pipeline_mode = #tpu.pipeline_mode<synchronous>, transform_indices = @transform_5, window_bounds = array<i64: 32, 4>}, {pipeline_mode = #tpu.pipeline_mode<synchronous>, transform_indices = @transform_6, window_bounds = array<i64: 1, 64>}, {transform_indices = @transform_7, window_bounds = array<i64: 64, 128>}, {transform_indices = @transform_8, window_bounds = array<i64: 64, 64>}]} {
    %c0 = arith.constant 0 : index
    %c0_0 = arith.constant 0 : index
    %0 = vector.load %arg1[%c0, %c0_0] : memref<128x32xf32, #tpu.memory_space<vmem>>, vector<128x32xf32>
    %c0_1 = arith.constant 0 : index
    %c0_2 = arith.constant 0 : index
    %1 = vector.load %arg4[%c0_1, %c0_2] : memref<32x64xf32, #tpu.memory_space<vmem>>, vector<32x64xf32>
    %cst = arith.constant dense<0.000000e+00> : vector<128x64xf32>
    %2 = tpu.matmul %0, %1, %cst {dimension_numbers = #tpu.dot_dimension_numbers<[1], [0], [0], [1], [0, 0, 1, 1], [], []>, precision = #tpu.contract_precision<fp32>} : vector<128x32xf32>, vector<32x64xf32>, vector<128x64xf32> -> vector<128x64xf32>
    %c0_3 = arith.constant 0 : index
    %c0_4 = arith.constant 0 : index
    %3 = vector.load %arg5[%c0_3, %c0_4] : memref<4x32xf32, #tpu.memory_space<vmem>>, vector<4x32xf32>
    %c0_5 = arith.constant 0 : index
    %c0_6 = arith.constant 0 : index
    %4 = vector.load %arg2[%c0_5, %c0_6] : memref<32x128xf32, #tpu.memory_space<vmem>>, vector<32x128xf32>
    %cst_7 = arith.constant dense<0.000000e+00> : vector<4x128xf32>
    %5 = tpu.matmul %3, %4, %cst_7 {dimension_numbers = #tpu.dot_dimension_numbers<[1], [0], [0], [1], [0, 0, 1, 1], [], []>, precision = #tpu.contract_precision<fp32>} : vector<4x32xf32>, vector<32x128xf32>, vector<4x128xf32> -> vector<4x128xf32>
    %c0_8 = arith.constant 0 : index
    %c0_9 = arith.constant 0 : index
    %6 = vector.load %arg3[%c0_8, %c0_9] : memref<64x32xf32, #tpu.memory_space<vmem>>, vector<64x32xf32>
    %c0_10 = arith.constant 0 : index
    %c0_11 = arith.constant 0 : index
    %7 = vector.load %arg6[%c0_10, %c0_11] : memref<32x4xf32, #tpu.memory_space<vmem>>, vector<32x4xf32>
    %cst_12 = arith.constant dense<0.000000e+00> : vector<64x4xf32>
    %8 = tpu.matmul %6, %7, %cst_12 {dimension_numbers = #tpu.dot_dimension_numbers<[1], [0], [0], [1], [0, 0, 1, 1], [], []>, precision = #tpu.contract_precision<fp32>} : vector<64x32xf32>, vector<32x4xf32>, vector<64x4xf32> -> vector<64x4xf32>
    %c0_13 = arith.constant 0 : index
    %c0_14 = arith.constant 0 : index
    %9 = vector.load %arg8[%c0_13, %c0_14] : memref<64x128xbf16, #tpu.memory_space<vmem>>, vector<64x128xbf16>
    %10 = arith.extf %9 : vector<64x128xbf16> to vector<64x128xf32>
    %c0_15 = arith.constant 0 : index
    %c0_16 = arith.constant 0 : index
    %11 = vector.load %arg7[%c0_15, %c0_16] : memref<1x64xf32, #tpu.memory_space<vmem>>, vector<1x64xf32>
    %12 = vector.extract_strided_slice %8 {offsets = [0, 0], sizes = [64, 1], strides = [1, 1]} : vector<64x4xf32> to vector<64x1xf32>
    %13 = vector.extract_strided_slice %5 {offsets = [0, 0], sizes = [1, 128], strides = [1, 1]} : vector<4x128xf32> to vector<1x128xf32>
    %14 = vector.broadcast %12 : vector<64x1xf32> to vector<64x128xf32>
    %15 = vector.broadcast %13 : vector<1x128xf32> to vector<64x128xf32>
    %16 = arith.addf %14, %15 : vector<64x128xf32>
    %cst_17 = arith.constant 2.000000e-01 : f32
    %17 = vector.broadcast %cst_17 : f32 to vector<64x128xf32>
    %18 = arith.mulf %17, %16 : vector<64x128xf32>
    %19 = arith.maximumf %16, %18 : vector<64x128xf32>
    %20 = arith.addf %19, %10 : vector<64x128xf32>
    %cst_18 = arith.constant dense<0xFF800000> : vector<64xf32>
    %21 = vector.multi_reduction <maximumf>, %20, %cst_18 [1] : vector<64x128xf32> to vector<64xf32>
    %22 = vector.shape_cast %21 : vector<64xf32> to vector<64x1xf32>
    %23 = vector.broadcast %22 : vector<64x1xf32> to vector<64x128xf32>
    %24 = arith.subf %20, %23 : vector<64x128xf32>
    %25 = math.exp %24 : vector<64x128xf32>
    %cst_19 = arith.constant dense<0.000000e+00> : vector<64xf32>
    %26 = vector.multi_reduction <add>, %25, %cst_19 [1] : vector<64x128xf32> to vector<64xf32>
    %27 = vector.shape_cast %26 : vector<64xf32> to vector<64x1xf32>
    %28 = vector.extract_strided_slice %2 {offsets = [0, 0], sizes = [128, 16], strides = [1, 1]} : vector<128x64xf32> to vector<128x16xf32>
    %cst_20 = arith.constant dense<0.000000e+00> : vector<64x16xf32>
    %29 = tpu.matmul %25, %28, %cst_20 {dimension_numbers = #tpu.dot_dimension_numbers<[1], [0], [0], [1], [0, 0, 1, 1], [], []>, precision = #tpu.contract_precision<fp32>} : vector<64x128xf32>, vector<128x16xf32>, vector<64x16xf32> -> vector<64x16xf32>
    %30 = vector.broadcast %27 : vector<64x1xf32> to vector<64x16xf32>
    %31 = arith.divf %29, %30 : vector<64x16xf32>
    %32 = vector.extract_strided_slice %11 {offsets = [0, 0], sizes = [1, 16], strides = [1, 1]} : vector<1x64xf32> to vector<1x16xf32>
    %33 = vector.broadcast %32 : vector<1x16xf32> to vector<64x16xf32>
    %34 = arith.addf %31, %33 : vector<64x16xf32>
    %c0_21 = arith.constant 0 : index
    %c0_22 = arith.constant 0 : index
    %35 = vector.load %arg9[%c0_21, %c0_22] : memref<64x64xf32, #tpu.memory_space<vmem>>, vector<64x16xf32>
    tpu.vector_store %arg9[%c0_21, %c0_22], %34 {strides = array<i32>} : memref<64x64xf32, #tpu.memory_space<vmem>>, vector<64x16xf32>,
    %36 = vector.extract_strided_slice %8 {offsets = [0, 1], sizes = [64, 1], strides = [1, 1]} : vector<64x4xf32> to vector<64x1xf32>
    %37 = vector.extract_strided_slice %5 {offsets = [1, 0], sizes = [1, 128], strides = [1, 1]} : vector<4x128xf32> to vector<1x128xf32>
    %38 = vector.broadcast %36 : vector<64x1xf32> to vector<64x128xf32>
    %39 = vector.broadcast %37 : vector<1x128xf32> to vector<64x128xf32>
    %40 = arith.addf %38, %39 : vector<64x128xf32>
    %cst_23 = arith.constant 2.000000e-01 : f32
    %41 = vector.broadcast %cst_23 : f32 to vector<64x128xf32>
    %42 = arith.mulf %41, %40 : vector<64x128xf32>
    %43 = arith.maximumf %40, %42 : vector<64x128xf32>
    %44 = arith.addf %43, %10 : vector<64x128xf32>
    %cst_24 = arith.constant dense<0xFF800000> : vector<64xf32>
    %45 = vector.multi_reduction <maximumf>, %44, %cst_24 [1] : vector<64x128xf32> to vector<64xf32>
    %46 = vector.shape_cast %45 : vector<64xf32> to vector<64x1xf32>
    %47 = vector.broadcast %46 : vector<64x1xf32> to vector<64x128xf32>
    %48 = arith.subf %44, %47 : vector<64x128xf32>
    %49 = math.exp %48 : vector<64x128xf32>
    %cst_25 = arith.constant dense<0.000000e+00> : vector<64xf32>
    %50 = vector.multi_reduction <add>, %49, %cst_25 [1] : vector<64x128xf32> to vector<64xf32>
    %51 = vector.shape_cast %50 : vector<64xf32> to vector<64x1xf32>
    %52 = vector.extract_strided_slice %2 {offsets = [0, 16], sizes = [128, 16], strides = [1, 1]} : vector<128x64xf32> to vector<128x16xf32>
    %cst_26 = arith.constant dense<0.000000e+00> : vector<64x16xf32>
    %53 = tpu.matmul %49, %52, %cst_26 {dimension_numbers = #tpu.dot_dimension_numbers<[1], [0], [0], [1], [0, 0, 1, 1], [], []>, precision = #tpu.contract_precision<fp32>} : vector<64x128xf32>, vector<128x16xf32>, vector<64x16xf32> -> vector<64x16xf32>
    %54 = vector.broadcast %51 : vector<64x1xf32> to vector<64x16xf32>
    %55 = arith.divf %53, %54 : vector<64x16xf32>
    %56 = vector.extract_strided_slice %11 {offsets = [0, 16], sizes = [1, 16], strides = [1, 1]} : vector<1x64xf32> to vector<1x16xf32>
    %57 = vector.broadcast %56 : vector<1x16xf32> to vector<64x16xf32>
    %58 = arith.addf %55, %57 : vector<64x16xf32>
    %c0_27 = arith.constant 0 : index
    %c16 = arith.constant 16 : index
    %59 = vector.load %arg9[%c0_27, %c16] : memref<64x64xf32, #tpu.memory_space<vmem>>, vector<64x16xf32>
    tpu.vector_store %arg9[%c0_27, %c16], %58 {strides = array<i32>} : memref<64x64xf32, #tpu.memory_space<vmem>>, vector<64x16xf32>,
    %60 = vector.extract_strided_slice %8 {offsets = [0, 2], sizes = [64, 1], strides = [1, 1]} : vector<64x4xf32> to vector<64x1xf32>
    %61 = vector.extract_strided_slice %5 {offsets = [2, 0], sizes = [1, 128], strides = [1, 1]} : vector<4x128xf32> to vector<1x128xf32>
    %62 = vector.broadcast %60 : vector<64x1xf32> to vector<64x128xf32>
    %63 = vector.broadcast %61 : vector<1x128xf32> to vector<64x128xf32>
    %64 = arith.addf %62, %63 : vector<64x128xf32>
    %cst_28 = arith.constant 2.000000e-01 : f32
    %65 = vector.broadcast %cst_28 : f32 to vector<64x128xf32>
    %66 = arith.mulf %65, %64 : vector<64x128xf32>
    %67 = arith.maximumf %64, %66 : vector<64x128xf32>
    %68 = arith.addf %67, %10 : vector<64x128xf32>
    %cst_29 = arith.constant dense<0xFF800000> : vector<64xf32>
    %69 = vector.multi_reduction <maximumf>, %68, %cst_29 [1] : vector<64x128xf32> to vector<64xf32>
    %70 = vector.shape_cast %69 : vector<64xf32> to vector<64x1xf32>
    %71 = vector.broadcast %70 : vector<64x1xf32> to vector<64x128xf32>
    %72 = arith.subf %68, %71 : vector<64x128xf32>
    %73 = math.exp %72 : vector<64x128xf32>
    %cst_30 = arith.constant dense<0.000000e+00> : vector<64xf32>
    %74 = vector.multi_reduction <add>, %73, %cst_30 [1] : vector<64x128xf32> to vector<64xf32>
    %75 = vector.shape_cast %74 : vector<64xf32> to vector<64x1xf32>
    %76 = vector.extract_strided_slice %2 {offsets = [0, 32], sizes = [128, 16], strides = [1, 1]} : vector<128x64xf32> to vector<128x16xf32>
    %cst_31 = arith.constant dense<0.000000e+00> : vector<64x16xf32>
    %77 = tpu.matmul %73, %76, %cst_31 {dimension_numbers = #tpu.dot_dimension_numbers<[1], [0], [0], [1], [0, 0, 1, 1], [], []>, precision = #tpu.contract_precision<fp32>} : vector<64x128xf32>, vector<128x16xf32>, vector<64x16xf32> -> vector<64x16xf32>
    %78 = vector.broadcast %75 : vector<64x1xf32> to vector<64x16xf32>
    %79 = arith.divf %77, %78 : vector<64x16xf32>
    %80 = vector.extract_strided_slice %11 {offsets = [0, 32], sizes = [1, 16], strides = [1, 1]} : vector<1x64xf32> to vector<1x16xf32>
    %81 = vector.broadcast %80 : vector<1x16xf32> to vector<64x16xf32>
    %82 = arith.addf %79, %81 : vector<64x16xf32>
    %c0_32 = arith.constant 0 : index
    %c32 = arith.constant 32 : index
    %83 = vector.load %arg9[%c0_32, %c32] : memref<64x64xf32, #tpu.memory_space<vmem>>, vector<64x16xf32>
    tpu.vector_store %arg9[%c0_32, %c32], %82 {strides = array<i32>} : memref<64x64xf32, #tpu.memory_space<vmem>>, vector<64x16xf32>,
    %84 = vector.extract_strided_slice %8 {offsets = [0, 3], sizes = [64, 1], strides = [1, 1]} : vector<64x4xf32> to vector<64x1xf32>
    %85 = vector.extract_strided_slice %5 {offsets = [3, 0], sizes = [1, 128], strides = [1, 1]} : vector<4x128xf32> to vector<1x128xf32>
    %86 = vector.broadcast %84 : vector<64x1xf32> to vector<64x128xf32>
    %87 = vector.broadcast %85 : vector<1x128xf32> to vector<64x128xf32>
    %88 = arith.addf %86, %87 : vector<64x128xf32>
    %cst_33 = arith.constant 2.000000e-01 : f32
    %89 = vector.broadcast %cst_33 : f32 to vector<64x128xf32>
    %90 = arith.mulf %89, %88 : vector<64x128xf32>
    %91 = arith.maximumf %88, %90 : vector<64x128xf32>
    %92 = arith.addf %91, %10 : vector<64x128xf32>
    %cst_34 = arith.constant dense<0xFF800000> : vector<64xf32>
    %93 = vector.multi_reduction <maximumf>, %92, %cst_34 [1] : vector<64x128xf32> to vector<64xf32>
    %94 = vector.shape_cast %93 : vector<64xf32> to vector<64x1xf32>
    %95 = vector.broadcast %94 : vector<64x1xf32> to vector<64x128xf32>
    %96 = arith.subf %92, %95 : vector<64x128xf32>
    %97 = math.exp %96 : vector<64x128xf32>
    %cst_35 = arith.constant dense<0.000000e+00> : vector<64xf32>
    %98 = vector.multi_reduction <add>, %97, %cst_35 [1] : vector<64x128xf32> to vector<64xf32>
    %99 = vector.shape_cast %98 : vector<64xf32> to vector<64x1xf32>
    %100 = vector.extract_strided_slice %2 {offsets = [0, 48], sizes = [128, 16], strides = [1, 1]} : vector<128x64xf32> to vector<128x16xf32>
    %cst_36 = arith.constant dense<0.000000e+00> : vector<64x16xf32>
    %101 = tpu.matmul %97, %100, %cst_36 {dimension_numbers = #tpu.dot_dimension_numbers<[1], [0], [0], [1], [0, 0, 1, 1], [], []>, precision = #tpu.contract_precision<fp32>} : vector<64x128xf32>, vector<128x16xf32>, vector<64x16xf32> -> vector<64x16xf32>
    %102 = vector.broadcast %99 : vector<64x1xf32> to vector<64x16xf32>
    %103 = arith.divf %101, %102 : vector<64x16xf32>
    %104 = vector.extract_strided_slice %11 {offsets = [0, 48], sizes = [1, 16], strides = [1, 1]} : vector<1x64xf32> to vector<1x16xf32>
    %105 = vector.broadcast %104 : vector<1x16xf32> to vector<64x16xf32>
    %106 = arith.addf %103, %105 : vector<64x16xf32>
    %c0_37 = arith.constant 0 : index
    %c48 = arith.constant 48 : index
    %107 = vector.load %arg9[%c0_37, %c48] : memref<64x64xf32, #tpu.memory_space<vmem>>, vector<64x16xf32>
    tpu.vector_store %arg9[%c0_37, %c48], %106 {strides = array<i32>} : memref<64x64xf32, #tpu.memory_space<vmem>>, vector<64x16xf32>,
    return
  }
  func.func @transform_0(%arg0: i32) -> (i32, i32) {
    %c0_i32 = arith.constant 0 : i32
    %c0_i32_0 = arith.constant 0 : i32
    %c0_i32_1 = arith.constant 0 : i32
    return %c0_i32, %c0_i32_0 : i32, i32
  }
  func.func @transform_1(%arg0: i32) -> (i32, i32) {
    %c0_i32 = arith.constant 0 : i32
    %c0_i32_0 = arith.constant 0 : i32
    %c0_i32_1 = arith.constant 0 : i32
    return %c0_i32, %c0_i32_0 : i32, i32
  }
  func.func @transform_2(%arg0: i32) -> (i32, i32) {
    %c0_i32 = arith.constant 0 : i32
    %c0_i32_0 = arith.constant 0 : i32
    return %arg0, %c0_i32 : i32, i32
  }
  func.func @transform_3(%arg0: i32) -> (i32, i32) {
    %c0_i32 = arith.constant 0 : i32
    %c0_i32_0 = arith.constant 0 : i32
    %c0_i32_1 = arith.constant 0 : i32
    return %c0_i32, %c0_i32_0 : i32, i32
  }
  func.func @transform_4(%arg0: i32) -> (i32, i32) {
    %c0_i32 = arith.constant 0 : i32
    %c0_i32_0 = arith.constant 0 : i32
    %c0_i32_1 = arith.constant 0 : i32
    return %c0_i32, %c0_i32_0 : i32, i32
  }
  func.func @transform_5(%arg0: i32) -> (i32, i32) {
    %c0_i32 = arith.constant 0 : i32
    %c0_i32_0 = arith.constant 0 : i32
    %c0_i32_1 = arith.constant 0 : i32
    return %c0_i32, %c0_i32_0 : i32, i32
  }
  func.func @transform_6(%arg0: i32) -> (i32, i32) {
    %c0_i32 = arith.constant 0 : i32
    %c0_i32_0 = arith.constant 0 : i32
    %c0_i32_1 = arith.constant 0 : i32
    return %c0_i32, %c0_i32_0 : i32, i32
  }
  func.func @transform_7(%arg0: i32) -> (i32, i32) {
    %c0_i32 = arith.constant 0 : i32
    %c0_i32_0 = arith.constant 0 : i32
    return %arg0, %c0_i32 : i32, i32
  }
  func.func @transform_8(%arg0: i32) -> (i32, i32) {
    %c0_i32 = arith.constant 0 : i32
    %c0_i32_0 = arith.constant 0 : i32
    return %arg0, %c0_i32 : i32, i32
  }
}

</mosaic_0001>

<llo_original>
// kernel: tpu_custom_call.1
$region0: #{tpu_custom_call.1}
  #allocation0 [shape = 'u32[]', space=smem, size = 0x4, offset = 0x4, fixed_abs, tag = 'smem constant byte address 0x4 - core index']
  #allocation1 [shape = 'u32[144,128]{1,0:T(1,128)}', space=vmem, size = 0x12000, scoped, tag = 'internal scratch']
  %s0 = inlined_call_operand.vmem [shape: f32[128,32], index: 0, kind: input, shape index: {}]
  %s1 = inlined_call_operand.vmem [shape: f32[32,128], index: 1, kind: input, shape index: {}]
  %s2 = inlined_call_operand.vmem [shape: f32[128,32], index: 2, kind: input, shape index: {}]
  %s3 = inlined_call_operand.vmem [shape: f32[32,64], index: 3, kind: input, shape index: {}]
  %s4 = inlined_call_operand.vmem [shape: f32[4,32], index: 4, kind: input, shape index: {}]
  %s5 = inlined_call_operand.vmem [shape: f32[32,4], index: 5, kind: input, shape index: {}]
  %s6 = inlined_call_operand.vmem [shape: f32[1,64], index: 6, kind: input, shape index: {}]
  %s7 = inlined_call_operand.vmem [shape: bf16[128,128], index: 7, kind: input, shape index: {}]
  %s8 = inlined_call_operand.vmem [shape: f32[128,64], index: 8, kind: output, shape index: {}]
  %s9 = sld [smem:[#allocation0]]
  $region65: #{tpu_custom_call.1} parent=0
    _
  %s11 = ssub.s32 1, %s9
  %s12 = scalar_select 0, %s11, %s9
  loop: start=0, step=1, limit=4
  $region2: #{tpu_custom_call.1} parent=0 // loop_pre_header
    _
  $region3: #{tpu_custom_call.1} parent=0 // loop_header
    %s14 = sphi 0, %s18
    %p15 = scmp.ge.s32.totalorder %s14, 4
    %s22 = sphi 0, %s22
    %s24 = sphi 0, %s22
    %s25 = sphi 0, %s24
    %s39 = sphi 0, %s25
    %s43 = sphi 0, %s43
    %s45 = sphi 0, %s43
    %s46 = sphi 0, %s45
    %s60 = sphi 0, %s46
    %s66 = sphi 0, %s68
    %s69 = sphi 0, %s66
    %s70 = sphi 0, %s69
    %s86 = sphi 0, %s70
    %s90 = sphi 0, %s90
    %s92 = sphi 0, %s90
    %s93 = sphi 0, %s92
    %s107 = sphi 0, %s93
    %s111 = sphi 0, %s111
    %s113 = sphi 0, %s111
    %s114 = sphi 0, %s113
    %s128 = sphi 0, %s114
    %s132 = sphi 0, %s132
    %s134 = sphi 0, %s132
    %s135 = sphi 0, %s134
    %s149 = sphi 0, %s135
    %s153 = sphi 0, %s153
    %s155 = sphi 0, %s153
    %s156 = sphi 0, %s155
    %s170 = sphi 0, %s156
    %s176 = sphi 0, %s178
    %s179 = sphi 0, %s176
    %s180 = sphi 0, %s179
    %s196 = sphi 0, %s180
    %s202 = sphi 0, %s204
    %s205 = sphi 0, %s202
    %s206 = sphi 0, %s205
    %s222 = sphi 0, %s206
  $region4: #{tpu_custom_call.1} parent=0 // loop_header_branch
    %17 = sbr.rel (%p15) target = $region8
  $region5: #{tpu_custom_call.1} parent=0 // loop_body
    %s19 = ssub.s32 %s14, 1
    %s20 = ssub.s32 %s14, 2
    %s21 = sadd.s32 %s14, 1
    %s23 = sadd.s32 %s22, 1
    %p26 = scmp.eq.s32.totalorder %s14, 1
    %p27 = scmp.ne.s32.totalorder %s22, %s24
    %p28 = scmp.eq.s32.totalorder %s14, 0
    %p29 = por %p27, %p28
    %p30 = scmp.ne.s32.totalorder %s22, %s24
    %p31 = scmp.eq.s32.totalorder %s19, 1
    %p32 = por %p30, %p31
    %p33 = scmp.ne.s32.totalorder %s24, %s25
    %p34 = scmp.eq.s32.totalorder %s19, 0
    %p35 = por %p33, %p34
    %p36 = scmp.ne.s32.totalorder %s24, %s25
    %p37 = scmp.eq.s32.totalorder %s20, 1
    %p38 = por %p36, %p37
    %p40 = scmp.ne.s32.totalorder %s25, %s39
    %p41 = scmp.eq.s32.totalorder %s20, 0
    %p42 = por %p40, %p41
    %s44 = sadd.s32 %s43, 1
    %p47 = scmp.eq.s32.totalorder %s14, 1
    %p48 = scmp.ne.s32.totalorder %s43, %s45
    %p49 = scmp.eq.s32.totalorder %s14, 0
    %p50 = por %p48, %p49
    %p51 = scmp.ne.s32.totalorder %s43, %s45
    %p52 = scmp.eq.s32.totalorder %s19, 1
    %p53 = por %p51, %p52
    %p54 = scmp.ne.s32.totalorder %s45, %s46
    %p55 = scmp.eq.s32.totalorder %s19, 0
    %p56 = por %p54, %p55
    %p57 = scmp.ne.s32.totalorder %s45, %s46
    %p58 = scmp.eq.s32.totalorder %s20, 1
    %p59 = por %p57, %p58
    %p61 = scmp.ne.s32.totalorder %s46, %s60
    %p62 = scmp.eq.s32.totalorder %s20, 0
    %p63 = por %p61, %p62
    %s64 = ssub.s32 %s14, %s21
    %p65 = scmp.eq.s32.totalorder %s64, 0
    %s67 = sadd.s32 %s66, 1
    %s68 = scalar_select %p65, %s66, %s67
    %p71 = pneg %p65
    %p72 = scmp.eq.s32.totalorder %s14, 1
    %p73 = por %p71, %p72
    %p74 = scmp.ne.s32.totalorder %s66, %s69
    %p75 = scmp.eq.s32.totalorder %s14, 0
    %p76 = por %p74, %p75
    %p77 = scmp.ne.s32.totalorder %s66, %s69
    %p78 = scmp.eq.s32.totalorder %s19, 1
    %p79 = por %p77, %p78
    %p80 = scmp.ne.s32.totalorder %s69, %s70
    %p81 = scmp.eq.s32.totalorder %s19, 0
    %p82 = por %p80, %p81
    %p83 = scmp.ne.s32.totalorder %s69, %s70
    %p84 = scmp.eq.s32.totalorder %s20, 1
    %p85 = por %p83, %p84
    %p87 = scmp.ne.s32.totalorder %s70, %s86
    %p88 = scmp.eq.s32.totalorder %s20, 0
    %p89 = por %p87, %p88
    %s91 = sadd.s32 %s90, 1
    %p94 = scmp.eq.s32.totalorder %s14, 1
    %p95 = scmp.ne.s32.totalorder %s90, %s92
    %p96 = scmp.eq.s32.totalorder %s14, 0
    %p97 = por %p95, %p96
    %p98 = scmp.ne.s32.totalorder %s90, %s92
    %p99 = scmp.eq.s32.totalorder %s19, 1
    %p100 = por %p98, %p99
    %p101 = scmp.ne.s32.totalorder %s92, %s93
    %p102 = scmp.eq.s32.totalorder %s19, 0
    %p103 = por %p101, %p102
    %p104 = scmp.ne.s32.totalorder %s92, %s93
    %p105 = scmp.eq.s32.totalorder %s20, 1
    %p106 = por %p104, %p105
    %p108 = scmp.ne.s32.totalorder %s93, %s107
    %p109 = scmp.eq.s32.totalorder %s20, 0
    %p110 = por %p108, %p109
    %s112 = sadd.s32 %s111, 1
    %p115 = scmp.eq.s32.totalorder %s14, 1
    %p116 = scmp.ne.s32.totalorder %s111, %s113
    %p117 = scmp.eq.s32.totalorder %s14, 0
    %p118 = por %p116, %p117
    %p119 = scmp.ne.s32.totalorder %s111, %s113
    %p120 = scmp.eq.s32.totalorder %s19, 1
    %p121 = por %p119, %p120
    %p122 = scmp.ne.s32.totalorder %s113, %s114
    %p123 = scmp.eq.s32.totalorder %s19, 0
    %p124 = por %p122, %p123
    %p125 = scmp.ne.s32.totalorder %s113, %s114
    %p126 = scmp.eq.s32.totalorder %s20, 1
    %p127 = por %p125, %p126
    %p129 = scmp.ne.s32.totalorder %s114, %s128
    %p130 = scmp.eq.s32.totalorder %s20, 0
    %p131 = por %p129, %p130
    %s133 = sadd.s32 %s132, 1
    %p136 = scmp.eq.s32.totalorder %s14, 1
    %p137 = scmp.ne.s32.totalorder %s132, %s134
    %p138 = scmp.eq.s32.totalorder %s14, 0
    %p139 = por %p137, %p138
    %p140 = scmp.ne.s32.totalorder %s132, %s134
    %p141 = scmp.eq.s32.totalorder %s19, 1
    %p142 = por %p140, %p141
    %p143 = scmp.ne.s32.totalorder %s134, %s135
    %p144 = scmp.eq.s32.totalorder %s19, 0
    %p145 = por %p143, %p144
    %p146 = scmp.ne.s32.totalorder %s134, %s135
    %p147 = scmp.eq.s32.totalorder %s20, 1
    %p148 = por %p146, %p147
    %p150 = scmp.ne.s32.totalorder %s135, %s149
    %p151 = scmp.eq.s32.totalorder %s20, 0
    %p152 = por %p150, %p151
    %s154 = sadd.s32 %s153, 1
    %p157 = scmp.eq.s32.totalorder %s14, 1
    %p158 = scmp.ne.s32.totalorder %s153, %s155
    %p159 = scmp.eq.s32.totalorder %s14, 0
    %p160 = por %p158, %p159
    %p161 = scmp.ne.s32.totalorder %s153, %s155
    %p162 = scmp.eq.s32.totalorder %s19, 1
    %p163 = por %p161, %p162
    %p164 = scmp.ne.s32.totalorder %s155, %s156
    %p165 = scmp.eq.s32.totalorder %s19, 0
    %p166 = por %p164, %p165
    %p167 = scmp.ne.s32.totalorder %s155, %s156
    %p168 = scmp.eq.s32.totalorder %s20, 1
    %p169 = por %p167, %p168
    %p171 = scmp.ne.s32.totalorder %s156, %s170
    %p172 = scmp.eq.s32.totalorder %s20, 0
    %p173 = por %p171, %p172
    %s174 = ssub.s32 %s14, %s21
    %p175 = scmp.eq.s32.totalorder %s174, 0
    %s177 = sadd.s32 %s176, 1
    %s178 = scalar_select %p175, %s176, %s177
    %p181 = pneg %p175
    %p182 = scmp.eq.s32.totalorder %s14, 1
    %p183 = por %p181, %p182
    %p184 = scmp.ne.s32.totalorder %s176, %s179
    %p185 = scmp.eq.s32.totalorder %s14, 0
    %p186 = por %p184, %p185
    %p187 = scmp.ne.s32.totalorder %s176, %s179
    %p188 = scmp.eq.s32.totalorder %s19, 1
    %p189 = por %p187, %p188
    %p190 = scmp.ne.s32.totalorder %s179, %s180
    %p191 = scmp.eq.s32.totalorder %s19, 0
    %p192 = por %p190, %p191
    %p193 = scmp.ne.s32.totalorder %s179, %s180
    %p194 = scmp.eq.s32.totalorder %s20, 1
    %p195 = por %p193, %p194
    %p197 = scmp.ne.s32.totalorder %s180, %s196
    %p198 = scmp.eq.s32.totalorder %s20, 0
    %p199 = por %p197, %p198
    %s200 = ssub.s32 %s14, %s21
    %p201 = scmp.eq.s32.totalorder %s200, 0
    %s203 = sadd.s32 %s202, 1
    %s204 = scalar_select %p201, %s202, %s203
    %p207 = pneg %p201
    %p208 = scmp.eq.s32.totalorder %s14, 1
    %p209 = por %p207, %p208
    %p210 = scmp.ne.s32.totalorder %s202, %s205
    %p211 = scmp.eq.s32.totalorder %s14, 0
    %p212 = por %p210, %p211
    %p213 = scmp.ne.s32.totalorder %s202, %s205
    %p214 = scmp.eq.s32.totalorder %s19, 1
    %p215 = por %p213, %p214
    %p216 = scmp.ne.s32.totalorder %s205, %s206
    %p217 = scmp.eq.s32.totalorder %s19, 0
    %p218 = por %p216, %p217
    %p219 = scmp.ne.s32.totalorder %s205, %s206
    %p220 = scmp.eq.s32.totalorder %s20, 1
    %p221 = por %p219, %p220
    %p223 = scmp.ne.s32.totalorder %s206, %s222
    %p224 = scmp.eq.s32.totalorder %s20, 0
    %p225 = por %p223, %p224
    %p226 = scmp.le.s32.totalorder 1, %s14
    %p227 = scmp.lt.s32.totalorder %s14, 3
    %p228 = pnand %p226, %p227
    %p229 = pneg %p228
    // Predicated region
    $region9: #{tpu_custom_call.1} parent=5 // pred_check
      _
    $region10: #{tpu_custom_call.1} parent=5 // pred_check_branch
      %231 = sbr.rel (%p228) target = $region12
    $region11: #{tpu_custom_call.1} parent=5 // pred_region
      %s232 = ssub.s32 %s14, 1
      // Predicated region
      $region13: #{tpu_custom_call.1} parent=11 // pred_check
        %p233 = pneg %p35
      $region14: #{tpu_custom_call.1} parent=11 // pred_check_branch
        %235 = sbr.rel (%p233) target = $region16
      $region15: #{tpu_custom_call.1} parent=11 // pred_region
        _
      $region16: #{tpu_custom_call.1} parent=11 // pred_fallthru
        _
      // Predicated region
      $region17: #{tpu_custom_call.1} parent=11 // pred_check
        %p236 = pneg %p56
      $region18: #{tpu_custom_call.1} parent=11 // pred_check_branch
        %238 = sbr.rel (%p236) target = $region20
      $region19: #{tpu_custom_call.1} parent=11 // pred_region
        _
      $region20: #{tpu_custom_call.1} parent=11 // pred_fallthru
        _
      // Predicated region
      $region21: #{tpu_custom_call.1} parent=11 // pred_check
        %p239 = pneg %p103
      $region22: #{tpu_custom_call.1} parent=11 // pred_check_branch
        %241 = sbr.rel (%p239) target = $region24
      $region23: #{tpu_custom_call.1} parent=11 // pred_region
        _
      $region24: #{tpu_custom_call.1} parent=11 // pred_fallthru
        _
      // Predicated region
      $region25: #{tpu_custom_call.1} parent=11 // pred_check
        %p242 = pneg %p124
      $region26: #{tpu_custom_call.1} parent=11 // pred_check_branch
        %244 = sbr.rel (%p242) target = $region28
      $region27: #{tpu_custom_call.1} parent=11 // pred_region
        _
      $region28: #{tpu_custom_call.1} parent=11 // pred_fallthru
        _
      // Predicated region
      $region29: #{tpu_custom_call.1} parent=11 // pred_check
        %p245 = pneg %p145
      $region30: #{tpu_custom_call.1} parent=11 // pred_check_branch
        %247 = sbr.rel (%p245) target = $region32
      $region31: #{tpu_custom_call.1} parent=11 // pred_region
        _
      $region32: #{tpu_custom_call.1} parent=11 // pred_fallthru
        _
      // Predicated region
      $region33: #{tpu_custom_call.1} parent=11 // pred_check
        %p248 = pneg %p166
      $region34: #{tpu_custom_call.1} parent=11 // pred_check_branch
        %250 = sbr.rel (%p248) target = $region36
      $region35: #{tpu_custom_call.1} parent=11 // pred_region
        _
      $region36: #{tpu_custom_call.1} parent=11 // pred_fallthru
        _
    $region12: #{tpu_custom_call.1} parent=5 // pred_fallthru
      _
    %p251 = scmp.lt.s32.totalorder %s14, 2
    // Predicated region
    $region37: #{tpu_custom_call.1} parent=5 // pred_check
      %p252 = pneg %p251
    $region38: #{tpu_custom_call.1} parent=5 // pred_check_branch
      %254 = sbr.rel (%p252) target = $region40
    $region39: #{tpu_custom_call.1} parent=5 // pred_region
      // Predicated region
      $region41: #{tpu_custom_call.1} parent=39 // pred_check
        %p255 = pneg %p76
      $region42: #{tpu_custom_call.1} parent=39 // pred_check_branch
        %257 = sbr.rel (%p255) target = $region44
      $region43: #{tpu_custom_call.1} parent=39 // pred_region
        %s258 = smul.u32 8, %s14
        %p259 = scmp.lt.s32.totalorder %s258, 15
        %s260 = scalar_select %p259, %s258, 15
        %s261 = smul.addr %s260, 8
        %s262 = scalar_lea.vmem %s2, %s261
        %s263 = smul.u32 8, %s14
      $region44: #{tpu_custom_call.1} parent=39 // pred_fallthru
        _
      // Predicated region
      $region45: #{tpu_custom_call.1} parent=39 // pred_check
        %p264 = pneg %p186
      $region46: #{tpu_custom_call.1} parent=39 // pred_check_branch
        %266 = sbr.rel (%p264) target = $region48
      $region47: #{tpu_custom_call.1} parent=39 // pred_region
        %s267 = smul.u32 8, %s14
        %p268 = scmp.lt.s32.totalorder %s267, 15
        %s269 = scalar_select %p268, %s267, 15
        %s270 = smul.addr %s269, 4
        %s271 = scalar_lea.vmem %s7, %s270
        %s272 = smul.u32 8, %s14
      $region48: #{tpu_custom_call.1} parent=39 // pred_fallthru
        _
    $region40: #{tpu_custom_call.1} parent=5 // pred_fallthru
      _
    %p273 = scmp.le.s32.totalorder 1, %s14
    %p274 = scmp.lt.s32.totalorder %s14, 3
    %p275 = pnand %p273, %p274
    %p276 = pneg %p275
    // Predicated region
    $region49: #{tpu_custom_call.1} parent=5 // pred_check
      _
    $region50: #{tpu_custom_call.1} parent=5 // pred_check_branch
      %278 = sbr.rel (%p275) target = $region52
    $region51: #{tpu_custom_call.1} parent=5 // pred_region
      %s279 = ssub.s32 %s14, 1
      %p280 = pneg %p35
      %p281 = pneg %p32
      %p282 = pneg %p56
      %p283 = pneg %p53
      %s284 = smul.u32 8, %s19
      %p285 = scmp.lt.s32.totalorder %s284, 15
      %s286 = scalar_select %p285, %s284, 15
      %s287 = smul.addr %s286, 8
      %s288 = scalar_lea.vmem %s2, %s287
      %p289 = pneg %p82
      %p290 = pneg %p79
      %p291 = pneg %p103
      %p292 = pneg %p100
      %p293 = pneg %p124
      %p294 = pneg %p121
      %p295 = pneg %p145
      %p296 = pneg %p142
      %p297 = pneg %p166
      %p298 = pneg %p163
      %s299 = smul.u32 8, %s19
      %p300 = scmp.lt.s32.totalorder %s299, 15
      %s301 = scalar_select %p300, %s299, 15
      %s302 = smul.addr %s301, 4
      %s303 = scalar_lea.vmem %s7, %s302
      %p304 = pneg %p192
      %p305 = pneg %p189
      %p306 = pneg %p218
      %p307 = pneg %p215
      %s308 = smul.u32 8, %s19
      %p309 = scmp.lt.s32.totalorder %s308, 15
      %s310 = scalar_select %p309, %s308, 15
      %s311 = smul.addr %s310, 8
      %s312 = scalar_lea.vmem %s8, %s311
      %s313 = smul.u32 8, %s19
      %p314 = scmp.lt.s32.totalorder %s313, 15
      %s315 = scalar_select %p314, %s313, 15
      %s316 = smul.addr %s315, 8
      %s317 = scalar_lea.vmem %s2, %s316
      %s318 = smul.u32 8, %s19
      %s319 = smul.u32 8, %s19
      %p320 = scmp.lt.s32.totalorder %s319, 15
      %s321 = scalar_select %p320, %s319, 15
      %s322 = smul.addr %s321, 4
      %s323 = scalar_lea.vmem %s7, %s322
      %s324 = smul.u32 8, %s19
      %s325 = smul.u32 8, %s19
      %p326 = scmp.lt.s32.totalorder %s325, 15
      %s327 = scalar_select %p326, %s325, 15
      %s328 = smul.addr %s327, 8
      %s329 = scalar_lea.vmem %s8, %s328
      %s330 = smul.u32 8, %s19
      %v331 = vld [vmem:[%s0] sm:$0xff]
      %v332 = vld [vmem:[%s0 + $0x8] sm:$0xff]
      %v333 = vld [vmem:[%s0 + $0x10] sm:$0xff]
      %v334 = vld [vmem:[%s0 + $0x18] sm:$0xff]
      %v335 = vld [vmem:[%s0 + $0x20] sm:$0xff]
      %v336 = vld [vmem:[%s0 + $0x28] sm:$0xff]
      %v337 = vld [vmem:[%s0 + $0x30] sm:$0xff]
      %v338 = vld [vmem:[%s0 + $0x38] sm:$0xff]
      %v339 = vld [vmem:[%s0 + $0x40] sm:$0xff]
      %v340 = vld [vmem:[%s0 + $0x48] sm:$0xff]
      %v341 = vld [vmem:[%s0 + $0x50] sm:$0xff]
      %v342 = vld [vmem:[%s0 + $0x58] sm:$0xff]
      %v343 = vld [vmem:[%s0 + $0x60] sm:$0xff]
      %v344 = vld [vmem:[%s0 + $0x68] sm:$0xff]
      %v345 = vld [vmem:[%s0 + $0x70] sm:$0xff]
      %v346 = vld [vmem:[%s0 + $0x78] sm:$0xff]
      %v347 = vld [vmem:[%s3] sm:$0xff]
      %v348 = vld [vmem:[%s3 + $0x8] sm:$0xff]
      %v349 = vld [vmem:[%s3 + $0x10] sm:$0xff]
      %v350 = vld [vmem:[%s3 + $0x18] sm:$0xff]
      %vm351 = vcmask 261120
      %v353 = vsel %vm351, %v331, 0
      %v356 = vsel %vm351, %v332, 0
      %v359 = vsel %vm351, %v333, 0
      %v362 = vsel %vm351, %v334, 0
      %v365 = vsel %vm351, %v335, 0
      %v368 = vsel %vm351, %v336, 0
      %v371 = vsel %vm351, %v337, 0
      %v374 = vsel %vm351, %v338, 0
      %v377 = vsel %vm351, %v339, 0
      %v380 = vsel %vm351, %v340, 0
      %v383 = vsel %vm351, %v341, 0
      %v386 = vsel %vm351, %v342, 0
      %v389 = vsel %vm351, %v343, 0
      %v392 = vsel %vm351, %v344, 0
      %v395 = vsel %vm351, %v345, 0
      %v398 = vsel %vm351, %v346, 0
      %400 = vmatprep.subr.mxu0 0.0
      %v401 = vand.u32 %v347, 4294901760
      %402 = vmatpush1.msra.mxu0 %v401
      %403 = vmatprep.subr.mxu0 0.0
      %v404 = vand.u32 %v348, 4294901760
      %405 = vmatpush1.msra.mxu0 %v404
      %406 = vmatprep.subr.mxu0 0.0
      %v407 = vand.u32 %v349, 4294901760
      %408 = vmatpush1.msra.mxu0 %v407
      %409 = vmatprep.subr.mxu0 0.0
      %v410 = vand.u32 %v350, 4294901760
      %411 = vmatpush1.msra.mxu0 %v410
      %412 = vmatprep.subr.mxu0 0.0
      %413 = vmatpush1.msra.mxu0 0.0
      %414 = vmatprep.subr.mxu0 0.0
      %415 = vmatpush1.msra.mxu0 0.0
      %416 = vmatprep.subr.mxu0 0.0
      %417 = vmatpush1.msra.mxu0 0.0
      %418 = vmatprep.subr.mxu0 0.0
      %419 = vmatpush1.msra.mxu0 0.0
      %420 = vmatprep.subr.mxu0 0.0
      %421 = vmatpush1.msra.mxu0 0.0
      %422 = vmatprep.subr.mxu0 0.0
      %423 = vmatpush1.msra.mxu0 0.0
      %424 = vmatprep.subr.mxu0 0.0
      %425 = vmatpush1.msra.mxu0 0.0
      %426 = vmatprep.subr.mxu0 0.0
      %427 = vmatpush1.msra.mxu0 0.0
      %428 = vmatprep.subr.mxu0 0.0
      %429 = vmatpush1.msra.mxu0 0.0
      %430 = vmatprep.subr.mxu0 0.0
      %431 = vmatpush1.msra.mxu0 0.0
      %432 = vmatprep.subr.mxu0 0.0
      %433 = vmatpush1.msra.mxu0 0.0
      %434 = vmatprep.subr.mxu0 0.0
      %435 = vmatpush1.msra.mxu0 0.0
      %436 = vmatprep.subr.mxu0 0.0
      %437 = vmatpush1.msra.mxu0 0.0
      %438 = vmatprep.subr.mxu0 0.0
      %439 = vmatpush1.msra.mxu0 0.0
      %440 = vmatprep.subr.mxu0 0.0
      %441 = vmatpush1.msra.mxu0 0.0
      %442 = vmatprep.subr.mxu0 0.0
      %443 = vmatpush1.msra.mxu0 0.0
      %444 = vmatprep.subr.mxu0 0.0
      %445 = vmatpush1.msra.mxu0 0.0
      %446 = vmatprep.subr.mxu0 0.0
      %447 = vmatpush1.msra.mxu0 0.0
      %448 = vmatprep.subr.mxu0 0.0
      %449 = vmatpush1.msra.mxu0 0.0
      %450 = vmatprep.subr.mxu0 0.0
      %451 = vmatpush1.msra.mxu0 0.0
      %452 = vmatprep.subr.mxu0 0.0
      %453 = vmatpush1.msra.mxu0 0.0
      %454 = vmatprep.subr.mxu0 0.0
      %455 = vmatpush1.msra.mxu0 0.0
      %456 = vmatprep.subr.mxu0 0.0
      %457 = vmatpush1.msra.mxu0 0.0
      %458 = vmatprep.subr.mxu0 0.0
      %459 = vmatpush1.msra.mxu0 0.0
      %460 = vmatprep.subr.mxu0 0.0
      %461 = vmatpush1.msra.mxu0 0.0
      %462 = vmatprep.subr.mxu0 0.0
      %463 = vmatpush1.msra.mxu0 0.0
      %464 = vmatprep.subr.mxu0 0.0
      %465 = vmatpush1.msra.mxu0 0.0
      %466 = vmatprep.subr.mxu0 0.0
      %467 = vmatpush1.msra.mxu0 0.0
      %468 = vmatprep.mubr.f32.mxu0 0.0
      %v469 = vand.u32 %v353, 4294901760
      %v470 = vsub.f32 %v353, %v469
      %v471 = vand.u32 %v470, 4294901760
      %v472 = vsub.f32 %v470, %v471
      %v473 = vand.u32 %v472, 4294901760
      %474 = vmatmul.mubr.f32.gmra.mrb[0].mxu0 %v473
      %v475 = vpop.f32.mrb[0].mxu0
      %v476 = vadd.f32 0.0, %v475
      %v477 = vpop.f32.mrb[0].mxu0
      %478 = vmatprep.mubr.f32.mxu0 0.0
      %v479 = vand.u32 %v356, 4294901760
      %v480 = vsub.f32 %v356, %v479
      %v481 = vand.u32 %v480, 4294901760
      %v482 = vsub.f32 %v480, %v481
      %v483 = vand.u32 %v482, 4294901760
      %484 = vmatmul.mubr.f32.gmra.mrb[0].mxu0 %v483
      %v485 = vpop.f32.mrb[0].mxu0
      %v486 = vadd.f32 0.0, %v485
      %v487 = vpop.f32.mrb[0].mxu0
      %488 = vmatprep.mubr.f32.mxu0 0.0
      %v489 = vand.u32 %v359, 4294901760
      %v490 = vsub.f32 %v359, %v489
      %v491 = vand.u32 %v490, 4294901760
      %v492 = vsub.f32 %v490, %v491
      %v493 = vand.u32 %v492, 4294901760
      %494 = vmatmul.mubr.f32.gmra.mrb[0].mxu0 %v493
      %v495 = vpop.f32.mrb[0].mxu0
      %v496 = vadd.f32 0.0, %v495
      %v497 = vpop.f32.mrb[0].mxu0
      %498 = vmatprep.mubr.f32.mxu0 0.0
      %v499 = vand.u32 %v362, 4294901760
      %v500 = vsub.f32 %v362, %v499
      %v501 = vand.u32 %v500, 4294901760
      %v502 = vsub.f32 %v500, %v501
      %v503 = vand.u32 %v502, 4294901760
      %504 = vmatmul.mubr.f32.gmra.mrb[0].mxu0 %v503
      %v505 = vpop.f32.mrb[0].mxu0
      %v506 = vadd.f32 0.0, %v505
      %v507 = vpop.f32.mrb[0].mxu0
      %508 = vmatprep.mubr.f32.mxu0 0.0
      %v509 = vand.u32 %v365, 4294901760
      %v510 = vsub.f32 %v365, %v509
      %v511 = vand.u32 %v510, 4294901760
      %v512 = vsub.f32 %v510, %v511
      %v513 = vand.u32 %v512, 4294901760
      %514 = vmatmul.mubr.f32.gmra.mrb[0].mxu0 %v513
      %v515 = vpop.f32.mrb[0].mxu0
      %v516 = vadd.f32 0.0, %v515
      %v517 = vpop.f32.mrb[0].mxu0
      %518 = vmatprep.mubr.f32.mxu0 0.0
      %v519 = vand.u32 %v368, 4294901760
      %v520 = vsub.f32 %v368, %v519
      %v521 = vand.u32 %v520, 4294901760
      %v522 = vsub.f32 %v520, %v521
      %v523 = vand.u32 %v522, 4294901760
      %524 = vmatmul.mubr.f32.gmra.mrb[0].mxu0 %v523
      %v525 = vpop.f32.mrb[0].mxu0
      %v526 = vadd.f32 0.0, %v525
      %v527 = vpop.f32.mrb[0].mxu0
      %528 = vmatprep.mubr.f32.mxu0 0.0
      %v529 = vand.u32 %v371, 4294901760
      %v530 = vsub.f32 %v371, %v529
      %v531 = vand.u32 %v530, 4294901760
      %v532 = vsub.f32 %v530, %v531
      %v533 = vand.u32 %v532, 4294901760
      %534 = vmatmul.mubr.f32.gmra.mrb[0].mxu0 %v533
      %v535 = vpop.f32.mrb[0].mxu0
      %v536 = vadd.f32 0.0, %v535
      %v537 = vpop.f32.mrb[0].mxu0
      %538 = vmatprep.mubr.f32.mxu0 0.0
      %v539 = vand.u32 %v374, 4294901760
      %v540 = vsub.f32 %v374, %v539
      %v541 = vand.u32 %v540, 4294901760
      %v542 = vsub.f32 %v540, %v541
      %v543 = vand.u32 %v542, 4294901760
      %544 = vmatmul.mubr.f32.gmra.mrb[0].mxu0 %v543
      %v545 = vpop.f32.mrb[0].mxu0
      %v546 = vadd.f32 0.0, %v545
      %v547 = vpop.f32.mrb[0].mxu0
      %548 = vmatprep.mubr.f32.mxu0 0.0
      %v549 = vand.u32 %v377, 4294901760
      %v550 = vsub.f32 %v377, %v549
      %v551 = vand.u32 %v550, 4294901760
      %v552 = vsub.f32 %v550, %v551
      %v553 = vand.u32 %v552, 4294901760
      %554 = vmatmul.mubr.f32.gmra.mrb[0].mxu0 %v553
      %v555 = vpop.f32.mrb[0].mxu0
      %v556 = vadd.f32 0.0, %v555
      %v557 = vpop.f32.mrb[0].mxu0
      %558 = vmatprep.mubr.f32.mxu0 0.0
      %v559 = vand.u32 %v380, 4294901760
      %v560 = vsub.f32 %v380, %v559
      %v561 = vand.u32 %v560, 4294901760
      %v562 = vsub.f32 %v560, %v561
      %v563 = vand.u32 %v562, 4294901760
      %564 = vmatmul.mubr.f32.gmra.mrb[0].mxu0 %v563
      %v565 = vpop.f32.mrb[0].mxu0
      %v566 = vadd.f32 0.0, %v565
      %v567 = vpop.f32.mrb[0].mxu0
      %568 = vmatprep.mubr.f32.mxu0 0.0
      %v569 = vand.u32 %v383, 4294901760
      %v570 = vsub.f32 %v383, %v569
      %v571 = vand.u32 %v570, 4294901760
      %v572 = vsub.f32 %v570, %v571
      %v573 = vand.u32 %v572, 4294901760
      %574 = vmatmul.mubr.f32.gmra.mrb[0].mxu0 %v573
      %v575 = vpop.f32.mrb[0].mxu0
      %v576 = vadd.f32 0.0, %v575
      %v577 = vpop.f32.mrb[0].mxu0
      %578 = vmatprep.mubr.f32.mxu0 0.0
      %v579 = vand.u32 %v386, 4294901760
      %v580 = vsub.f32 %v386, %v579
      %v581 = vand.u32 %v580, 4294901760
      %v582 = vsub.f32 %v580, %v581
      %v583 = vand.u32 %v582, 4294901760
      %584 = vmatmul.mubr.f32.gmra.mrb[0].mxu0 %v583
      %v585 = vpop.f32.mrb[0].mxu0
      %v586 = vadd.f32 0.0, %v585
      %v587 = vpop.f32.mrb[0].mxu0
      %588 = vmatprep.mubr.f32.mxu0 0.0
      %v589 = vand.u32 %v389, 4294901760
      %v590 = vsub.f32 %v389, %v589
      %v591 = vand.u32 %v590, 4294901760
      %v592 = vsub.f32 %v590, %v591
      %v593 = vand.u32 %v592, 4294901760
      %594 = vmatmul.mubr.f32.gmra.mrb[0].mxu0 %v593
      %v595 = vpop.f32.mrb[0].mxu0
      %v596 = vadd.f32 0.0, %v595
      %v597 = vpop.f32.mrb[0].mxu0
      %598 = vmatprep.mubr.f32.mxu0 0.0
      %v599 = vand.u32 %v392, 4294901760
      %v600 = vsub.f32 %v392, %v599
      %v601 = vand.u32 %v600, 4294901760
      %v602 = vsub.f32 %v600, %v601
      %v603 = vand.u32 %v602, 4294901760
      %604 = vmatmul.mubr.f32.gmra.mrb[0].mxu0 %v603
      %v605 = vpop.f32.mrb[0].mxu0
      %v606 = vadd.f32 0.0, %v605
      %v607 = vpop.f32.mrb[0].mxu0
      %608 = vmatprep.mubr.f32.mxu0 0.0
      %v609 = vand.u32 %v395, 4294901760
      %v610 = vsub.f32 %v395, %v609
      %v611 = vand.u32 %v610, 4294901760
      %v612 = vsub.f32 %v610, %v611
      %v613 = vand.u32 %v612, 4294901760
      %614 = vmatmul.mubr.f32.gmra.mrb[0].mxu0 %v613
      %v615 = vpop.f32.mrb[0].mxu0
      %v616 = vadd.f32 0.0, %v615
      %v617 = vpop.f32.mrb[0].mxu0
      %618 = vmatprep.mubr.f32.mxu0 0.0
      %v619 = vand.u32 %v398, 4294901760
      %v620 = vsub.f32 %v398, %v619
      %v621 = vand.u32 %v620, 4294901760
      %v622 = vsub.f32 %v620, %v621
      %v623 = vand.u32 %v622, 4294901760
      %624 = vmatmul.mubr.f32.gmra.mrb[0].mxu0 %v623
      %v625 = vpop.f32.mrb[0].mxu0
      %v626 = vadd.f32 0.0, %v625
      %v627 = vpop.f32.mrb[0].mxu0
      %628 = vdwg.mxu0
      %629 = vmatprep.subr.mxu0 0.0
      %v630 = vand.u32 %v347, 4294901760
      %v631 = vsub.f32 %v347, %v630
      %v632 = vand.u32 %v631, 4294901760
      %v633 = vsub.f32 %v631, %v632
      %v634 = vand.u32 %v633, 4294901760
      %635 = vmatpush1.msra.mxu0 %v634
      %636 = vmatprep.subr.mxu0 0.0
      %v637 = vand.u32 %v348, 4294901760
      %v638 = vsub.f32 %v348, %v637
      %v639 = vand.u32 %v638, 4294901760
      %v640 = vsub.f32 %v638, %v639
      %v641 = vand.u32 %v640, 4294901760
      %642 = vmatpush1.msra.mxu0 %v641
      %643 = vmatprep.subr.mxu0 0.0
      %v644 = vand.u32 %v349, 4294901760
      %v645 = vsub.f32 %v349, %v644
      %v646 = vand.u32 %v645, 4294901760
      %v647 = vsub.f32 %v645, %v646
      %v648 = vand.u32 %v647, 4294901760
      %649 = vmatpush1.msra.mxu0 %v648
      %650 = vmatprep.subr.mxu0 0.0
      %v651 = vand.u32 %v350, 4294901760
      %v652 = vsub.f32 %v350, %v651
      %v653 = vand.u32 %v652, 4294901760
      %v654 = vsub.f32 %v652, %v653
      %v655 = vand.u32 %v654, 4294901760
      %656 = vmatpush1.msra.mxu0 %v655
      %657 = vmatprep.subr.mxu0 0.0
      %658 = vmatpush1.msra.mxu0 0.0
      %659 = vmatprep.subr.mxu0 0.0
      %660 = vmatpush1.msra.mxu0 0.0
      %661 = vmatprep.subr.mxu0 0.0
      %662 = vmatpush1.msra.mxu0 0.0
      %663 = vmatprep.subr.mxu0 0.0
      %664 = vmatpush1.msra.mxu0 0.0
      %665 = vmatprep.subr.mxu0 0.0
      %666 = vmatpush1.msra.mxu0 0.0
      %667 = vmatprep.subr.mxu0 0.0
      %668 = vmatpush1.msra.mxu0 0.0
      %669 = vmatprep.subr.mxu0 0.0
      %670 = vmatpush1.msra.mxu0 0.0
      %671 = vmatprep.subr.mxu0 0.0
      %672 = vmatpush1.msra.mxu0 0.0
      %673 = vmatprep.subr.mxu0 0.0
      %674 = vmatpush1.msra.mxu0 0.0
      %675 = vmatprep.subr.mxu0 0.0
      %676 = vmatpush1.msra.mxu0 0.0
      %677 = vmatprep.subr.mxu0 0.0
      %678 = vmatpush1.msra.mxu0 0.0
      %679 = vmatprep.subr.mxu0 0.0
      %680 = vmatpush1.msra.mxu0 0.0
      %681 = vmatprep.subr.mxu0 0.0
      %682 = vmatpush1.msra.mxu0 0.0
      %683 = vmatprep.subr.mxu0 0.0
      %684 = vmatpush1.msra.mxu0 0.0
      %685 = vmatprep.subr.mxu0 0.0
      %686 = vmatpush1.msra.mxu0 0.0
      %687 = vmatprep.subr.mxu0 0.0
      %688 = vmatpush1.msra.mxu0 0.0
      %689 = vmatprep.subr.mxu0 0.0
      %690 = vmatpush1.msra.mxu0 0.0
      %691 = vmatprep.subr.mxu0 0.0
      %692 = vmatpush1.msra.mxu0 0.0
      %693 = vmatprep.subr.mxu0 0.0
      %694 = vmatpush1.msra.mxu0 0.0
      %695 = vmatprep.subr.mxu0 0.0
      %696 = vmatpush1.msra.mxu0 0.0
      %697 = vmatprep.subr.mxu0 0.0
      %698 = vmatpush1.msra.mxu0 0.0
      %699 = vmatprep.subr.mxu0 0.0
      %700 = vmatpush1.msra.mxu0 0.0
      %701 = vmatprep.subr.mxu0 0.0
      %702 = vmatpush1.msra.mxu0 0.0
      %703 = vmatprep.subr.mxu0 0.0
      %704 = vmatpush1.msra.mxu0 0.0
      %705 = vmatprep.subr.mxu0 0.0
      %706 = vmatpush1.msra.mxu0 0.0
      %707 = vmatprep.subr.mxu0 0.0
      %708 = vmatpush1.msra.mxu0 0.0
      %709 = vmatprep.subr.mxu0 0.0
      %710 = vmatpush1.msra.mxu0 0.0
      %711 = vmatprep.subr.mxu0 0.0
      %712 = vmatpush1.msra.mxu0 0.0
      %713 = vmatprep.mubr.f32.mxu0 0.0
      %v714 = vand.u32 %v353, 4294901760
      %715 = vmatmul.mubr.f32.gmra.mrb[0].mxu0 %v714
      %v716 = vpop.f32.mrb[0].mxu0
      %v717 = vadd.f32 %v476, %v716
      %v718 = vpop.f32.mrb[0].mxu0
      %719 = vmatprep.mubr.f32.mxu0 0.0
      %v720 = vand.u32 %v356, 4294901760
      %721 = vmatmul.mubr.f32.gmra.mrb[0].mxu0 %v720
      %v722 = vpop.f32.mrb[0].mxu0
      %v723 = vadd.f32 %v486, %v722
      %v724 = vpop.f32.mrb[0].mxu0
      %725 = vmatprep.mubr.f32.mxu0 0.0
      %v726 = vand.u32 %v359, 4294901760
      %727 = vmatmul.mubr.f32.gmra.mrb[0].mxu0 %v726
      %v728 = vpop.f32.mrb[0].mxu0
      %v729 = vadd.f32 %v496, %v728
      %v730 = vpop.f32.mrb[0].mxu0
      %731 = vmatprep.mubr.f32.mxu0 0.0
      %v732 = vand.u32 %v362, 4294901760
      %733 = vmatmul.mubr.f32.gmra.mrb[0].mxu0 %v732
      %v734 = vpop.f32.mrb[0].mxu0
      %v735 = vadd.f32 %v506, %v734
      %v736 = vpop.f32.mrb[0].mxu0
      %737 = vmatprep.mubr.f32.mxu0 0.0
      %v738 = vand.u32 %v365, 4294901760
      %739 = vmatmul.mubr.f32.gmra.mrb[0].mxu0 %v738
      %v740 = vpop.f32.mrb[0].mxu0
      %v741 = vadd.f32 %v516, %v740
      %v742 = vpop.f32.mrb[0].mxu0
      %743 = vmatprep.mubr.f32.mxu0 0.0
      %v744 = vand.u32 %v368, 4294901760
      %745 = vmatmul.mubr.f32.gmra.mrb[0].mxu0 %v744
      %v746 = vpop.f32.mrb[0].mxu0
      %v747 = vadd.f32 %v526, %v746
      %v748 = vpop.f32.mrb[0].mxu0
      %749 = vmatprep.mubr.f32.mxu0 0.0
      %v750 = vand.u32 %v371, 4294901760
      %751 = vmatmul.mubr.f32.gmra.mrb[0].mxu0 %v750
      %v752 = vpop.f32.mrb[0].mxu0
      %v753 = vadd.f32 %v536, %v752
      %v754 = vpop.f32.mrb[0].mxu0
      %755 = vmatprep.mubr.f32.mxu0 0.0
      %v756 = vand.u32 %v374, 4294901760
      %757 = vmatmul.mubr.f32.gmra.mrb[0].mxu0 %v756
      %v758 = vpop.f32.mrb[0].mxu0
      %v759 = vadd.f32 %v546, %v758
      %v760 = vpop.f32.mrb[0].mxu0
      %761 = vmatprep.mubr.f32.mxu0 0.0
      %v762 = vand.u32 %v377, 4294901760
      %763 = vmatmul.mubr.f32.gmra.mrb[0].mxu0 %v762
      %v764 = vpop.f32.mrb[0].mxu0
      %v765 = vadd.f32 %v556, %v764
      %v766 = vpop.f32.mrb[0].mxu0
      %767 = vmatprep.mubr.f32.mxu0 0.0
      %v768 = vand.u32 %v380, 4294901760
      %769 = vmatmul.mubr.f32.gmra.mrb[0].mxu0 %v768
      %v770 = vpop.f32.mrb[0].mxu0
      %v771 = vadd.f32 %v566, %v770
      %v772 = vpop.f32.mrb[0].mxu0
      %773 = vmatprep.mubr.f32.mxu0 0.0
      %v774 = vand.u32 %v383, 4294901760
      %775 = vmatmul.mubr.f32.gmra.mrb[0].mxu0 %v774
      %v776 = vpop.f32.mrb[0].mxu0
      %v777 = vadd.f32 %v576, %v776
      %v778 = vpop.f32.mrb[0].mxu0
      %779 = vmatprep.mubr.f32.mxu0 0.0
      %v780 = vand.u32 %v386, 4294901760
      %781 = vmatmul.mubr.f32.gmra.mrb[0].mxu0 %v780
      %v782 = vpop.f32.mrb[0].mxu0
      %v783 = vadd.f32 %v586, %v782
      %v784 = vpop.f32.mrb[0].mxu0
      %785 = vmatprep.mubr.f32.mxu0 0.0
      %v786 = vand.u32 %v389, 4294901760
      %787 = vmatmul.mubr.f32.gmra.mrb[0].mxu0 %v786
      %v788 = vpop.f32.mrb[0].mxu0
      %v789 = vadd.f32 %v596, %v788
      %v790 = vpop.f32.mrb[0].mxu0
      %791 = vmatprep.mubr.f32.mxu0 0.0
      %v792 = vand.u32 %v392, 4294901760
      %793 = vmatmul.mubr.f32.gmra.mrb[0].mxu0 %v792
      %v794 = vpop.f32.mrb[0].mxu0
      %v795 = vadd.f32 %v606, %v794
      %v796 = vpop.f32.mrb[0].mxu0
      %797 = vmatprep.mubr.f32.mxu0 0.0
      %v798 = vand.u32 %v395, 4294901760
      %799 = vmatmul.mubr.f32.gmra.mrb[0].mxu0 %v798
      %v800 = vpop.f32.mrb[0].mxu0
      %v801 = vadd.f32 %v616, %v800
      %v802 = vpop.f32.mrb[0].mxu0
      %803 = vmatprep.mubr.f32.mxu0 0.0
      %v804 = vand.u32 %v398, 4294901760
      %805 = vmatmul.mubr.f32.gmra.mrb[0].mxu0 %v804
      %v806 = vpop.f32.mrb[0].mxu0
      %v807 = vadd.f32 %v626, %v806
      %v808 = vpop.f32.mrb[0].mxu0
      %809 = vdwg.mxu0
      %810 = vmatprep.subr.mxu0 0.0
      %v811 = vand.u32 %v347, 4294901760
      %v812 = vsub.f32 %v347, %v811
      %813 = vmatpush1.msra.mxu0 %v812
      %814 = vmatprep.subr.mxu0 0.0
      %v815 = vand.u32 %v348, 4294901760
      %v816 = vsub.f32 %v348, %v815
      %817 = vmatpush1.msra.mxu0 %v816
      %818 = vmatprep.subr.mxu0 0.0
      %v819 = vand.u32 %v349, 4294901760
      %v820 = vsub.f32 %v349, %v819
      %821 = vmatpush1.msra.mxu0 %v820
      %822 = vmatprep.subr.mxu0 0.0
      %v823 = vand.u32 %v350, 4294901760
      %v824 = vsub.f32 %v350, %v823
      %825 = vmatpush1.msra.mxu0 %v824
      %826 = vmatprep.subr.mxu0 0.0
      %827 = vmatpush1.msra.mxu0 0.0
      %828 = vmatprep.subr.mxu0 0.0
      %829 = vmatpush1.msra.mxu0 0.0
      %830 = vmatprep.subr.mxu0 0.0
      %831 = vmatpush1.msra.mxu0 0.0
      %832 = vmatprep.subr.mxu0 0.0
      %833 = vmatpush1.msra.mxu0 0.0
      %834 = vmatprep.subr.mxu0 0.0
      %835 = vmatpush1.msra.mxu0 0.0
      %836 = vmatprep.subr.mxu0 0.0
      %837 = vmatpush1.msra.mxu0 0.0
      %838 = vmatprep.subr.mxu0 0.0
      %839 = vmatpush1.msra.mxu0 0.0
      %840 = vmatprep.subr.mxu0 0.0
      %841 = vmatpush1.msra.mxu0 0.0
      %842 = vmatprep.subr.mxu0 0.0
      %843 = vmatpush1.msra.mxu0 0.0
      %844 = vmatprep.subr.mxu0 0.0
      %845 = vmatpush1.msra.mxu0 0.0
      %846 = vmatprep.subr.mxu0 0.0
      %847 = vmatpush1.msra.mxu0 0.0
      %848 = vmatprep.subr.mxu0 0.0
      %849 = vmatpush1.msra.mxu0 0.0
      %850 = vmatprep.subr.mxu0 0.0
      %851 = vmatpush1.msra.mxu0 0.0
      %852 = vmatprep.subr.mxu0 0.0
      %853 = vmatpush1.msra.mxu0 0.0
      %854 = vmatprep.subr.mxu0 0.0
      %855 = vmatpush1.msra.mxu0 0.0
      %856 = vmatprep.subr.mxu0 0.0
      %857 = vmatpush1.msra.mxu0 0.0
      %858 = vmatprep.subr.mxu0 0.0
      %859 = vmatpush1.msra.mxu0 0.0
      %860 = vmatprep.subr.mxu0 0.0
      %861 = vmatpush1.msra.mxu0 0.0
      %862 = vmatprep.subr.mxu0 0.0
      %863 = vmatpush1.msra.mxu0 0.0
      %864 = vmatprep.subr.mxu0 0.0
      %865 = vmatpush1.msra.mxu0 0.0
      %866 = vmatprep.subr.mxu0 0.0
      %867 = vmatpush1.msra.mxu0 0.0
      %868 = vmatprep.subr.mxu0 0.0
      %869 = vmatpush1.msra.mxu0 0.0
      %870 = vmatprep.subr.mxu0 0.0
      %871 = vmatpush1.msra.mxu0 0.0
      %872 = vmatprep.subr.mxu0 0.0
      %873 = vmatpush1.msra.mxu0 0.0
      %874 = vmatprep.subr.mxu0 0.0
      %875 = vmatpush1.msra.mxu0 0.0
      %876 = vmatprep.subr.mxu0 0.0
      %877 = vmatpush1.msra.mxu0 0.0
      %878 = vmatprep.subr.mxu0 0.0
      %879 = vmatpush1.msra.mxu0 0.0
      %880 = vmatprep.subr.mxu0 0.0
      %881 = vmatpush1.msra.mxu0 0.0
      %882 = vmatprep.mubr.f32.mxu0 0.0
      %v883 = vand.u32 %v353, 4294901760
      %v884 = vsub.f32 %v353, %v883
      %885 = vmatmul.mubr.f32.gmra.mrb[0].mxu0 %v884
      %v886 = vpop.f32.mrb[0].mxu0
      %v887 = vadd.f32 %v717, %v886
      %v888 = vpop.f32.mrb[0].mxu0
      %889 = vmatprep.mubr.f32.mxu0 0.0
      %v890 = vand.u32 %v356, 4294901760
      %v891 = vsub.f32 %v356, %v890
      %892 = vmatmul.mubr.f32.gmra.mrb[0].mxu0 %v891
      %v893 = vpop.f32.mrb[0].mxu0
      %v894 = vadd.f32 %v723, %v893
      %v895 = vpop.f32.mrb[0].mxu0
      %896 = vmatprep.mubr.f32.mxu0 0.0
      %v897 = vand.u32 %v359, 4294901760
      %v898 = vsub.f32 %v359, %v897
      %899 = vmatmul.mubr.f32.gmra.mrb[0].mxu0 %v898
      %v900 = vpop.f32.mrb[0].mxu0
      %v901 = vadd.f32 %v729, %v900
      %v902 = vpop.f32.mrb[0].mxu0
      %903 = vmatprep.mubr.f32.mxu0 0.0
      %v904 = vand.u32 %v362, 4294901760
      %v905 = vsub.f32 %v362, %v904
      %906 = vmatmul.mubr.f32.gmra.mrb[0].mxu0 %v905
      %v907 = vpop.f32.mrb[0].mxu0
      %v908 = vadd.f32 %v735, %v907
      %v909 = vpop.f32.mrb[0].mxu0
      %910 = vmatprep.mubr.f32.mxu0 0.0
      %v911 = vand.u32 %v365, 4294901760
      %v912 = vsub.f32 %v365, %v911
      %913 = vmatmul.mubr.f32.gmra.mrb[0].mxu0 %v912
      %v914 = vpop.f32.mrb[0].mxu0
      %v915 = vadd.f32 %v741, %v914
      %v916 = vpop.f32.mrb[0].mxu0
      %917 = vmatprep.mubr.f32.mxu0 0.0
      %v918 = vand.u32 %v368, 4294901760
      %v919 = vsub.f32 %v368, %v918
      %920 = vmatmul.mubr.f32.gmra.mrb[0].mxu0 %v919
      %v921 = vpop.f32.mrb[0].mxu0
      %v922 = vadd.f32 %v747, %v921
      %v923 = vpop.f32.mrb[0].mxu0
      %924 = vmatprep.mubr.f32.mxu0 0.0
      %v925 = vand.u32 %v371, 4294901760
      %v926 = vsub.f32 %v371, %v925
      %927 = vmatmul.mubr.f32.gmra.mrb[0].mxu0 %v926
      %v928 = vpop.f32.mrb[0].mxu0
      %v929 = vadd.f32 %v753, %v928
      %v930 = vpop.f32.mrb[0].mxu0
      %931 = vmatprep.mubr.f32.mxu0 0.0
      %v932 = vand.u32 %v374, 4294901760
      %v933 = vsub.f32 %v374, %v932
      %934 = vmatmul.mubr.f32.gmra.mrb[0].mxu0 %v933
      %v935 = vpop.f32.mrb[0].mxu0
      %v936 = vadd.f32 %v759, %v935
      %v937 = vpop.f32.mrb[0].mxu0
      %938 = vmatprep.mubr.f32.mxu0 0.0
      %v939 = vand.u32 %v377, 4294901760
      %v940 = vsub.f32 %v377, %v939
      %941 = vmatmul.mubr.f32.gmra.mrb[0].mxu0 %v940
      %v942 = vpop.f32.mrb[0].mxu0
      %v943 = vadd.f32 %v765, %v942
      %v944 = vpop.f32.mrb[0].mxu0
      %945 = vmatprep.mubr.f32.mxu0 0.0
      %v946 = vand.u32 %v380, 4294901760
      %v947 = vsub.f32 %v380, %v946
      %948 = vmatmul.mubr.f32.gmra.mrb[0].mxu0 %v947
      %v949 = vpop.f32.mrb[0].mxu0
      %v950 = vadd.f32 %v771, %v949
      %v951 = vpop.f32.mrb[0].mxu0
      %952 = vmatprep.mubr.f32.mxu0 0.0
      %v953 = vand.u32 %v383, 4294901760
      %v954 = vsub.f32 %v383, %v953
      %955 = vmatmul.mubr.f32.gmra.mrb[0].mxu0 %v954
      %v956 = vpop.f32.mrb[0].mxu0
      %v957 = vadd.f32 %v777, %v956
      %v958 = vpop.f32.mrb[0].mxu0
      %959 = vmatprep.mubr.f32.mxu0 0.0
      %v960 = vand.u32 %v386, 4294901760
      %v961 = vsub.f32 %v386, %v960
      %962 = vmatmul.mubr.f32.gmra.mrb[0].mxu0 %v961
      %v963 = vpop.f32.mrb[0].mxu0
      %v964 = vadd.f32 %v783, %v963
      %v965 = vpop.f32.mrb[0].mxu0
      %966 = vmatprep.mubr.f32.mxu0 0.0
      %v967 = vand.u32 %v389, 4294901760
      %v968 = vsub.f32 %v389, %v967
      %969 = vmatmul.mubr.f32.gmra.mrb[0].mxu0 %v968
      %v970 = vpop.f32.mrb[0].mxu0
      %v971 = vadd.f32 %v789, %v970
      %v972 = vpop.f32.mrb[0].mxu0
      %973 = vmatprep.mubr.f32.mxu0 0.0
      %v974 = vand.u32 %v392, 4294901760
      %v975 = vsub.f32 %v392, %v974
      %976 = vmatmul.mubr.f32.gmra.mrb[0].mxu0 %v975
      %v977 = vpop.f32.mrb[0].mxu0
      %v978 = vadd.f32 %v795, %v977
      %v979 = vpop.f32.mrb[0].mxu0
      %980 = vmatprep.mubr.f32.mxu0 0.0
      %v981 = vand.u32 %v395, 4294901760
      %v982 = vsub.f32 %v395, %v981
      %983 = vmatmul.mubr.f32.gmra.mrb[0].mxu0 %v982
      %v984 = vpop.f32.mrb[0].mxu0
      %v985 = vadd.f32 %v801, %v984
      %v986 = vpop.f32.mrb[0].mxu0
      %987 = vmatprep.mubr.f32.mxu0 0.0
      %v988 = vand.u32 %v398, 4294901760
      %v989 = vsub.f32 %v398, %v988
      %990 = vmatmul.mubr.f32.gmra.mrb[0].mxu0 %v989
      %v991 = vpop.f32.mrb[0].mxu0
      %v992 = vadd.f32 %v807, %v991
      %v993 = vpop.f32.mrb[0].mxu0
      %994 = vdwg.mxu0
      %995 = vmatprep.subr.mxu0 0.0
      %v996 = vand.u32 %v347, 4294901760
      %997 = vmatpush1.msra.mxu0 %v996
      %998 = vmatprep.subr.mxu0 0.0
      %v999 = vand.u32 %v348, 4294901760
      %1000 = vmatpush1.msra.mxu0 %v999
      %1001 = vmatprep.subr.mxu0 0.0
      %v1002 = vand.u32 %v349, 4294901760
      %1003 = vmatpush1.msra.mxu0 %v1002
      %1004 = vmatprep.subr.mxu0 0.0
      %v1005 = vand.u32 %v350, 4294901760
      %1006 = vmatpush1.msra.mxu0 %v1005
      %1007 = vmatprep.subr.mxu0 0.0
      %1008 = vmatpush1.msra.mxu0 0.0
      %1009 = vmatprep.subr.mxu0 0.0
      %1010 = vmatpush1.msra.mxu0 0.0
      %1011 = vmatprep.subr.mxu0 0.0
      %1012 = vmatpush1.msra.mxu0 0.0
      %1013 = vmatprep.subr.mxu0 0.0
      %1014 = vmatpush1.msra.mxu0 0.0
      %1015 = vmatprep.subr.mxu0 0.0
      %1016 = vmatpush1.msra.mxu0 0.0
      %1017 = vmatprep.subr.mxu0 0.0
      %1018 = vmatpush1.msra.mxu0 0.0
      %1019 = vmatprep.subr.mxu0 0.0
      %1020 = vmatpush1.msra.mxu0 0.0
      %1021 = vmatprep.subr.mxu0 0.0
      %1022 = vmatpush1.msra.mxu0 0.0
      %1023 = vmatprep.subr.mxu0 0.0
      %1024 = vmatpush1.msra.mxu0 0.0
      %1025 = vmatprep.subr.mxu0 0.0
      %1026 = vmatpush1.msra.mxu0 0.0
      %1027 = vmatprep.subr.mxu0 0.0
      %1028 = vmatpush1.msra.mxu0 0.0
      %1029 = vmatprep.subr.mxu0 0.0
      %1030 = vmatpush1.msra.mxu0 0.0
      %1031 = vmatprep.subr.mxu0 0.0
      %1032 = vmatpush1.msra.mxu0 0.0
      %1033 = vmatprep.subr.mxu0 0.0
      %1034 = vmatpush1.msra.mxu0 0.0
      %1035 = vmatprep.subr.mxu0 0.0
      %1036 = vmatpush1.msra.mxu0 0.0
      %1037 = vmatprep.subr.mxu0 0.0
      %1038 = vmatpush1.msra.mxu0 0.0
      %1039 = vmatprep.subr.mxu0 0.0
      %1040 = vmatpush1.msra.mxu0 0.0
      %1041 = vmatprep.subr.mxu0 0.0
      %1042 = vmatpush1.msra.mxu0 0.0
      %1043 = vmatprep.subr.mxu0 0.0
      %1044 = vmatpush1.msra.mxu0 0.0
      %1045 = vmatprep.subr.mxu0 0.0
      %1046 = vmatpush1.msra.mxu0 0.0
      %1047 = vmatprep.subr.mxu0 0.0
      %1048 = vmatpush1.msra.mxu0 0.0
      %1049 = vmatprep.subr.mxu0 0.0
      %1050 = vmatpush1.msra.mxu0 0.0
      %1051 = vmatprep.subr.mxu0 0.0
      %1052 = vmatpush1.msra.mxu0 0.0
      %1053 = vmatprep.subr.mxu0 0.0
      %1054 = vmatpush1.msra.mxu0 0.0
      %1055 = vmatprep.subr.mxu0 0.0
      %1056 = vmatpush1.msra.mxu0 0.0
      %1057 = vmatprep.subr.mxu0 0.0
      %1058 = vmatpush1.msra.mxu0 0.0
      %1059 = vmatprep.subr.mxu0 0.0
      %1060 = vmatpush1.msra.mxu0 0.0
      %1061 = vmatprep.subr.mxu0 0.0
      %1062 = vmatpush1.msra.mxu0 0.0
      %1063 = vmatprep.mubr.f32.mxu0 0.0
      %v1064 = vand.u32 %v353, 4294901760
      %v1065 = vsub.f32 %v353, %v1064
      %v1066 = vand.u32 %v1065, 4294901760
      %1067 = vmatmul.mubr.f32.gmra.mrb[0].mxu0 %v1066
      %v1068 = vpop.f32.mrb[0].mxu0
      %v1069 = vadd.f32 %v887, %v1068
      %v1070 = vpop.f32.mrb[0].mxu0
      %1071 = vmatprep.mubr.f32.mxu0 0.0
      %v1072 = vand.u32 %v356, 4294901760
      %v1073 = vsub.f32 %v356, %v1072
      %v1074 = vand.u32 %v1073, 4294901760
      %1075 = vmatmul.mubr.f32.gmra.mrb[0].mxu0 %v1074
      %v1076 = vpop.f32.mrb[0].mxu0
      %v1077 = vadd.f32 %v894, %v1076
      %v1078 = vpop.f32.mrb[0].mxu0
      %1079 = vmatprep.mubr.f32.mxu0 0.0
      %v1080 = vand.u32 %v359, 4294901760
      %v1081 = vsub.f32 %v359, %v1080
      %v1082 = vand.u32 %v1081, 4294901760
      %1083 = vmatmul.mubr.f32.gmra.mrb[0].mxu0 %v1082
      %v1084 = vpop.f32.mrb[0].mxu0
      %v1085 = vadd.f32 %v901, %v1084
      %v1086 = vpop.f32.mrb[0].mxu0
      %1087 = vmatprep.mubr.f32.mxu0 0.0
      %v1088 = vand.u32 %v362, 4294901760
      %v1089 = vsub.f32 %v362, %v1088
      %v1090 = vand.u32 %v1089, 4294901760
      %1091 = vmatmul.mubr.f32.gmra.mrb[0].mxu0 %v1090
      %v1092 = vpop.f32.mrb[0].mxu0
      %v1093 = vadd.f32 %v908, %v1092
      %v1094 = vpop.f32.mrb[0].mxu0
      %1095 = vmatprep.mubr.f32.mxu0 0.0
      %v1096 = vand.u32 %v365, 4294901760
      %v1097 = vsub.f32 %v365, %v1096
      %v1098 = vand.u32 %v1097, 4294901760
      %1099 = vmatmul.mubr.f32.gmra.mrb[0].mxu0 %v1098
      %v1100 = vpop.f32.mrb[0].mxu0
      %v1101 = vadd.f32 %v915, %v1100
      %v1102 = vpop.f32.mrb[0].mxu0
      %1103 = vmatprep.mubr.f32.mxu0 0.0
      %v1104 = vand.u32 %v368, 4294901760
      %v1105 = vsub.f32 %v368, %v1104
      %v1106 = vand.u32 %v1105, 4294901760
      %1107 = vmatmul.mubr.f32.gmra.mrb[0].mxu0 %v1106
      %v1108 = vpop.f32.mrb[0].mxu0
      %v1109 = vadd.f32 %v922, %v1108
      %v1110 = vpop.f32.mrb[0].mxu0
      %1111 = vmatprep.mubr.f32.mxu0 0.0
      %v1112 = vand.u32 %v371, 4294901760
      %v1113 = vsub.f32 %v371, %v1112
      %v1114 = vand.u32 %v1113, 4294901760
      %1115 = vmatmul.mubr.f32.gmra.mrb[0].mxu0 %v1114
      %v1116 = vpop.f32.mrb[0].mxu0
      %v1117 = vadd.f32 %v929, %v1116
      %v1118 = vpop.f32.mrb[0].mxu0
      %1119 = vmatprep.mubr.f32.mxu0 0.0
      %v1120 = vand.u32 %v374, 4294901760
      %v1121 = vsub.f32 %v374, %v1120
      %v1122 = vand.u32 %v1121, 4294901760
      %1123 = vmatmul.mubr.f32.gmra.mrb[0].mxu0 %v1122
      %v1124 = vpop.f32.mrb[0].mxu0
      %v1125 = vadd.f32 %v936, %v1124
      %v1126 = vpop.f32.mrb[0].mxu0
      %1127 = vmatprep.mubr.f32.mxu0 0.0
      %v1128 = vand.u32 %v377, 4294901760
      %v1129 = vsub.f32 %v377, %v1128
      %v1130 = vand.u32 %v1129, 4294901760
      %1131 = vmatmul.mubr.f32.gmra.mrb[0].mxu0 %v1130
      %v1132 = vpop.f32.mrb[0].mxu0
      %v1133 = vadd.f32 %v943, %v1132
      %v1134 = vpop.f32.mrb[0].mxu0
      %1135 = vmatprep.mubr.f32.mxu0 0.0
      %v1136 = vand.u32 %v380, 4294901760
      %v1137 = vsub.f32 %v380, %v1136
      %v1138 = vand.u32 %v1137, 4294901760
      %1139 = vmatmul.mubr.f32.gmra.mrb[0].mxu0 %v1138
      %v1140 = vpop.f32.mrb[0].mxu0
      %v1141 = vadd.f32 %v950, %v1140
      %v1142 = vpop.f32.mrb[0].mxu0
      %1143 = vmatprep.mubr.f32.mxu0 0.0
      %v1144 = vand.u32 %v383, 4294901760
      %v1145 = vsub.f32 %v383, %v1144
      %v1146 = vand.u32 %v1145, 4294901760
      %1147 = vmatmul.mubr.f32.gmra.mrb[0].mxu0 %v1146
      %v1148 = vpop.f32.mrb[0].mxu0
      %v1149 = vadd.f32 %v957, %v1148
      %v1150 = vpop.f32.mrb[0].mxu0
      %1151 = vmatprep.mubr.f32.mxu0 0.0
      %v1152 = vand.u32 %v386, 4294901760
      %v1153 = vsub.f32 %v386, %v1152
      %v1154 = vand.u32 %v1153, 4294901760
      %1155 = vmatmul.mubr.f32.gmra.mrb[0].mxu0 %v1154
      %v1156 = vpop.f32.mrb[0].mxu0
      %v1157 = vadd.f32 %v964, %v1156
      %v1158 = vpop.f32.mrb[0].mxu0
      %1159 = vmatprep.mubr.f32.mxu0 0.0
      %v1160 = vand.u32 %v389, 4294901760
      %v1161 = vsub.f32 %v389, %v1160
      %v1162 = vand.u32 %v1161, 4294901760
      %1163 = vmatmul.mubr.f32.gmra.mrb[0].mxu0 %v1162
      %v1164 = vpop.f32.mrb[0].mxu0
      %v1165 = vadd.f32 %v971, %v1164
      %v1166 = vpop.f32.mrb[0].mxu0
      %1167 = vmatprep.mubr.f32.mxu0 0.0
      %v1168 = vand.u32 %v392, 4294901760
      %v1169 = vsub.f32 %v392, %v1168
      %v1170 = vand.u32 %v1169, 4294901760
      %1171 = vmatmul.mubr.f32.gmra.mrb[0].mxu0 %v1170
      %v1172 = vpop.f32.mrb[0].mxu0
      %v1173 = vadd.f32 %v978, %v1172
      %v1174 = vpop.f32.mrb[0].mxu0
      %1175 = vmatprep.mubr.f32.mxu0 0.0
      %v1176 = vand.u32 %v395, 4294901760
      %v1177 = vsub.f32 %v395, %v1176
      %v1178 = vand.u32 %v1177, 4294901760
      %1179 = vmatmul.mubr.f32.gmra.mrb[0].mxu0 %v1178
      %v1180 = vpop.f32.mrb[0].mxu0
      %v1181 = vadd.f32 %v985, %v1180
      %v1182 = vpop.f32.mrb[0].mxu0
      %1183 = vmatprep.mubr.f32.mxu0 0.0
      %v1184 = vand.u32 %v398, 4294901760
      %v1185 = vsub.f32 %v398, %v1184
      %v1186 = vand.u32 %v1185, 4294901760
      %1187 = vmatmul.mubr.f32.gmra.mrb[0].mxu0 %v1186
      %v1188 = vpop.f32.mrb[0].mxu0
      %v1189 = vadd.f32 %v992, %v1188
      %v1190 = vpop.f32.mrb[0].mxu0
      %1191 = vdwg.mxu0
      %1192 = vmatprep.subr.mxu0 0.0
      %v1193 = vand.u32 %v347, 4294901760
      %v1194 = vsub.f32 %v347, %v1193
      %v1195 = vand.u32 %v1194, 4294901760
      %1196 = vmatpush1.msra.mxu0 %v1195
      %1197 = vmatprep.subr.mxu0 0.0
      %v1198 = vand.u32 %v348, 4294901760
      %v1199 = vsub.f32 %v348, %v1198
      %v1200 = vand.u32 %v1199, 4294901760
      %1201 = vmatpush1.msra.mxu0 %v1200
      %1202 = vmatprep.subr.mxu0 0.0
      %v1203 = vand.u32 %v349, 4294901760
      %v1204 = vsub.f32 %v349, %v1203
      %v1205 = vand.u32 %v1204, 4294901760
      %1206 = vmatpush1.msra.mxu0 %v1205
      %1207 = vmatprep.subr.mxu0 0.0
      %v1208 = vand.u32 %v350, 4294901760
      %v1209 = vsub.f32 %v350, %v1208
      %v1210 = vand.u32 %v1209, 4294901760
      %1211 = vmatpush1.msra.mxu0 %v1210
      %1212 = vmatprep.subr.mxu0 0.0
      %1213 = vmatpush1.msra.mxu0 0.0
      %1214 = vmatprep.subr.mxu0 0.0
      %1215 = vmatpush1.msra.mxu0 0.0
      %1216 = vmatprep.subr.mxu0 0.0
      %1217 = vmatpush1.msra.mxu0 0.0
      %1218 = vmatprep.subr.mxu0 0.0
      %1219 = vmatpush1.msra.mxu0 0.0
      %1220 = vmatprep.subr.mxu0 0.0
      %1221 = vmatpush1.msra.mxu0 0.0
      %1222 = vmatprep.subr.mxu0 0.0
      %1223 = vmatpush1.msra.mxu0 0.0
      %1224 = vmatprep.subr.mxu0 0.0
      %1225 = vmatpush1.msra.mxu0 0.0
      %1226 = vmatprep.subr.mxu0 0.0
      %1227 = vmatpush1.msra.mxu0 0.0
      %1228 = vmatprep.subr.mxu0 0.0
      %1229 = vmatpush1.msra.mxu0 0.0
      %1230 = vmatprep.subr.mxu0 0.0
      %1231 = vmatpush1.msra.mxu0 0.0
      %1232 = vmatprep.subr.mxu0 0.0
      %1233 = vmatpush1.msra.mxu0 0.0
      %1234 = vmatprep.subr.mxu0 0.0
      %1235 = vmatpush1.msra.mxu0 0.0
      %1236 = vmatprep.subr.mxu0 0.0
      %1237 = vmatpush1.msra.mxu0 0.0
      %1238 = vmatprep.subr.mxu0 0.0
      %1239 = vmatpush1.msra.mxu0 0.0
      %1240 = vmatprep.subr.mxu0 0.0
      %1241 = vmatpush1.msra.mxu0 0.0
      %1242 = vmatprep.subr.mxu0 0.0
      %1243 = vmatpush1.msra.mxu0 0.0
      %1244 = vmatprep.subr.mxu0 0.0
      %1245 = vmatpush1.msra.mxu0 0.0
      %1246 = vmatprep.subr.mxu0 0.0
      %1247 = vmatpush1.msra.mxu0 0.0
      %1248 = vmatprep.subr.mxu0 0.0
      %1249 = vmatpush1.msra.mxu0 0.0
      %1250 = vmatprep.subr.mxu0 0.0
      %1251 = vmatpush1.msra.mxu0 0.0
      %1252 = vmatprep.subr.mxu0 0.0
      %1253 = vmatpush1.msra.mxu0 0.0
      %1254 = vmatprep.subr.mxu0 0.0
      %1255 = vmatpush1.msra.mxu0 0.0
      %1256 = vmatprep.subr.mxu0 0.0
      %1257 = vmatpush1.msra.mxu0 0.0
      %1258 = vmatprep.subr.mxu0 0.0
      %1259 = vmatpush1.msra.mxu0 0.0
      %1260 = vmatprep.subr.mxu0 0.0
      %1261 = vmatpush1.msra.mxu0 0.0
      %1262 = vmatprep.subr.mxu0 0.0
      %1263 = vmatpush1.msra.mxu0 0.0
      %1264 = vmatprep.subr.mxu0 0.0
      %1265 = vmatpush1.msra.mxu0 0.0
      %1266 = vmatprep.subr.mxu0 0.0
      %1267 = vmatpush1.msra.mxu0 0.0
      %1268 = vmatprep.mubr.f32.mxu0 0.0
      %v1269 = vand.u32 %v353, 4294901760
      %1270 = vmatmul.mubr.f32.gmra.mrb[0].mxu0 %v1269
      %v1271 = vpop.f32.mrb[0].mxu0
      %v1272 = vadd.f32 %v1069, %v1271
      %v1273 = vpop.f32.mrb[0].mxu0
      %1274 = vmatprep.mubr.f32.mxu0 0.0
      %v1275 = vand.u32 %v356, 4294901760
      %1276 = vmatmul.mubr.f32.gmra.mrb[0].mxu0 %v1275
      %v1277 = vpop.f32.mrb[0].mxu0
      %v1278 = vadd.f32 %v1077, %v1277
      %v1279 = vpop.f32.mrb[0].mxu0
      %1280 = vmatprep.mubr.f32.mxu0 0.0
      %v1281 = vand.u32 %v359, 4294901760
      %1282 = vmatmul.mubr.f32.gmra.mrb[0].mxu0 %v1281
      %v1283 = vpop.f32.mrb[0].mxu0
      %v1284 = vadd.f32 %v1085, %v1283
      %v1285 = vpop.f32.mrb[0].mxu0
      %1286 = vmatprep.mubr.f32.mxu0 0.0
      %v1287 = vand.u32 %v362, 4294901760
      %1288 = vmatmul.mubr.f32.gmra.mrb[0].mxu0 %v1287
      %v1289 = vpop.f32.mrb[0].mxu0
      %v1290 = vadd.f32 %v1093, %v1289
      %v1291 = vpop.f32.mrb[0].mxu0
      %1292 = vmatprep.mubr.f32.mxu0 0.0
      %v1293 = vand.u32 %v365, 4294901760
      %1294 = vmatmul.mubr.f32.gmra.mrb[0].mxu0 %v1293
      %v1295 = vpop.f32.mrb[0].mxu0
      %v1296 = vadd.f32 %v1101, %v1295
      %v1297 = vpop.f32.mrb[0].mxu0
      %1298 = vmatprep.mubr.f32.mxu0 0.0
      %v1299 = vand.u32 %v368, 4294901760
      %1300 = vmatmul.mubr.f32.gmra.mrb[0].mxu0 %v1299
      %v1301 = vpop.f32.mrb[0].mxu0
      %v1302 = vadd.f32 %v1109, %v1301
      %v1303 = vpop.f32.mrb[0].mxu0
      %1304 = vmatprep.mubr.f32.mxu0 0.0
      %v1305 = vand.u32 %v371, 4294901760
      %1306 = vmatmul.mubr.f32.gmra.mrb[0].mxu0 %v1305
      %v1307 = vpop.f32.mrb[0].mxu0
      %v1308 = vadd.f32 %v1117, %v1307
      %v1309 = vpop.f32.mrb[0].mxu0
      %1310 = vmatprep.mubr.f32.mxu0 0.0
      %v1311 = vand.u32 %v374, 4294901760
      %1312 = vmatmul.mubr.f32.gmra.mrb[0].mxu0 %v1311
      %v1313 = vpop.f32.mrb[0].mxu0
      %v1314 = vadd.f32 %v1125, %v1313
      %v1315 = vpop.f32.mrb[0].mxu0
      %1316 = vmatprep.mubr.f32.mxu0 0.0
      %v1317 = vand.u32 %v377, 4294901760
      %1318 = vmatmul.mubr.f32.gmra.mrb[0].mxu0 %v1317
      %v1319 = vpop.f32.mrb[0].mxu0
      %v1320 = vadd.f32 %v1133, %v1319
      %v1321 = vpop.f32.mrb[0].mxu0
      %1322 = vmatprep.mubr.f32.mxu0 0.0
      %v1323 = vand.u32 %v380, 4294901760
      %1324 = vmatmul.mubr.f32.gmra.mrb[0].mxu0 %v1323
      %v1325 = vpop.f32.mrb[0].mxu0
      %v1326 = vadd.f32 %v1141, %v1325
      %v1327 = vpop.f32.mrb[0].mxu0
      %1328 = vmatprep.mubr.f32.mxu0 0.0
      %v1329 = vand.u32 %v383, 4294901760
      %1330 = vmatmul.mubr.f32.gmra.mrb[0].mxu0 %v1329
      %v1331 = vpop.f32.mrb[0].mxu0
      %v1332 = vadd.f32 %v1149, %v1331
      %v1333 = vpop.f32.mrb[0].mxu0
      %1334 = vmatprep.mubr.f32.mxu0 0.0
      %v1335 = vand.u32 %v386, 4294901760
      %1336 = vmatmul.mubr.f32.gmra.mrb[0].mxu0 %v1335
      %v1337 = vpop.f32.mrb[0].mxu0
      %v1338 = vadd.f32 %v1157, %v1337
      %v1339 = vpop.f32.mrb[0].mxu0
      %1340 = vmatprep.mubr.f32.mxu0 0.0
      %v1341 = vand.u32 %v389, 4294901760
      %1342 = vmatmul.mubr.f32.gmra.mrb[0].mxu0 %v1341
      %v1343 = vpop.f32.mrb[0].mxu0
      %v1344 = vadd.f32 %v1165, %v1343
      %v1345 = vpop.f32.mrb[0].mxu0
      %1346 = vmatprep.mubr.f32.mxu0 0.0
      %v1347 = vand.u32 %v392, 4294901760
      %1348 = vmatmul.mubr.f32.gmra.mrb[0].mxu0 %v1347
      %v1349 = vpop.f32.mrb[0].mxu0
      %v1350 = vadd.f32 %v1173, %v1349
      %v1351 = vpop.f32.mrb[0].mxu0
      %1352 = vmatprep.mubr.f32.mxu0 0.0
      %v1353 = vand.u32 %v395, 4294901760
      %1354 = vmatmul.mubr.f32.gmra.mrb[0].mxu0 %v1353
      %v1355 = vpop.f32.mrb[0].mxu0
      %v1356 = vadd.f32 %v1181, %v1355
      %v1357 = vpop.f32.mrb[0].mxu0
      %1358 = vmatprep.mubr.f32.mxu0 0.0
      %v1359 = vand.u32 %v398, 4294901760
      %1360 = vmatmul.mubr.f32.gmra.mrb[0].mxu0 %v1359
      %v1361 = vpop.f32.mrb[0].mxu0
      %v1362 = vadd.f32 %v1189, %v1361
      %v1363 = vpop.f32.mrb[0].mxu0
      %1364 = vdwg.mxu0
      %1365 = vmatprep.subr.mxu0 0.0
      %v1366 = vand.u32 %v347, 4294901760
      %1367 = vmatpush1.msra.mxu0 %v1366
      %1368 = vmatprep.subr.mxu0 0.0
      %v1369 = vand.u32 %v348, 4294901760
      %1370 = vmatpush1.msra.mxu0 %v1369
      %1371 = vmatprep.subr.mxu0 0.0
      %v1372 = vand.u32 %v349, 4294901760
      %1373 = vmatpush1.msra.mxu0 %v1372
      %1374 = vmatprep.subr.mxu0 0.0
      %v1375 = vand.u32 %v350, 4294901760
      %1376 = vmatpush1.msra.mxu0 %v1375
      %1377 = vmatprep.subr.mxu0 0.0
      %1378 = vmatpush1.msra.mxu0 0.0
      %1379 = vmatprep.subr.mxu0 0.0
      %1380 = vmatpush1.msra.mxu0 0.0
      %1381 = vmatprep.subr.mxu0 0.0
      %1382 = vmatpush1.msra.mxu0 0.0
      %1383 = vmatprep.subr.mxu0 0.0
      %1384 = vmatpush1.msra.mxu0 0.0
      %1385 = vmatprep.subr.mxu0 0.0
      %1386 = vmatpush1.msra.mxu0 0.0
      %1387 = vmatprep.subr.mxu0 0.0
      %1388 = vmatpush1.msra.mxu0 0.0
      %1389 = vmatprep.subr.mxu0 0.0
      %1390 = vmatpush1.msra.mxu0 0.0
      %1391 = vmatprep.subr.mxu0 0.0
      %1392 = vmatpush1.msra.mxu0 0.0
      %1393 = vmatprep.subr.mxu0 0.0
      %1394 = vmatpush1.msra.mxu0 0.0
      %1395 = vmatprep.subr.mxu0 0.0
      %1396 = vmatpush1.msra.mxu0 0.0
      %1397 = vmatprep.subr.mxu0 0.0
      %1398 = vmatpush1.msra.mxu0 0.0
      %1399 = vmatprep.subr.mxu0 0.0
      %1400 = vmatpush1.msra.mxu0 0.0
      %1401 = vmatprep.subr.mxu0 0.0
      %1402 = vmatpush1.msra.mxu0 0.0
      %1403 = vmatprep.subr.mxu0 0.0
      %1404 = vmatpush1.msra.mxu0 0.0
      %1405 = vmatprep.subr.mxu0 0.0
      %1406 = vmatpush1.msra.mxu0 0.0
      %1407 = vmatprep.subr.mxu0 0.0
      %1408 = vmatpush1.msra.mxu0 0.0
      %1409 = vmatprep.subr.mxu0 0.0
      %1410 = vmatpush1.msra.mxu0 0.0
      %1411 = vmatprep.subr.mxu0 0.0
      %1412 = vmatpush1.msra.mxu0 0.0
      %1413 = vmatprep.subr.mxu0 0.0
      %1414 = vmatpush1.msra.mxu0 0.0
      %1415 = vmatprep.subr.mxu0 0.0
      %1416 = vmatpush1.msra.mxu0 0.0
      %1417 = vmatprep.subr.mxu0 0.0
      %1418 = vmatpush1.msra.mxu0 0.0
      %1419 = vmatprep.subr.mxu0 0.0
      %1420 = vmatpush1.msra.mxu0 0.0
      %1421 = vmatprep.subr.mxu0 0.0
      %1422 = vmatpush1.msra.mxu0 0.0
      %1423 = vmatprep.subr.mxu0 0.0
      %1424 = vmatpush1.msra.mxu0 0.0
      %1425 = vmatprep.subr.mxu0 0.0
      %1426 = vmatpush1.msra.mxu0 0.0
      %1427 = vmatprep.subr.mxu0 0.0
      %1428 = vmatpush1.msra.mxu0 0.0
      %1429 = vmatprep.subr.mxu0 0.0
      %1430 = vmatpush1.msra.mxu0 0.0
      %1431 = vmatprep.subr.mxu0 0.0
      %1432 = vmatpush1.msra.mxu0 0.0
      %1433 = vmatprep.mubr.f32.mxu0 0.0
      %v1434 = vand.u32 %v353, 4294901760
      %1435 = vmatmul.mubr.f32.gmra.mrb[0].mxu0 %v1434
      %v1436 = vpop.f32.mrb[0].mxu0
      %v1437 = vadd.f32 %v1272, %v1436
      %v1438 = vpop.f32.mrb[0].mxu0
      %1439 = vmatprep.mubr.f32.mxu0 0.0
      %v1440 = vand.u32 %v356, 4294901760
      %1441 = vmatmul.mubr.f32.gmra.mrb[0].mxu0 %v1440
      %v1442 = vpop.f32.mrb[0].mxu0
      %v1443 = vadd.f32 %v1278, %v1442
      %v1444 = vpop.f32.mrb[0].mxu0
      %1445 = vmatprep.mubr.f32.mxu0 0.0
      %v1446 = vand.u32 %v359, 4294901760
      %1447 = vmatmul.mubr.f32.gmra.mrb[0].mxu0 %v1446
      %v1448 = vpop.f32.mrb[0].mxu0
      %v1449 = vadd.f32 %v1284, %v1448
      %v1450 = vpop.f32.mrb[0].mxu0
      %1451 = vmatprep.mubr.f32.mxu0 0.0
      %v1452 = vand.u32 %v362, 4294901760
      %1453 = vmatmul.mubr.f32.gmra.mrb[0].mxu0 %v1452
      %v1454 = vpop.f32.mrb[0].mxu0
      %v1455 = vadd.f32 %v1290, %v1454
      %v1456 = vpop.f32.mrb[0].mxu0
      %1457 = vmatprep.mubr.f32.mxu0 0.0
      %v1458 = vand.u32 %v365, 4294901760
      %1459 = vmatmul.mubr.f32.gmra.mrb[0].mxu0 %v1458
      %v1460 = vpop.f32.mrb[0].mxu0
      %v1461 = vadd.f32 %v1296, %v1460
      %v1462 = vpop.f32.mrb[0].mxu0
      %1463 = vmatprep.mubr.f32.mxu0 0.0
      %v1464 = vand.u32 %v368, 4294901760
      %1465 = vmatmul.mubr.f32.gmra.mrb[0].mxu0 %v1464
      %v1466 = vpop.f32.mrb[0].mxu0
      %v1467 = vadd.f32 %v1302, %v1466
      %v1468 = vpop.f32.mrb[0].mxu0
      %1469 = vmatprep.mubr.f32.mxu0 0.0
      %v1470 = vand.u32 %v371, 4294901760
      %1471 = vmatmul.mubr.f32.gmra.mrb[0].mxu0 %v1470
      %v1472 = vpop.f32.mrb[0].mxu0
      %v1473 = vadd.f32 %v1308, %v1472
      %v1474 = vpop.f32.mrb[0].mxu0
      %1475 = vmatprep.mubr.f32.mxu0 0.0
      %v1476 = vand.u32 %v374, 4294901760
      %1477 = vmatmul.mubr.f32.gmra.mrb[0].mxu0 %v1476
      %v1478 = vpop.f32.mrb[0].mxu0
      %v1479 = vadd.f32 %v1314, %v1478
      %v1480 = vpop.f32.mrb[0].mxu0
      %1481 = vmatprep.mubr.f32.mxu0 0.0
      %v1482 = vand.u32 %v377, 4294901760
      %1483 = vmatmul.mubr.f32.gmra.mrb[0].mxu0 %v1482
      %v1484 = vpop.f32.mrb[0].mxu0
      %v1485 = vadd.f32 %v1320, %v1484
      %v1486 = vpop.f32.mrb[0].mxu0
      %1487 = vmatprep.mubr.f32.mxu0 0.0
      %v1488 = vand.u32 %v380, 4294901760
      %1489 = vmatmul.mubr.f32.gmra.mrb[0].mxu0 %v1488
      %v1490 = vpop.f32.mrb[0].mxu0
      %v1491 = vadd.f32 %v1326, %v1490
      %v1492 = vpop.f32.mrb[0].mxu0
      %1493 = vmatprep.mubr.f32.mxu0 0.0
      %v1494 = vand.u32 %v383, 4294901760
      %1495 = vmatmul.mubr.f32.gmra.mrb[0].mxu0 %v1494
      %v1496 = vpop.f32.mrb[0].mxu0
      %v1497 = vadd.f32 %v1332, %v1496
      %v1498 = vpop.f32.mrb[0].mxu0
      %1499 = vmatprep.mubr.f32.mxu0 0.0
      %v1500 = vand.u32 %v386, 4294901760
      %1501 = vmatmul.mubr.f32.gmra.mrb[0].mxu0 %v1500
      %v1502 = vpop.f32.mrb[0].mxu0
      %v1503 = vadd.f32 %v1338, %v1502
      %v1504 = vpop.f32.mrb[0].mxu0
      %1505 = vmatprep.mubr.f32.mxu0 0.0
      %v1506 = vand.u32 %v389, 4294901760
      %1507 = vmatmul.mubr.f32.gmra.mrb[0].mxu0 %v1506
      %v1508 = vpop.f32.mrb[0].mxu0
      %v1509 = vadd.f32 %v1344, %v1508
      %v1510 = vpop.f32.mrb[0].mxu0
      %1511 = vmatprep.mubr.f32.mxu0 0.0
      %v1512 = vand.u32 %v392, 4294901760
      %1513 = vmatmul.mubr.f32.gmra.mrb[0].mxu0 %v1512
      %v1514 = vpop.f32.mrb[0].mxu0
      %v1515 = vadd.f32 %v1350, %v1514
      %v1516 = vpop.f32.mrb[0].mxu0
      %1517 = vmatprep.mubr.f32.mxu0 0.0
      %v1518 = vand.u32 %v395, 4294901760
      %1519 = vmatmul.mubr.f32.gmra.mrb[0].mxu0 %v1518
      %v1520 = vpop.f32.mrb[0].mxu0
      %v1521 = vadd.f32 %v1356, %v1520
      %v1522 = vpop.f32.mrb[0].mxu0
      %1523 = vmatprep.mubr.f32.mxu0 0.0
      %v1524 = vand.u32 %v398, 4294901760
      %1525 = vmatmul.mubr.f32.gmra.mrb[0].mxu0 %v1524
      %v1526 = vpop.f32.mrb[0].mxu0
      %v1527 = vadd.f32 %v1362, %v1526
      %v1528 = vpop.f32.mrb[0].mxu0
      %1529 = vdwg.mxu0
      %v1530 = vld [vmem:[%s4] sm:$0xf]
      %v1531 = vld [vmem:[%s1] sm:$0xff]
      %v1532 = vld [vmem:[%s1 + $0x8] sm:$0xff]
      %v1533 = vld [vmem:[%s1 + $0x10] sm:$0xff]
      %v1534 = vld [vmem:[%s1 + $0x18] sm:$0xff]
      %v1536 = vsel %vm351, %v1530, 0
      %1538 = vmatprep.subr.mxu0 0.0
      %v1539 = vand.u32 %v1531, 4294901760
      %1540 = vmatpush1.msra.mxu0 %v1539
      %1541 = vmatprep.subr.mxu0 0.0
      %v1542 = vand.u32 %v1532, 4294901760
      %1543 = vmatpush1.msra.mxu0 %v1542
      %1544 = vmatprep.subr.mxu0 0.0
      %v1545 = vand.u32 %v1533, 4294901760
      %1546 = vmatpush1.msra.mxu0 %v1545
      %1547 = vmatprep.subr.mxu0 0.0
      %v1548 = vand.u32 %v1534, 4294901760
      %1549 = vmatpush1.msra.mxu0 %v1548
      %1550 = vmatprep.subr.mxu0 0.0
      %1551 = vmatpush1.msra.mxu0 0.0
      %1552 = vmatprep.subr.mxu0 0.0
      %1553 = vmatpush1.msra.mxu0 0.0
      %1554 = vmatprep.subr.mxu0 0.0
      %1555 = vmatpush1.msra.mxu0 0.0
      %1556 = vmatprep.subr.mxu0 0.0
      %1557 = vmatpush1.msra.mxu0 0.0
      %1558 = vmatprep.subr.mxu0 0.0
      %1559 = vmatpush1.msra.mxu0 0.0
      %1560 = vmatprep.subr.mxu0 0.0
      %1561 = vmatpush1.msra.mxu0 0.0
      %1562 = vmatprep.subr.mxu0 0.0
      %1563 = vmatpush1.msra.mxu0 0.0
      %1564 = vmatprep.subr.mxu0 0.0
      %1565 = vmatpush1.msra.mxu0 0.0
      %1566 = vmatprep.subr.mxu0 0.0
      %1567 = vmatpush1.msra.mxu0 0.0
      %1568 = vmatprep.subr.mxu0 0.0
      %1569 = vmatpush1.msra.mxu0 0.0
      %1570 = vmatprep.subr.mxu0 0.0
      %1571 = vmatpush1.msra.mxu0 0.0
      %1572 = vmatprep.subr.mxu0 0.0
      %1573 = vmatpush1.msra.mxu0 0.0
      %1574 = vmatprep.subr.mxu0 0.0
      %1575 = vmatpush1.msra.mxu0 0.0
      %1576 = vmatprep.subr.mxu0 0.0
      %1577 = vmatpush1.msra.mxu0 0.0
      %1578 = vmatprep.subr.mxu0 0.0
      %1579 = vmatpush1.msra.mxu0 0.0
      %1580 = vmatprep.subr.mxu0 0.0
      %1581 = vmatpush1.msra.mxu0 0.0
      %1582 = vmatprep.subr.mxu0 0.0
      %1583 = vmatpush1.msra.mxu0 0.0
      %1584 = vmatprep.subr.mxu0 0.0
      %1585 = vmatpush1.msra.mxu0 0.0
      %1586 = vmatprep.subr.mxu0 0.0
      %1587 = vmatpush1.msra.mxu0 0.0
      %1588 = vmatprep.subr.mxu0 0.0
      %1589 = vmatpush1.msra.mxu0 0.0
      %1590 = vmatprep.subr.mxu0 0.0
      %1591 = vmatpush1.msra.mxu0 0.0
      %1592 = vmatprep.subr.mxu0 0.0
      %1593 = vmatpush1.msra.mxu0 0.0
      %1594 = vmatprep.subr.mxu0 0.0
      %1595 = vmatpush1.msra.mxu0 0.0
      %1596 = vmatprep.subr.mxu0 0.0
      %1597 = vmatpush1.msra.mxu0 0.0
      %1598 = vmatprep.subr.mxu0 0.0
      %1599 = vmatpush1.msra.mxu0 0.0
      %1600 = vmatprep.subr.mxu0 0.0
      %1601 = vmatpush1.msra.mxu0 0.0
      %1602 = vmatprep.subr.mxu0 0.0
      %1603 = vmatpush1.msra.mxu0 0.0
      %1604 = vmatprep.subr.mxu0 0.0
      %1605 = vmatpush1.msra.mxu0 0.0
      %1606 = vmatprep.mubr.f32.mxu0 0.0
      %v1607 = vand.u32 %v1536, 4294901760
      %v1608 = vsub.f32 %v1536, %v1607
      %v1609 = vand.u32 %v1608, 4294901760
      %v1610 = vsub.f32 %v1608, %v1609
      %v1611 = vand.u32 %v1610, 4294901760
      %1612 = vmatmul.mubr.f32.gmra.mrb[0].mxu0 %v1611
      %v1613 = vpop.f32.mrb[0].mxu0
      %v1614 = vadd.f32 0.0, %v1613
      %v1615 = vpop.f32.mrb[0].mxu0
      %1616 = vdwg.mxu0
      %1617 = vmatprep.subr.mxu0 0.0
      %v1618 = vand.u32 %v1531, 4294901760
      %v1619 = vsub.f32 %v1531, %v1618
      %v1620 = vand.u32 %v1619, 4294901760
      %v1621 = vsub.f32 %v1619, %v1620
      %v1622 = vand.u32 %v1621, 4294901760
      %1623 = vmatpush1.msra.mxu0 %v1622
      %1624 = vmatprep.subr.mxu0 0.0
      %v1625 = vand.u32 %v1532, 4294901760
      %v1626 = vsub.f32 %v1532, %v1625
      %v1627 = vand.u32 %v1626, 4294901760
      %v1628 = vsub.f32 %v1626, %v1627
      %v1629 = vand.u32 %v1628, 4294901760
      %1630 = vmatpush1.msra.mxu0 %v1629
      %1631 = vmatprep.subr.mxu0 0.0
      %v1632 = vand.u32 %v1533, 4294901760
      %v1633 = vsub.f32 %v1533, %v1632
      %v1634 = vand.u32 %v1633, 4294901760
      %v1635 = vsub.f32 %v1633, %v1634
      %v1636 = vand.u32 %v1635, 4294901760
      %1637 = vmatpush1.msra.mxu0 %v1636
      %1638 = vmatprep.subr.mxu0 0.0
      %v1639 = vand.u32 %v1534, 4294901760
      %v1640 = vsub.f32 %v1534, %v1639
      %v1641 = vand.u32 %v1640, 4294901760
      %v1642 = vsub.f32 %v1640, %v1641
      %v1643 = vand.u32 %v1642, 4294901760
      %1644 = vmatpush1.msra.mxu0 %v1643
      %1645 = vmatprep.subr.mxu0 0.0
      %1646 = vmatpush1.msra.mxu0 0.0
      %1647 = vmatprep.subr.mxu0 0.0
      %1648 = vmatpush1.msra.mxu0 0.0
      %1649 = vmatprep.subr.mxu0 0.0
      %1650 = vmatpush1.msra.mxu0 0.0
      %1651 = vmatprep.subr.mxu0 0.0
      %1652 = vmatpush1.msra.mxu0 0.0
      %1653 = vmatprep.subr.mxu0 0.0
      %1654 = vmatpush1.msra.mxu0 0.0
      %1655 = vmatprep.subr.mxu0 0.0
      %1656 = vmatpush1.msra.mxu0 0.0
      %1657 = vmatprep.subr.mxu0 0.0
      %1658 = vmatpush1.msra.mxu0 0.0
      %1659 = vmatprep.subr.mxu0 0.0
      %1660 = vmatpush1.msra.mxu0 0.0
      %1661 = vmatprep.subr.mxu0 0.0
      %1662 = vmatpush1.msra.mxu0 0.0
      %1663 = vmatprep.subr.mxu0 0.0
      %1664 = vmatpush1.msra.mxu0 0.0
      %1665 = vmatprep.subr.mxu0 0.0
      %1666 = vmatpush1.msra.mxu0 0.0
      %1667 = vmatprep.subr.mxu0 0.0
      %1668 = vmatpush1.msra.mxu0 0.0
      %1669 = vmatprep.subr.mxu0 0.0
      %1670 = vmatpush1.msra.mxu0 0.0
      %1671 = vmatprep.subr.mxu0 0.0
      %1672 = vmatpush1.msra.mxu0 0.0
      %1673 = vmatprep.subr.mxu0 0.0
      %1674 = vmatpush1.msra.mxu0 0.0
      %1675 = vmatprep.subr.mxu0 0.0
      %1676 = vmatpush1.msra.mxu0 0.0
      %1677 = vmatprep.subr.mxu0 0.0
      %1678 = vmatpush1.msra.mxu0 0.0
      %1679 = vmatprep.subr.mxu0 0.0
      %1680 = vmatpush1.msra.mxu0 0.0
      %1681 = vmatprep.subr.mxu0 0.0
      %1682 = vmatpush1.msra.mxu0 0.0
      %1683 = vmatprep.subr.mxu0 0.0
      %1684 = vmatpush1.msra.mxu0 0.0
      %1685 = vmatprep.subr.mxu0 0.0
      %1686 = vmatpush1.msra.mxu0 0.0
      %1687 = vmatprep.subr.mxu0 0.0
      %1688 = vmatpush1.msra.mxu0 0.0
      %1689 = vmatprep.subr.mxu0 0.0
      %1690 = vmatpush1.msra.mxu0 0.0
      %1691 = vmatprep.subr.mxu0 0.0
      %1692 = vmatpush1.msra.mxu0 0.0
      %1693 = vmatprep.subr.mxu0 0.0
      %1694 = vmatpush1.msra.mxu0 0.0
      %1695 = vmatprep.subr.mxu0 0.0
      %1696 = vmatpush1.msra.mxu0 0.0
      %1697 = vmatprep.subr.mxu0 0.0
      %1698 = vmatpush1.msra.mxu0 0.0
      %1699 = vmatprep.subr.mxu0 0.0
      %1700 = vmatpush1.msra.mxu0 0.0
      %1701 = vmatprep.mubr.f32.mxu0 0.0
      %v1702 = vand.u32 %v1536, 4294901760
      %1703 = vmatmul.mubr.f32.gmra.mrb[0].mxu0 %v1702
      %v1704 = vpop.f32.mrb[0].mxu0
      %v1705 = vadd.f32 %v1614, %v1704
      %v1706 = vpop.f32.mrb[0].mxu0
      %1707 = vdwg.mxu0
      %1708 = vmatprep.subr.mxu0 0.0
      %v1709 = vand.u32 %v1531, 4294901760
      %v1710 = vsub.f32 %v1531, %v1709
      %1711 = vmatpush1.msra.mxu0 %v1710
      %1712 = vmatprep.subr.mxu0 0.0
      %v1713 = vand.u32 %v1532, 4294901760
      %v1714 = vsub.f32 %v1532, %v1713
      %1715 = vmatpush1.msra.mxu0 %v1714
      %1716 = vmatprep.subr.mxu0 0.0
      %v1717 = vand.u32 %v1533, 4294901760
      %v1718 = vsub.f32 %v1533, %v1717
      %1719 = vmatpush1.msra.mxu0 %v1718
      %1720 = vmatprep.subr.mxu0 0.0
      %v1721 = vand.u32 %v1534, 4294901760
      %v1722 = vsub.f32 %v1534, %v1721
      %1723 = vmatpush1.msra.mxu0 %v1722
      %1724 = vmatprep.subr.mxu0 0.0
      %1725 = vmatpush1.msra.mxu0 0.0
      %1726 = vmatprep.subr.mxu0 0.0
      %1727 = vmatpush1.msra.mxu0 0.0
      %1728 = vmatprep.subr.mxu0 0.0
      %1729 = vmatpush1.msra.mxu0 0.0
      %1730 = vmatprep.subr.mxu0 0.0
      %1731 = vmatpush1.msra.mxu0 0.0
      %1732 = vmatprep.subr.mxu0 0.0
      %1733 = vmatpush1.msra.mxu0 0.0
      %1734 = vmatprep.subr.mxu0 0.0
      %1735 = vmatpush1.msra.mxu0 0.0
      %1736 = vmatprep.subr.mxu0 0.0
      %1737 = vmatpush1.msra.mxu0 0.0
      %1738 = vmatprep.subr.mxu0 0.0
      %1739 = vmatpush1.msra.mxu0 0.0
      %1740 = vmatprep.subr.mxu0 0.0
      %1741 = vmatpush1.msra.mxu0 0.0
      %1742 = vmatprep.subr.mxu0 0.0
      %1743 = vmatpush1.msra.mxu0 0.0
      %1744 = vmatprep.subr.mxu0 0.0
      %1745 = vmatpush1.msra.mxu0 0.0
      %1746 = vmatprep.subr.mxu0 0.0
      %1747 = vmatpush1.msra.mxu0 0.0
      %1748 = vmatprep.subr.mxu0 0.0
      %1749 = vmatpush1.msra.mxu0 0.0
      %1750 = vmatprep.subr.mxu0 0.0
      %1751 = vmatpush1.msra.mxu0 0.0
      %1752 = vmatprep.subr.mxu0 0.0
      %1753 = vmatpush1.msra.mxu0 0.0
      %1754 = vmatprep.subr.mxu0 0.0
      %1755 = vmatpush1.msra.mxu0 0.0
      %1756 = vmatprep.subr.mxu0 0.0
      %1757 = vmatpush1.msra.mxu0 0.0
      %1758 = vmatprep.subr.mxu0 0.0
      %1759 = vmatpush1.msra.mxu0 0.0
      %1760 = vmatprep.subr.mxu0 0.0
      %1761 = vmatpush1.msra.mxu0 0.0
      %1762 = vmatprep.subr.mxu0 0.0
      %1763 = vmatpush1.msra.mxu0 0.0
      %1764 = vmatprep.subr.mxu0 0.0
      %1765 = vmatpush1.msra.mxu0 0.0
      %1766 = vmatprep.subr.mxu0 0.0
      %1767 = vmatpush1.msra.mxu0 0.0
      %1768 = vmatprep.subr.mxu0 0.0
      %1769 = vmatpush1.msra.mxu0 0.0
      %1770 = vmatprep.subr.mxu0 0.0
      %1771 = vmatpush1.msra.mxu0 0.0
      %1772 = vmatprep.subr.mxu0 0.0
      %1773 = vmatpush1.msra.mxu0 0.0
      %1774 = vmatprep.subr.mxu0 0.0
      %1775 = vmatpush1.msra.mxu0 0.0
      %1776 = vmatprep.subr.mxu0 0.0
      %1777 = vmatpush1.msra.mxu0 0.0
      %1778 = vmatprep.subr.mxu0 0.0
      %1779 = vmatpush1.msra.mxu0 0.0
      %1780 = vmatprep.mubr.f32.mxu0 0.0
      %v1781 = vand.u32 %v1536, 4294901760
      %v1782 = vsub.f32 %v1536, %v1781
      %1783 = vmatmul.mubr.f32.gmra.mrb[0].mxu0 %v1782
      %v1784 = vpop.f32.mrb[0].mxu0
      %v1785 = vadd.f32 %v1705, %v1784
      %v1786 = vpop.f32.mrb[0].mxu0
      %1787 = vdwg.mxu0
      %1788 = vmatprep.subr.mxu0 0.0
      %v1789 = vand.u32 %v1531, 4294901760
      %1790 = vmatpush1.msra.mxu0 %v1789
      %1791 = vmatprep.subr.mxu0 0.0
      %v1792 = vand.u32 %v1532, 4294901760
      %1793 = vmatpush1.msra.mxu0 %v1792
      %1794 = vmatprep.subr.mxu0 0.0
      %v1795 = vand.u32 %v1533, 4294901760
      %1796 = vmatpush1.msra.mxu0 %v1795
      %1797 = vmatprep.subr.mxu0 0.0
      %v1798 = vand.u32 %v1534, 4294901760
      %1799 = vmatpush1.msra.mxu0 %v1798
      %1800 = vmatprep.subr.mxu0 0.0
      %1801 = vmatpush1.msra.mxu0 0.0
      %1802 = vmatprep.subr.mxu0 0.0
      %1803 = vmatpush1.msra.mxu0 0.0
      %1804 = vmatprep.subr.mxu0 0.0
      %1805 = vmatpush1.msra.mxu0 0.0
      %1806 = vmatprep.subr.mxu0 0.0
      %1807 = vmatpush1.msra.mxu0 0.0
      %1808 = vmatprep.subr.mxu0 0.0
      %1809 = vmatpush1.msra.mxu0 0.0
      %1810 = vmatprep.subr.mxu0 0.0
      %1811 = vmatpush1.msra.mxu0 0.0
      %1812 = vmatprep.subr.mxu0 0.0
      %1813 = vmatpush1.msra.mxu0 0.0
      %1814 = vmatprep.subr.mxu0 0.0
      %1815 = vmatpush1.msra.mxu0 0.0
      %1816 = vmatprep.subr.mxu0 0.0
      %1817 = vmatpush1.msra.mxu0 0.0
      %1818 = vmatprep.subr.mxu0 0.0
      %1819 = vmatpush1.msra.mxu0 0.0
      %1820 = vmatprep.subr.mxu0 0.0
      %1821 = vmatpush1.msra.mxu0 0.0
      %1822 = vmatprep.subr.mxu0 0.0
      %1823 = vmatpush1.msra.mxu0 0.0
      %1824 = vmatprep.subr.mxu0 0.0
      %1825 = vmatpush1.msra.mxu0 0.0
      %1826 = vmatprep.subr.mxu0 0.0
      %1827 = vmatpush1.msra.mxu0 0.0
      %1828 = vmatprep.subr.mxu0 0.0
      %1829 = vmatpush1.msra.mxu0 0.0
      %1830 = vmatprep.subr.mxu0 0.0
      %1831 = vmatpush1.msra.mxu0 0.0
      %1832 = vmatprep.subr.mxu0 0.0
      %1833 = vmatpush1.msra.mxu0 0.0
      %1834 = vmatprep.subr.mxu0 0.0
      %1835 = vmatpush1.msra.mxu0 0.0
      %1836 = vmatprep.subr.mxu0 0.0
      %1837 = vmatpush1.msra.mxu0 0.0
      %1838 = vmatprep.subr.mxu0 0.0
      %1839 = vmatpush1.msra.mxu0 0.0
      %1840 = vmatprep.subr.mxu0 0.0
      %1841 = vmatpush1.msra.mxu0 0.0
      %1842 = vmatprep.subr.mxu0 0.0
      %1843 = vmatpush1.msra.mxu0 0.0
      %1844 = vmatprep.subr.mxu0 0.0
      %1845 = vmatpush1.msra.mxu0 0.0
      %1846 = vmatprep.subr.mxu0 0.0
      %1847 = vmatpush1.msra.mxu0 0.0
      %1848 = vmatprep.subr.mxu0 0.0
      %1849 = vmatpush1.msra.mxu0 0.0
      %1850 = vmatprep.subr.mxu0 0.0
      %1851 = vmatpush1.msra.mxu0 0.0
      %1852 = vmatprep.subr.mxu0 0.0
      %1853 = vmatpush1.msra.mxu0 0.0
      %1854 = vmatprep.subr.mxu0 0.0
      %1855 = vmatpush1.msra.mxu0 0.0
      %1856 = vmatprep.mubr.f32.mxu0 0.0
      %v1857 = vand.u32 %v1536, 4294901760
      %v1858 = vsub.f32 %v1536, %v1857
      %v1859 = vand.u32 %v1858, 4294901760
      %1860 = vmatmul.mubr.f32.gmra.mrb[0].mxu0 %v1859
      %v1861 = vpop.f32.mrb[0].mxu0
      %v1862 = vadd.f32 %v1785, %v1861
      %v1863 = vpop.f32.mrb[0].mxu0
      %1864 = vdwg.mxu0
      %1865 = vmatprep.subr.mxu0 0.0
      %v1866 = vand.u32 %v1531, 4294901760
      %v1867 = vsub.f32 %v1531, %v1866
      %v1868 = vand.u32 %v1867, 4294901760
      %1869 = vmatpush1.msra.mxu0 %v1868
      %1870 = vmatprep.subr.mxu0 0.0
      %v1871 = vand.u32 %v1532, 4294901760
      %v1872 = vsub.f32 %v1532, %v1871
      %v1873 = vand.u32 %v1872, 4294901760
      %1874 = vmatpush1.msra.mxu0 %v1873
      %1875 = vmatprep.subr.mxu0 0.0
      %v1876 = vand.u32 %v1533, 4294901760
      %v1877 = vsub.f32 %v1533, %v1876
      %v1878 = vand.u32 %v1877, 4294901760
      %1879 = vmatpush1.msra.mxu0 %v1878
      %1880 = vmatprep.subr.mxu0 0.0
      %v1881 = vand.u32 %v1534, 4294901760
      %v1882 = vsub.f32 %v1534, %v1881
      %v1883 = vand.u32 %v1882, 4294901760
      %1884 = vmatpush1.msra.mxu0 %v1883
      %1885 = vmatprep.subr.mxu0 0.0
      %1886 = vmatpush1.msra.mxu0 0.0
      %1887 = vmatprep.subr.mxu0 0.0
      %1888 = vmatpush1.msra.mxu0 0.0
      %1889 = vmatprep.subr.mxu0 0.0
      %1890 = vmatpush1.msra.mxu0 0.0
      %1891 = vmatprep.subr.mxu0 0.0
      %1892 = vmatpush1.msra.mxu0 0.0
      %1893 = vmatprep.subr.mxu0 0.0
      %1894 = vmatpush1.msra.mxu0 0.0
      %1895 = vmatprep.subr.mxu0 0.0
      %1896 = vmatpush1.msra.mxu0 0.0
      %1897 = vmatprep.subr.mxu0 0.0
      %1898 = vmatpush1.msra.mxu0 0.0
      %1899 = vmatprep.subr.mxu0 0.0
      %1900 = vmatpush1.msra.mxu0 0.0
      %1901 = vmatprep.subr.mxu0 0.0
      %1902 = vmatpush1.msra.mxu0 0.0
      %1903 = vmatprep.subr.mxu0 0.0
      %1904 = vmatpush1.msra.mxu0 0.0
      %1905 = vmatprep.subr.mxu0 0.0
      %1906 = vmatpush1.msra.mxu0 0.0
      %1907 = vmatprep.subr.mxu0 0.0
      %1908 = vmatpush1.msra.mxu0 0.0
      %1909 = vmatprep.subr.mxu0 0.0
      %1910 = vmatpush1.msra.mxu0 0.0
      %1911 = vmatprep.subr.mxu0 0.0
      %1912 = vmatpush1.msra.mxu0 0.0
      %1913 = vmatprep.subr.mxu0 0.0
      %1914 = vmatpush1.msra.mxu0 0.0
      %1915 = vmatprep.subr.mxu0 0.0
      %1916 = vmatpush1.msra.mxu0 0.0
      %1917 = vmatprep.subr.mxu0 0.0
      %1918 = vmatpush1.msra.mxu0 0.0
      %1919 = vmatprep.subr.mxu0 0.0
      %1920 = vmatpush1.msra.mxu0 0.0
      %1921 = vmatprep.subr.mxu0 0.0
      %1922 = vmatpush1.msra.mxu0 0.0
      %1923 = vmatprep.subr.mxu0 0.0
      %1924 = vmatpush1.msra.mxu0 0.0
      %1925 = vmatprep.subr.mxu0 0.0
      %1926 = vmatpush1.msra.mxu0 0.0
      %1927 = vmatprep.subr.mxu0 0.0
      %1928 = vmatpush1.msra.mxu0 0.0
      %1929 = vmatprep.subr.mxu0 0.0
      %1930 = vmatpush1.msra.mxu0 0.0
      %1931 = vmatprep.subr.mxu0 0.0
      %1932 = vmatpush1.msra.mxu0 0.0
      %1933 = vmatprep.subr.mxu0 0.0
      %1934 = vmatpush1.msra.mxu0 0.0
      %1935 = vmatprep.subr.mxu0 0.0
      %1936 = vmatpush1.msra.mxu0 0.0
      %1937 = vmatprep.subr.mxu0 0.0
      %1938 = vmatpush1.msra.mxu0 0.0
      %1939 = vmatprep.subr.mxu0 0.0
      %1940 = vmatpush1.msra.mxu0 0.0
      %1941 = vmatprep.mubr.f32.mxu0 0.0
      %v1942 = vand.u32 %v1536, 4294901760
      %1943 = vmatmul.mubr.f32.gmra.mrb[0].mxu0 %v1942
      %v1944 = vpop.f32.mrb[0].mxu0
      %v1945 = vadd.f32 %v1862, %v1944
      %v1946 = vpop.f32.mrb[0].mxu0
      %1947 = vdwg.mxu0
      %1948 = vmatprep.subr.mxu0 0.0
      %v1949 = vand.u32 %v1531, 4294901760
      %1950 = vmatpush1.msra.mxu0 %v1949
      %1951 = vmatprep.subr.mxu0 0.0
      %v1952 = vand.u32 %v1532, 4294901760
      %1953 = vmatpush1.msra.mxu0 %v1952
      %1954 = vmatprep.subr.mxu0 0.0
      %v1955 = vand.u32 %v1533, 4294901760
      %1956 = vmatpush1.msra.mxu0 %v1955
      %1957 = vmatprep.subr.mxu0 0.0
      %v1958 = vand.u32 %v1534, 4294901760
      %1959 = vmatpush1.msra.mxu0 %v1958
      %1960 = vmatprep.subr.mxu0 0.0
      %1961 = vmatpush1.msra.mxu0 0.0
      %1962 = vmatprep.subr.mxu0 0.0
      %1963 = vmatpush1.msra.mxu0 0.0
      %1964 = vmatprep.subr.mxu0 0.0
      %1965 = vmatpush1.msra.mxu0 0.0
      %1966 = vmatprep.subr.mxu0 0.0
      %1967 = vmatpush1.msra.mxu0 0.0
      %1968 = vmatprep.subr.mxu0 0.0
      %1969 = vmatpush1.msra.mxu0 0.0
      %1970 = vmatprep.subr.mxu0 0.0
      %1971 = vmatpush1.msra.mxu0 0.0
      %1972 = vmatprep.subr.mxu0 0.0
      %1973 = vmatpush1.msra.mxu0 0.0
      %1974 = vmatprep.subr.mxu0 0.0
      %1975 = vmatpush1.msra.mxu0 0.0
      %1976 = vmatprep.subr.mxu0 0.0
      %1977 = vmatpush1.msra.mxu0 0.0
      %1978 = vmatprep.subr.mxu0 0.0
      %1979 = vmatpush1.msra.mxu0 0.0
      %1980 = vmatprep.subr.mxu0 0.0
      %1981 = vmatpush1.msra.mxu0 0.0
      %1982 = vmatprep.subr.mxu0 0.0
      %1983 = vmatpush1.msra.mxu0 0.0
      %1984 = vmatprep.subr.mxu0 0.0
      %1985 = vmatpush1.msra.mxu0 0.0
      %1986 = vmatprep.subr.mxu0 0.0
      %1987 = vmatpush1.msra.mxu0 0.0
      %1988 = vmatprep.subr.mxu0 0.0
      %1989 = vmatpush1.msra.mxu0 0.0
      %1990 = vmatprep.subr.mxu0 0.0
      %1991 = vmatpush1.msra.mxu0 0.0
      %1992 = vmatprep.subr.mxu0 0.0
      %1993 = vmatpush1.msra.mxu0 0.0
      %1994 = vmatprep.subr.mxu0 0.0
      %1995 = vmatpush1.msra.mxu0 0.0
      %1996 = vmatprep.subr.mxu0 0.0
      %1997 = vmatpush1.msra.mxu0 0.0
      %1998 = vmatprep.subr.mxu0 0.0
      %1999 = vmatpush1.msra.mxu0 0.0
      %2000 = vmatprep.subr.mxu0 0.0
      %2001 = vmatpush1.msra.mxu0 0.0
      %2002 = vmatprep.subr.mxu0 0.0
      %2003 = vmatpush1.msra.mxu0 0.0
      %2004 = vmatprep.subr.mxu0 0.0
      %2005 = vmatpush1.msra.mxu0 0.0
      %2006 = vmatprep.subr.mxu0 0.0
      %2007 = vmatpush1.msra.mxu0 0.0
      %2008 = vmatprep.subr.mxu0 0.0
      %2009 = vmatpush1.msra.mxu0 0.0
      %2010 = vmatprep.subr.mxu0 0.0
      %2011 = vmatpush1.msra.mxu0 0.0
      %2012 = vmatprep.subr.mxu0 0.0
      %2013 = vmatpush1.msra.mxu0 0.0
      %2014 = vmatprep.subr.mxu0 0.0
      %2015 = vmatpush1.msra.mxu0 0.0
      %2016 = vmatprep.mubr.f32.mxu0 0.0
      %v2017 = vand.u32 %v1536, 4294901760
      %2018 = vmatmul.mubr.f32.gmra.mrb[0].mxu0 %v2017
      %v2019 = vpop.f32.mrb[0].mxu0
      %v2020 = vadd.f32 %v1945, %v2019
      %v2021 = vpop.f32.mrb[0].mxu0
      %2022 = vdwg.mxu0
      %v2023 = vld [vmem:[%s317] sm:$0xff]
      %v2024 = vld [vmem:[%s317 + $0x8] sm:$0xff]
      %v2025 = vld [vmem:[%s317 + $0x10] sm:$0xff]
      %v2026 = vld [vmem:[%s317 + $0x18] sm:$0xff]
      %v2027 = vld [vmem:[%s317 + $0x20] sm:$0xff]
      %v2028 = vld [vmem:[%s317 + $0x28] sm:$0xff]
      %v2029 = vld [vmem:[%s317 + $0x30] sm:$0xff]
      %v2030 = vld [vmem:[%s317 + $0x38] sm:$0xff]
      %v2031 = vld [vmem:[%s5] sm:$0xff]
      %v2032 = vld [vmem:[%s5 + $0x8] sm:$0xff]
      %v2033 = vld [vmem:[%s5 + $0x10] sm:$0xff]
      %v2034 = vld [vmem:[%s5 + $0x18] sm:$0xff]
      %v2036 = vsel %vm351, %v2023, 0
      %v2039 = vsel %vm351, %v2024, 0
      %v2042 = vsel %vm351, %v2025, 0
      %v2045 = vsel %vm351, %v2026, 0
      %v2048 = vsel %vm351, %v2027, 0
      %v2051 = vsel %vm351, %v2028, 0
      %v2054 = vsel %vm351, %v2029, 0
      %v2057 = vsel %vm351, %v2030, 0
      %2059 = vmatprep.subr.mxu0 0.0
      %v2060 = vand.u32 %v2031, 4294901760
      %2061 = vmatpush1.msra.mxu0 %v2060
      %2062 = vmatprep.subr.mxu0 0.0
      %v2063 = vand.u32 %v2032, 4294901760
      %2064 = vmatpush1.msra.mxu0 %v2063
      %2065 = vmatprep.subr.mxu0 0.0
      %v2066 = vand.u32 %v2033, 4294901760
      %2067 = vmatpush1.msra.mxu0 %v2066
      %2068 = vmatprep.subr.mxu0 0.0
      %v2069 = vand.u32 %v2034, 4294901760
      %2070 = vmatpush1.msra.mxu0 %v2069
      %2071 = vmatprep.subr.mxu0 0.0
      %2072 = vmatpush1.msra.mxu0 0.0
      %2073 = vmatprep.subr.mxu0 0.0
      %2074 = vmatpush1.msra.mxu0 0.0
      %2075 = vmatprep.subr.mxu0 0.0
      %2076 = vmatpush1.msra.mxu0 0.0
      %2077 = vmatprep.subr.mxu0 0.0
      %2078 = vmatpush1.msra.mxu0 0.0
      %2079 = vmatprep.subr.mxu0 0.0
      %2080 = vmatpush1.msra.mxu0 0.0
      %2081 = vmatprep.subr.mxu0 0.0
      %2082 = vmatpush1.msra.mxu0 0.0
      %2083 = vmatprep.subr.mxu0 0.0
      %2084 = vmatpush1.msra.mxu0 0.0
      %2085 = vmatprep.subr.mxu0 0.0
      %2086 = vmatpush1.msra.mxu0 0.0
      %2087 = vmatprep.subr.mxu0 0.0
      %2088 = vmatpush1.msra.mxu0 0.0
      %2089 = vmatprep.subr.mxu0 0.0
      %2090 = vmatpush1.msra.mxu0 0.0
      %2091 = vmatprep.subr.mxu0 0.0
      %2092 = vmatpush1.msra.mxu0 0.0
      %2093 = vmatprep.subr.mxu0 0.0
      %2094 = vmatpush1.msra.mxu0 0.0
      %2095 = vmatprep.subr.mxu0 0.0
      %2096 = vmatpush1.msra.mxu0 0.0
      %2097 = vmatprep.subr.mxu0 0.0
      %2098 = vmatpush1.msra.mxu0 0.0
      %2099 = vmatprep.subr.mxu0 0.0
      %2100 = vmatpush1.msra.mxu0 0.0
      %2101 = vmatprep.subr.mxu0 0.0
      %2102 = vmatpush1.msra.mxu0 0.0
      %2103 = vmatprep.subr.mxu0 0.0
      %2104 = vmatpush1.msra.mxu0 0.0
      %2105 = vmatprep.subr.mxu0 0.0
      %2106 = vmatpush1.msra.mxu0 0.0
      %2107 = vmatprep.subr.mxu0 0.0
      %2108 = vmatpush1.msra.mxu0 0.0
      %2109 = vmatprep.subr.mxu0 0.0
      %2110 = vmatpush1.msra.mxu0 0.0
      %2111 = vmatprep.subr.mxu0 0.0
      %2112 = vmatpush1.msra.mxu0 0.0
      %2113 = vmatprep.subr.mxu0 0.0
      %2114 = vmatpush1.msra.mxu0 0.0
      %2115 = vmatprep.subr.mxu0 0.0
      %2116 = vmatpush1.msra.mxu0 0.0
      %2117 = vmatprep.subr.mxu0 0.0
      %2118 = vmatpush1.msra.mxu0 0.0
      %2119 = vmatprep.subr.mxu0 0.0
      %2120 = vmatpush1.msra.mxu0 0.0
      %2121 = vmatprep.subr.mxu0 0.0
      %2122 = vmatpush1.msra.mxu0 0.0
      %2123 = vmatprep.subr.mxu0 0.0
      %2124 = vmatpush1.msra.mxu0 0.0
      %2125 = vmatprep.subr.mxu0 0.0
      %2126 = vmatpush1.msra.mxu0 0.0
      %2127 = vmatprep.mubr.f32.mxu0 0.0
      %v2128 = vand.u32 %v2036, 4294901760
      %v2129 = vsub.f32 %v2036, %v2128
      %v2130 = vand.u32 %v2129, 4294901760
      %v2131 = vsub.f32 %v2129, %v2130
      %v2132 = vand.u32 %v2131, 4294901760
      %2133 = vmatmul.mubr.f32.gmra.mrb[0].mxu0 %v2132
      %v2134 = vpop.f32.mrb[0].mxu0
      %v2135 = vadd.f32 0.0, %v2134
      %v2136 = vpop.f32.mrb[0].mxu0
      %2137 = vmatprep.mubr.f32.mxu0 0.0
      %v2138 = vand.u32 %v2039, 4294901760
      %v2139 = vsub.f32 %v2039, %v2138
      %v2140 = vand.u32 %v2139, 4294901760
      %v2141 = vsub.f32 %v2139, %v2140
      %v2142 = vand.u32 %v2141, 4294901760
      %2143 = vmatmul.mubr.f32.gmra.mrb[0].mxu0 %v2142
      %v2144 = vpop.f32.mrb[0].mxu0
      %v2145 = vadd.f32 0.0, %v2144
      %v2146 = vpop.f32.mrb[0].mxu0
      %2147 = vmatprep.mubr.f32.mxu0 0.0
      %v2148 = vand.u32 %v2042, 4294901760
      %v2149 = vsub.f32 %v2042, %v2148
      %v2150 = vand.u32 %v2149, 4294901760
      %v2151 = vsub.f32 %v2149, %v2150
      %v2152 = vand.u32 %v2151, 4294901760
      %2153 = vmatmul.mubr.f32.gmra.mrb[0].mxu0 %v2152
      %v2154 = vpop.f32.mrb[0].mxu0
      %v2155 = vadd.f32 0.0, %v2154
      %v2156 = vpop.f32.mrb[0].mxu0
      %2157 = vmatprep.mubr.f32.mxu0 0.0
      %v2158 = vand.u32 %v2045, 4294901760
      %v2159 = vsub.f32 %v2045, %v2158
      %v2160 = vand.u32 %v2159, 4294901760
      %v2161 = vsub.f32 %v2159, %v2160
      %v2162 = vand.u32 %v2161, 4294901760
      %2163 = vmatmul.mubr.f32.gmra.mrb[0].mxu0 %v2162
      %v2164 = vpop.f32.mrb[0].mxu0
      %v2165 = vadd.f32 0.0, %v2164
      %v2166 = vpop.f32.mrb[0].mxu0
      %2167 = vmatprep.mubr.f32.mxu0 0.0
      %v2168 = vand.u32 %v2048, 4294901760
      %v2169 = vsub.f32 %v2048, %v2168
      %v2170 = vand.u32 %v2169, 4294901760
      %v2171 = vsub.f32 %v2169, %v2170
      %v2172 = vand.u32 %v2171, 4294901760
      %2173 = vmatmul.mubr.f32.gmra.mrb[0].mxu0 %v2172
      %v2174 = vpop.f32.mrb[0].mxu0
      %v2175 = vadd.f32 0.0, %v2174
      %v2176 = vpop.f32.mrb[0].mxu0
      %2177 = vmatprep.mubr.f32.mxu0 0.0
      %v2178 = vand.u32 %v2051, 4294901760
      %v2179 = vsub.f32 %v2051, %v2178
      %v2180 = vand.u32 %v2179, 4294901760
      %v2181 = vsub.f32 %v2179, %v2180
      %v2182 = vand.u32 %v2181, 4294901760
      %2183 = vmatmul.mubr.f32.gmra.mrb[0].mxu0 %v2182
      %v2184 = vpop.f32.mrb[0].mxu0
      %v2185 = vadd.f32 0.0, %v2184
      %v2186 = vpop.f32.mrb[0].mxu0
      %2187 = vmatprep.mubr.f32.mxu0 0.0
      %v2188 = vand.u32 %v2054, 4294901760
      %v2189 = vsub.f32 %v2054, %v2188
      %v2190 = vand.u32 %v2189, 4294901760
      %v2191 = vsub.f32 %v2189, %v2190
      %v2192 = vand.u32 %v2191, 4294901760
      %2193 = vmatmul.mubr.f32.gmra.mrb[0].mxu0 %v2192
      %v2194 = vpop.f32.mrb[0].mxu0
      %v2195 = vadd.f32 0.0, %v2194
      %v2196 = vpop.f32.mrb[0].mxu0
      %2197 = vmatprep.mubr.f32.mxu0 0.0
      %v2198 = vand.u32 %v2057, 4294901760
      %v2199 = vsub.f32 %v2057, %v2198
      %v2200 = vand.u32 %v2199, 4294901760
      %v2201 = vsub.f32 %v2199, %v2200
      %v2202 = vand.u32 %v2201, 4294901760
      %2203 = vmatmul.mubr.f32.gmra.mrb[0].mxu0 %v2202
      %v2204 = vpop.f32.mrb[0].mxu0
      %v2205 = vadd.f32 0.0, %v2204
      %v2206 = vpop.f32.mrb[0].mxu0
      %2207 = vdwg.mxu0
      %2208 = vmatprep.subr.mxu0 0.0
      %v2209 = vand.u32 %v2031, 4294901760
      %v2210 = vsub.f32 %v2031, %v2209
      %v2211 = vand.u32 %v2210, 4294901760
      %v2212 = vsub.f32 %v2210, %v2211
      %v2213 = vand.u32 %v2212, 4294901760
      %2214 = vmatpush1.msra.mxu0 %v2213
      %2215 = vmatprep.subr.mxu0 0.0
      %v2216 = vand.u32 %v2032, 4294901760
      %v2217 = vsub.f32 %v2032, %v2216
      %v2218 = vand.u32 %v2217, 4294901760
      %v2219 = vsub.f32 %v2217, %v2218
      %v2220 = vand.u32 %v2219, 4294901760
      %2221 = vmatpush1.msra.mxu0 %v2220
      %2222 = vmatprep.subr.mxu0 0.0
      %v2223 = vand.u32 %v2033, 4294901760
      %v2224 = vsub.f32 %v2033, %v2223
      %v2225 = vand.u32 %v2224, 4294901760
      %v2226 = vsub.f32 %v2224, %v2225
      %v2227 = vand.u32 %v2226, 4294901760
      %2228 = vmatpush1.msra.mxu0 %v2227
      %2229 = vmatprep.subr.mxu0 0.0
      %v2230 = vand.u32 %v2034, 4294901760
      %v2231 = vsub.f32 %v2034, %v2230
      %v2232 = vand.u32 %v2231, 4294901760
      %v2233 = vsub.f32 %v2231, %v2232
      %v2234 = vand.u32 %v2233, 4294901760
      %2235 = vmatpush1.msra.mxu0 %v2234
      %2236 = vmatprep.subr.mxu0 0.0
      %2237 = vmatpush1.msra.mxu0 0.0
      %2238 = vmatprep.subr.mxu0 0.0
      %2239 = vmatpush1.msra.mxu0 0.0
      %2240 = vmatprep.subr.mxu0 0.0
      %2241 = vmatpush1.msra.mxu0 0.0
      %2242 = vmatprep.subr.mxu0 0.0
      %2243 = vmatpush1.msra.mxu0 0.0
      %2244 = vmatprep.subr.mxu0 0.0
      %2245 = vmatpush1.msra.mxu0 0.0
      %2246 = vmatprep.subr.mxu0 0.0
      %2247 = vmatpush1.msra.mxu0 0.0
      %2248 = vmatprep.subr.mxu0 0.0
      %2249 = vmatpush1.msra.mxu0 0.0
      %2250 = vmatprep.subr.mxu0 0.0
      %2251 = vmatpush1.msra.mxu0 0.0
      %2252 = vmatprep.subr.mxu0 0.0
      %2253 = vmatpush1.msra.mxu0 0.0
      %2254 = vmatprep.subr.mxu0 0.0
      %2255 = vmatpush1.msra.mxu0 0.0
      %2256 = vmatprep.subr.mxu0 0.0
      %2257 = vmatpush1.msra.mxu0 0.0
      %2258 = vmatprep.subr.mxu0 0.0
      %2259 = vmatpush1.msra.mxu0 0.0
      %2260 = vmatprep.subr.mxu0 0.0
      %2261 = vmatpush1.msra.mxu0 0.0
      %2262 = vmatprep.subr.mxu0 0.0
      %2263 = vmatpush1.msra.mxu0 0.0
      %2264 = vmatprep.subr.mxu0 0.0
      %2265 = vmatpush1.msra.mxu0 0.0
      %2266 = vmatprep.subr.mxu0 0.0
      %2267 = vmatpush1.msra.mxu0 0.0
      %2268 = vmatprep.subr.mxu0 0.0
      %2269 = vmatpush1.msra.mxu0 0.0
      %2270 = vmatprep.subr.mxu0 0.0
      %2271 = vmatpush1.msra.mxu0 0.0
      %2272 = vmatprep.subr.mxu0 0.0
      %2273 = vmatpush1.msra.mxu0 0.0
      %2274 = vmatprep.subr.mxu0 0.0
      %2275 = vmatpush1.msra.mxu0 0.0
      %2276 = vmatprep.subr.mxu0 0.0
      %2277 = vmatpush1.msra.mxu0 0.0
      %2278 = vmatprep.subr.mxu0 0.0
      %2279 = vmatpush1.msra.mxu0 0.0
      %2280 = vmatprep.subr.mxu0 0.0
      %2281 = vmatpush1.msra.mxu0 0.0
      %2282 = vmatprep.subr.mxu0 0.0
      %2283 = vmatpush1.msra.mxu0 0.0
      %2284 = vmatprep.subr.mxu0 0.0
      %2285 = vmatpush1.msra.mxu0 0.0
      %2286 = vmatprep.subr.mxu0 0.0
      %2287 = vmatpush1.msra.mxu0 0.0
      %2288 = vmatprep.subr.mxu0 0.0
      %2289 = vmatpush1.msra.mxu0 0.0
      %2290 = vmatprep.subr.mxu0 0.0
      %2291 = vmatpush1.msra.mxu0 0.0
      %2292 = vmatprep.mubr.f32.mxu0 0.0
      %v2293 = vand.u32 %v2036, 4294901760
      %2294 = vmatmul.mubr.f32.gmra.mrb[0].mxu0 %v2293
      %v2295 = vpop.f32.mrb[0].mxu0
      %v2296 = vadd.f32 %v2135, %v2295
      %v2297 = vpop.f32.mrb[0].mxu0
      %2298 = vmatprep.mubr.f32.mxu0 0.0
      %v2299 = vand.u32 %v2039, 4294901760
      %2300 = vmatmul.mubr.f32.gmra.mrb[0].mxu0 %v2299
      %v2301 = vpop.f32.mrb[0].mxu0
      %v2302 = vadd.f32 %v2145, %v2301
      %v2303 = vpop.f32.mrb[0].mxu0
      %2304 = vmatprep.mubr.f32.mxu0 0.0
      %v2305 = vand.u32 %v2042, 4294901760
      %2306 = vmatmul.mubr.f32.gmra.mrb[0].mxu0 %v2305
      %v2307 = vpop.f32.mrb[0].mxu0
      %v2308 = vadd.f32 %v2155, %v2307
      %v2309 = vpop.f32.mrb[0].mxu0
      %2310 = vmatprep.mubr.f32.mxu0 0.0
      %v2311 = vand.u32 %v2045, 4294901760
      %2312 = vmatmul.mubr.f32.gmra.mrb[0].mxu0 %v2311
      %v2313 = vpop.f32.mrb[0].mxu0
      %v2314 = vadd.f32 %v2165, %v2313
      %v2315 = vpop.f32.mrb[0].mxu0
      %2316 = vmatprep.mubr.f32.mxu0 0.0
      %v2317 = vand.u32 %v2048, 4294901760
      %2318 = vmatmul.mubr.f32.gmra.mrb[0].mxu0 %v2317
      %v2319 = vpop.f32.mrb[0].mxu0
      %v2320 = vadd.f32 %v2175, %v2319
      %v2321 = vpop.f32.mrb[0].mxu0
      %2322 = vmatprep.mubr.f32.mxu0 0.0
      %v2323 = vand.u32 %v2051, 4294901760
      %2324 = vmatmul.mubr.f32.gmra.mrb[0].mxu0 %v2323
      %v2325 = vpop.f32.mrb[0].mxu0
      %v2326 = vadd.f32 %v2185, %v2325
      %v2327 = vpop.f32.mrb[0].mxu0
      %2328 = vmatprep.mubr.f32.mxu0 0.0
      %v2329 = vand.u32 %v2054, 4294901760
      %2330 = vmatmul.mubr.f32.gmra.mrb[0].mxu0 %v2329
      %v2331 = vpop.f32.mrb[0].mxu0
      %v2332 = vadd.f32 %v2195, %v2331
      %v2333 = vpop.f32.mrb[0].mxu0
      %2334 = vmatprep.mubr.f32.mxu0 0.0
      %v2335 = vand.u32 %v2057, 4294901760
      %2336 = vmatmul.mubr.f32.gmra.mrb[0].mxu0 %v2335
      %v2337 = vpop.f32.mrb[0].mxu0
      %v2338 = vadd.f32 %v2205, %v2337
      %v2339 = vpop.f32.mrb[0].mxu0
      %2340 = vdwg.mxu0
      %2341 = vmatprep.subr.mxu0 0.0
      %v2342 = vand.u32 %v2031, 4294901760
      %v2343 = vsub.f32 %v2031, %v2342
      %2344 = vmatpush1.msra.mxu0 %v2343
      %2345 = vmatprep.subr.mxu0 0.0
      %v2346 = vand.u32 %v2032, 4294901760
      %v2347 = vsub.f32 %v2032, %v2346
      %2348 = vmatpush1.msra.mxu0 %v2347
      %2349 = vmatprep.subr.mxu0 0.0
      %v2350 = vand.u32 %v2033, 4294901760
      %v2351 = vsub.f32 %v2033, %v2350
      %2352 = vmatpush1.msra.mxu0 %v2351
      %2353 = vmatprep.subr.mxu0 0.0
      %v2354 = vand.u32 %v2034, 4294901760
      %v2355 = vsub.f32 %v2034, %v2354
      %2356 = vmatpush1.msra.mxu0 %v2355
      %2357 = vmatprep.subr.mxu0 0.0
      %2358 = vmatpush1.msra.mxu0 0.0
      %2359 = vmatprep.subr.mxu0 0.0
      %2360 = vmatpush1.msra.mxu0 0.0
      %2361 = vmatprep.subr.mxu0 0.0
      %2362 = vmatpush1.msra.mxu0 0.0
      %2363 = vmatprep.subr.mxu0 0.0
      %2364 = vmatpush1.msra.mxu0 0.0
      %2365 = vmatprep.subr.mxu0 0.0
      %2366 = vmatpush1.msra.mxu0 0.0
      %2367 = vmatprep.subr.mxu0 0.0
      %2368 = vmatpush1.msra.mxu0 0.0
      %2369 = vmatprep.subr.mxu0 0.0
      %2370 = vmatpush1.msra.mxu0 0.0
      %2371 = vmatprep.subr.mxu0 0.0
      %2372 = vmatpush1.msra.mxu0 0.0
      %2373 = vmatprep.subr.mxu0 0.0
      %2374 = vmatpush1.msra.mxu0 0.0
      %2375 = vmatprep.subr.mxu0 0.0
      %2376 = vmatpush1.msra.mxu0 0.0
      %2377 = vmatprep.subr.mxu0 0.0
      %2378 = vmatpush1.msra.mxu0 0.0
      %2379 = vmatprep.subr.mxu0 0.0
      %2380 = vmatpush1.msra.mxu0 0.0
      %2381 = vmatprep.subr.mxu0 0.0
      %2382 = vmatpush1.msra.mxu0 0.0
      %2383 = vmatprep.subr.mxu0 0.0
      %2384 = vmatpush1.msra.mxu0 0.0
      %2385 = vmatprep.subr.mxu0 0.0
      %2386 = vmatpush1.msra.mxu0 0.0
      %2387 = vmatprep.subr.mxu0 0.0
      %2388 = vmatpush1.msra.mxu0 0.0
      %2389 = vmatprep.subr.mxu0 0.0
      %2390 = vmatpush1.msra.mxu0 0.0
      %2391 = vmatprep.subr.mxu0 0.0
      %2392 = vmatpush1.msra.mxu0 0.0
      %2393 = vmatprep.subr.mxu0 0.0
      %2394 = vmatpush1.msra.mxu0 0.0
      %2395 = vmatprep.subr.mxu0 0.0
      %2396 = vmatpush1.msra.mxu0 0.0
      %2397 = vmatprep.subr.mxu0 0.0
      %2398 = vmatpush1.msra.mxu0 0.0
      %2399 = vmatprep.subr.mxu0 0.0
      %2400 = vmatpush1.msra.mxu0 0.0
      %2401 = vmatprep.subr.mxu0 0.0
      %2402 = vmatpush1.msra.mxu0 0.0
      %2403 = vmatprep.subr.mxu0 0.0
      %2404 = vmatpush1.msra.mxu0 0.0
      %2405 = vmatprep.subr.mxu0 0.0
      %2406 = vmatpush1.msra.mxu0 0.0
      %2407 = vmatprep.subr.mxu0 0.0
      %2408 = vmatpush1.msra.mxu0 0.0
      %2409 = vmatprep.subr.mxu0 0.0
      %2410 = vmatpush1.msra.mxu0 0.0
      %2411 = vmatprep.subr.mxu0 0.0
      %2412 = vmatpush1.msra.mxu0 0.0
      %2413 = vmatprep.mubr.f32.mxu0 0.0
      %v2414 = vand.u32 %v2036, 4294901760
      %v2415 = vsub.f32 %v2036, %v2414
      %2416 = vmatmul.mubr.f32.gmra.mrb[0].mxu0 %v2415
      %v2417 = vpop.f32.mrb[0].mxu0
      %v2418 = vadd.f32 %v2296, %v2417
      %v2419 = vpop.f32.mrb[0].mxu0
      %2420 = vmatprep.mubr.f32.mxu0 0.0
      %v2421 = vand.u32 %v2039, 4294901760
      %v2422 = vsub.f32 %v2039, %v2421
      %2423 = vmatmul.mubr.f32.gmra.mrb[0].mxu0 %v2422
      %v2424 = vpop.f32.mrb[0].mxu0
      %v2425 = vadd.f32 %v2302, %v2424
      %v2426 = vpop.f32.mrb[0].mxu0
      %2427 = vmatprep.mubr.f32.mxu0 0.0
      %v2428 = vand.u32 %v2042, 4294901760
      %v2429 = vsub.f32 %v2042, %v2428
      %2430 = vmatmul.mubr.f32.gmra.mrb[0].mxu0 %v2429
      %v2431 = vpop.f32.mrb[0].mxu0
      %v2432 = vadd.f32 %v2308, %v2431
      %v2433 = vpop.f32.mrb[0].mxu0
      %2434 = vmatprep.mubr.f32.mxu0 0.0
      %v2435 = vand.u32 %v2045, 4294901760
      %v2436 = vsub.f32 %v2045, %v2435
      %2437 = vmatmul.mubr.f32.gmra.mrb[0].mxu0 %v2436
      %v2438 = vpop.f32.mrb[0].mxu0
      %v2439 = vadd.f32 %v2314, %v2438
      %v2440 = vpop.f32.mrb[0].mxu0
      %2441 = vmatprep.mubr.f32.mxu0 0.0
      %v2442 = vand.u32 %v2048, 4294901760
      %v2443 = vsub.f32 %v2048, %v2442
      %2444 = vmatmul.mubr.f32.gmra.mrb[0].mxu0 %v2443
      %v2445 = vpop.f32.mrb[0].mxu0
      %v2446 = vadd.f32 %v2320, %v2445
      %v2447 = vpop.f32.mrb[0].mxu0
      %2448 = vmatprep.mubr.f32.mxu0 0.0
      %v2449 = vand.u32 %v2051, 4294901760
      %v2450 = vsub.f32 %v2051, %v2449
      %2451 = vmatmul.mubr.f32.gmra.mrb[0].mxu0 %v2450
      %v2452 = vpop.f32.mrb[0].mxu0
      %v2453 = vadd.f32 %v2326, %v2452
      %v2454 = vpop.f32.mrb[0].mxu0
      %2455 = vmatprep.mubr.f32.mxu0 0.0
      %v2456 = vand.u32 %v2054, 4294901760
      %v2457 = vsub.f32 %v2054, %v2456
      %2458 = vmatmul.mubr.f32.gmra.mrb[0].mxu0 %v2457
      %v2459 = vpop.f32.mrb[0].mxu0
      %v2460 = vadd.f32 %v2332, %v2459
      %v2461 = vpop.f32.mrb[0].mxu0
      %2462 = vmatprep.mubr.f32.mxu0 0.0
      %v2463 = vand.u32 %v2057, 4294901760
      %v2464 = vsub.f32 %v2057, %v2463
      %2465 = vmatmul.mubr.f32.gmra.mrb[0].mxu0 %v2464
      %v2466 = vpop.f32.mrb[0].mxu0
      %v2467 = vadd.f32 %v2338, %v2466
      %v2468 = vpop.f32.mrb[0].mxu0
      %2469 = vdwg.mxu0
      %2470 = vmatprep.subr.mxu0 0.0
      %v2471 = vand.u32 %v2031, 4294901760
      %2472 = vmatpush1.msra.mxu0 %v2471
      %2473 = vmatprep.subr.mxu0 0.0
      %v2474 = vand.u32 %v2032, 4294901760
      %2475 = vmatpush1.msra.mxu0 %v2474
      %2476 = vmatprep.subr.mxu0 0.0
      %v2477 = vand.u32 %v2033, 4294901760
      %2478 = vmatpush1.msra.mxu0 %v2477
      %2479 = vmatprep.subr.mxu0 0.0
      %v2480 = vand.u32 %v2034, 4294901760
      %2481 = vmatpush1.msra.mxu0 %v2480
      %2482 = vmatprep.subr.mxu0 0.0
      %2483 = vmatpush1.msra.mxu0 0.0
      %2484 = vmatprep.subr.mxu0 0.0
      %2485 = vmatpush1.msra.mxu0 0.0
      %2486 = vmatprep.subr.mxu0 0.0
      %2487 = vmatpush1.msra.mxu0 0.0
      %2488 = vmatprep.subr.mxu0 0.0
      %2489 = vmatpush1.msra.mxu0 0.0
      %2490 = vmatprep.subr.mxu0 0.0
      %2491 = vmatpush1.msra.mxu0 0.0
      %2492 = vmatprep.subr.mxu0 0.0
      %2493 = vmatpush1.msra.mxu0 0.0
      %2494 = vmatprep.subr.mxu0 0.0
      %2495 = vmatpush1.msra.mxu0 0.0
      %2496 = vmatprep.subr.mxu0 0.0
      %2497 = vmatpush1.msra.mxu0 0.0
      %2498 = vmatprep.subr.mxu0 0.0
      %2499 = vmatpush1.msra.mxu0 0.0
      %2500 = vmatprep.subr.mxu0 0.0
      %2501 = vmatpush1.msra.mxu0 0.0
      %2502 = vmatprep.subr.mxu0 0.0
      %2503 = vmatpush1.msra.mxu0 0.0
      %2504 = vmatprep.subr.mxu0 0.0
      %2505 = vmatpush1.msra.mxu0 0.0
      %2506 = vmatprep.subr.mxu0 0.0
      %2507 = vmatpush1.msra.mxu0 0.0
      %2508 = vmatprep.subr.mxu0 0.0
      %2509 = vmatpush1.msra.mxu0 0.0
      %2510 = vmatprep.subr.mxu0 0.0
      %2511 = vmatpush1.msra.mxu0 0.0
      %2512 = vmatprep.subr.mxu0 0.0
      %2513 = vmatpush1.msra.mxu0 0.0
      %2514 = vmatprep.subr.mxu0 0.0
      %2515 = vmatpush1.msra.mxu0 0.0
      %2516 = vmatprep.subr.mxu0 0.0
      %2517 = vmatpush1.msra.mxu0 0.0
      %2518 = vmatprep.subr.mxu0 0.0
      %2519 = vmatpush1.msra.mxu0 0.0
      %2520 = vmatprep.subr.mxu0 0.0
      %2521 = vmatpush1.msra.mxu0 0.0
      %2522 = vmatprep.subr.mxu0 0.0
      %2523 = vmatpush1.msra.mxu0 0.0
      %2524 = vmatprep.subr.mxu0 0.0
      %2525 = vmatpush1.msra.mxu0 0.0
      %2526 = vmatprep.subr.mxu0 0.0
      %2527 = vmatpush1.msra.mxu0 0.0
      %2528 = vmatprep.subr.mxu0 0.0
      %2529 = vmatpush1.msra.mxu0 0.0
      %2530 = vmatprep.subr.mxu0 0.0
      %2531 = vmatpush1.msra.mxu0 0.0
      %2532 = vmatprep.subr.mxu0 0.0
      %2533 = vmatpush1.msra.mxu0 0.0
      %2534 = vmatprep.subr.mxu0 0.0
      %2535 = vmatpush1.msra.mxu0 0.0
      %2536 = vmatprep.subr.mxu0 0.0
      %2537 = vmatpush1.msra.mxu0 0.0
      %2538 = vmatprep.mubr.f32.mxu0 0.0
      %v2539 = vand.u32 %v2036, 4294901760
      %v2540 = vsub.f32 %v2036, %v2539
      %v2541 = vand.u32 %v2540, 4294901760
      %2542 = vmatmul.mubr.f32.gmra.mrb[0].mxu0 %v2541
      %v2543 = vpop.f32.mrb[0].mxu0
      %v2544 = vadd.f32 %v2418, %v2543
      %v2545 = vpop.f32.mrb[0].mxu0
      %2546 = vmatprep.mubr.f32.mxu0 0.0
      %v2547 = vand.u32 %v2039, 4294901760
      %v2548 = vsub.f32 %v2039, %v2547
      %v2549 = vand.u32 %v2548, 4294901760
      %2550 = vmatmul.mubr.f32.gmra.mrb[0].mxu0 %v2549
      %v2551 = vpop.f32.mrb[0].mxu0
      %v2552 = vadd.f32 %v2425, %v2551
      %v2553 = vpop.f32.mrb[0].mxu0
      %2554 = vmatprep.mubr.f32.mxu0 0.0
      %v2555 = vand.u32 %v2042, 4294901760
      %v2556 = vsub.f32 %v2042, %v2555
      %v2557 = vand.u32 %v2556, 4294901760
      %2558 = vmatmul.mubr.f32.gmra.mrb[0].mxu0 %v2557
      %v2559 = vpop.f32.mrb[0].mxu0
      %v2560 = vadd.f32 %v2432, %v2559
      %v2561 = vpop.f32.mrb[0].mxu0
      %2562 = vmatprep.mubr.f32.mxu0 0.0
      %v2563 = vand.u32 %v2045, 4294901760
      %v2564 = vsub.f32 %v2045, %v2563
      %v2565 = vand.u32 %v2564, 4294901760
      %2566 = vmatmul.mubr.f32.gmra.mrb[0].mxu0 %v2565
      %v2567 = vpop.f32.mrb[0].mxu0
      %v2568 = vadd.f32 %v2439, %v2567
      %v2569 = vpop.f32.mrb[0].mxu0
      %2570 = vmatprep.mubr.f32.mxu0 0.0
      %v2571 = vand.u32 %v2048, 4294901760
      %v2572 = vsub.f32 %v2048, %v2571
      %v2573 = vand.u32 %v2572, 4294901760
      %2574 = vmatmul.mubr.f32.gmra.mrb[0].mxu0 %v2573
      %v2575 = vpop.f32.mrb[0].mxu0
      %v2576 = vadd.f32 %v2446, %v2575
      %v2577 = vpop.f32.mrb[0].mxu0
      %2578 = vmatprep.mubr.f32.mxu0 0.0
      %v2579 = vand.u32 %v2051, 4294901760
      %v2580 = vsub.f32 %v2051, %v2579
      %v2581 = vand.u32 %v2580, 4294901760
      %2582 = vmatmul.mubr.f32.gmra.mrb[0].mxu0 %v2581
      %v2583 = vpop.f32.mrb[0].mxu0
      %v2584 = vadd.f32 %v2453, %v2583
      %v2585 = vpop.f32.mrb[0].mxu0
      %2586 = vmatprep.mubr.f32.mxu0 0.0
      %v2587 = vand.u32 %v2054, 4294901760
      %v2588 = vsub.f32 %v2054, %v2587
      %v2589 = vand.u32 %v2588, 4294901760
      %2590 = vmatmul.mubr.f32.gmra.mrb[0].mxu0 %v2589
      %v2591 = vpop.f32.mrb[0].mxu0
      %v2592 = vadd.f32 %v2460, %v2591
      %v2593 = vpop.f32.mrb[0].mxu0
      %2594 = vmatprep.mubr.f32.mxu0 0.0
      %v2595 = vand.u32 %v2057, 4294901760
      %v2596 = vsub.f32 %v2057, %v2595
      %v2597 = vand.u32 %v2596, 4294901760
      %2598 = vmatmul.mubr.f32.gmra.mrb[0].mxu0 %v2597
      %v2599 = vpop.f32.mrb[0].mxu0
      %v2600 = vadd.f32 %v2467, %v2599
      %v2601 = vpop.f32.mrb[0].mxu0
      %2602 = vdwg.mxu0
      %2603 = vmatprep.subr.mxu0 0.0
      %v2604 = vand.u32 %v2031, 4294901760
      %v2605 = vsub.f32 %v2031, %v2604
      %v2606 = vand.u32 %v2605, 4294901760
      %2607 = vmatpush1.msra.mxu0 %v2606
      %2608 = vmatprep.subr.mxu0 0.0
      %v2609 = vand.u32 %v2032, 4294901760
      %v2610 = vsub.f32 %v2032, %v2609
      %v2611 = vand.u32 %v2610, 4294901760
      %2612 = vmatpush1.msra.mxu0 %v2611
      %2613 = vmatprep.subr.mxu0 0.0
      %v2614 = vand.u32 %v2033, 4294901760
      %v2615 = vsub.f32 %v2033, %v2614
      %v2616 = vand.u32 %v2615, 4294901760
      %2617 = vmatpush1.msra.mxu0 %v2616
      %2618 = vmatprep.subr.mxu0 0.0
      %v2619 = vand.u32 %v2034, 4294901760
      %v2620 = vsub.f32 %v2034, %v2619
      %v2621 = vand.u32 %v2620, 4294901760
      %2622 = vmatpush1.msra.mxu0 %v2621
      %2623 = vmatprep.subr.mxu0 0.0
      %2624 = vmatpush1.msra.mxu0 0.0
      %2625 = vmatprep.subr.mxu0 0.0
      %2626 = vmatpush1.msra.mxu0 0.0
      %2627 = vmatprep.subr.mxu0 0.0
      %2628 = vmatpush1.msra.mxu0 0.0
      %2629 = vmatprep.subr.mxu0 0.0
      %2630 = vmatpush1.msra.mxu0 0.0
      %2631 = vmatprep.subr.mxu0 0.0
      %2632 = vmatpush1.msra.mxu0 0.0
      %2633 = vmatprep.subr.mxu0 0.0
      %2634 = vmatpush1.msra.mxu0 0.0
      %2635 = vmatprep.subr.mxu0 0.0
      %2636 = vmatpush1.msra.mxu0 0.0
      %2637 = vmatprep.subr.mxu0 0.0
      %2638 = vmatpush1.msra.mxu0 0.0
      %2639 = vmatprep.subr.mxu0 0.0
      %2640 = vmatpush1.msra.mxu0 0.0
      %2641 = vmatprep.subr.mxu0 0.0
      %2642 = vmatpush1.msra.mxu0 0.0
      %2643 = vmatprep.subr.mxu0 0.0
      %2644 = vmatpush1.msra.mxu0 0.0
      %2645 = vmatprep.subr.mxu0 0.0
      %2646 = vmatpush1.msra.mxu0 0.0
      %2647 = vmatprep.subr.mxu0 0.0
      %2648 = vmatpush1.msra.mxu0 0.0
      %2649 = vmatprep.subr.mxu0 0.0
      %2650 = vmatpush1.msra.mxu0 0.0
      %2651 = vmatprep.subr.mxu0 0.0
      %2652 = vmatpush1.msra.mxu0 0.0
      %2653 = vmatprep.subr.mxu0 0.0
      %2654 = vmatpush1.msra.mxu0 0.0
      %2655 = vmatprep.subr.mxu0 0.0
      %2656 = vmatpush1.msra.mxu0 0.0
      %2657 = vmatprep.subr.mxu0 0.0
      %2658 = vmatpush1.msra.mxu0 0.0
      %2659 = vmatprep.subr.mxu0 0.0
      %2660 = vmatpush1.msra.mxu0 0.0
      %2661 = vmatprep.subr.mxu0 0.0
      %2662 = vmatpush1.msra.mxu0 0.0
      %2663 = vmatprep.subr.mxu0 0.0
      %2664 = vmatpush1.msra.mxu0 0.0
      %2665 = vmatprep.subr.mxu0 0.0
      %2666 = vmatpush1.msra.mxu0 0.0
      %2667 = vmatprep.subr.mxu0 0.0
      %2668 = vmatpush1.msra.mxu0 0.0
      %2669 = vmatprep.subr.mxu0 0.0
      %2670 = vmatpush1.msra.mxu0 0.0
      %2671 = vmatprep.subr.mxu0 0.0
      %2672 = vmatpush1.msra.mxu0 0.0
      %2673 = vmatprep.subr.mxu0 0.0
      %2674 = vmatpush1.msra.mxu0 0.0
      %2675 = vmatprep.subr.mxu0 0.0
      %2676 = vmatpush1.msra.mxu0 0.0
      %2677 = vmatprep.subr.mxu0 0.0
      %2678 = vmatpush1.msra.mxu0 0.0
      %2679 = vmatprep.mubr.f32.mxu0 0.0
      %v2680 = vand.u32 %v2036, 4294901760
      %2681 = vmatmul.mubr.f32.gmra.mrb[0].mxu0 %v2680
      %v2682 = vpop.f32.mrb[0].mxu0
      %v2683 = vadd.f32 %v2544, %v2682
      %v2684 = vpop.f32.mrb[0].mxu0
      %2685 = vmatprep.mubr.f32.mxu0 0.0
      %v2686 = vand.u32 %v2039, 4294901760
      %2687 = vmatmul.mubr.f32.gmra.mrb[0].mxu0 %v2686
      %v2688 = vpop.f32.mrb[0].mxu0
      %v2689 = vadd.f32 %v2552, %v2688
      %v2690 = vpop.f32.mrb[0].mxu0
      %2691 = vmatprep.mubr.f32.mxu0 0.0
      %v2692 = vand.u32 %v2042, 4294901760
      %2693 = vmatmul.mubr.f32.gmra.mrb[0].mxu0 %v2692
      %v2694 = vpop.f32.mrb[0].mxu0
      %v2695 = vadd.f32 %v2560, %v2694
      %v2696 = vpop.f32.mrb[0].mxu0
      %2697 = vmatprep.mubr.f32.mxu0 0.0
      %v2698 = vand.u32 %v2045, 4294901760
      %2699 = vmatmul.mubr.f32.gmra.mrb[0].mxu0 %v2698
      %v2700 = vpop.f32.mrb[0].mxu0
      %v2701 = vadd.f32 %v2568, %v2700
      %v2702 = vpop.f32.mrb[0].mxu0
      %2703 = vmatprep.mubr.f32.mxu0 0.0
      %v2704 = vand.u32 %v2048, 4294901760
      %2705 = vmatmul.mubr.f32.gmra.mrb[0].mxu0 %v2704
      %v2706 = vpop.f32.mrb[0].mxu0
      %v2707 = vadd.f32 %v2576, %v2706
      %v2708 = vpop.f32.mrb[0].mxu0
      %2709 = vmatprep.mubr.f32.mxu0 0.0
      %v2710 = vand.u32 %v2051, 4294901760
      %2711 = vmatmul.mubr.f32.gmra.mrb[0].mxu0 %v2710
      %v2712 = vpop.f32.mrb[0].mxu0
      %v2713 = vadd.f32 %v2584, %v2712
      %v2714 = vpop.f32.mrb[0].mxu0
      %2715 = vmatprep.mubr.f32.mxu0 0.0
      %v2716 = vand.u32 %v2054, 4294901760
      %2717 = vmatmul.mubr.f32.gmra.mrb[0].mxu0 %v2716
      %v2718 = vpop.f32.mrb[0].mxu0
      %v2719 = vadd.f32 %v2592, %v2718
      %v2720 = vpop.f32.mrb[0].mxu0
      %2721 = vmatprep.mubr.f32.mxu0 0.0
      %v2722 = vand.u32 %v2057, 4294901760
      %2723 = vmatmul.mubr.f32.gmra.mrb[0].mxu0 %v2722
      %v2724 = vpop.f32.mrb[0].mxu0
      %v2725 = vadd.f32 %v2600, %v2724
      %v2726 = vpop.f32.mrb[0].mxu0
      %2727 = vdwg.mxu0
      %2728 = vmatprep.subr.mxu0 0.0
      %v2729 = vand.u32 %v2031, 4294901760
      %2730 = vmatpush1.msra.mxu0 %v2729
      %2731 = vmatprep.subr.mxu0 0.0
      %v2732 = vand.u32 %v2032, 4294901760
      %2733 = vmatpush1.msra.mxu0 %v2732
      %2734 = vmatprep.subr.mxu0 0.0
      %v2735 = vand.u32 %v2033, 4294901760
      %2736 = vmatpush1.msra.mxu0 %v2735
      %2737 = vmatprep.subr.mxu0 0.0
      %v2738 = vand.u32 %v2034, 4294901760
      %2739 = vmatpush1.msra.mxu0 %v2738
      %2740 = vmatprep.subr.mxu0 0.0
      %2741 = vmatpush1.msra.mxu0 0.0
      %2742 = vmatprep.subr.mxu0 0.0
      %2743 = vmatpush1.msra.mxu0 0.0
      %2744 = vmatprep.subr.mxu0 0.0
      %2745 = vmatpush1.msra.mxu0 0.0
      %2746 = vmatprep.subr.mxu0 0.0
      %2747 = vmatpush1.msra.mxu0 0.0
      %2748 = vmatprep.subr.mxu0 0.0
      %2749 = vmatpush1.msra.mxu0 0.0
      %2750 = vmatprep.subr.mxu0 0.0
      %2751 = vmatpush1.msra.mxu0 0.0
      %2752 = vmatprep.subr.mxu0 0.0
      %2753 = vmatpush1.msra.mxu0 0.0
      %2754 = vmatprep.subr.mxu0 0.0
      %2755 = vmatpush1.msra.mxu0 0.0
      %2756 = vmatprep.subr.mxu0 0.0
      %2757 = vmatpush1.msra.mxu0 0.0
      %2758 = vmatprep.subr.mxu0 0.0
      %2759 = vmatpush1.msra.mxu0 0.0
      %2760 = vmatprep.subr.mxu0 0.0
      %2761 = vmatpush1.msra.mxu0 0.0
      %2762 = vmatprep.subr.mxu0 0.0
      %2763 = vmatpush1.msra.mxu0 0.0
      %2764 = vmatprep.subr.mxu0 0.0
      %2765 = vmatpush1.msra.mxu0 0.0
      %2766 = vmatprep.subr.mxu0 0.0
      %2767 = vmatpush1.msra.mxu0 0.0
      %2768 = vmatprep.subr.mxu0 0.0
      %2769 = vmatpush1.msra.mxu0 0.0
      %2770 = vmatprep.subr.mxu0 0.0
      %2771 = vmatpush1.msra.mxu0 0.0
      %2772 = vmatprep.subr.mxu0 0.0
      %2773 = vmatpush1.msra.mxu0 0.0
      %2774 = vmatprep.subr.mxu0 0.0
      %2775 = vmatpush1.msra.mxu0 0.0
      %2776 = vmatprep.subr.mxu0 0.0
      %2777 = vmatpush1.msra.mxu0 0.0
      %2778 = vmatprep.subr.mxu0 0.0
      %2779 = vmatpush1.msra.mxu0 0.0
      %2780 = vmatprep.subr.mxu0 0.0
      %2781 = vmatpush1.msra.mxu0 0.0
      %2782 = vmatprep.subr.mxu0 0.0
      %2783 = vmatpush1.msra.mxu0 0.0
      %2784 = vmatprep.subr.mxu0 0.0
      %2785 = vmatpush1.msra.mxu0 0.0
      %2786 = vmatprep.subr.mxu0 0.0
      %2787 = vmatpush1.msra.mxu0 0.0
      %2788 = vmatprep.subr.mxu0 0.0
      %2789 = vmatpush1.msra.mxu0 0.0
      %2790 = vmatprep.subr.mxu0 0.0
      %2791 = vmatpush1.msra.mxu0 0.0
      %2792 = vmatprep.subr.mxu0 0.0
      %2793 = vmatpush1.msra.mxu0 0.0
      %2794 = vmatprep.subr.mxu0 0.0
      %2795 = vmatpush1.msra.mxu0 0.0
      %2796 = vmatprep.mubr.f32.mxu0 0.0
      %v2797 = vand.u32 %v2036, 4294901760
      %2798 = vmatmul.mubr.f32.gmra.mrb[0].mxu0 %v2797
      %v2799 = vpop.f32.mrb[0].mxu0
      %v2800 = vadd.f32 %v2683, %v2799
      %v2801 = vpop.f32.mrb[0].mxu0
      %2802 = vmatprep.mubr.f32.mxu0 0.0
      %v2803 = vand.u32 %v2039, 4294901760
      %2804 = vmatmul.mubr.f32.gmra.mrb[0].mxu0 %v2803
      %v2805 = vpop.f32.mrb[0].mxu0
      %v2806 = vadd.f32 %v2689, %v2805
      %v2807 = vpop.f32.mrb[0].mxu0
      %2808 = vmatprep.mubr.f32.mxu0 0.0
      %v2809 = vand.u32 %v2042, 4294901760
      %2810 = vmatmul.mubr.f32.gmra.mrb[0].mxu0 %v2809
      %v2811 = vpop.f32.mrb[0].mxu0
      %v2812 = vadd.f32 %v2695, %v2811
      %v2813 = vpop.f32.mrb[0].mxu0
      %2814 = vmatprep.mubr.f32.mxu0 0.0
      %v2815 = vand.u32 %v2045, 4294901760
      %2816 = vmatmul.mubr.f32.gmra.mrb[0].mxu0 %v2815
      %v2817 = vpop.f32.mrb[0].mxu0
      %v2818 = vadd.f32 %v2701, %v2817
      %v2819 = vpop.f32.mrb[0].mxu0
      %2820 = vmatprep.mubr.f32.mxu0 0.0
      %v2821 = vand.u32 %v2048, 4294901760
      %2822 = vmatmul.mubr.f32.gmra.mrb[0].mxu0 %v2821
      %v2823 = vpop.f32.mrb[0].mxu0
      %v2824 = vadd.f32 %v2707, %v2823
      %v2825 = vpop.f32.mrb[0].mxu0
      %2826 = vmatprep.mubr.f32.mxu0 0.0
      %v2827 = vand.u32 %v2051, 4294901760
      %2828 = vmatmul.mubr.f32.gmra.mrb[0].mxu0 %v2827
      %v2829 = vpop.f32.mrb[0].mxu0
      %v2830 = vadd.f32 %v2713, %v2829
      %v2831 = vpop.f32.mrb[0].mxu0
      %2832 = vmatprep.mubr.f32.mxu0 0.0
      %v2833 = vand.u32 %v2054, 4294901760
      %2834 = vmatmul.mubr.f32.gmra.mrb[0].mxu0 %v2833
      %v2835 = vpop.f32.mrb[0].mxu0
      %v2836 = vadd.f32 %v2719, %v2835
      %v2837 = vpop.f32.mrb[0].mxu0
      %2838 = vmatprep.mubr.f32.mxu0 0.0
      %v2839 = vand.u32 %v2057, 4294901760
      %2840 = vmatmul.mubr.f32.gmra.mrb[0].mxu0 %v2839
      %v2841 = vpop.f32.mrb[0].mxu0
      %v2842 = vadd.f32 %v2725, %v2841
      %v2843 = vpop.f32.mrb[0].mxu0
      %2844 = vdwg.mxu0
      %v2845 = vld [vmem:[%s323] sm:$0xf]
      %v2846 = vld [vmem:[%s323 + $0x4] sm:$0xf]
      %v2847 = vld [vmem:[%s323 + $0x8] sm:$0xf]
      %v2848 = vld [vmem:[%s323 + $0xc] sm:$0xf]
      %v2849 = vld [vmem:[%s323 + $0x10] sm:$0xf]
      %v2850 = vld [vmem:[%s323 + $0x14] sm:$0xf]
      %v2851 = vld [vmem:[%s323 + $0x18] sm:$0xf]
      %v2852 = vld [vmem:[%s323 + $0x1c] sm:$0xf]
      %v2853 = vunpack.c.l.bf16 %v2845
      %v2854 = vunpack.c.l.bf16 %v2846
      %v2855 = vunpack.c.l.bf16 %v2847
      %v2856 = vunpack.c.l.bf16 %v2848
      %v2857 = vunpack.c.l.bf16 %v2849
      %v2858 = vunpack.c.l.bf16 %v2850
      %v2859 = vunpack.c.l.bf16 %v2851
      %v2860 = vunpack.c.l.bf16 %v2852
      %v2861 = vld [vmem:[%s6] sm:$0x1]
      %2863 = vset.pattern.permute.xlu0 0
      %2864 = vperm.xlu0 %2863, %v2800
      %v2865 = vpop.permute.xlu0 %2864
      %2868 = vset.pattern.permute.xlu0 0
      %2869 = vperm.xlu0 %2868, %v2806
      %v2870 = vpop.permute.xlu0 %2869
      %2873 = vset.pattern.permute.xlu0 0
      %2874 = vperm.xlu0 %2873, %v2812
      %v2875 = vpop.permute.xlu0 %2874
      %2878 = vset.pattern.permute.xlu0 0
      %2879 = vperm.xlu0 %2878, %v2818
      %v2880 = vpop.permute.xlu0 %2879
      %2883 = vset.pattern.permute.xlu0 0
      %2884 = vperm.xlu0 %2883, %v2824
      %v2885 = vpop.permute.xlu0 %2884
      %2888 = vset.pattern.permute.xlu0 0
      %2889 = vperm.xlu0 %2888, %v2830
      %v2890 = vpop.permute.xlu0 %2889
      %2893 = vset.pattern.permute.xlu0 0
      %2894 = vperm.xlu0 %2893, %v2836
      %v2895 = vpop.permute.xlu0 %2894
      %2898 = vset.pattern.permute.xlu0 0
      %2899 = vperm.xlu0 %2898, %v2842
      %v2900 = vpop.permute.xlu0 %2899
      %v2902 = vlaneseq
      %v2903 = vshrl.u32 %v2902, 7
      %v2904 = vsub.s32 0, %v2903
      %v2905 = vrot.slane %v2020, %v2904
      %v2906 = vadd.f32 %v2865, %v2905
      %v2907 = vadd.f32 %v2870, %v2905
      %v2908 = vadd.f32 %v2875, %v2905
      %v2909 = vadd.f32 %v2880, %v2905
      %v2910 = vadd.f32 %v2885, %v2905
      %v2911 = vadd.f32 %v2890, %v2905
      %v2912 = vadd.f32 %v2895, %v2905
      %v2913 = vadd.f32 %v2900, %v2905
      %v2914 = vmul.f32 %v2906, 0.2
      %v2915 = vmul.f32 %v2907, 0.2
      %v2916 = vmul.f32 %v2908, 0.2
      %v2917 = vmul.f32 %v2909, 0.2
      %v2918 = vmul.f32 %v2910, 0.2
      %v2919 = vmul.f32 %v2911, 0.2
      %v2920 = vmul.f32 %v2912, 0.2
      %v2921 = vmul.f32 %v2913, 0.2
      %v2922 = vmax.f32 %v2906, %v2914
      %v2923 = vmax.f32 %v2907, %v2915
      %v2924 = vmax.f32 %v2908, %v2916
      %v2925 = vmax.f32 %v2909, %v2917
      %v2926 = vmax.f32 %v2910, %v2918
      %v2927 = vmax.f32 %v2911, %v2919
      %v2928 = vmax.f32 %v2912, %v2920
      %v2929 = vmax.f32 %v2913, %v2921
      %v2930 = vadd.f32 %v2922, %v2853
      %v2931 = vadd.f32 %v2923, %v2854
      %v2932 = vadd.f32 %v2924, %v2855
      %v2933 = vadd.f32 %v2925, %v2856
      %v2934 = vadd.f32 %v2926, %v2857
      %v2935 = vadd.f32 %v2927, %v2858
      %v2936 = vadd.f32 %v2928, %v2859
      %v2937 = vadd.f32 %v2929, %v2860
      %2938 = vmax.xlane.f32.xlu0 %v2930
      %v2939 = vpop.xlane.xlu0 %2938
      %2940 = vmax.xlane.f32.xlu0 %v2931
      %v2941 = vpop.xlane.xlu0 %2940
      %2942 = vmax.xlane.f32.xlu0 %v2932
      %v2943 = vpop.xlane.xlu0 %2942
      %2944 = vmax.xlane.f32.xlu0 %v2933
      %v2945 = vpop.xlane.xlu0 %2944
      %2946 = vmax.xlane.f32.xlu0 %v2934
      %v2947 = vpop.xlane.xlu0 %2946
      %2948 = vmax.xlane.f32.xlu0 %v2935
      %v2949 = vpop.xlane.xlu0 %2948
      %2950 = vmax.xlane.f32.xlu0 %v2936
      %v2951 = vpop.xlane.xlu0 %2950
      %2952 = vmax.xlane.f32.xlu0 %v2937
      %v2953 = vpop.xlane.xlu0 %2952
      %v2954 = vsub.f32 %v2930, %v2939
      %v2955 = vsub.f32 %v2931, %v2941
      %v2956 = vsub.f32 %v2932, %v2943
      %v2957 = vsub.f32 %v2933, %v2945
      %v2958 = vsub.f32 %v2934, %v2947
      %v2959 = vsub.f32 %v2935, %v2949
      %v2960 = vsub.f32 %v2936, %v2951
      %v2961 = vsub.f32 %v2937, %v2953
      %v2962 = vmul.f32 %v2954, 1.442695
      %v2963 = vpow.pop %v2962
      %v2964 = vmul.f32 %v2955, 1.442695
      %v2965 = vpow.pop %v2964
      %v2966 = vmul.f32 %v2956, 1.442695
      %v2967 = vpow.pop %v2966
      %v2968 = vmul.f32 %v2957, 1.442695
      %v2969 = vpow.pop %v2968
      %v2970 = vmul.f32 %v2958, 1.442695
      %v2971 = vpow.pop %v2970
      %v2972 = vmul.f32 %v2959, 1.442695
      %v2973 = vpow.pop %v2972
      %v2974 = vmul.f32 %v2960, 1.442695
      %v2975 = vpow.pop %v2974
      %v2976 = vmul.f32 %v2961, 1.442695
      %v2977 = vpow.pop %v2976
      %2978 = vadd.xlane.f32.xlu0 %v2963
      %v2979 = vpop.xlane.xlu0 %2978
      %2980 = vadd.xlane.f32.xlu0 %v2965
      %v2981 = vpop.xlane.xlu0 %2980
      %2982 = vadd.xlane.f32.xlu0 %v2967
      %v2983 = vpop.xlane.xlu0 %2982
      %2984 = vadd.xlane.f32.xlu0 %v2969
      %v2985 = vpop.xlane.xlu0 %2984
      %2986 = vadd.xlane.f32.xlu0 %v2971
      %v2987 = vpop.xlane.xlu0 %2986
      %2988 = vadd.xlane.f32.xlu0 %v2973
      %v2989 = vpop.xlane.xlu0 %2988
      %2990 = vadd.xlane.f32.xlu0 %v2975
      %v2991 = vpop.xlane.xlu0 %2990
      %2992 = vadd.xlane.f32.xlu0 %v2977
      %v2993 = vpop.xlane.xlu0 %2992
      %2994 = vmatprep.subr.mxu0 0.0
      %v2995 = vand.u32 %v1437, 4294901760
      %2996 = vmatpush1.msra.mxu0 %v2995
      %2997 = vmatprep.subr.mxu0 0.0
      %v2998 = vand.u32 %v1443, 4294901760
      %2999 = vmatpush1.msra.mxu0 %v2998
      %3000 = vmatprep.subr.mxu0 0.0
      %v3001 = vand.u32 %v1449, 4294901760
      %3002 = vmatpush1.msra.mxu0 %v3001
      %3003 = vmatprep.subr.mxu0 0.0
      %v3004 = vand.u32 %v1455, 4294901760
      %3005 = vmatpush1.msra.mxu0 %v3004
      %3006 = vmatprep.subr.mxu0 0.0
      %v3007 = vand.u32 %v1461, 4294901760
      %3008 = vmatpush1.msra.mxu0 %v3007
      %3009 = vmatprep.subr.mxu0 0.0
      %v3010 = vand.u32 %v1467, 4294901760
      %3011 = vmatpush1.msra.mxu0 %v3010
      %3012 = vmatprep.subr.mxu0 0.0
      %v3013 = vand.u32 %v1473, 4294901760
      %3014 = vmatpush1.msra.mxu0 %v3013
      %3015 = vmatprep.subr.mxu0 0.0
      %v3016 = vand.u32 %v1479, 4294901760
      %3017 = vmatpush1.msra.mxu0 %v3016
      %3018 = vmatprep.subr.mxu0 0.0
      %v3019 = vand.u32 %v1485, 4294901760
      %3020 = vmatpush1.msra.mxu0 %v3019
      %3021 = vmatprep.subr.mxu0 0.0
      %v3022 = vand.u32 %v1491, 4294901760
      %3023 = vmatpush1.msra.mxu0 %v3022
      %3024 = vmatprep.subr.mxu0 0.0
      %v3025 = vand.u32 %v1497, 4294901760
      %3026 = vmatpush1.msra.mxu0 %v3025
      %3027 = vmatprep.subr.mxu0 0.0
      %v3028 = vand.u32 %v1503, 4294901760
      %3029 = vmatpush1.msra.mxu0 %v3028
      %3030 = vmatprep.subr.mxu0 0.0
      %v3031 = vand.u32 %v1509, 4294901760
      %3032 = vmatpush1.msra.mxu0 %v3031
      %3033 = vmatprep.subr.mxu0 0.0
      %v3034 = vand.u32 %v1515, 4294901760
      %3035 = vmatpush1.msra.mxu0 %v3034
      %3036 = vmatprep.subr.mxu0 0.0
      %v3037 = vand.u32 %v1521, 4294901760
      %3038 = vmatpush1.msra.mxu0 %v3037
      %3039 = vmatprep.subr.mxu0 0.0
      %v3040 = vand.u32 %v1527, 4294901760
      %3041 = vmatpush1.msra.mxu0 %v3040
      %3042 = vmatprep.subr.mxu0 0.0
      %3043 = vmatpush1.msra.mxu0 0.0
      %3044 = vmatprep.subr.mxu0 0.0
      %3045 = vmatpush1.msra.mxu0 0.0
      %3046 = vmatprep.subr.mxu0 0.0
      %3047 = vmatpush1.msra.mxu0 0.0
      %3048 = vmatprep.subr.mxu0 0.0
      %3049 = vmatpush1.msra.mxu0 0.0
      %3050 = vmatprep.subr.mxu0 0.0
      %3051 = vmatpush1.msra.mxu0 0.0
      %3052 = vmatprep.subr.mxu0 0.0
      %3053 = vmatpush1.msra.mxu0 0.0
      %3054 = vmatprep.subr.mxu0 0.0
      %3055 = vmatpush1.msra.mxu0 0.0
      %3056 = vmatprep.subr.mxu0 0.0
      %3057 = vmatpush1.msra.mxu0 0.0
      %3058 = vmatprep.subr.mxu0 0.0
      %3059 = vmatpush1.msra.mxu0 0.0
      %3060 = vmatprep.subr.mxu0 0.0
      %3061 = vmatpush1.msra.mxu0 0.0
      %3062 = vmatprep.subr.mxu0 0.0
      %3063 = vmatpush1.msra.mxu0 0.0
      %3064 = vmatprep.subr.mxu0 0.0
      %3065 = vmatpush1.msra.mxu0 0.0
      %3066 = vmatprep.subr.mxu0 0.0
      %3067 = vmatpush1.msra.mxu0 0.0
      %3068 = vmatprep.subr.mxu0 0.0
      %3069 = vmatpush1.msra.mxu0 0.0
      %3070 = vmatprep.subr.mxu0 0.0
      %3071 = vmatpush1.msra.mxu0 0.0
      %3072 = vmatprep.subr.mxu0 0.0
      %3073 = vmatpush1.msra.mxu0 0.0
      %3074 = vmatprep.mubr.f32.mxu0 0.0
      %v3075 = vand.u32 %v2963, 4294901760
      %v3076 = vsub.f32 %v2963, %v3075
      %v3077 = vand.u32 %v3076, 4294901760
      %v3078 = vsub.f32 %v3076, %v3077
      %v3079 = vand.u32 %v3078, 4294901760
      %3080 = vmatmul.mubr.f32.gmra.mrb[0].mxu0 %v3079
      %v3081 = vpop.f32.mrb[0].mxu0
      %v3082 = vadd.f32 0.0, %v3081
      %v3083 = vpop.f32.mrb[0].mxu0
      %3084 = vmatprep.mubr.f32.mxu0 0.0
      %v3085 = vand.u32 %v2965, 4294901760
      %v3086 = vsub.f32 %v2965, %v3085
      %v3087 = vand.u32 %v3086, 4294901760
      %v3088 = vsub.f32 %v3086, %v3087
      %v3089 = vand.u32 %v3088, 4294901760
      %3090 = vmatmul.mubr.f32.gmra.mrb[0].mxu0 %v3089
      %v3091 = vpop.f32.mrb[0].mxu0
      %v3092 = vadd.f32 0.0, %v3091
      %v3093 = vpop.f32.mrb[0].mxu0
      %3094 = vmatprep.mubr.f32.mxu0 0.0
      %v3095 = vand.u32 %v2967, 4294901760
      %v3096 = vsub.f32 %v2967, %v3095
      %v3097 = vand.u32 %v3096, 4294901760
      %v3098 = vsub.f32 %v3096, %v3097
      %v3099 = vand.u32 %v3098, 4294901760
      %3100 = vmatmul.mubr.f32.gmra.mrb[0].mxu0 %v3099
      %v3101 = vpop.f32.mrb[0].mxu0
      %v3102 = vadd.f32 0.0, %v3101
      %v3103 = vpop.f32.mrb[0].mxu0
      %3104 = vmatprep.mubr.f32.mxu0 0.0
      %v3105 = vand.u32 %v2969, 4294901760
      %v3106 = vsub.f32 %v2969, %v3105
      %v3107 = vand.u32 %v3106, 4294901760
      %v3108 = vsub.f32 %v3106, %v3107
      %v3109 = vand.u32 %v3108, 4294901760
      %3110 = vmatmul.mubr.f32.gmra.mrb[0].mxu0 %v3109
      %v3111 = vpop.f32.mrb[0].mxu0
      %v3112 = vadd.f32 0.0, %v3111
      %v3113 = vpop.f32.mrb[0].mxu0
      %3114 = vmatprep.mubr.f32.mxu0 0.0
      %v3115 = vand.u32 %v2971, 4294901760
      %v3116 = vsub.f32 %v2971, %v3115
      %v3117 = vand.u32 %v3116, 4294901760
      %v3118 = vsub.f32 %v3116, %v3117
      %v3119 = vand.u32 %v3118, 4294901760
      %3120 = vmatmul.mubr.f32.gmra.mrb[0].mxu0 %v3119
      %v3121 = vpop.f32.mrb[0].mxu0
      %v3122 = vadd.f32 0.0, %v3121
      %v3123 = vpop.f32.mrb[0].mxu0
      %3124 = vmatprep.mubr.f32.mxu0 0.0
      %v3125 = vand.u32 %v2973, 4294901760
      %v3126 = vsub.f32 %v2973, %v3125
      %v3127 = vand.u32 %v3126, 4294901760
      %v3128 = vsub.f32 %v3126, %v3127
      %v3129 = vand.u32 %v3128, 4294901760
      %3130 = vmatmul.mubr.f32.gmra.mrb[0].mxu0 %v3129
      %v3131 = vpop.f32.mrb[0].mxu0
      %v3132 = vadd.f32 0.0, %v3131
      %v3133 = vpop.f32.mrb[0].mxu0
      %3134 = vmatprep.mubr.f32.mxu0 0.0
      %v3135 = vand.u32 %v2975, 4294901760
      %v3136 = vsub.f32 %v2975, %v3135
      %v3137 = vand.u32 %v3136, 4294901760
      %v3138 = vsub.f32 %v3136, %v3137
      %v3139 = vand.u32 %v3138, 4294901760
      %3140 = vmatmul.mubr.f32.gmra.mrb[0].mxu0 %v3139
      %v3141 = vpop.f32.mrb[0].mxu0
      %v3142 = vadd.f32 0.0, %v3141
      %v3143 = vpop.f32.mrb[0].mxu0
      %3144 = vmatprep.mubr.f32.mxu0 0.0
      %v3145 = vand.u32 %v2977, 4294901760
      %v3146 = vsub.f32 %v2977, %v3145
      %v3147 = vand.u32 %v3146, 4294901760
      %v3148 = vsub.f32 %v3146, %v3147
      %v3149 = vand.u32 %v3148, 4294901760
      %3150 = vmatmul.mubr.f32.gmra.mrb[0].mxu0 %v3149
      %v3151 = vpop.f32.mrb[0].mxu0
      %v3152 = vadd.f32 0.0, %v3151
      %v3153 = vpop.f32.mrb[0].mxu0
      %3154 = vdwg.mxu0
      %3155 = vmatprep.subr.mxu0 0.0
      %v3156 = vand.u32 %v1437, 4294901760
      %v3157 = vsub.f32 %v1437, %v3156
      %v3158 = vand.u32 %v3157, 4294901760
      %v3159 = vsub.f32 %v3157, %v3158
      %v3160 = vand.u32 %v3159, 4294901760
      %3161 = vmatpush1.msra.mxu0 %v3160
      %3162 = vmatprep.subr.mxu0 0.0
      %v3163 = vand.u32 %v1443, 4294901760
      %v3164 = vsub.f32 %v1443, %v3163
      %v3165 = vand.u32 %v3164, 4294901760
      %v3166 = vsub.f32 %v3164, %v3165
      %v3167 = vand.u32 %v3166, 4294901760
      %3168 = vmatpush1.msra.mxu0 %v3167
      %3169 = vmatprep.subr.mxu0 0.0
      %v3170 = vand.u32 %v1449, 4294901760
      %v3171 = vsub.f32 %v1449, %v3170
      %v3172 = vand.u32 %v3171, 4294901760
      %v3173 = vsub.f32 %v3171, %v3172
      %v3174 = vand.u32 %v3173, 4294901760
      %3175 = vmatpush1.msra.mxu0 %v3174
      %3176 = vmatprep.subr.mxu0 0.0
      %v3177 = vand.u32 %v1455, 4294901760
      %v3178 = vsub.f32 %v1455, %v3177
      %v3179 = vand.u32 %v3178, 4294901760
      %v3180 = vsub.f32 %v3178, %v3179
      %v3181 = vand.u32 %v3180, 4294901760
      %3182 = vmatpush1.msra.mxu0 %v3181
      %3183 = vmatprep.subr.mxu0 0.0
      %v3184 = vand.u32 %v1461, 4294901760
      %v3185 = vsub.f32 %v1461, %v3184
      %v3186 = vand.u32 %v3185, 4294901760
      %v3187 = vsub.f32 %v3185, %v3186
      %v3188 = vand.u32 %v3187, 4294901760
      %3189 = vmatpush1.msra.mxu0 %v3188
      %3190 = vmatprep.subr.mxu0 0.0
      %v3191 = vand.u32 %v1467, 4294901760
      %v3192 = vsub.f32 %v1467, %v3191
      %v3193 = vand.u32 %v3192, 4294901760
      %v3194 = vsub.f32 %v3192, %v3193
      %v3195 = vand.u32 %v3194, 4294901760
      %3196 = vmatpush1.msra.mxu0 %v3195
      %3197 = vmatprep.subr.mxu0 0.0
      %v3198 = vand.u32 %v1473, 4294901760
      %v3199 = vsub.f32 %v1473, %v3198
      %v3200 = vand.u32 %v3199, 4294901760
      %v3201 = vsub.f32 %v3199, %v3200
      %v3202 = vand.u32 %v3201, 4294901760
      %3203 = vmatpush1.msra.mxu0 %v3202
      %3204 = vmatprep.subr.mxu0 0.0
      %v3205 = vand.u32 %v1479, 4294901760
      %v3206 = vsub.f32 %v1479, %v3205
      %v3207 = vand.u32 %v3206, 4294901760
      %v3208 = vsub.f32 %v3206, %v3207
      %v3209 = vand.u32 %v3208, 4294901760
      %3210 = vmatpush1.msra.mxu0 %v3209
      %3211 = vmatprep.subr.mxu0 0.0
      %v3212 = vand.u32 %v1485, 4294901760
      %v3213 = vsub.f32 %v1485, %v3212
      %v3214 = vand.u32 %v3213, 4294901760
      %v3215 = vsub.f32 %v3213, %v3214
      %v3216 = vand.u32 %v3215, 4294901760
      %3217 = vmatpush1.msra.mxu0 %v3216
      %3218 = vmatprep.subr.mxu0 0.0
      %v3219 = vand.u32 %v1491, 4294901760
      %v3220 = vsub.f32 %v1491, %v3219
      %v3221 = vand.u32 %v3220, 4294901760
      %v3222 = vsub.f32 %v3220, %v3221
      %v3223 = vand.u32 %v3222, 4294901760
      %3224 = vmatpush1.msra.mxu0 %v3223
      %3225 = vmatprep.subr.mxu0 0.0
      %v3226 = vand.u32 %v1497, 4294901760
      %v3227 = vsub.f32 %v1497, %v3226
      %v3228 = vand.u32 %v3227, 4294901760
      %v3229 = vsub.f32 %v3227, %v3228
      %v3230 = vand.u32 %v3229, 4294901760
      %3231 = vmatpush1.msra.mxu0 %v3230
      %3232 = vmatprep.subr.mxu0 0.0
      %v3233 = vand.u32 %v1503, 4294901760
      %v3234 = vsub.f32 %v1503, %v3233
      %v3235 = vand.u32 %v3234, 4294901760
      %v3236 = vsub.f32 %v3234, %v3235
      %v3237 = vand.u32 %v3236, 4294901760
      %3238 = vmatpush1.msra.mxu0 %v3237
      %3239 = vmatprep.subr.mxu0 0.0
      %v3240 = vand.u32 %v1509, 4294901760
      %v3241 = vsub.f32 %v1509, %v3240
      %v3242 = vand.u32 %v3241, 4294901760
      %v3243 = vsub.f32 %v3241, %v3242
      %v3244 = vand.u32 %v3243, 4294901760
      %3245 = vmatpush1.msra.mxu0 %v3244
      %3246 = vmatprep.subr.mxu0 0.0
      %v3247 = vand.u32 %v1515, 4294901760
      %v3248 = vsub.f32 %v1515, %v3247
      %v3249 = vand.u32 %v3248, 4294901760
      %v3250 = vsub.f32 %v3248, %v3249
      %v3251 = vand.u32 %v3250, 4294901760
      %3252 = vmatpush1.msra.mxu0 %v3251
      %3253 = vmatprep.subr.mxu0 0.0
      %v3254 = vand.u32 %v1521, 4294901760
      %v3255 = vsub.f32 %v1521, %v3254
      %v3256 = vand.u32 %v3255, 4294901760
      %v3257 = vsub.f32 %v3255, %v3256
      %v3258 = vand.u32 %v3257, 4294901760
      %3259 = vmatpush1.msra.mxu0 %v3258
      %3260 = vmatprep.subr.mxu0 0.0
      %v3261 = vand.u32 %v1527, 4294901760
      %v3262 = vsub.f32 %v1527, %v3261
      %v3263 = vand.u32 %v3262, 4294901760
      %v3264 = vsub.f32 %v3262, %v3263
      %v3265 = vand.u32 %v3264, 4294901760
      %3266 = vmatpush1.msra.mxu0 %v3265
      %3267 = vmatprep.subr.mxu0 0.0
      %3268 = vmatpush1.msra.mxu0 0.0
      %3269 = vmatprep.subr.mxu0 0.0
      %3270 = vmatpush1.msra.mxu0 0.0
      %3271 = vmatprep.subr.mxu0 0.0
      %3272 = vmatpush1.msra.mxu0 0.0
      %3273 = vmatprep.subr.mxu0 0.0
      %3274 = vmatpush1.msra.mxu0 0.0
      %3275 = vmatprep.subr.mxu0 0.0
      %3276 = vmatpush1.msra.mxu0 0.0
      %3277 = vmatprep.subr.mxu0 0.0
      %3278 = vmatpush1.msra.mxu0 0.0
      %3279 = vmatprep.subr.mxu0 0.0
      %3280 = vmatpush1.msra.mxu0 0.0
      %3281 = vmatprep.subr.mxu0 0.0
      %3282 = vmatpush1.msra.mxu0 0.0
      %3283 = vmatprep.subr.mxu0 0.0
      %3284 = vmatpush1.msra.mxu0 0.0
      %3285 = vmatprep.subr.mxu0 0.0
      %3286 = vmatpush1.msra.mxu0 0.0
      %3287 = vmatprep.subr.mxu0 0.0
      %3288 = vmatpush1.msra.mxu0 0.0
      %3289 = vmatprep.subr.mxu0 0.0
      %3290 = vmatpush1.msra.mxu0 0.0
      %3291 = vmatprep.subr.mxu0 0.0
      %3292 = vmatpush1.msra.mxu0 0.0
      %3293 = vmatprep.subr.mxu0 0.0
      %3294 = vmatpush1.msra.mxu0 0.0
      %3295 = vmatprep.subr.mxu0 0.0
      %3296 = vmatpush1.msra.mxu0 0.0
      %3297 = vmatprep.subr.mxu0 0.0
      %3298 = vmatpush1.msra.mxu0 0.0
      %3299 = vmatprep.mubr.f32.mxu0 0.0
      %v3300 = vand.u32 %v2963, 4294901760
      %3301 = vmatmul.mubr.f32.gmra.mrb[0].mxu0 %v3300
      %v3302 = vpop.f32.mrb[0].mxu0
      %v3303 = vadd.f32 %v3082, %v3302
      %v3304 = vpop.f32.mrb[0].mxu0
      %3305 = vmatprep.mubr.f32.mxu0 0.0
      %v3306 = vand.u32 %v2965, 4294901760
      %3307 = vmatmul.mubr.f32.gmra.mrb[0].mxu0 %v3306
      %v3308 = vpop.f32.mrb[0].mxu0
      %v3309 = vadd.f32 %v3092, %v3308
      %v3310 = vpop.f32.mrb[0].mxu0
      %3311 = vmatprep.mubr.f32.mxu0 0.0
      %v3312 = vand.u32 %v2967, 4294901760
      %3313 = vmatmul.mubr.f32.gmra.mrb[0].mxu0 %v3312
      %v3314 = vpop.f32.mrb[0].mxu0
      %v3315 = vadd.f32 %v3102, %v3314
      %v3316 = vpop.f32.mrb[0].mxu0
      %3317 = vmatprep.mubr.f32.mxu0 0.0
      %v3318 = vand.u32 %v2969, 4294901760
      %3319 = vmatmul.mubr.f32.gmra.mrb[0].mxu0 %v3318
      %v3320 = vpop.f32.mrb[0].mxu0
      %v3321 = vadd.f32 %v3112, %v3320
      %v3322 = vpop.f32.mrb[0].mxu0
      %3323 = vmatprep.mubr.f32.mxu0 0.0
      %v3324 = vand.u32 %v2971, 4294901760
      %3325 = vmatmul.mubr.f32.gmra.mrb[0].mxu0 %v3324
      %v3326 = vpop.f32.mrb[0].mxu0
      %v3327 = vadd.f32 %v3122, %v3326
      %v3328 = vpop.f32.mrb[0].mxu0
      %3329 = vmatprep.mubr.f32.mxu0 0.0
      %v3330 = vand.u32 %v2973, 4294901760
      %3331 = vmatmul.mubr.f32.gmra.mrb[0].mxu0 %v3330
      %v3332 = vpop.f32.mrb[0].mxu0
      %v3333 = vadd.f32 %v3132, %v3332
      %v3334 = vpop.f32.mrb[0].mxu0
      %3335 = vmatprep.mubr.f32.mxu0 0.0
      %v3336 = vand.u32 %v2975, 4294901760
      %3337 = vmatmul.mubr.f32.gmra.mrb[0].mxu0 %v3336
      %v3338 = vpop.f32.mrb[0].mxu0
      %v3339 = vadd.f32 %v3142, %v3338
      %v3340 = vpop.f32.mrb[0].mxu0
      %3341 = vmatprep.mubr.f32.mxu0 0.0
      %v3342 = vand.u32 %v2977, 4294901760
      %3343 = vmatmul.mubr.f32.gmra.mrb[0].mxu0 %v3342
      %v3344 = vpop.f32.mrb[0].mxu0
      %v3345 = vadd.f32 %v3152, %v3344
      %v3346 = vpop.f32.mrb[0].mxu0
      %3347 = vdwg.mxu0
      %3348 = vmatprep.subr.mxu0 0.0
      %v3349 = vand.u32 %v1437, 4294901760
      %v3350 = vsub.f32 %v1437, %v3349
      %3351 = vmatpush1.msra.mxu0 %v3350
      %3352 = vmatprep.subr.mxu0 0.0
      %v3353 = vand.u32 %v1443, 4294901760
      %v3354 = vsub.f32 %v1443, %v3353
      %3355 = vmatpush1.msra.mxu0 %v3354
      %3356 = vmatprep.subr.mxu0 0.0
      %v3357 = vand.u32 %v1449, 4294901760
      %v3358 = vsub.f32 %v1449, %v3357
      %3359 = vmatpush1.msra.mxu0 %v3358
      %3360 = vmatprep.subr.mxu0 0.0
      %v3361 = vand.u32 %v1455, 4294901760
      %v3362 = vsub.f32 %v1455, %v3361
      %3363 = vmatpush1.msra.mxu0 %v3362
      %3364 = vmatprep.subr.mxu0 0.0
      %v3365 = vand.u32 %v1461, 4294901760
      %v3366 = vsub.f32 %v1461, %v3365
      %3367 = vmatpush1.msra.mxu0 %v3366
      %3368 = vmatprep.subr.mxu0 0.0
      %v3369 = vand.u32 %v1467, 4294901760
      %v3370 = vsub.f32 %v1467, %v3369
      %3371 = vmatpush1.msra.mxu0 %v3370
      %3372 = vmatprep.subr.mxu0 0.0
      %v3373 = vand.u32 %v1473, 4294901760
      %v3374 = vsub.f32 %v1473, %v3373
      %3375 = vmatpush1.msra.mxu0 %v3374
      %3376 = vmatprep.subr.mxu0 0.0
      %v3377 = vand.u32 %v1479, 4294901760
      %v3378 = vsub.f32 %v1479, %v3377
      %3379 = vmatpush1.msra.mxu0 %v3378
      %3380 = vmatprep.subr.mxu0 0.0
      %v3381 = vand.u32 %v1485, 4294901760
      %v3382 = vsub.f32 %v1485, %v3381
      %3383 = vmatpush1.msra.mxu0 %v3382
      %3384 = vmatprep.subr.mxu0 0.0
      %v3385 = vand.u32 %v1491, 4294901760
      %v3386 = vsub.f32 %v1491, %v3385
      %3387 = vmatpush1.msra.mxu0 %v3386
      %3388 = vmatprep.subr.mxu0 0.0
      %v3389 = vand.u32 %v1497, 4294901760
      %v3390 = vsub.f32 %v1497, %v3389
      %3391 = vmatpush1.msra.mxu0 %v3390
      %3392 = vmatprep.subr.mxu0 0.0
      %v3393 = vand.u32 %v1503, 4294901760
      %v3394 = vsub.f32 %v1503, %v3393
      %3395 = vmatpush1.msra.mxu0 %v3394
      %3396 = vmatprep.subr.mxu0 0.0
      %v3397 = vand.u32 %v1509, 4294901760
      %v3398 = vsub.f32 %v1509, %v3397
      %3399 = vmatpush1.msra.mxu0 %v3398
      %3400 = vmatprep.subr.mxu0 0.0
      %v3401 = vand.u32 %v1515, 4294901760
      %v3402 = vsub.f32 %v1515, %v3401
      %3403 = vmatpush1.msra.mxu0 %v3402
      %3404 = vmatprep.subr.mxu0 0.0
      %v3405 = vand.u32 %v1521, 4294901760
      %v3406 = vsub.f32 %v1521, %v3405
      %3407 = vmatpush1.msra.mxu0 %v3406
      %3408 = vmatprep.subr.mxu0 0.0
      %v3409 = vand.u32 %v1527, 4294901760
      %v3410 = vsub.f32 %v1527, %v3409
      %3411 = vmatpush1.msra.mxu0 %v3410
      %3412 = vmatprep.subr.mxu0 0.0
      %3413 = vmatpush1.msra.mxu0 0.0
      %3414 = vmatprep.subr.mxu0 0.0
      %3415 = vmatpush1.msra.mxu0 0.0
      %3416 = vmatprep.subr.mxu0 0.0
      %3417 = vmatpush1.msra.mxu0 0.0
      %3418 = vmatprep.subr.mxu0 0.0
      %3419 = vmatpush1.msra.mxu0 0.0
      %3420 = vmatprep.subr.mxu0 0.0
      %3421 = vmatpush1.msra.mxu0 0.0
      %3422 = vmatprep.subr.mxu0 0.0
      %3423 = vmatpush1.msra.mxu0 0.0
      %3424 = vmatprep.subr.mxu0 0.0
      %3425 = vmatpush1.msra.mxu0 0.0
      %3426 = vmatprep.subr.mxu0 0.0
      %3427 = vmatpush1.msra.mxu0 0.0
      %3428 = vmatprep.subr.mxu0 0.0
      %3429 = vmatpush1.msra.mxu0 0.0
      %3430 = vmatprep.subr.mxu0 0.0
      %3431 = vmatpush1.msra.mxu0 0.0
      %3432 = vmatprep.subr.mxu0 0.0
      %3433 = vmatpush1.msra.mxu0 0.0
      %3434 = vmatprep.subr.mxu0 0.0
      %3435 = vmatpush1.msra.mxu0 0.0
      %3436 = vmatprep.subr.mxu0 0.0
      %3437 = vmatpush1.msra.mxu0 0.0
      %3438 = vmatprep.subr.mxu0 0.0
      %3439 = vmatpush1.msra.mxu0 0.0
      %3440 = vmatprep.subr.mxu0 0.0
      %3441 = vmatpush1.msra.mxu0 0.0
      %3442 = vmatprep.subr.mxu0 0.0
      %3443 = vmatpush1.msra.mxu0 0.0
      %3444 = vmatprep.mubr.f32.mxu0 0.0
      %v3445 = vand.u32 %v2963, 4294901760
      %v3446 = vsub.f32 %v2963, %v3445
      %3447 = vmatmul.mubr.f32.gmra.mrb[0].mxu0 %v3446
      %v3448 = vpop.f32.mrb[0].mxu0
      %v3449 = vadd.f32 %v3303, %v3448
      %v3450 = vpop.f32.mrb[0].mxu0
      %3451 = vmatprep.mubr.f32.mxu0 0.0
      %v3452 = vand.u32 %v2965, 4294901760
      %v3453 = vsub.f32 %v2965, %v3452
      %3454 = vmatmul.mubr.f32.gmra.mrb[0].mxu0 %v3453
      %v3455 = vpop.f32.mrb[0].mxu0
      %v3456 = vadd.f32 %v3309, %v3455
      %v3457 = vpop.f32.mrb[0].mxu0
      %3458 = vmatprep.mubr.f32.mxu0 0.0
      %v3459 = vand.u32 %v2967, 4294901760
      %v3460 = vsub.f32 %v2967, %v3459
      %3461 = vmatmul.mubr.f32.gmra.mrb[0].mxu0 %v3460
      %v3462 = vpop.f32.mrb[0].mxu0
      %v3463 = vadd.f32 %v3315, %v3462
      %v3464 = vpop.f32.mrb[0].mxu0
      %3465 = vmatprep.mubr.f32.mxu0 0.0
      %v3466 = vand.u32 %v2969, 4294901760
      %v3467 = vsub.f32 %v2969, %v3466
      %3468 = vmatmul.mubr.f32.gmra.mrb[0].mxu0 %v3467
      %v3469 = vpop.f32.mrb[0].mxu0
      %v3470 = vadd.f32 %v3321, %v3469
      %v3471 = vpop.f32.mrb[0].mxu0
      %3472 = vmatprep.mubr.f32.mxu0 0.0
      %v3473 = vand.u32 %v2971, 4294901760
      %v3474 = vsub.f32 %v2971, %v3473
      %3475 = vmatmul.mubr.f32.gmra.mrb[0].mxu0 %v3474
      %v3476 = vpop.f32.mrb[0].mxu0
      %v3477 = vadd.f32 %v3327, %v3476
      %v3478 = vpop.f32.mrb[0].mxu0
      %3479 = vmatprep.mubr.f32.mxu0 0.0
      %v3480 = vand.u32 %v2973, 4294901760
      %v3481 = vsub.f32 %v2973, %v3480
      %3482 = vmatmul.mubr.f32.gmra.mrb[0].mxu0 %v3481
      %v3483 = vpop.f32.mrb[0].mxu0
      %v3484 = vadd.f32 %v3333, %v3483
      %v3485 = vpop.f32.mrb[0].mxu0
      %3486 = vmatprep.mubr.f32.mxu0 0.0
      %v3487 = vand.u32 %v2975, 4294901760
      %v3488 = vsub.f32 %v2975, %v3487
      %3489 = vmatmul.mubr.f32.gmra.mrb[0].mxu0 %v3488
      %v3490 = vpop.f32.mrb[0].mxu0
      %v3491 = vadd.f32 %v3339, %v3490
      %v3492 = vpop.f32.mrb[0].mxu0
      %3493 = vmatprep.mubr.f32.mxu0 0.0
      %v3494 = vand.u32 %v2977, 4294901760
      %v3495 = vsub.f32 %v2977, %v3494
      %3496 = vmatmul.mubr.f32.gmra.mrb[0].mxu0 %v3495
      %v3497 = vpop.f32.mrb[0].mxu0
      %v3498 = vadd.f32 %v3345, %v3497
      %v3499 = vpop.f32.mrb[0].mxu0
      %3500 = vdwg.mxu0
      %3501 = vmatprep.subr.mxu0 0.0
      %v3502 = vand.u32 %v1437, 4294901760
      %3503 = vmatpush1.msra.mxu0 %v3502
      %3504 = vmatprep.subr.mxu0 0.0
      %v3505 = vand.u32 %v1443, 4294901760
      %3506 = vmatpush1.msra.mxu0 %v3505
      %3507 = vmatprep.subr.mxu0 0.0
      %v3508 = vand.u32 %v1449, 4294901760
      %3509 = vmatpush1.msra.mxu0 %v3508
      %3510 = vmatprep.subr.mxu0 0.0
      %v3511 = vand.u32 %v1455, 4294901760
      %3512 = vmatpush1.msra.mxu0 %v3511
      %3513 = vmatprep.subr.mxu0 0.0
      %v3514 = vand.u32 %v1461, 4294901760
      %3515 = vmatpush1.msra.mxu0 %v3514
      %3516 = vmatprep.subr.mxu0 0.0
      %v3517 = vand.u32 %v1467, 4294901760
      %3518 = vmatpush1.msra.mxu0 %v3517
      %3519 = vmatprep.subr.mxu0 0.0
      %v3520 = vand.u32 %v1473, 4294901760
      %3521 = vmatpush1.msra.mxu0 %v3520
      %3522 = vmatprep.subr.mxu0 0.0
      %v3523 = vand.u32 %v1479, 4294901760
      %3524 = vmatpush1.msra.mxu0 %v3523
      %3525 = vmatprep.subr.mxu0 0.0
      %v3526 = vand.u32 %v1485, 4294901760
      %3527 = vmatpush1.msra.mxu0 %v3526
      %3528 = vmatprep.subr.mxu0 0.0
      %v3529 = vand.u32 %v1491, 4294901760
      %3530 = vmatpush1.msra.mxu0 %v3529
      %3531 = vmatprep.subr.mxu0 0.0
      %v3532 = vand.u32 %v1497, 4294901760
      %3533 = vmatpush1.msra.mxu0 %v3532
      %3534 = vmatprep.subr.mxu0 0.0
      %v3535 = vand.u32 %v1503, 4294901760
      %3536 = vmatpush1.msra.mxu0 %v3535
      %3537 = vmatprep.subr.mxu0 0.0
      %v3538 = vand.u32 %v1509, 4294901760
      %3539 = vmatpush1.msra.mxu0 %v3538
      %3540 = vmatprep.subr.mxu0 0.0
      %v3541 = vand.u32 %v1515, 4294901760
      %3542 = vmatpush1.msra.mxu0 %v3541
      %3543 = vmatprep.subr.mxu0 0.0
      %v3544 = vand.u32 %v1521, 4294901760
      %3545 = vmatpush1.msra.mxu0 %v3544
      %3546 = vmatprep.subr.mxu0 0.0
      %v3547 = vand.u32 %v1527, 4294901760
      %3548 = vmatpush1.msra.mxu0 %v3547
      %3549 = vmatprep.subr.mxu0 0.0
      %3550 = vmatpush1.msra.mxu0 0.0
      %3551 = vmatprep.subr.mxu0 0.0
      %3552 = vmatpush1.msra.mxu0 0.0
      %3553 = vmatprep.subr.mxu0 0.0
      %3554 = vmatpush1.msra.mxu0 0.0
      %3555 = vmatprep.subr.mxu0 0.0
      %3556 = vmatpush1.msra.mxu0 0.0
      %3557 = vmatprep.subr.mxu0 0.0
      %3558 = vmatpush1.msra.mxu0 0.0
      %3559 = vmatprep.subr.mxu0 0.0
      %3560 = vmatpush1.msra.mxu0 0.0
      %3561 = vmatprep.subr.mxu0 0.0
      %3562 = vmatpush1.msra.mxu0 0.0
      %3563 = vmatprep.subr.mxu0 0.0
      %3564 = vmatpush1.msra.mxu0 0.0
      %3565 = vmatprep.subr.mxu0 0.0
      %3566 = vmatpush1.msra.mxu0 0.0
      %3567 = vmatprep.subr.mxu0 0.0
      %3568 = vmatpush1.msra.mxu0 0.0
      %3569 = vmatprep.subr.mxu0 0.0
      %3570 = vmatpush1.msra.mxu0 0.0
      %3571 = vmatprep.subr.mxu0 0.0
      %3572 = vmatpush1.msra.mxu0 0.0
      %3573 = vmatprep.subr.mxu0 0.0
      %3574 = vmatpush1.msra.mxu0 0.0
      %3575 = vmatprep.subr.mxu0 0.0
      %3576 = vmatpush1.msra.mxu0 0.0
      %3577 = vmatprep.subr.mxu0 0.0
      %3578 = vmatpush1.msra.mxu0 0.0
      %3579 = vmatprep.subr.mxu0 0.0
      %3580 = vmatpush1.msra.mxu0 0.0
      %3581 = vmatprep.mubr.f32.mxu0 0.0
      %v3582 = vand.u32 %v2963, 4294901760
      %v3583 = vsub.f32 %v2963, %v3582
      %v3584 = vand.u32 %v3583, 4294901760
      %3585 = vmatmul.mubr.f32.gmra.mrb[0].mxu0 %v3584
      %v3586 = vpop.f32.mrb[0].mxu0
      %v3587 = vadd.f32 %v3449, %v3586
      %v3588 = vpop.f32.mrb[0].mxu0
      %3589 = vmatprep.mubr.f32.mxu0 0.0
      %v3590 = vand.u32 %v2965, 4294901760
      %v3591 = vsub.f32 %v2965, %v3590
      %v3592 = vand.u32 %v3591, 4294901760
      %3593 = vmatmul.mubr.f32.gmra.mrb[0].mxu0 %v3592
      %v3594 = vpop.f32.mrb[0].mxu0
      %v3595 = vadd.f32 %v3456, %v3594
      %v3596 = vpop.f32.mrb[0].mxu0
      %3597 = vmatprep.mubr.f32.mxu0 0.0
      %v3598 = vand.u32 %v2967, 4294901760
      %v3599 = vsub.f32 %v2967, %v3598
      %v3600 = vand.u32 %v3599, 4294901760
      %3601 = vmatmul.mubr.f32.gmra.mrb[0].mxu0 %v3600
      %v3602 = vpop.f32.mrb[0].mxu0
      %v3603 = vadd.f32 %v3463, %v3602
      %v3604 = vpop.f32.mrb[0].mxu0
      %3605 = vmatprep.mubr.f32.mxu0 0.0
      %v3606 = vand.u32 %v2969, 4294901760
      %v3607 = vsub.f32 %v2969, %v3606
      %v3608 = vand.u32 %v3607, 4294901760
      %3609 = vmatmul.mubr.f32.gmra.mrb[0].mxu0 %v3608
      %v3610 = vpop.f32.mrb[0].mxu0
      %v3611 = vadd.f32 %v3470, %v3610
      %v3612 = vpop.f32.mrb[0].mxu0
      %3613 = vmatprep.mubr.f32.mxu0 0.0
      %v3614 = vand.u32 %v2971, 4294901760
      %v3615 = vsub.f32 %v2971, %v3614
      %v3616 = vand.u32 %v3615, 4294901760
      %3617 = vmatmul.mubr.f32.gmra.mrb[0].mxu0 %v3616
      %v3618 = vpop.f32.mrb[0].mxu0
      %v3619 = vadd.f32 %v3477, %v3618
      %v3620 = vpop.f32.mrb[0].mxu0
      %3621 = vmatprep.mubr.f32.mxu0 0.0
      %v3622 = vand.u32 %v2973, 4294901760
      %v3623 = vsub.f32 %v2973, %v3622
      %v3624 = vand.u32 %v3623, 4294901760
      %3625 = vmatmul.mubr.f32.gmra.mrb[0].mxu0 %v3624
      %v3626 = vpop.f32.mrb[0].mxu0
      %v3627 = vadd.f32 %v3484, %v3626
      %v3628 = vpop.f32.mrb[0].mxu0
      %3629 = vmatprep.mubr.f32.mxu0 0.0
      %v3630 = vand.u32 %v2975, 4294901760
      %v3631 = vsub.f32 %v2975, %v3630
      %v3632 = vand.u32 %v3631, 4294901760
      %3633 = vmatmul.mubr.f32.gmra.mrb[0].mxu0 %v3632
      %v3634 = vpop.f32.mrb[0].mxu0
      %v3635 = vadd.f32 %v3491, %v3634
      %v3636 = vpop.f32.mrb[0].mxu0
      %3637 = vmatprep.mubr.f32.mxu0 0.0
      %v3638 = vand.u32 %v2977, 4294901760
      %v3639 = vsub.f32 %v2977, %v3638
      %v3640 = vand.u32 %v3639, 4294901760
      %3641 = vmatmul.mubr.f32.gmra.mrb[0].mxu0 %v3640
      %v3642 = vpop.f32.mrb[0].mxu0
      %v3643 = vadd.f32 %v3498, %v3642
      %v3644 = vpop.f32.mrb[0].mxu0
      %3645 = vdwg.mxu0
      %3646 = vmatprep.subr.mxu0 0.0
      %v3647 = vand.u32 %v1437, 4294901760
      %v3648 = vsub.f32 %v1437, %v3647
      %v3649 = vand.u32 %v3648, 4294901760
      %3650 = vmatpush1.msra.mxu0 %v3649
      %3651 = vmatprep.subr.mxu0 0.0
      %v3652 = vand.u32 %v1443, 4294901760
      %v3653 = vsub.f32 %v1443, %v3652
      %v3654 = vand.u32 %v3653, 4294901760
      %3655 = vmatpush1.msra.mxu0 %v3654
      %3656 = vmatprep.subr.mxu0 0.0
      %v3657 = vand.u32 %v1449, 4294901760
      %v3658 = vsub.f32 %v1449, %v3657
      %v3659 = vand.u32 %v3658, 4294901760
      %3660 = vmatpush1.msra.mxu0 %v3659
      %3661 = vmatprep.subr.mxu0 0.0
      %v3662 = vand.u32 %v1455, 4294901760
      %v3663 = vsub.f32 %v1455, %v3662
      %v3664 = vand.u32 %v3663, 4294901760
      %3665 = vmatpush1.msra.mxu0 %v3664
      %3666 = vmatprep.subr.mxu0 0.0
      %v3667 = vand.u32 %v1461, 4294901760
      %v3668 = vsub.f32 %v1461, %v3667
      %v3669 = vand.u32 %v3668, 4294901760
      %3670 = vmatpush1.msra.mxu0 %v3669
      %3671 = vmatprep.subr.mxu0 0.0
      %v3672 = vand.u32 %v1467, 4294901760
      %v3673 = vsub.f32 %v1467, %v3672
      %v3674 = vand.u32 %v3673, 4294901760
      %3675 = vmatpush1.msra.mxu0 %v3674
      %3676 = vmatprep.subr.mxu0 0.0
      %v3677 = vand.u32 %v1473, 4294901760
      %v3678 = vsub.f32 %v1473, %v3677
      %v3679 = vand.u32 %v3678, 4294901760
      %3680 = vmatpush1.msra.mxu0 %v3679
      %3681 = vmatprep.subr.mxu0 0.0
      %v3682 = vand.u32 %v1479, 4294901760
      %v3683 = vsub.f32 %v1479, %v3682
      %v3684 = vand.u32 %v3683, 4294901760
      %3685 = vmatpush1.msra.mxu0 %v3684
      %3686 = vmatprep.subr.mxu0 0.0
      %v3687 = vand.u32 %v1485, 4294901760
      %v3688 = vsub.f32 %v1485, %v3687
      %v3689 = vand.u32 %v3688, 4294901760
      %3690 = vmatpush1.msra.mxu0 %v3689
      %3691 = vmatprep.subr.mxu0 0.0
      %v3692 = vand.u32 %v1491, 4294901760
      %v3693 = vsub.f32 %v1491, %v3692
      %v3694 = vand.u32 %v3693, 4294901760
      %3695 = vmatpush1.msra.mxu0 %v3694
      %3696 = vmatprep.subr.mxu0 0.0
      %v3697 = vand.u32 %v1497, 4294901760
      %v3698 = vsub.f32 %v1497, %v3697
      %v3699 = vand.u32 %v3698, 4294901760
      %3700 = vmatpush1.msra.mxu0 %v3699
      %3701 = vmatprep.subr.mxu0 0.0
      %v3702 = vand.u32 %v1503, 4294901760
      %v3703 = vsub.f32 %v1503, %v3702
      %v3704 = vand.u32 %v3703, 4294901760
      %3705 = vmatpush1.msra.mxu0 %v3704
      %3706 = vmatprep.subr.mxu0 0.0
      %v3707 = vand.u32 %v1509, 4294901760
      %v3708 = vsub.f32 %v1509, %v3707
      %v3709 = vand.u32 %v3708, 4294901760
      %3710 = vmatpush1.msra.mxu0 %v3709
      %3711 = vmatprep.subr.mxu0 0.0
      %v3712 = vand.u32 %v1515, 4294901760
      %v3713 = vsub.f32 %v1515, %v3712
      %v3714 = vand.u32 %v3713, 4294901760
      %3715 = vmatpush1.msra.mxu0 %v3714
      %3716 = vmatprep.subr.mxu0 0.0
      %v3717 = vand.u32 %v1521, 4294901760
      %v3718 = vsub.f32 %v1521, %v3717
      %v3719 = vand.u32 %v3718, 4294901760
      %3720 = vmatpush1.msra.mxu0 %v3719
      %3721 = vmatprep.subr.mxu0 0.0
      %v3722 = vand.u32 %v1527, 4294901760
      %v3723 = vsub.f32 %v1527, %v3722
      %v3724 = vand.u32 %v3723, 4294901760
      %3725 = vmatpush1.msra.mxu0 %v3724
      %3726 = vmatprep.subr.mxu0 0.0
      %3727 = vmatpush1.msra.mxu0 0.0
      %3728 = vmatprep.subr.mxu0 0.0
      %3729 = vmatpush1.msra.mxu0 0.0
      %3730 = vmatprep.subr.mxu0 0.0
      %3731 = vmatpush1.msra.mxu0 0.0
      %3732 = vmatprep.subr.mxu0 0.0
      %3733 = vmatpush1.msra.mxu0 0.0
      %3734 = vmatprep.subr.mxu0 0.0
      %3735 = vmatpush1.msra.mxu0 0.0
      %3736 = vmatprep.subr.mxu0 0.0
      %3737 = vmatpush1.msra.mxu0 0.0
      %3738 = vmatprep.subr.mxu0 0.0
      %3739 = vmatpush1.msra.mxu0 0.0
      %3740 = vmatprep.subr.mxu0 0.0
      %3741 = vmatpush1.msra.mxu0 0.0
      %3742 = vmatprep.subr.mxu0 0.0
      %3743 = vmatpush1.msra.mxu0 0.0
      %3744 = vmatprep.subr.mxu0 0.0
      %3745 = vmatpush1.msra.mxu0 0.0
      %3746 = vmatprep.subr.mxu0 0.0
      %3747 = vmatpush1.msra.mxu0 0.0
      %3748 = vmatprep.subr.mxu0 0.0
      %3749 = vmatpush1.msra.mxu0 0.0
      %3750 = vmatprep.subr.mxu0 0.0
      %3751 = vmatpush1.msra.mxu0 0.0
      %3752 = vmatprep.subr.mxu0 0.0
      %3753 = vmatpush1.msra.mxu0 0.0
      %3754 = vmatprep.subr.mxu0 0.0
      %3755 = vmatpush1.msra.mxu0 0.0
      %3756 = vmatprep.subr.mxu0 0.0
      %3757 = vmatpush1.msra.mxu0 0.0
      %3758 = vmatprep.mubr.f32.mxu0 0.0
      %v3759 = vand.u32 %v2963, 4294901760
      %3760 = vmatmul.mubr.f32.gmra.mrb[0].mxu0 %v3759
      %v3761 = vpop.f32.mrb[0].mxu0
      %v3762 = vadd.f32 %v3587, %v3761
      %v3763 = vpop.f32.mrb[0].mxu0
      %3764 = vmatprep.mubr.f32.mxu0 0.0
      %v3765 = vand.u32 %v2965, 4294901760
      %3766 = vmatmul.mubr.f32.gmra.mrb[0].mxu0 %v3765
      %v3767 = vpop.f32.mrb[0].mxu0
      %v3768 = vadd.f32 %v3595, %v3767
      %v3769 = vpop.f32.mrb[0].mxu0
      %3770 = vmatprep.mubr.f32.mxu0 0.0
      %v3771 = vand.u32 %v2967, 4294901760
      %3772 = vmatmul.mubr.f32.gmra.mrb[0].mxu0 %v3771
      %v3773 = vpop.f32.mrb[0].mxu0
      %v3774 = vadd.f32 %v3603, %v3773
      %v3775 = vpop.f32.mrb[0].mxu0
      %3776 = vmatprep.mubr.f32.mxu0 0.0
      %v3777 = vand.u32 %v2969, 4294901760
      %3778 = vmatmul.mubr.f32.gmra.mrb[0].mxu0 %v3777
      %v3779 = vpop.f32.mrb[0].mxu0
      %v3780 = vadd.f32 %v3611, %v3779
      %v3781 = vpop.f32.mrb[0].mxu0
      %3782 = vmatprep.mubr.f32.mxu0 0.0
      %v3783 = vand.u32 %v2971, 4294901760
      %3784 = vmatmul.mubr.f32.gmra.mrb[0].mxu0 %v3783
      %v3785 = vpop.f32.mrb[0].mxu0
      %v3786 = vadd.f32 %v3619, %v3785
      %v3787 = vpop.f32.mrb[0].mxu0
      %3788 = vmatprep.mubr.f32.mxu0 0.0
      %v3789 = vand.u32 %v2973, 4294901760
      %3790 = vmatmul.mubr.f32.gmra.mrb[0].mxu0 %v3789
      %v3791 = vpop.f32.mrb[0].mxu0
      %v3792 = vadd.f32 %v3627, %v3791
      %v3793 = vpop.f32.mrb[0].mxu0
      %3794 = vmatprep.mubr.f32.mxu0 0.0
      %v3795 = vand.u32 %v2975, 4294901760
      %3796 = vmatmul.mubr.f32.gmra.mrb[0].mxu0 %v3795
      %v3797 = vpop.f32.mrb[0].mxu0
      %v3798 = vadd.f32 %v3635, %v3797
      %v3799 = vpop.f32.mrb[0].mxu0
      %3800 = vmatprep.mubr.f32.mxu0 0.0
      %v3801 = vand.u32 %v2977, 4294901760
      %3802 = vmatmul.mubr.f32.gmra.mrb[0].mxu0 %v3801
      %v3803 = vpop.f32.mrb[0].mxu0
      %v3804 = vadd.f32 %v3643, %v3803
      %v3805 = vpop.f32.mrb[0].mxu0
      %3806 = vdwg.mxu0
      %3807 = vmatprep.subr.mxu0 0.0
      %v3808 = vand.u32 %v1437, 4294901760
      %3809 = vmatpush1.msra.mxu0 %v3808
      %3810 = vmatprep.subr.mxu0 0.0
      %v3811 = vand.u32 %v1443, 4294901760
      %3812 = vmatpush1.msra.mxu0 %v3811
      %3813 = vmatprep.subr.mxu0 0.0
      %v3814 = vand.u32 %v1449, 4294901760
      %3815 = vmatpush1.msra.mxu0 %v3814
      %3816 = vmatprep.subr.mxu0 0.0
      %v3817 = vand.u32 %v1455, 4294901760
      %3818 = vmatpush1.msra.mxu0 %v3817
      %3819 = vmatprep.subr.mxu0 0.0
      %v3820 = vand.u32 %v1461, 4294901760
      %3821 = vmatpush1.msra.mxu0 %v3820
      %3822 = vmatprep.subr.mxu0 0.0
      %v3823 = vand.u32 %v1467, 4294901760
      %3824 = vmatpush1.msra.mxu0 %v3823
      %3825 = vmatprep.subr.mxu0 0.0
      %v3826 = vand.u32 %v1473, 4294901760
      %3827 = vmatpush1.msra.mxu0 %v3826
      %3828 = vmatprep.subr.mxu0 0.0
      %v3829 = vand.u32 %v1479, 4294901760
      %3830 = vmatpush1.msra.mxu0 %v3829
      %3831 = vmatprep.subr.mxu0 0.0
      %v3832 = vand.u32 %v1485, 4294901760
      %3833 = vmatpush1.msra.mxu0 %v3832
      %3834 = vmatprep.subr.mxu0 0.0
      %v3835 = vand.u32 %v1491, 4294901760
      %3836 = vmatpush1.msra.mxu0 %v3835
      %3837 = vmatprep.subr.mxu0 0.0
      %v3838 = vand.u32 %v1497, 4294901760
      %3839 = vmatpush1.msra.mxu0 %v3838
      %3840 = vmatprep.subr.mxu0 0.0
      %v3841 = vand.u32 %v1503, 4294901760
      %3842 = vmatpush1.msra.mxu0 %v3841
      %3843 = vmatprep.subr.mxu0 0.0
      %v3844 = vand.u32 %v1509, 4294901760
      %3845 = vmatpush1.msra.mxu0 %v3844
      %3846 = vmatprep.subr.mxu0 0.0
      %v3847 = vand.u32 %v1515, 4294901760
      %3848 = vmatpush1.msra.mxu0 %v3847
      %3849 = vmatprep.subr.mxu0 0.0
      %v3850 = vand.u32 %v1521, 4294901760
      %3851 = vmatpush1.msra.mxu0 %v3850
      %3852 = vmatprep.subr.mxu0 0.0
      %v3853 = vand.u32 %v1527, 4294901760
      %3854 = vmatpush1.msra.mxu0 %v3853
      %3855 = vmatprep.subr.mxu0 0.0
      %3856 = vmatpush1.msra.mxu0 0.0
      %3857 = vmatprep.subr.mxu0 0.0
      %3858 = vmatpush1.msra.mxu0 0.0
      %3859 = vmatprep.subr.mxu0 0.0
      %3860 = vmatpush1.msra.mxu0 0.0
      %3861 = vmatprep.subr.mxu0 0.0
      %3862 = vmatpush1.msra.mxu0 0.0
      %3863 = vmatprep.subr.mxu0 0.0
      %3864 = vmatpush1.msra.mxu0 0.0
      %3865 = vmatprep.subr.mxu0 0.0
      %3866 = vmatpush1.msra.mxu0 0.0
      %3867 = vmatprep.subr.mxu0 0.0
      %3868 = vmatpush1.msra.mxu0 0.0
      %3869 = vmatprep.subr.mxu0 0.0
      %3870 = vmatpush1.msra.mxu0 0.0
      %3871 = vmatprep.subr.mxu0 0.0
      %3872 = vmatpush1.msra.mxu0 0.0
      %3873 = vmatprep.subr.mxu0 0.0
      %3874 = vmatpush1.msra.mxu0 0.0
      %3875 = vmatprep.subr.mxu0 0.0
      %3876 = vmatpush1.msra.mxu0 0.0
      %3877 = vmatprep.subr.mxu0 0.0
      %3878 = vmatpush1.msra.mxu0 0.0
      %3879 = vmatprep.subr.mxu0 0.0
      %3880 = vmatpush1.msra.mxu0 0.0
      %3881 = vmatprep.subr.mxu0 0.0
      %3882 = vmatpush1.msra.mxu0 0.0
      %3883 = vmatprep.subr.mxu0 0.0
      %3884 = vmatpush1.msra.mxu0 0.0
      %3885 = vmatprep.subr.mxu0 0.0
      %3886 = vmatpush1.msra.mxu0 0.0
      %3887 = vmatprep.mubr.f32.mxu0 0.0
      %v3888 = vand.u32 %v2963, 4294901760
      %3889 = vmatmul.mubr.f32.gmra.mrb[0].mxu0 %v3888
      %v3890 = vpop.f32.mrb[0].mxu0
      %v3891 = vadd.f32 %v3762, %v3890
      %v3892 = vpop.f32.mrb[0].mxu0
      %3893 = vmatprep.mubr.f32.mxu0 0.0
      %v3894 = vand.u32 %v2965, 4294901760
      %3895 = vmatmul.mubr.f32.gmra.mrb[0].mxu0 %v3894
      %v3896 = vpop.f32.mrb[0].mxu0
      %v3897 = vadd.f32 %v3768, %v3896
      %v3898 = vpop.f32.mrb[0].mxu0
      %3899 = vmatprep.mubr.f32.mxu0 0.0
      %v3900 = vand.u32 %v2967, 4294901760
      %3901 = vmatmul.mubr.f32.gmra.mrb[0].mxu0 %v3900
      %v3902 = vpop.f32.mrb[0].mxu0
      %v3903 = vadd.f32 %v3774, %v3902
      %v3904 = vpop.f32.mrb[0].mxu0
      %3905 = vmatprep.mubr.f32.mxu0 0.0
      %v3906 = vand.u32 %v2969, 4294901760
      %3907 = vmatmul.mubr.f32.gmra.mrb[0].mxu0 %v3906
      %v3908 = vpop.f32.mrb[0].mxu0
      %v3909 = vadd.f32 %v3780, %v3908
      %v3910 = vpop.f32.mrb[0].mxu0
      %3911 = vmatprep.mubr.f32.mxu0 0.0
      %v3912 = vand.u32 %v2971, 4294901760
      %3913 = vmatmul.mubr.f32.gmra.mrb[0].mxu0 %v3912
      %v3914 = vpop.f32.mrb[0].mxu0
      %v3915 = vadd.f32 %v3786, %v3914
      %v3916 = vpop.f32.mrb[0].mxu0
      %3917 = vmatprep.mubr.f32.mxu0 0.0
      %v3918 = vand.u32 %v2973, 4294901760
      %3919 = vmatmul.mubr.f32.gmra.mrb[0].mxu0 %v3918
      %v3920 = vpop.f32.mrb[0].mxu0
      %v3921 = vadd.f32 %v3792, %v3920
      %v3922 = vpop.f32.mrb[0].mxu0
      %3923 = vmatprep.mubr.f32.mxu0 0.0
      %v3924 = vand.u32 %v2975, 4294901760
      %3925 = vmatmul.mubr.f32.gmra.mrb[0].mxu0 %v3924
      %v3926 = vpop.f32.mrb[0].mxu0
      %v3927 = vadd.f32 %v3798, %v3926
      %v3928 = vpop.f32.mrb[0].mxu0
      %3929 = vmatprep.mubr.f32.mxu0 0.0
      %v3930 = vand.u32 %v2977, 4294901760
      %3931 = vmatmul.mubr.f32.gmra.mrb[0].mxu0 %v3930
      %v3932 = vpop.f32.mrb[0].mxu0
      %v3933 = vadd.f32 %v3804, %v3932
      %v3934 = vpop.f32.mrb[0].mxu0
      %3935 = vdwg.mxu0
      %v3936 = vrcp.pop %v2979
      %v3937 = vmul.f32 %v3891, %v3936
      %v3938 = vrcp.pop %v2981
      %v3939 = vmul.f32 %v3897, %v3938
      %v3940 = vrcp.pop %v2983
      %v3941 = vmul.f32 %v3903, %v3940
      %v3942 = vrcp.pop %v2985
      %v3943 = vmul.f32 %v3909, %v3942
      %v3944 = vrcp.pop %v2987
      %v3945 = vmul.f32 %v3915, %v3944
      %v3946 = vrcp.pop %v2989
      %v3947 = vmul.f32 %v3921, %v3946
      %v3948 = vrcp.pop %v2991
      %v3949 = vmul.f32 %v3927, %v3948
      %v3950 = vrcp.pop %v2993
      %v3951 = vmul.f32 %v3933, %v3950
      %v3953 = vlaneseq
      %v3954 = vshrl.u32 %v3953, 7
      %v3955 = vsub.s32 0, %v3954
      %v3956 = vrot.slane %v2861, %v3955
      %v3958 = vadd.f32 %v3937, %v3956
      %v3959 = vadd.f32 %v3939, %v3956
      %v3960 = vadd.f32 %v3941, %v3956
      %v3961 = vadd.f32 %v3943, %v3956
      %v3962 = vadd.f32 %v3945, %v3956
      %v3963 = vadd.f32 %v3947, %v3956
      %v3964 = vadd.f32 %v3949, %v3956
      %v3965 = vadd.f32 %v3951, %v3956
      %vm3966 = vcmask 130048
      %3967 = vst.msk [vmem:[%s329] sm:$0xff] %vm3966, %v3958
      %3968 = vst.msk [vmem:[%s329 + $0x8] sm:$0xff] %vm3966, %v3959
      %3969 = vst.msk [vmem:[%s329 + $0x10] sm:$0xff] %vm3966, %v3960
      %3970 = vst.msk [vmem:[%s329 + $0x18] sm:$0xff] %vm3966, %v3961
      %3971 = vst.msk [vmem:[%s329 + $0x20] sm:$0xff] %vm3966, %v3962
      %3972 = vst.msk [vmem:[%s329 + $0x28] sm:$0xff] %vm3966, %v3963
      %3973 = vst.msk [vmem:[%s329 + $0x30] sm:$0xff] %vm3966, %v3964
      %3974 = vst.msk [vmem:[%s329 + $0x38] sm:$0xff] %vm3966, %v3965
      %3975 = vset.pattern.permute.xlu0 1
      %3976 = vperm.xlu0 %3975, %v2800
      %v3977 = vpop.permute.xlu0 %3976
      %3979 = vset.pattern.permute.xlu0 1
      %3980 = vperm.xlu0 %3979, %v2806
      %v3981 = vpop.permute.xlu0 %3980
      %3983 = vset.pattern.permute.xlu0 1
      %3984 = vperm.xlu0 %3983, %v2812
      %v3985 = vpop.permute.xlu0 %3984
      %3987 = vset.pattern.permute.xlu0 1
      %3988 = vperm.xlu0 %3987, %v2818
      %v3989 = vpop.permute.xlu0 %3988
      %3991 = vset.pattern.permute.xlu0 1
      %3992 = vperm.xlu0 %3991, %v2824
      %v3993 = vpop.permute.xlu0 %3992
      %3995 = vset.pattern.permute.xlu0 1
      %3996 = vperm.xlu0 %3995, %v2830
      %v3997 = vpop.permute.xlu0 %3996
      %3999 = vset.pattern.permute.xlu0 1
      %4000 = vperm.xlu0 %3999, %v2836
      %v4001 = vpop.permute.xlu0 %4000
      %4003 = vset.pattern.permute.xlu0 1
      %4004 = vperm.xlu0 %4003, %v2842
      %v4005 = vpop.permute.xlu0 %4004
      %v4007 = vlaneseq
      %v4008 = vshrl.u32 %v4007, 7
      %v4009 = vsub.s32 1, %v4008
      %v4010 = vrot.slane %v2020, %v4009
      %v4011 = vadd.f32 %v3977, %v4010
      %v4012 = vadd.f32 %v3981, %v4010
      %v4013 = vadd.f32 %v3985, %v4010
      %v4014 = vadd.f32 %v3989, %v4010
      %v4015 = vadd.f32 %v3993, %v4010
      %v4016 = vadd.f32 %v3997, %v4010
      %v4017 = vadd.f32 %v4001, %v4010
      %v4018 = vadd.f32 %v4005, %v4010
      %v4019 = vmul.f32 %v4011, 0.2
      %v4020 = vmul.f32 %v4012, 0.2
      %v4021 = vmul.f32 %v4013, 0.2
      %v4022 = vmul.f32 %v4014, 0.2
      %v4023 = vmul.f32 %v4015, 0.2
      %v4024 = vmul.f32 %v4016, 0.2
      %v4025 = vmul.f32 %v4017, 0.2
      %v4026 = vmul.f32 %v4018, 0.2
      %v4027 = vmax.f32 %v4011, %v4019
      %v4028 = vmax.f32 %v4012, %v4020
      %v4029 = vmax.f32 %v4013, %v4021
      %v4030 = vmax.f32 %v4014, %v4022
      %v4031 = vmax.f32 %v4015, %v4023
      %v4032 = vmax.f32 %v4016, %v4024
      %v4033 = vmax.f32 %v4017, %v4025
      %v4034 = vmax.f32 %v4018, %v4026
      %v4035 = vadd.f32 %v4027, %v2853
      %v4036 = vadd.f32 %v4028, %v2854
      %v4037 = vadd.f32 %v4029, %v2855
      %v4038 = vadd.f32 %v4030, %v2856
      %v4039 = vadd.f32 %v4031, %v2857
      %v4040 = vadd.f32 %v4032, %v2858
      %v4041 = vadd.f32 %v4033, %v2859
      %v4042 = vadd.f32 %v4034, %v2860
      %4043 = vmax.xlane.f32.xlu0 %v4035
      %v4044 = vpop.xlane.xlu0 %4043
      %4045 = vmax.xlane.f32.xlu0 %v4036
      %v4046 = vpop.xlane.xlu0 %4045
      %4047 = vmax.xlane.f32.xlu0 %v4037
      %v4048 = vpop.xlane.xlu0 %4047
      %4049 = vmax.xlane.f32.xlu0 %v4038
      %v4050 = vpop.xlane.xlu0 %4049
      %4051 = vmax.xlane.f32.xlu0 %v4039
      %v4052 = vpop.xlane.xlu0 %4051
      %4053 = vmax.xlane.f32.xlu0 %v4040
      %v4054 = vpop.xlane.xlu0 %4053
      %4055 = vmax.xlane.f32.xlu0 %v4041
      %v4056 = vpop.xlane.xlu0 %4055
      %4057 = vmax.xlane.f32.xlu0 %v4042
      %v4058 = vpop.xlane.xlu0 %4057
      %v4059 = vsub.f32 %v4035, %v4044
      %v4060 = vsub.f32 %v4036, %v4046
      %v4061 = vsub.f32 %v4037, %v4048
      %v4062 = vsub.f32 %v4038, %v4050
      %v4063 = vsub.f32 %v4039, %v4052
      %v4064 = vsub.f32 %v4040, %v4054
      %v4065 = vsub.f32 %v4041, %v4056
      %v4066 = vsub.f32 %v4042, %v4058
      %v4067 = vmul.f32 %v4059, 1.442695
      %v4068 = vpow.pop %v4067
      %v4069 = vmul.f32 %v4060, 1.442695
      %v4070 = vpow.pop %v4069
      %v4071 = vmul.f32 %v4061, 1.442695
      %v4072 = vpow.pop %v4071
      %v4073 = vmul.f32 %v4062, 1.442695
      %v4074 = vpow.pop %v4073
      %v4075 = vmul.f32 %v4063, 1.442695
      %v4076 = vpow.pop %v4075
      %v4077 = vmul.f32 %v4064, 1.442695
      %v4078 = vpow.pop %v4077
      %v4079 = vmul.f32 %v4065, 1.442695
      %v4080 = vpow.pop %v4079
      %v4081 = vmul.f32 %v4066, 1.442695
      %v4082 = vpow.pop %v4081
      %4083 = vadd.xlane.f32.xlu0 %v4068
      %v4084 = vpop.xlane.xlu0 %4083
      %4085 = vadd.xlane.f32.xlu0 %v4070
      %v4086 = vpop.xlane.xlu0 %4085
      %4087 = vadd.xlane.f32.xlu0 %v4072
      %v4088 = vpop.xlane.xlu0 %4087
      %4089 = vadd.xlane.f32.xlu0 %v4074
      %v4090 = vpop.xlane.xlu0 %4089
      %4091 = vadd.xlane.f32.xlu0 %v4076
      %v4092 = vpop.xlane.xlu0 %4091
      %4093 = vadd.xlane.f32.xlu0 %v4078
      %v4094 = vpop.xlane.xlu0 %4093
      %4095 = vadd.xlane.f32.xlu0 %v4080
      %v4096 = vpop.xlane.xlu0 %4095
      %4097 = vadd.xlane.f32.xlu0 %v4082
      %v4098 = vpop.xlane.xlu0 %4097
      %4115 = vrot.lane.b32.xlu0 %v1437, 112
      %v4116 = vpop.permute.xlu0 %4115
      %4117 = vrot.lane.b32.xlu0 %v1443, 112
      %v4118 = vpop.permute.xlu0 %4117
      %4119 = vrot.lane.b32.xlu0 %v1449, 112
      %v4120 = vpop.permute.xlu0 %4119
      %4121 = vrot.lane.b32.xlu0 %v1455, 112
      %v4122 = vpop.permute.xlu0 %4121
      %4123 = vrot.lane.b32.xlu0 %v1461, 112
      %v4124 = vpop.permute.xlu0 %4123
      %4125 = vrot.lane.b32.xlu0 %v1467, 112
      %v4126 = vpop.permute.xlu0 %4125
      %4127 = vrot.lane.b32.xlu0 %v1473, 112
      %v4128 = vpop.permute.xlu0 %4127
      %4129 = vrot.lane.b32.xlu0 %v1479, 112
      %v4130 = vpop.permute.xlu0 %4129
      %4131 = vrot.lane.b32.xlu0 %v1485, 112
      %v4132 = vpop.permute.xlu0 %4131
      %4133 = vrot.lane.b32.xlu0 %v1491, 112
      %v4134 = vpop.permute.xlu0 %4133
      %4135 = vrot.lane.b32.xlu0 %v1497, 112
      %v4136 = vpop.permute.xlu0 %4135
      %4137 = vrot.lane.b32.xlu0 %v1503, 112
      %v4138 = vpop.permute.xlu0 %4137
      %4139 = vrot.lane.b32.xlu0 %v1509, 112
      %v4140 = vpop.permute.xlu0 %4139
      %4141 = vrot.lane.b32.xlu0 %v1515, 112
      %v4142 = vpop.permute.xlu0 %4141
      %4143 = vrot.lane.b32.xlu0 %v1521, 112
      %v4144 = vpop.permute.xlu0 %4143
      %4145 = vrot.lane.b32.xlu0 %v1527, 112
      %v4146 = vpop.permute.xlu0 %4145
      %4163 = vmatprep.subr.mxu0 0.0
      %v4164 = vand.u32 %v4116, 4294901760
      %4165 = vmatpush1.msra.mxu0 %v4164
      %4166 = vmatprep.subr.mxu0 0.0
      %v4167 = vand.u32 %v4118, 4294901760
      %4168 = vmatpush1.msra.mxu0 %v4167
      %4169 = vmatprep.subr.mxu0 0.0
      %v4170 = vand.u32 %v4120, 4294901760
      %4171 = vmatpush1.msra.mxu0 %v4170
      %4172 = vmatprep.subr.mxu0 0.0
      %v4173 = vand.u32 %v4122, 4294901760
      %4174 = vmatpush1.msra.mxu0 %v4173
      %4175 = vmatprep.subr.mxu0 0.0
      %v4176 = vand.u32 %v4124, 4294901760
      %4177 = vmatpush1.msra.mxu0 %v4176
      %4178 = vmatprep.subr.mxu0 0.0
      %v4179 = vand.u32 %v4126, 4294901760
      %4180 = vmatpush1.msra.mxu0 %v4179
      %4181 = vmatprep.subr.mxu0 0.0
      %v4182 = vand.u32 %v4128, 4294901760
      %4183 = vmatpush1.msra.mxu0 %v4182
      %4184 = vmatprep.subr.mxu0 0.0
      %v4185 = vand.u32 %v4130, 4294901760
      %4186 = vmatpush1.msra.mxu0 %v4185
      %4187 = vmatprep.subr.mxu0 0.0
      %v4188 = vand.u32 %v4132, 4294901760
      %4189 = vmatpush1.msra.mxu0 %v4188
      %4190 = vmatprep.subr.mxu0 0.0
      %v4191 = vand.u32 %v4134, 4294901760
      %4192 = vmatpush1.msra.mxu0 %v4191
      %4193 = vmatprep.subr.mxu0 0.0
      %v4194 = vand.u32 %v4136, 4294901760
      %4195 = vmatpush1.msra.mxu0 %v4194
      %4196 = vmatprep.subr.mxu0 0.0
      %v4197 = vand.u32 %v4138, 4294901760
      %4198 = vmatpush1.msra.mxu0 %v4197
      %4199 = vmatprep.subr.mxu0 0.0
      %v4200 = vand.u32 %v4140, 4294901760
      %4201 = vmatpush1.msra.mxu0 %v4200
      %4202 = vmatprep.subr.mxu0 0.0
      %v4203 = vand.u32 %v4142, 4294901760
      %4204 = vmatpush1.msra.mxu0 %v4203
      %4205 = vmatprep.subr.mxu0 0.0
      %v4206 = vand.u32 %v4144, 4294901760
      %4207 = vmatpush1.msra.mxu0 %v4206
      %4208 = vmatprep.subr.mxu0 0.0
      %v4209 = vand.u32 %v4146, 4294901760
      %4210 = vmatpush1.msra.mxu0 %v4209
      %4211 = vmatprep.subr.mxu0 0.0
      %4212 = vmatpush1.msra.mxu0 0.0
      %4213 = vmatprep.subr.mxu0 0.0
      %4214 = vmatpush1.msra.mxu0 0.0
      %4215 = vmatprep.subr.mxu0 0.0
      %4216 = vmatpush1.msra.mxu0 0.0
      %4217 = vmatprep.subr.mxu0 0.0
      %4218 = vmatpush1.msra.mxu0 0.0
      %4219 = vmatprep.subr.mxu0 0.0
      %4220 = vmatpush1.msra.mxu0 0.0
      %4221 = vmatprep.subr.mxu0 0.0
      %4222 = vmatpush1.msra.mxu0 0.0
      %4223 = vmatprep.subr.mxu0 0.0
      %4224 = vmatpush1.msra.mxu0 0.0
      %4225 = vmatprep.subr.mxu0 0.0
      %4226 = vmatpush1.msra.mxu0 0.0
      %4227 = vmatprep.subr.mxu0 0.0
      %4228 = vmatpush1.msra.mxu0 0.0
      %4229 = vmatprep.subr.mxu0 0.0
      %4230 = vmatpush1.msra.mxu0 0.0
      %4231 = vmatprep.subr.mxu0 0.0
      %4232 = vmatpush1.msra.mxu0 0.0
      %4233 = vmatprep.subr.mxu0 0.0
      %4234 = vmatpush1.msra.mxu0 0.0
      %4235 = vmatprep.subr.mxu0 0.0
      %4236 = vmatpush1.msra.mxu0 0.0
      %4237 = vmatprep.subr.mxu0 0.0
      %4238 = vmatpush1.msra.mxu0 0.0
      %4239 = vmatprep.subr.mxu0 0.0
      %4240 = vmatpush1.msra.mxu0 0.0
      %4241 = vmatprep.subr.mxu0 0.0
      %4242 = vmatpush1.msra.mxu0 0.0
      %4243 = vmatprep.mubr.f32.mxu0 0.0
      %v4244 = vand.u32 %v4068, 4294901760
      %v4245 = vsub.f32 %v4068, %v4244
      %v4246 = vand.u32 %v4245, 4294901760
      %v4247 = vsub.f32 %v4245, %v4246
      %v4248 = vand.u32 %v4247, 4294901760
      %4249 = vmatmul.mubr.f32.gmra.mrb[0].mxu0 %v4248
      %v4250 = vpop.f32.mrb[0].mxu0
      %v4251 = vadd.f32 0.0, %v4250
      %v4252 = vpop.f32.mrb[0].mxu0
      %4253 = vmatprep.mubr.f32.mxu0 0.0
      %v4254 = vand.u32 %v4070, 4294901760
      %v4255 = vsub.f32 %v4070, %v4254
      %v4256 = vand.u32 %v4255, 4294901760
      %v4257 = vsub.f32 %v4255, %v4256
      %v4258 = vand.u32 %v4257, 4294901760
      %4259 = vmatmul.mubr.f32.gmra.mrb[0].mxu0 %v4258
      %v4260 = vpop.f32.mrb[0].mxu0
      %v4261 = vadd.f32 0.0, %v4260
      %v4262 = vpop.f32.mrb[0].mxu0
      %4263 = vmatprep.mubr.f32.mxu0 0.0
      %v4264 = vand.u32 %v4072, 4294901760
      %v4265 = vsub.f32 %v4072, %v4264
      %v4266 = vand.u32 %v4265, 4294901760
      %v4267 = vsub.f32 %v4265, %v4266
      %v4268 = vand.u32 %v4267, 4294901760
      %4269 = vmatmul.mubr.f32.gmra.mrb[0].mxu0 %v4268
      %v4270 = vpop.f32.mrb[0].mxu0
      %v4271 = vadd.f32 0.0, %v4270
      %v4272 = vpop.f32.mrb[0].mxu0
      %4273 = vmatprep.mubr.f32.mxu0 0.0
      %v4274 = vand.u32 %v4074, 4294901760
      %v4275 = vsub.f32 %v4074, %v4274
      %v4276 = vand.u32 %v4275, 4294901760
      %v4277 = vsub.f32 %v4275, %v4276
      %v4278 = vand.u32 %v4277, 4294901760
      %4279 = vmatmul.mubr.f32.gmra.mrb[0].mxu0 %v4278
      %v4280 = vpop.f32.mrb[0].mxu0
      %v4281 = vadd.f32 0.0, %v4280
      %v4282 = vpop.f32.mrb[0].mxu0
      %4283 = vmatprep.mubr.f32.mxu0 0.0
      %v4284 = vand.u32 %v4076, 4294901760
      %v4285 = vsub.f32 %v4076, %v4284
      %v4286 = vand.u32 %v4285, 4294901760
      %v4287 = vsub.f32 %v4285, %v4286
      %v4288 = vand.u32 %v4287, 4294901760
      %4289 = vmatmul.mubr.f32.gmra.mrb[0].mxu0 %v4288
      %v4290 = vpop.f32.mrb[0].mxu0
      %v4291 = vadd.f32 0.0, %v4290
      %v4292 = vpop.f32.mrb[0].mxu0
      %4293 = vmatprep.mubr.f32.mxu0 0.0
      %v4294 = vand.u32 %v4078, 4294901760
      %v4295 = vsub.f32 %v4078, %v4294
      %v4296 = vand.u32 %v4295, 4294901760
      %v4297 = vsub.f32 %v4295, %v4296
      %v4298 = vand.u32 %v4297, 4294901760
      %4299 = vmatmul.mubr.f32.gmra.mrb[0].mxu0 %v4298
      %v4300 = vpop.f32.mrb[0].mxu0
      %v4301 = vadd.f32 0.0, %v4300
      %v4302 = vpop.f32.mrb[0].mxu0
      %4303 = vmatprep.mubr.f32.mxu0 0.0
      %v4304 = vand.u32 %v4080, 4294901760
      %v4305 = vsub.f32 %v4080, %v4304
      %v4306 = vand.u32 %v4305, 4294901760
      %v4307 = vsub.f32 %v4305, %v4306
      %v4308 = vand.u32 %v4307, 4294901760
      %4309 = vmatmul.mubr.f32.gmra.mrb[0].mxu0 %v4308
      %v4310 = vpop.f32.mrb[0].mxu0
      %v4311 = vadd.f32 0.0, %v4310
      %v4312 = vpop.f32.mrb[0].mxu0
      %4313 = vmatprep.mubr.f32.mxu0 0.0
      %v4314 = vand.u32 %v4082, 4294901760
      %v4315 = vsub.f32 %v4082, %v4314
      %v4316 = vand.u32 %v4315, 4294901760
      %v4317 = vsub.f32 %v4315, %v4316
      %v4318 = vand.u32 %v4317, 4294901760
      %4319 = vmatmul.mubr.f32.gmra.mrb[0].mxu0 %v4318
      %v4320 = vpop.f32.mrb[0].mxu0
      %v4321 = vadd.f32 0.0, %v4320
      %v4322 = vpop.f32.mrb[0].mxu0
      %4323 = vdwg.mxu0
      %4324 = vmatprep.subr.mxu0 0.0
      %v4325 = vand.u32 %v4116, 4294901760
      %v4326 = vsub.f32 %v4116, %v4325
      %v4327 = vand.u32 %v4326, 4294901760
      %v4328 = vsub.f32 %v4326, %v4327
      %v4329 = vand.u32 %v4328, 4294901760
      %4330 = vmatpush1.msra.mxu0 %v4329
      %4331 = vmatprep.subr.mxu0 0.0
      %v4332 = vand.u32 %v4118, 4294901760
      %v4333 = vsub.f32 %v4118, %v4332
      %v4334 = vand.u32 %v4333, 4294901760
      %v4335 = vsub.f32 %v4333, %v4334
      %v4336 = vand.u32 %v4335, 4294901760
      %4337 = vmatpush1.msra.mxu0 %v4336
      %4338 = vmatprep.subr.mxu0 0.0
      %v4339 = vand.u32 %v4120, 4294901760
      %v4340 = vsub.f32 %v4120, %v4339
      %v4341 = vand.u32 %v4340, 4294901760
      %v4342 = vsub.f32 %v4340, %v4341
      %v4343 = vand.u32 %v4342, 4294901760
      %4344 = vmatpush1.msra.mxu0 %v4343
      %4345 = vmatprep.subr.mxu0 0.0
      %v4346 = vand.u32 %v4122, 4294901760
      %v4347 = vsub.f32 %v4122, %v4346
      %v4348 = vand.u32 %v4347, 4294901760
      %v4349 = vsub.f32 %v4347, %v4348
      %v4350 = vand.u32 %v4349, 4294901760
      %4351 = vmatpush1.msra.mxu0 %v4350
      %4352 = vmatprep.subr.mxu0 0.0
      %v4353 = vand.u32 %v4124, 4294901760
      %v4354 = vsub.f32 %v4124, %v4353
      %v4355 = vand.u32 %v4354, 4294901760
      %v4356 = vsub.f32 %v4354, %v4355
      %v4357 = vand.u32 %v4356, 4294901760
      %4358 = vmatpush1.msra.mxu0 %v4357
      %4359 = vmatprep.subr.mxu0 0.0
      %v4360 = vand.u32 %v4126, 4294901760
      %v4361 = vsub.f32 %v4126, %v4360
      %v4362 = vand.u32 %v4361, 4294901760
      %v4363 = vsub.f32 %v4361, %v4362
      %v4364 = vand.u32 %v4363, 4294901760
      %4365 = vmatpush1.msra.mxu0 %v4364
      %4366 = vmatprep.subr.mxu0 0.0
      %v4367 = vand.u32 %v4128, 4294901760
      %v4368 = vsub.f32 %v4128, %v4367
      %v4369 = vand.u32 %v4368, 4294901760
      %v4370 = vsub.f32 %v4368, %v4369
      %v4371 = vand.u32 %v4370, 4294901760
      %4372 = vmatpush1.msra.mxu0 %v4371
      %4373 = vmatprep.subr.mxu0 0.0
      %v4374 = vand.u32 %v4130, 4294901760
      %v4375 = vsub.f32 %v4130, %v4374
      %v4376 = vand.u32 %v4375, 4294901760
      %v4377 = vsub.f32 %v4375, %v4376
      %v4378 = vand.u32 %v4377, 4294901760
      %4379 = vmatpush1.msra.mxu0 %v4378
      %4380 = vmatprep.subr.mxu0 0.0
      %v4381 = vand.u32 %v4132, 4294901760
      %v4382 = vsub.f32 %v4132, %v4381
      %v4383 = vand.u32 %v4382, 4294901760
      %v4384 = vsub.f32 %v4382, %v4383
      %v4385 = vand.u32 %v4384, 4294901760
      %4386 = vmatpush1.msra.mxu0 %v4385
      %4387 = vmatprep.subr.mxu0 0.0
      %v4388 = vand.u32 %v4134, 4294901760
      %v4389 = vsub.f32 %v4134, %v4388
      %v4390 = vand.u32 %v4389, 4294901760
      %v4391 = vsub.f32 %v4389, %v4390
      %v4392 = vand.u32 %v4391, 4294901760
      %4393 = vmatpush1.msra.mxu0 %v4392
      %4394 = vmatprep.subr.mxu0 0.0
      %v4395 = vand.u32 %v4136, 4294901760
      %v4396 = vsub.f32 %v4136, %v4395
      %v4397 = vand.u32 %v4396, 4294901760
      %v4398 = vsub.f32 %v4396, %v4397
      %v4399 = vand.u32 %v4398, 4294901760
      %4400 = vmatpush1.msra.mxu0 %v4399
      %4401 = vmatprep.subr.mxu0 0.0
      %v4402 = vand.u32 %v4138, 4294901760
      %v4403 = vsub.f32 %v4138, %v4402
      %v4404 = vand.u32 %v4403, 4294901760
      %v4405 = vsub.f32 %v4403, %v4404
      %v4406 = vand.u32 %v4405, 4294901760
      %4407 = vmatpush1.msra.mxu0 %v4406
      %4408 = vmatprep.subr.mxu0 0.0
      %v4409 = vand.u32 %v4140, 4294901760
      %v4410 = vsub.f32 %v4140, %v4409
      %v4411 = vand.u32 %v4410, 4294901760
      %v4412 = vsub.f32 %v4410, %v4411
      %v4413 = vand.u32 %v4412, 4294901760
      %4414 = vmatpush1.msra.mxu0 %v4413
      %4415 = vmatprep.subr.mxu0 0.0
      %v4416 = vand.u32 %v4142, 4294901760
      %v4417 = vsub.f32 %v4142, %v4416
      %v4418 = vand.u32 %v4417, 4294901760
      %v4419 = vsub.f32 %v4417, %v4418
      %v4420 = vand.u32 %v4419, 4294901760
      %4421 = vmatpush1.msra.mxu0 %v4420
      %4422 = vmatprep.subr.mxu0 0.0
      %v4423 = vand.u32 %v4144, 4294901760
      %v4424 = vsub.f32 %v4144, %v4423
      %v4425 = vand.u32 %v4424, 4294901760
      %v4426 = vsub.f32 %v4424, %v4425
      %v4427 = vand.u32 %v4426, 4294901760
      %4428 = vmatpush1.msra.mxu0 %v4427
      %4429 = vmatprep.subr.mxu0 0.0
      %v4430 = vand.u32 %v4146, 4294901760
      %v4431 = vsub.f32 %v4146, %v4430
      %v4432 = vand.u32 %v4431, 4294901760
      %v4433 = vsub.f32 %v4431, %v4432
      %v4434 = vand.u32 %v4433, 4294901760
      %4435 = vmatpush1.msra.mxu0 %v4434
      %4436 = vmatprep.subr.mxu0 0.0
      %4437 = vmatpush1.msra.mxu0 0.0
      %4438 = vmatprep.subr.mxu0 0.0
      %4439 = vmatpush1.msra.mxu0 0.0
      %4440 = vmatprep.subr.mxu0 0.0
      %4441 = vmatpush1.msra.mxu0 0.0
      %4442 = vmatprep.subr.mxu0 0.0
      %4443 = vmatpush1.msra.mxu0 0.0
      %4444 = vmatprep.subr.mxu0 0.0
      %4445 = vmatpush1.msra.mxu0 0.0
      %4446 = vmatprep.subr.mxu0 0.0
      %4447 = vmatpush1.msra.mxu0 0.0
      %4448 = vmatprep.subr.mxu0 0.0
      %4449 = vmatpush1.msra.mxu0 0.0
      %4450 = vmatprep.subr.mxu0 0.0
      %4451 = vmatpush1.msra.mxu0 0.0
      %4452 = vmatprep.subr.mxu0 0.0
      %4453 = vmatpush1.msra.mxu0 0.0
      %4454 = vmatprep.subr.mxu0 0.0
      %4455 = vmatpush1.msra.mxu0 0.0
      %4456 = vmatprep.subr.mxu0 0.0
      %4457 = vmatpush1.msra.mxu0 0.0
      %4458 = vmatprep.subr.mxu0 0.0
      %4459 = vmatpush1.msra.mxu0 0.0
      %4460 = vmatprep.subr.mxu0 0.0
      %4461 = vmatpush1.msra.mxu0 0.0
      %4462 = vmatprep.subr.mxu0 0.0
      %4463 = vmatpush1.msra.mxu0 0.0
      %4464 = vmatprep.subr.mxu0 0.0
      %4465 = vmatpush1.msra.mxu0 0.0
      %4466 = vmatprep.subr.mxu0 0.0
      %4467 = vmatpush1.msra.mxu0 0.0
      %4468 = vmatprep.mubr.f32.mxu0 0.0
      %v4469 = vand.u32 %v4068, 4294901760
      %4470 = vmatmul.mubr.f32.gmra.mrb[0].mxu0 %v4469
      %v4471 = vpop.f32.mrb[0].mxu0
      %v4472 = vadd.f32 %v4251, %v4471
      %v4473 = vpop.f32.mrb[0].mxu0
      %4474 = vmatprep.mubr.f32.mxu0 0.0
      %v4475 = vand.u32 %v4070, 4294901760
      %4476 = vmatmul.mubr.f32.gmra.mrb[0].mxu0 %v4475
      %v4477 = vpop.f32.mrb[0].mxu0
      %v4478 = vadd.f32 %v4261, %v4477
      %v4479 = vpop.f32.mrb[0].mxu0
      %4480 = vmatprep.mubr.f32.mxu0 0.0
      %v4481 = vand.u32 %v4072, 4294901760
      %4482 = vmatmul.mubr.f32.gmra.mrb[0].mxu0 %v4481
      %v4483 = vpop.f32.mrb[0].mxu0
      %v4484 = vadd.f32 %v4271, %v4483
      %v4485 = vpop.f32.mrb[0].mxu0
      %4486 = vmatprep.mubr.f32.mxu0 0.0
      %v4487 = vand.u32 %v4074, 4294901760
      %4488 = vmatmul.mubr.f32.gmra.mrb[0].mxu0 %v4487
      %v4489 = vpop.f32.mrb[0].mxu0
      %v4490 = vadd.f32 %v4281, %v4489
      %v4491 = vpop.f32.mrb[0].mxu0
      %4492 = vmatprep.mubr.f32.mxu0 0.0
      %v4493 = vand.u32 %v4076, 4294901760
      %4494 = vmatmul.mubr.f32.gmra.mrb[0].mxu0 %v4493
      %v4495 = vpop.f32.mrb[0].mxu0
      %v4496 = vadd.f32 %v4291, %v4495
      %v4497 = vpop.f32.mrb[0].mxu0
      %4498 = vmatprep.mubr.f32.mxu0 0.0
      %v4499 = vand.u32 %v4078, 4294901760
      %4500 = vmatmul.mubr.f32.gmra.mrb[0].mxu0 %v4499
      %v4501 = vpop.f32.mrb[0].mxu0
      %v4502 = vadd.f32 %v4301, %v4501
      %v4503 = vpop.f32.mrb[0].mxu0
      %4504 = vmatprep.mubr.f32.mxu0 0.0
      %v4505 = vand.u32 %v4080, 4294901760
      %4506 = vmatmul.mubr.f32.gmra.mrb[0].mxu0 %v4505
      %v4507 = vpop.f32.mrb[0].mxu0
      %v4508 = vadd.f32 %v4311, %v4507
      %v4509 = vpop.f32.mrb[0].mxu0
      %4510 = vmatprep.mubr.f32.mxu0 0.0
      %v4511 = vand.u32 %v4082, 4294901760
      %4512 = vmatmul.mubr.f32.gmra.mrb[0].mxu0 %v4511
      %v4513 = vpop.f32.mrb[0].mxu0
      %v4514 = vadd.f32 %v4321, %v4513
      %v4515 = vpop.f32.mrb[0].mxu0
      %4516 = vdwg.mxu0
      %4517 = vmatprep.subr.mxu0 0.0
      %v4518 = vand.u32 %v4116, 4294901760
      %v4519 = vsub.f32 %v4116, %v4518
      %4520 = vmatpush1.msra.mxu0 %v4519
      %4521 = vmatprep.subr.mxu0 0.0
      %v4522 = vand.u32 %v4118, 4294901760
      %v4523 = vsub.f32 %v4118, %v4522
      %4524 = vmatpush1.msra.mxu0 %v4523
      %4525 = vmatprep.subr.mxu0 0.0
      %v4526 = vand.u32 %v4120, 4294901760
      %v4527 = vsub.f32 %v4120, %v4526
      %4528 = vmatpush1.msra.mxu0 %v4527
      %4529 = vmatprep.subr.mxu0 0.0
      %v4530 = vand.u32 %v4122, 4294901760
      %v4531 = vsub.f32 %v4122, %v4530
      %4532 = vmatpush1.msra.mxu0 %v4531
      %4533 = vmatprep.subr.mxu0 0.0
      %v4534 = vand.u32 %v4124, 4294901760
      %v4535 = vsub.f32 %v4124, %v4534
      %4536 = vmatpush1.msra.mxu0 %v4535
      %4537 = vmatprep.subr.mxu0 0.0
      %v4538 = vand.u32 %v4126, 4294901760
      %v4539 = vsub.f32 %v4126, %v4538
      %4540 = vmatpush1.msra.mxu0 %v4539
      %4541 = vmatprep.subr.mxu0 0.0
      %v4542 = vand.u32 %v4128, 4294901760
      %v4543 = vsub.f32 %v4128, %v4542
      %4544 = vmatpush1.msra.mxu0 %v4543
      %4545 = vmatprep.subr.mxu0 0.0
      %v4546 = vand.u32 %v4130, 4294901760
      %v4547 = vsub.f32 %v4130, %v4546
      %4548 = vmatpush1.msra.mxu0 %v4547
      %4549 = vmatprep.subr.mxu0 0.0
      %v4550 = vand.u32 %v4132, 4294901760
      %v4551 = vsub.f32 %v4132, %v4550
      %4552 = vmatpush1.msra.mxu0 %v4551
      %4553 = vmatprep.subr.mxu0 0.0
      %v4554 = vand.u32 %v4134, 4294901760
      %v4555 = vsub.f32 %v4134, %v4554
      %4556 = vmatpush1.msra.mxu0 %v4555
      %4557 = vmatprep.subr.mxu0 0.0
      %v4558 = vand.u32 %v4136, 4294901760
      %v4559 = vsub.f32 %v4136, %v4558
      %4560 = vmatpush1.msra.mxu0 %v4559
      %4561 = vmatprep.subr.mxu0 0.0
      %v4562 = vand.u32 %v4138, 4294901760
      %v4563 = vsub.f32 %v4138, %v4562
      %4564 = vmatpush1.msra.mxu0 %v4563
      %4565 = vmatprep.subr.mxu0 0.0
      %v4566 = vand.u32 %v4140, 4294901760
      %v4567 = vsub.f32 %v4140, %v4566
      %4568 = vmatpush1.msra.mxu0 %v4567
      %4569 = vmatprep.subr.mxu0 0.0
      %v4570 = vand.u32 %v4142, 4294901760
      %v4571 = vsub.f32 %v4142, %v4570
      %4572 = vmatpush1.msra.mxu0 %v4571
      %4573 = vmatprep.subr.mxu0 0.0
      %v4574 = vand.u32 %v4144, 4294901760
      %v4575 = vsub.f32 %v4144, %v4574
      %4576 = vmatpush1.msra.mxu0 %v4575
      %4577 = vmatprep.subr.mxu0 0.0
      %v4578 = vand.u32 %v4146, 4294901760
      %v4579 = vsub.f32 %v4146, %v4578
      %4580 = vmatpush1.msra.mxu0 %v4579
      %4581 = vmatprep.subr.mxu0 0.0
      %4582 = vmatpush1.msra.mxu0 0.0
      %4583 = vmatprep.subr.mxu0 0.0
      %4584 = vmatpush1.msra.mxu0 0.0
      %4585 = vmatprep.subr.mxu0 0.0
      %4586 = vmatpush1.msra.mxu0 0.0
      %4587 = vmatprep.subr.mxu0 0.0
      %4588 = vmatpush1.msra.mxu0 0.0
      %4589 = vmatprep.subr.mxu0 0.0
      %4590 = vmatpush1.msra.mxu0 0.0
      %4591 = vmatprep.subr.mxu0 0.0
      %4592 = vmatpush1.msra.mxu0 0.0
      %4593 = vmatprep.subr.mxu0 0.0
      %4594 = vmatpush1.msra.mxu0 0.0
      %4595 = vmatprep.subr.mxu0 0.0
      %4596 = vmatpush1.msra.mxu0 0.0
      %4597 = vmatprep.subr.mxu0 0.0
      %4598 = vmatpush1.msra.mxu0 0.0
      %4599 = vmatprep.subr.mxu0 0.0
      %4600 = vmatpush1.msra.mxu0 0.0
      %4601 = vmatprep.subr.mxu0 0.0
      %4602 = vmatpush1.msra.mxu0 0.0
      %4603 = vmatprep.subr.mxu0 0.0
      %4604 = vmatpush1.msra.mxu0 0.0
      %4605 = vmatprep.subr.mxu0 0.0
      %4606 = vmatpush1.msra.mxu0 0.0
      %4607 = vmatprep.subr.mxu0 0.0
      %4608 = vmatpush1.msra.mxu0 0.0
      %4609 = vmatprep.subr.mxu0 0.0
      %4610 = vmatpush1.msra.mxu0 0.0
      %4611 = vmatprep.subr.mxu0 0.0
      %4612 = vmatpush1.msra.mxu0 0.0
      %4613 = vmatprep.mubr.f32.mxu0 0.0
      %v4614 = vand.u32 %v4068, 4294901760
      %v4615 = vsub.f32 %v4068, %v4614
      %4616 = vmatmul.mubr.f32.gmra.mrb[0].mxu0 %v4615
      %v4617 = vpop.f32.mrb[0].mxu0
      %v4618 = vadd.f32 %v4472, %v4617
      %v4619 = vpop.f32.mrb[0].mxu0
      %4620 = vmatprep.mubr.f32.mxu0 0.0
      %v4621 = vand.u32 %v4070, 4294901760
      %v4622 = vsub.f32 %v4070, %v4621
      %4623 = vmatmul.mubr.f32.gmra.mrb[0].mxu0 %v4622
      %v4624 = vpop.f32.mrb[0].mxu0
      %v4625 = vadd.f32 %v4478, %v4624
      %v4626 = vpop.f32.mrb[0].mxu0
      %4627 = vmatprep.mubr.f32.mxu0 0.0
      %v4628 = vand.u32 %v4072, 4294901760
      %v4629 = vsub.f32 %v4072, %v4628
      %4630 = vmatmul.mubr.f32.gmra.mrb[0].mxu0 %v4629
      %v4631 = vpop.f32.mrb[0].mxu0
      %v4632 = vadd.f32 %v4484, %v4631
      %v4633 = vpop.f32.mrb[0].mxu0
      %4634 = vmatprep.mubr.f32.mxu0 0.0
      %v4635 = vand.u32 %v4074, 4294901760
      %v4636 = vsub.f32 %v4074, %v4635
      %4637 = vmatmul.mubr.f32.gmra.mrb[0].mxu0 %v4636
      %v4638 = vpop.f32.mrb[0].mxu0
      %v4639 = vadd.f32 %v4490, %v4638
      %v4640 = vpop.f32.mrb[0].mxu0
      %4641 = vmatprep.mubr.f32.mxu0 0.0
      %v4642 = vand.u32 %v4076, 4294901760
      %v4643 = vsub.f32 %v4076, %v4642
      %4644 = vmatmul.mubr.f32.gmra.mrb[0].mxu0 %v4643
      %v4645 = vpop.f32.mrb[0].mxu0
      %v4646 = vadd.f32 %v4496, %v4645
      %v4647 = vpop.f32.mrb[0].mxu0
      %4648 = vmatprep.mubr.f32.mxu0 0.0
      %v4649 = vand.u32 %v4078, 4294901760
      %v4650 = vsub.f32 %v4078, %v4649
      %4651 = vmatmul.mubr.f32.gmra.mrb[0].mxu0 %v4650
      %v4652 = vpop.f32.mrb[0].mxu0
      %v4653 = vadd.f32 %v4502, %v4652
      %v4654 = vpop.f32.mrb[0].mxu0
      %4655 = vmatprep.mubr.f32.mxu0 0.0
      %v4656 = vand.u32 %v4080, 4294901760
      %v4657 = vsub.f32 %v4080, %v4656
      %4658 = vmatmul.mubr.f32.gmra.mrb[0].mxu0 %v4657
      %v4659 = vpop.f32.mrb[0].mxu0
      %v4660 = vadd.f32 %v4508, %v4659
      %v4661 = vpop.f32.mrb[0].mxu0
      %4662 = vmatprep.mubr.f32.mxu0 0.0
      %v4663 = vand.u32 %v4082, 4294901760
      %v4664 = vsub.f32 %v4082, %v4663
      %4665 = vmatmul.mubr.f32.gmra.mrb[0].mxu0 %v4664
      %v4666 = vpop.f32.mrb[0].mxu0
      %v4667 = vadd.f32 %v4514, %v4666
      %v4668 = vpop.f32.mrb[0].mxu0
      %4669 = vdwg.mxu0
      %4670 = vmatprep.subr.mxu0 0.0
      %v4671 = vand.u32 %v4116, 4294901760
      %4672 = vmatpush1.msra.mxu0 %v4671
      %4673 = vmatprep.subr.mxu0 0.0
      %v4674 = vand.u32 %v4118, 4294901760
      %4675 = vmatpush1.msra.mxu0 %v4674
      %4676 = vmatprep.subr.mxu0 0.0
      %v4677 = vand.u32 %v4120, 4294901760
      %4678 = vmatpush1.msra.mxu0 %v4677
      %4679 = vmatprep.subr.mxu0 0.0
      %v4680 = vand.u32 %v4122, 4294901760
      %4681 = vmatpush1.msra.mxu0 %v4680
      %4682 = vmatprep.subr.mxu0 0.0
      %v4683 = vand.u32 %v4124, 4294901760
      %4684 = vmatpush1.msra.mxu0 %v4683
      %4685 = vmatprep.subr.mxu0 0.0
      %v4686 = vand.u32 %v4126, 4294901760
      %4687 = vmatpush1.msra.mxu0 %v4686
      %4688 = vmatprep.subr.mxu0 0.0
      %v4689 = vand.u32 %v4128, 4294901760
      %4690 = vmatpush1.msra.mxu0 %v4689
      %4691 = vmatprep.subr.mxu0 0.0
      %v4692 = vand.u32 %v4130, 4294901760
      %4693 = vmatpush1.msra.mxu0 %v4692
      %4694 = vmatprep.subr.mxu0 0.0
      %v4695 = vand.u32 %v4132, 4294901760
      %4696 = vmatpush1.msra.mxu0 %v4695
      %4697 = vmatprep.subr.mxu0 0.0
      %v4698 = vand.u32 %v4134, 4294901760
      %4699 = vmatpush1.msra.mxu0 %v4698
      %4700 = vmatprep.subr.mxu0 0.0
      %v4701 = vand.u32 %v4136, 4294901760
      %4702 = vmatpush1.msra.mxu0 %v4701
      %4703 = vmatprep.subr.mxu0 0.0
      %v4704 = vand.u32 %v4138, 4294901760
      %4705 = vmatpush1.msra.mxu0 %v4704
      %4706 = vmatprep.subr.mxu0 0.0
      %v4707 = vand.u32 %v4140, 4294901760
      %4708 = vmatpush1.msra.mxu0 %v4707
      %4709 = vmatprep.subr.mxu0 0.0
      %v4710 = vand.u32 %v4142, 4294901760
      %4711 = vmatpush1.msra.mxu0 %v4710
      %4712 = vmatprep.subr.mxu0 0.0
      %v4713 = vand.u32 %v4144, 4294901760
      %4714 = vmatpush1.msra.mxu0 %v4713
      %4715 = vmatprep.subr.mxu0 0.0
      %v4716 = vand.u32 %v4146, 4294901760
      %4717 = vmatpush1.msra.mxu0 %v4716
      %4718 = vmatprep.subr.mxu0 0.0
      %4719 = vmatpush1.msra.mxu0 0.0
      %4720 = vmatprep.subr.mxu0 0.0
      %4721 = vmatpush1.msra.mxu0 0.0
      %4722 = vmatprep.subr.mxu0 0.0
      %4723 = vmatpush1.msra.mxu0 0.0
      %4724 = vmatprep.subr.mxu0 0.0
      %4725 = vmatpush1.msra.mxu0 0.0
      %4726 = vmatprep.subr.mxu0 0.0
      %4727 = vmatpush1.msra.mxu0 0.0
      %4728 = vmatprep.subr.mxu0 0.0
      %4729 = vmatpush1.msra.mxu0 0.0
      %4730 = vmatprep.subr.mxu0 0.0
      %4731 = vmatpush1.msra.mxu0 0.0
      %4732 = vmatprep.subr.mxu0 0.0
      %4733 = vmatpush1.msra.mxu0 0.0
      %4734 = vmatprep.subr.mxu0 0.0
      %4735 = vmatpush1.msra.mxu0 0.0
      %4736 = vmatprep.subr.mxu0 0.0
      %4737 = vmatpush1.msra.mxu0 0.0
      %4738 = vmatprep.subr.mxu0 0.0
      %4739 = vmatpush1.msra.mxu0 0.0
      %4740 = vmatprep.subr.mxu0 0.0
      %4741 = vmatpush1.msra.mxu0 0.0
      %4742 = vmatprep.subr.mxu0 0.0
      %4743 = vmatpush1.msra.mxu0 0.0
      %4744 = vmatprep.subr.mxu0 0.0
      %4745 = vmatpush1.msra.mxu0 0.0
      %4746 = vmatprep.subr.mxu0 0.0
      %4747 = vmatpush1.msra.mxu0 0.0
      %4748 = vmatprep.subr.mxu0 0.0
      %4749 = vmatpush1.msra.mxu0 0.0
      %4750 = vmatprep.mubr.f32.mxu0 0.0
      %v4751 = vand.u32 %v4068, 4294901760
      %v4752 = vsub.f32 %v4068, %v4751
      %v4753 = vand.u32 %v4752, 4294901760
      %4754 = vmatmul.mubr.f32.gmra.mrb[0].mxu0 %v4753
      %v4755 = vpop.f32.mrb[0].mxu0
      %v4756 = vadd.f32 %v4618, %v4755
      %v4757 = vpop.f32.mrb[0].mxu0
      %4758 = vmatprep.mubr.f32.mxu0 0.0
      %v4759 = vand.u32 %v4070, 4294901760
      %v4760 = vsub.f32 %v4070, %v4759
      %v4761 = vand.u32 %v4760, 4294901760
      %4762 = vmatmul.mubr.f32.gmra.mrb[0].mxu0 %v4761
      %v4763 = vpop.f32.mrb[0].mxu0
      %v4764 = vadd.f32 %v4625, %v4763
      %v4765 = vpop.f32.mrb[0].mxu0
      %4766 = vmatprep.mubr.f32.mxu0 0.0
      %v4767 = vand.u32 %v4072, 4294901760
      %v4768 = vsub.f32 %v4072, %v4767
      %v4769 = vand.u32 %v4768, 4294901760
      %4770 = vmatmul.mubr.f32.gmra.mrb[0].mxu0 %v4769
      %v4771 = vpop.f32.mrb[0].mxu0
      %v4772 = vadd.f32 %v4632, %v4771
      %v4773 = vpop.f32.mrb[0].mxu0
      %4774 = vmatprep.mubr.f32.mxu0 0.0
      %v4775 = vand.u32 %v4074, 4294901760
      %v4776 = vsub.f32 %v4074, %v4775
      %v4777 = vand.u32 %v4776, 4294901760
      %4778 = vmatmul.mubr.f32.gmra.mrb[0].mxu0 %v4777
      %v4779 = vpop.f32.mrb[0].mxu0
      %v4780 = vadd.f32 %v4639, %v4779
      %v4781 = vpop.f32.mrb[0].mxu0
      %4782 = vmatprep.mubr.f32.mxu0 0.0
      %v4783 = vand.u32 %v4076, 4294901760
      %v4784 = vsub.f32 %v4076, %v4783
      %v4785 = vand.u32 %v4784, 4294901760
      %4786 = vmatmul.mubr.f32.gmra.mrb[0].mxu0 %v4785
      %v4787 = vpop.f32.mrb[0].mxu0
      %v4788 = vadd.f32 %v4646, %v4787
      %v4789 = vpop.f32.mrb[0].mxu0
      %4790 = vmatprep.mubr.f32.mxu0 0.0
      %v4791 = vand.u32 %v4078, 4294901760
      %v4792 = vsub.f32 %v4078, %v4791
      %v4793 = vand.u32 %v4792, 4294901760
      %4794 = vmatmul.mubr.f32.gmra.mrb[0].mxu0 %v4793
      %v4795 = vpop.f32.mrb[0].mxu0
      %v4796 = vadd.f32 %v4653, %v4795
      %v4797 = vpop.f32.mrb[0].mxu0
      %4798 = vmatprep.mubr.f32.mxu0 0.0
      %v4799 = vand.u32 %v4080, 4294901760
      %v4800 = vsub.f32 %v4080, %v4799
      %v4801 = vand.u32 %v4800, 4294901760
      %4802 = vmatmul.mubr.f32.gmra.mrb[0].mxu0 %v4801
      %v4803 = vpop.f32.mrb[0].mxu0
      %v4804 = vadd.f32 %v4660, %v4803
      %v4805 = vpop.f32.mrb[0].mxu0
      %4806 = vmatprep.mubr.f32.mxu0 0.0
      %v4807 = vand.u32 %v4082, 4294901760
      %v4808 = vsub.f32 %v4082, %v4807
      %v4809 = vand.u32 %v4808, 4294901760
      %4810 = vmatmul.mubr.f32.gmra.mrb[0].mxu0 %v4809
      %v4811 = vpop.f32.mrb[0].mxu0
      %v4812 = vadd.f32 %v4667, %v4811
      %v4813 = vpop.f32.mrb[0].mxu0
      %4814 = vdwg.mxu0
      %4815 = vmatprep.subr.mxu0 0.0
      %v4816 = vand.u32 %v4116, 4294901760
      %v4817 = vsub.f32 %v4116, %v4816
      %v4818 = vand.u32 %v4817, 4294901760
      %4819 = vmatpush1.msra.mxu0 %v4818
      %4820 = vmatprep.subr.mxu0 0.0
      %v4821 = vand.u32 %v4118, 4294901760
      %v4822 = vsub.f32 %v4118, %v4821
      %v4823 = vand.u32 %v4822, 4294901760
      %4824 = vmatpush1.msra.mxu0 %v4823
      %4825 = vmatprep.subr.mxu0 0.0
      %v4826 = vand.u32 %v4120, 4294901760
      %v4827 = vsub.f32 %v4120, %v4826
      %v4828 = vand.u32 %v4827, 4294901760
      %4829 = vmatpush1.msra.mxu0 %v4828
      %4830 = vmatprep.subr.mxu0 0.0
      %v4831 = vand.u32 %v4122, 4294901760
      %v4832 = vsub.f32 %v4122, %v4831
      %v4833 = vand.u32 %v4832, 4294901760
      %4834 = vmatpush1.msra.mxu0 %v4833
      %4835 = vmatprep.subr.mxu0 0.0
      %v4836 = vand.u32 %v4124, 4294901760
      %v4837 = vsub.f32 %v4124, %v4836
      %v4838 = vand.u32 %v4837, 4294901760
      %4839 = vmatpush1.msra.mxu0 %v4838
      %4840 = vmatprep.subr.mxu0 0.0
      %v4841 = vand.u32 %v4126, 4294901760
      %v4842 = vsub.f32 %v4126, %v4841
      %v4843 = vand.u32 %v4842, 4294901760
      %4844 = vmatpush1.msra.mxu0 %v4843
      %4845 = vmatprep.subr.mxu0 0.0
      %v4846 = vand.u32 %v4128, 4294901760
      %v4847 = vsub.f32 %v4128, %v4846
      %v4848 = vand.u32 %v4847, 4294901760
      %4849 = vmatpush1.msra.mxu0 %v4848
      %4850 = vmatprep.subr.mxu0 0.0
      %v4851 = vand.u32 %v4130, 4294901760
      %v4852 = vsub.f32 %v4130, %v4851
      %v4853 = vand.u32 %v4852, 4294901760
      %4854 = vmatpush1.msra.mxu0 %v4853
      %4855 = vmatprep.subr.mxu0 0.0
      %v4856 = vand.u32 %v4132, 4294901760
      %v4857 = vsub.f32 %v4132, %v4856
      %v4858 = vand.u32 %v4857, 4294901760
      %4859 = vmatpush1.msra.mxu0 %v4858
      %4860 = vmatprep.subr.mxu0 0.0
      %v4861 = vand.u32 %v4134, 4294901760
      %v4862 = vsub.f32 %v4134, %v4861
      %v4863 = vand.u32 %v4862, 4294901760
      %4864 = vmatpush1.msra.mxu0 %v4863
      %4865 = vmatprep.subr.mxu0 0.0
      %v4866 = vand.u32 %v4136, 4294901760
      %v4867 = vsub.f32 %v4136, %v4866
      %v4868 = vand.u32 %v4867, 4294901760
      %4869 = vmatpush1.msra.mxu0 %v4868
      %4870 = vmatprep.subr.mxu0 0.0
      %v4871 = vand.u32 %v4138, 4294901760
      %v4872 = vsub.f32 %v4138, %v4871
      %v4873 = vand.u32 %v4872, 4294901760
      %4874 = vmatpush1.msra.mxu0 %v4873
      %4875 = vmatprep.subr.mxu0 0.0
      %v4876 = vand.u32 %v4140, 4294901760
      %v4877 = vsub.f32 %v4140, %v4876
      %v4878 = vand.u32 %v4877, 4294901760
      %4879 = vmatpush1.msra.mxu0 %v4878
      %4880 = vmatprep.subr.mxu0 0.0
      %v4881 = vand.u32 %v4142, 4294901760
      %v4882 = vsub.f32 %v4142, %v4881
      %v4883 = vand.u32 %v4882, 4294901760
      %4884 = vmatpush1.msra.mxu0 %v4883
      %4885 = vmatprep.subr.mxu0 0.0
      %v4886 = vand.u32 %v4144, 4294901760
      %v4887 = vsub.f32 %v4144, %v4886
      %v4888 = vand.u32 %v4887, 4294901760
      %4889 = vmatpush1.msra.mxu0 %v4888
      %4890 = vmatprep.subr.mxu0 0.0
      %v4891 = vand.u32 %v4146, 4294901760
      %v4892 = vsub.f32 %v4146, %v4891
      %v4893 = vand.u32 %v4892, 4294901760
      %4894 = vmatpush1.msra.mxu0 %v4893
      %4895 = vmatprep.subr.mxu0 0.0
      %4896 = vmatpush1.msra.mxu0 0.0
      %4897 = vmatprep.subr.mxu0 0.0
      %4898 = vmatpush1.msra.mxu0 0.0
      %4899 = vmatprep.subr.mxu0 0.0
      %4900 = vmatpush1.msra.mxu0 0.0
      %4901 = vmatprep.subr.mxu0 0.0
      %4902 = vmatpush1.msra.mxu0 0.0
      %4903 = vmatprep.subr.mxu0 0.0
      %4904 = vmatpush1.msra.mxu0 0.0
      %4905 = vmatprep.subr.mxu0 0.0
      %4906 = vmatpush1.msra.mxu0 0.0
      %4907 = vmatprep.subr.mxu0 0.0
      %4908 = vmatpush1.msra.mxu0 0.0
      %4909 = vmatprep.subr.mxu0 0.0
      %4910 = vmatpush1.msra.mxu0 0.0
      %4911 = vmatprep.subr.mxu0 0.0
      %4912 = vmatpush1.msra.mxu0 0.0
      %4913 = vmatprep.subr.mxu0 0.0
      %4914 = vmatpush1.msra.mxu0 0.0
      %4915 = vmatprep.subr.mxu0 0.0
      %4916 = vmatpush1.msra.mxu0 0.0
      %4917 = vmatprep.subr.mxu0 0.0
      %4918 = vmatpush1.msra.mxu0 0.0
      %4919 = vmatprep.subr.mxu0 0.0
      %4920 = vmatpush1.msra.mxu0 0.0
      %4921 = vmatprep.subr.mxu0 0.0
      %4922 = vmatpush1.msra.mxu0 0.0
      %4923 = vmatprep.subr.mxu0 0.0
      %4924 = vmatpush1.msra.mxu0 0.0
      %4925 = vmatprep.subr.mxu0 0.0
      %4926 = vmatpush1.msra.mxu0 0.0
      %4927 = vmatprep.mubr.f32.mxu0 0.0
      %v4928 = vand.u32 %v4068, 4294901760
      %4929 = vmatmul.mubr.f32.gmra.mrb[0].mxu0 %v4928
      %v4930 = vpop.f32.mrb[0].mxu0
      %v4931 = vadd.f32 %v4756, %v4930
      %v4932 = vpop.f32.mrb[0].mxu0
      %4933 = vmatprep.mubr.f32.mxu0 0.0
      %v4934 = vand.u32 %v4070, 4294901760
      %4935 = vmatmul.mubr.f32.gmra.mrb[0].mxu0 %v4934
      %v4936 = vpop.f32.mrb[0].mxu0
      %v4937 = vadd.f32 %v4764, %v4936
      %v4938 = vpop.f32.mrb[0].mxu0
      %4939 = vmatprep.mubr.f32.mxu0 0.0
      %v4940 = vand.u32 %v4072, 4294901760
      %4941 = vmatmul.mubr.f32.gmra.mrb[0].mxu0 %v4940
      %v4942 = vpop.f32.mrb[0].mxu0
      %v4943 = vadd.f32 %v4772, %v4942
      %v4944 = vpop.f32.mrb[0].mxu0
      %4945 = vmatprep.mubr.f32.mxu0 0.0
      %v4946 = vand.u32 %v4074, 4294901760
      %4947 = vmatmul.mubr.f32.gmra.mrb[0].mxu0 %v4946
      %v4948 = vpop.f32.mrb[0].mxu0
      %v4949 = vadd.f32 %v4780, %v4948
      %v4950 = vpop.f32.mrb[0].mxu0
      %4951 = vmatprep.mubr.f32.mxu0 0.0
      %v4952 = vand.u32 %v4076, 4294901760
      %4953 = vmatmul.mubr.f32.gmra.mrb[0].mxu0 %v4952
      %v4954 = vpop.f32.mrb[0].mxu0
      %v4955 = vadd.f32 %v4788, %v4954
      %v4956 = vpop.f32.mrb[0].mxu0
      %4957 = vmatprep.mubr.f32.mxu0 0.0
      %v4958 = vand.u32 %v4078, 4294901760
      %4959 = vmatmul.mubr.f32.gmra.mrb[0].mxu0 %v4958
      %v4960 = vpop.f32.mrb[0].mxu0
      %v4961 = vadd.f32 %v4796, %v4960
      %v4962 = vpop.f32.mrb[0].mxu0
      %4963 = vmatprep.mubr.f32.mxu0 0.0
      %v4964 = vand.u32 %v4080, 4294901760
      %4965 = vmatmul.mubr.f32.gmra.mrb[0].mxu0 %v4964
      %v4966 = vpop.f32.mrb[0].mxu0
      %v4967 = vadd.f32 %v4804, %v4966
      %v4968 = vpop.f32.mrb[0].mxu0
      %4969 = vmatprep.mubr.f32.mxu0 0.0
      %v4970 = vand.u32 %v4082, 4294901760
      %4971 = vmatmul.mubr.f32.gmra.mrb[0].mxu0 %v4970
      %v4972 = vpop.f32.mrb[0].mxu0
      %v4973 = vadd.f32 %v4812, %v4972
      %v4974 = vpop.f32.mrb[0].mxu0
      %4975 = vdwg.mxu0
      %4976 = vmatprep.subr.mxu0 0.0
      %v4977 = vand.u32 %v4116, 4294901760
      %4978 = vmatpush1.msra.mxu0 %v4977
      %4979 = vmatprep.subr.mxu0 0.0
      %v4980 = vand.u32 %v4118, 4294901760
      %4981 = vmatpush1.msra.mxu0 %v4980
      %4982 = vmatprep.subr.mxu0 0.0
      %v4983 = vand.u32 %v4120, 4294901760
      %4984 = vmatpush1.msra.mxu0 %v4983
      %4985 = vmatprep.subr.mxu0 0.0
      %v4986 = vand.u32 %v4122, 4294901760
      %4987 = vmatpush1.msra.mxu0 %v4986
      %4988 = vmatprep.subr.mxu0 0.0
      %v4989 = vand.u32 %v4124, 4294901760
      %4990 = vmatpush1.msra.mxu0 %v4989
      %4991 = vmatprep.subr.mxu0 0.0
      %v4992 = vand.u32 %v4126, 4294901760
      %4993 = vmatpush1.msra.mxu0 %v4992
      %4994 = vmatprep.subr.mxu0 0.0
      %v4995 = vand.u32 %v4128, 4294901760
      %4996 = vmatpush1.msra.mxu0 %v4995
      %4997 = vmatprep.subr.mxu0 0.0
      %v4998 = vand.u32 %v4130, 4294901760
      %4999 = vmatpush1.msra.mxu0 %v4998
      %5000 = vmatprep.subr.mxu0 0.0
      %v5001 = vand.u32 %v4132, 4294901760
      %5002 = vmatpush1.msra.mxu0 %v5001
      %5003 = vmatprep.subr.mxu0 0.0
      %v5004 = vand.u32 %v4134, 4294901760
      %5005 = vmatpush1.msra.mxu0 %v5004
      %5006 = vmatprep.subr.mxu0 0.0
      %v5007 = vand.u32 %v4136, 4294901760
      %5008 = vmatpush1.msra.mxu0 %v5007
      %5009 = vmatprep.subr.mxu0 0.0
      %v5010 = vand.u32 %v4138, 4294901760
      %5011 = vmatpush1.msra.mxu0 %v5010
      %5012 = vmatprep.subr.mxu0 0.0
      %v5013 = vand.u32 %v4140, 4294901760
      %5014 = vmatpush1.msra.mxu0 %v5013
      %5015 = vmatprep.subr.mxu0 0.0
      %v5016 = vand.u32 %v4142, 4294901760
      %5017 = vmatpush1.msra.mxu0 %v5016
      %5018 = vmatprep.subr.mxu0 0.0
      %v5019 = vand.u32 %v4144, 4294901760
      %5020 = vmatpush1.msra.mxu0 %v5019
      %5021 = vmatprep.subr.mxu0 0.0
      %v5022 = vand.u32 %v4146, 4294901760
      %5023 = vmatpush1.msra.mxu0 %v5022
      %5024 = vmatprep.subr.mxu0 0.0
      %5025 = vmatpush1.msra.mxu0 0.0
      %5026 = vmatprep.subr.mxu0 0.0
      %5027 = vmatpush1.msra.mxu0 0.0
      %5028 = vmatprep.subr.mxu0 0.0
      %5029 = vmatpush1.msra.mxu0 0.0
      %5030 = vmatprep.subr.mxu0 0.0
      %5031 = vmatpush1.msra.mxu0 0.0
      %5032 = vmatprep.subr.mxu0 0.0
      %5033 = vmatpush1.msra.mxu0 0.0
      %5034 = vmatprep.subr.mxu0 0.0
      %5035 = vmatpush1.msra.mxu0 0.0
      %5036 = vmatprep.subr.mxu0 0.0
      %5037 = vmatpush1.msra.mxu0 0.0
      %5038 = vmatprep.subr.mxu0 0.0
      %5039 = vmatpush1.msra.mxu0 0.0
      %5040 = vmatprep.subr.mxu0 0.0
      %5041 = vmatpush1.msra.mxu0 0.0
      %5042 = vmatprep.subr.mxu0 0.0
      %5043 = vmatpush1.msra.mxu0 0.0
      %5044 = vmatprep.subr.mxu0 0.0
      %5045 = vmatpush1.msra.mxu0 0.0
      %5046 = vmatprep.subr.mxu0 0.0
      %5047 = vmatpush1.msra.mxu0 0.0
      %5048 = vmatprep.subr.mxu0 0.0
      %5049 = vmatpush1.msra.mxu0 0.0
      %5050 = vmatprep.subr.mxu0 0.0
      %5051 = vmatpush1.msra.mxu0 0.0
      %5052 = vmatprep.subr.mxu0 0.0
      %5053 = vmatpush1.msra.mxu0 0.0
      %5054 = vmatprep.subr.mxu0 0.0
      %5055 = vmatpush1.msra.mxu0 0.0
      %5056 = vmatprep.mubr.f32.mxu0 0.0
      %v5057 = vand.u32 %v4068, 4294901760
      %5058 = vmatmul.mubr.f32.gmra.mrb[0].mxu0 %v5057
      %v5059 = vpop.f32.mrb[0].mxu0
      %v5060 = vadd.f32 %v4931, %v5059
      %v5061 = vpop.f32.mrb[0].mxu0
      %5062 = vmatprep.mubr.f32.mxu0 0.0
      %v5063 = vand.u32 %v4070, 4294901760
      %5064 = vmatmul.mubr.f32.gmra.mrb[0].mxu0 %v5063
      %v5065 = vpop.f32.mrb[0].mxu0
      %v5066 = vadd.f32 %v4937, %v5065
      %v5067 = vpop.f32.mrb[0].mxu0
      %5068 = vmatprep.mubr.f32.mxu0 0.0
      %v5069 = vand.u32 %v4072, 4294901760
      %5070 = vmatmul.mubr.f32.gmra.mrb[0].mxu0 %v5069
      %v5071 = vpop.f32.mrb[0].mxu0
      %v5072 = vadd.f32 %v4943, %v5071
      %v5073 = vpop.f32.mrb[0].mxu0
      %5074 = vmatprep.mubr.f32.mxu0 0.0
      %v5075 = vand.u32 %v4074, 4294901760
      %5076 = vmatmul.mubr.f32.gmra.mrb[0].mxu0 %v5075
      %v5077 = vpop.f32.mrb[0].mxu0
      %v5078 = vadd.f32 %v4949, %v5077
      %v5079 = vpop.f32.mrb[0].mxu0
      %5080 = vmatprep.mubr.f32.mxu0 0.0
      %v5081 = vand.u32 %v4076, 4294901760
      %5082 = vmatmul.mubr.f32.gmra.mrb[0].mxu0 %v5081
      %v5083 = vpop.f32.mrb[0].mxu0
      %v5084 = vadd.f32 %v4955, %v5083
      %v5085 = vpop.f32.mrb[0].mxu0
      %5086 = vmatprep.mubr.f32.mxu0 0.0
      %v5087 = vand.u32 %v4078, 4294901760
      %5088 = vmatmul.mubr.f32.gmra.mrb[0].mxu0 %v5087
      %v5089 = vpop.f32.mrb[0].mxu0
      %v5090 = vadd.f32 %v4961, %v5089
      %v5091 = vpop.f32.mrb[0].mxu0
      %5092 = vmatprep.mubr.f32.mxu0 0.0
      %v5093 = vand.u32 %v4080, 4294901760
      %5094 = vmatmul.mubr.f32.gmra.mrb[0].mxu0 %v5093
      %v5095 = vpop.f32.mrb[0].mxu0
      %v5096 = vadd.f32 %v4967, %v5095
      %v5097 = vpop.f32.mrb[0].mxu0
      %5098 = vmatprep.mubr.f32.mxu0 0.0
      %v5099 = vand.u32 %v4082, 4294901760
      %5100 = vmatmul.mubr.f32.gmra.mrb[0].mxu0 %v5099
      %v5101 = vpop.f32.mrb[0].mxu0
      %v5102 = vadd.f32 %v4973, %v5101
      %v5103 = vpop.f32.mrb[0].mxu0
      %5104 = vdwg.mxu0
      %v5105 = vrcp.pop %v4084
      %v5106 = vmul.f32 %v5060, %v5105
      %v5107 = vrcp.pop %v4086
      %v5108 = vmul.f32 %v5066, %v5107
      %v5109 = vrcp.pop %v4088
      %v5110 = vmul.f32 %v5072, %v5109
      %v5111 = vrcp.pop %v4090
      %v5112 = vmul.f32 %v5078, %v5111
      %v5113 = vrcp.pop %v4092
      %v5114 = vmul.f32 %v5084, %v5113
      %v5115 = vrcp.pop %v4094
      %v5116 = vmul.f32 %v5090, %v5115
      %v5117 = vrcp.pop %v4096
      %v5118 = vmul.f32 %v5096, %v5117
      %v5119 = vrcp.pop %v4098
      %v5120 = vmul.f32 %v5102, %v5119
      %5121 = vrot.lane.b32.xlu0 %v3956, 112
      %v5122 = vpop.permute.xlu0 %5121
      %v5124 = vadd.f32 %v5106, %v5122
      %v5125 = vadd.f32 %v5108, %v5122
      %v5126 = vadd.f32 %v5110, %v5122
      %v5127 = vadd.f32 %v5112, %v5122
      %v5128 = vadd.f32 %v5114, %v5122
      %v5129 = vadd.f32 %v5116, %v5122
      %v5130 = vadd.f32 %v5118, %v5122
      %v5131 = vadd.f32 %v5120, %v5122
      %5140 = vrot.lane.b32.xlu0 %v5124, 16
      %v5141 = vpop.permute.xlu0 %5140
      %5142 = vrot.lane.b32.xlu0 %v5125, 16
      %v5143 = vpop.permute.xlu0 %5142
      %5144 = vrot.lane.b32.xlu0 %v5126, 16
      %v5145 = vpop.permute.xlu0 %5144
      %5146 = vrot.lane.b32.xlu0 %v5127, 16
      %v5147 = vpop.permute.xlu0 %5146
      %5148 = vrot.lane.b32.xlu0 %v5128, 16
      %v5149 = vpop.permute.xlu0 %5148
      %5150 = vrot.lane.b32.xlu0 %v5129, 16
      %v5151 = vpop.permute.xlu0 %5150
      %5152 = vrot.lane.b32.xlu0 %v5130, 16
      %v5153 = vpop.permute.xlu0 %5152
      %5154 = vrot.lane.b32.xlu0 %v5131, 16
      %v5155 = vpop.permute.xlu0 %5154
      %vm5164 = vcmask 261248
      %5165 = vst.msk [vmem:[%s329] sm:$0xff] %vm5164, %v5141
      %5166 = vst.msk [vmem:[%s329 + $0x8] sm:$0xff] %vm5164, %v5143
      %5167 = vst.msk [vmem:[%s329 + $0x10] sm:$0xff] %vm5164, %v5145
      %5168 = vst.msk [vmem:[%s329 + $0x18] sm:$0xff] %vm5164, %v5147
      %5169 = vst.msk [vmem:[%s329 + $0x20] sm:$0xff] %vm5164, %v5149
      %5170 = vst.msk [vmem:[%s329 + $0x28] sm:$0xff] %vm5164, %v5151
      %5171 = vst.msk [vmem:[%s329 + $0x30] sm:$0xff] %vm5164, %v5153
      %5172 = vst.msk [vmem:[%s329 + $0x38] sm:$0xff] %vm5164, %v5155
      %5173 = vset.pattern.permute.xlu0 2
      %5174 = vperm.xlu0 %5173, %v2800
      %v5175 = vpop.permute.xlu0 %5174
      %5177 = vset.pattern.permute.xlu0 2
      %5178 = vperm.xlu0 %5177, %v2806
      %v5179 = vpop.permute.xlu0 %5178
      %5181 = vset.pattern.permute.xlu0 2
      %5182 = vperm.xlu0 %5181, %v2812
      %v5183 = vpop.permute.xlu0 %5182
      %5185 = vset.pattern.permute.xlu0 2
      %5186 = vperm.xlu0 %5185, %v2818
      %v5187 = vpop.permute.xlu0 %5186
      %5189 = vset.pattern.permute.xlu0 2
      %5190 = vperm.xlu0 %5189, %v2824
      %v5191 = vpop.permute.xlu0 %5190
      %5193 = vset.pattern.permute.xlu0 2
      %5194 = vperm.xlu0 %5193, %v2830
      %v5195 = vpop.permute.xlu0 %5194
      %5197 = vset.pattern.permute.xlu0 2
      %5198 = vperm.xlu0 %5197, %v2836
      %v5199 = vpop.permute.xlu0 %5198
      %5201 = vset.pattern.permute.xlu0 2
      %5202 = vperm.xlu0 %5201, %v2842
      %v5203 = vpop.permute.xlu0 %5202
      %v5205 = vlaneseq
      %v5206 = vshrl.u32 %v5205, 7
      %v5207 = vsub.s32 2, %v5206
      %v5208 = vrot.slane %v2020, %v5207
      %v5209 = vadd.f32 %v5175, %v5208
      %v5210 = vadd.f32 %v5179, %v5208
      %v5211 = vadd.f32 %v5183, %v5208
      %v5212 = vadd.f32 %v5187, %v5208
      %v5213 = vadd.f32 %v5191, %v5208
      %v5214 = vadd.f32 %v5195, %v5208
      %v5215 = vadd.f32 %v5199, %v5208
      %v5216 = vadd.f32 %v5203, %v5208
      %v5217 = vmul.f32 %v5209, 0.2
      %v5218 = vmul.f32 %v5210, 0.2
      %v5219 = vmul.f32 %v5211, 0.2
      %v5220 = vmul.f32 %v5212, 0.2
      %v5221 = vmul.f32 %v5213, 0.2
      %v5222 = vmul.f32 %v5214, 0.2
      %v5223 = vmul.f32 %v5215, 0.2
      %v5224 = vmul.f32 %v5216, 0.2
      %v5225 = vmax.f32 %v5209, %v5217
      %v5226 = vmax.f32 %v5210, %v5218
      %v5227 = vmax.f32 %v5211, %v5219
      %v5228 = vmax.f32 %v5212, %v5220
      %v5229 = vmax.f32 %v5213, %v5221
      %v5230 = vmax.f32 %v5214, %v5222
      %v5231 = vmax.f32 %v5215, %v5223
      %v5232 = vmax.f32 %v5216, %v5224
      %v5233 = vadd.f32 %v5225, %v2853
      %v5234 = vadd.f32 %v5226, %v2854
      %v5235 = vadd.f32 %v5227, %v2855
      %v5236 = vadd.f32 %v5228, %v2856
      %v5237 = vadd.f32 %v5229, %v2857
      %v5238 = vadd.f32 %v5230, %v2858
      %v5239 = vadd.f32 %v5231, %v2859
      %v5240 = vadd.f32 %v5232, %v2860
      %5241 = vmax.xlane.f32.xlu0 %v5233
      %v5242 = vpop.xlane.xlu0 %5241
      %5243 = vmax.xlane.f32.xlu0 %v5234
      %v5244 = vpop.xlane.xlu0 %5243
      %5245 = vmax.xlane.f32.xlu0 %v5235
      %v5246 = vpop.xlane.xlu0 %5245
      %5247 = vmax.xlane.f32.xlu0 %v5236
      %v5248 = vpop.xlane.xlu0 %5247
      %5249 = vmax.xlane.f32.xlu0 %v5237
      %v5250 = vpop.xlane.xlu0 %5249
      %5251 = vmax.xlane.f32.xlu0 %v5238
      %v5252 = vpop.xlane.xlu0 %5251
      %5253 = vmax.xlane.f32.xlu0 %v5239
      %v5254 = vpop.xlane.xlu0 %5253
      %5255 = vmax.xlane.f32.xlu0 %v5240
      %v5256 = vpop.xlane.xlu0 %5255
      %v5257 = vsub.f32 %v5233, %v5242
      %v5258 = vsub.f32 %v5234, %v5244
      %v5259 = vsub.f32 %v5235, %v5246
      %v5260 = vsub.f32 %v5236, %v5248
      %v5261 = vsub.f32 %v5237, %v5250
      %v5262 = vsub.f32 %v5238, %v5252
      %v5263 = vsub.f32 %v5239, %v5254
      %v5264 = vsub.f32 %v5240, %v5256
      %v5265 = vmul.f32 %v5257, 1.442695
      %v5266 = vpow.pop %v5265
      %v5267 = vmul.f32 %v5258, 1.442695
      %v5268 = vpow.pop %v5267
      %v5269 = vmul.f32 %v5259, 1.442695
      %v5270 = vpow.pop %v5269
      %v5271 = vmul.f32 %v5260, 1.442695
      %v5272 = vpow.pop %v5271
      %v5273 = vmul.f32 %v5261, 1.442695
      %v5274 = vpow.pop %v5273
      %v5275 = vmul.f32 %v5262, 1.442695
      %v5276 = vpow.pop %v5275
      %v5277 = vmul.f32 %v5263, 1.442695
      %v5278 = vpow.pop %v5277
      %v5279 = vmul.f32 %v5264, 1.442695
      %v5280 = vpow.pop %v5279
      %5281 = vadd.xlane.f32.xlu0 %v5266
      %v5282 = vpop.xlane.xlu0 %5281
      %5283 = vadd.xlane.f32.xlu0 %v5268
      %v5284 = vpop.xlane.xlu0 %5283
      %5285 = vadd.xlane.f32.xlu0 %v5270
      %v5286 = vpop.xlane.xlu0 %5285
      %5287 = vadd.xlane.f32.xlu0 %v5272
      %v5288 = vpop.xlane.xlu0 %5287
      %5289 = vadd.xlane.f32.xlu0 %v5274
      %v5290 = vpop.xlane.xlu0 %5289
      %5291 = vadd.xlane.f32.xlu0 %v5276
      %v5292 = vpop.xlane.xlu0 %5291
      %5293 = vadd.xlane.f32.xlu0 %v5278
      %v5294 = vpop.xlane.xlu0 %5293
      %5295 = vadd.xlane.f32.xlu0 %v5280
      %v5296 = vpop.xlane.xlu0 %5295
      %5297 = vrot.lane.b32.xlu0 %v1437, 96
      %v5298 = vpop.permute.xlu0 %5297
      %5299 = vrot.lane.b32.xlu0 %v1443, 96
      %v5300 = vpop.permute.xlu0 %5299
      %5301 = vrot.lane.b32.xlu0 %v1449, 96
      %v5302 = vpop.permute.xlu0 %5301
      %5303 = vrot.lane.b32.xlu0 %v1455, 96
      %v5304 = vpop.permute.xlu0 %5303
      %5305 = vrot.lane.b32.xlu0 %v1461, 96
      %v5306 = vpop.permute.xlu0 %5305
      %5307 = vrot.lane.b32.xlu0 %v1467, 96
      %v5308 = vpop.permute.xlu0 %5307
      %5309 = vrot.lane.b32.xlu0 %v1473, 96
      %v5310 = vpop.permute.xlu0 %5309
      %5311 = vrot.lane.b32.xlu0 %v1479, 96
      %v5312 = vpop.permute.xlu0 %5311
      %5313 = vrot.lane.b32.xlu0 %v1485, 96
      %v5314 = vpop.permute.xlu0 %5313
      %5315 = vrot.lane.b32.xlu0 %v1491, 96
      %v5316 = vpop.permute.xlu0 %5315
      %5317 = vrot.lane.b32.xlu0 %v1497, 96
      %v5318 = vpop.permute.xlu0 %5317
      %5319 = vrot.lane.b32.xlu0 %v1503, 96
      %v5320 = vpop.permute.xlu0 %5319
      %5321 = vrot.lane.b32.xlu0 %v1509, 96
      %v5322 = vpop.permute.xlu0 %5321
      %5323 = vrot.lane.b32.xlu0 %v1515, 96
      %v5324 = vpop.permute.xlu0 %5323
      %5325 = vrot.lane.b32.xlu0 %v1521, 96
      %v5326 = vpop.permute.xlu0 %5325
      %5327 = vrot.lane.b32.xlu0 %v1527, 96
      %v5328 = vpop.permute.xlu0 %5327
      %5345 = vmatprep.subr.mxu0 0.0
      %v5346 = vand.u32 %v5298, 4294901760
      %5347 = vmatpush1.msra.mxu0 %v5346
      %5348 = vmatprep.subr.mxu0 0.0
      %v5349 = vand.u32 %v5300, 4294901760
      %5350 = vmatpush1.msra.mxu0 %v5349
      %5351 = vmatprep.subr.mxu0 0.0
      %v5352 = vand.u32 %v5302, 4294901760
      %5353 = vmatpush1.msra.mxu0 %v5352
      %5354 = vmatprep.subr.mxu0 0.0
      %v5355 = vand.u32 %v5304, 4294901760
      %5356 = vmatpush1.msra.mxu0 %v5355
      %5357 = vmatprep.subr.mxu0 0.0
      %v5358 = vand.u32 %v5306, 4294901760
      %5359 = vmatpush1.msra.mxu0 %v5358
      %5360 = vmatprep.subr.mxu0 0.0
      %v5361 = vand.u32 %v5308, 4294901760
      %5362 = vmatpush1.msra.mxu0 %v5361
      %5363 = vmatprep.subr.mxu0 0.0
      %v5364 = vand.u32 %v5310, 4294901760
      %5365 = vmatpush1.msra.mxu0 %v5364
      %5366 = vmatprep.subr.mxu0 0.0
      %v5367 = vand.u32 %v5312, 4294901760
      %5368 = vmatpush1.msra.mxu0 %v5367
      %5369 = vmatprep.subr.mxu0 0.0
      %v5370 = vand.u32 %v5314, 4294901760
      %5371 = vmatpush1.msra.mxu0 %v5370
      %5372 = vmatprep.subr.mxu0 0.0
      %v5373 = vand.u32 %v5316, 4294901760
      %5374 = vmatpush1.msra.mxu0 %v5373
      %5375 = vmatprep.subr.mxu0 0.0
      %v5376 = vand.u32 %v5318, 4294901760
      %5377 = vmatpush1.msra.mxu0 %v5376
      %5378 = vmatprep.subr.mxu0 0.0
      %v5379 = vand.u32 %v5320, 4294901760
      %5380 = vmatpush1.msra.mxu0 %v5379
      %5381 = vmatprep.subr.mxu0 0.0
      %v5382 = vand.u32 %v5322, 4294901760
      %5383 = vmatpush1.msra.mxu0 %v5382
      %5384 = vmatprep.subr.mxu0 0.0
      %v5385 = vand.u32 %v5324, 4294901760
      %5386 = vmatpush1.msra.mxu0 %v5385
      %5387 = vmatprep.subr.mxu0 0.0
      %v5388 = vand.u32 %v5326, 4294901760
      %5389 = vmatpush1.msra.mxu0 %v5388
      %5390 = vmatprep.subr.mxu0 0.0
      %v5391 = vand.u32 %v5328, 4294901760
      %5392 = vmatpush1.msra.mxu0 %v5391
      %5393 = vmatprep.subr.mxu0 0.0
      %5394 = vmatpush1.msra.mxu0 0.0
      %5395 = vmatprep.subr.mxu0 0.0
      %5396 = vmatpush1.msra.mxu0 0.0
      %5397 = vmatprep.subr.mxu0 0.0
      %5398 = vmatpush1.msra.mxu0 0.0
      %5399 = vmatprep.subr.mxu0 0.0
      %5400 = vmatpush1.msra.mxu0 0.0
      %5401 = vmatprep.subr.mxu0 0.0
      %5402 = vmatpush1.msra.mxu0 0.0
      %5403 = vmatprep.subr.mxu0 0.0
      %5404 = vmatpush1.msra.mxu0 0.0
      %5405 = vmatprep.subr.mxu0 0.0
      %5406 = vmatpush1.msra.mxu0 0.0
      %5407 = vmatprep.subr.mxu0 0.0
      %5408 = vmatpush1.msra.mxu0 0.0
      %5409 = vmatprep.subr.mxu0 0.0
      %5410 = vmatpush1.msra.mxu0 0.0
      %5411 = vmatprep.subr.mxu0 0.0
      %5412 = vmatpush1.msra.mxu0 0.0
      %5413 = vmatprep.subr.mxu0 0.0
      %5414 = vmatpush1.msra.mxu0 0.0
      %5415 = vmatprep.subr.mxu0 0.0
      %5416 = vmatpush1.msra.mxu0 0.0
      %5417 = vmatprep.subr.mxu0 0.0
      %5418 = vmatpush1.msra.mxu0 0.0
      %5419 = vmatprep.subr.mxu0 0.0
      %5420 = vmatpush1.msra.mxu0 0.0
      %5421 = vmatprep.subr.mxu0 0.0
      %5422 = vmatpush1.msra.mxu0 0.0
      %5423 = vmatprep.subr.mxu0 0.0
      %5424 = vmatpush1.msra.mxu0 0.0
      %5425 = vmatprep.mubr.f32.mxu0 0.0
      %v5426 = vand.u32 %v5266, 4294901760
      %v5427 = vsub.f32 %v5266, %v5426
      %v5428 = vand.u32 %v5427, 4294901760
      %v5429 = vsub.f32 %v5427, %v5428
      %v5430 = vand.u32 %v5429, 4294901760
      %5431 = vmatmul.mubr.f32.gmra.mrb[0].mxu0 %v5430
      %v5432 = vpop.f32.mrb[0].mxu0
      %v5433 = vadd.f32 0.0, %v5432
      %v5434 = vpop.f32.mrb[0].mxu0
      %5435 = vmatprep.mubr.f32.mxu0 0.0
      %v5436 = vand.u32 %v5268, 4294901760
      %v5437 = vsub.f32 %v5268, %v5436
      %v5438 = vand.u32 %v5437, 4294901760
      %v5439 = vsub.f32 %v5437, %v5438
      %v5440 = vand.u32 %v5439, 4294901760
      %5441 = vmatmul.mubr.f32.gmra.mrb[0].mxu0 %v5440
      %v5442 = vpop.f32.mrb[0].mxu0
      %v5443 = vadd.f32 0.0, %v5442
      %v5444 = vpop.f32.mrb[0].mxu0
      %5445 = vmatprep.mubr.f32.mxu0 0.0
      %v5446 = vand.u32 %v5270, 4294901760
      %v5447 = vsub.f32 %v5270, %v5446
      %v5448 = vand.u32 %v5447, 4294901760
      %v5449 = vsub.f32 %v5447, %v5448
      %v5450 = vand.u32 %v5449, 4294901760
      %5451 = vmatmul.mubr.f32.gmra.mrb[0].mxu0 %v5450
      %v5452 = vpop.f32.mrb[0].mxu0
      %v5453 = vadd.f32 0.0, %v5452
      %v5454 = vpop.f32.mrb[0].mxu0
      %5455 = vmatprep.mubr.f32.mxu0 0.0
      %v5456 = vand.u32 %v5272, 4294901760
      %v5457 = vsub.f32 %v5272, %v5456
      %v5458 = vand.u32 %v5457, 4294901760
      %v5459 = vsub.f32 %v5457, %v5458
      %v5460 = vand.u32 %v5459, 4294901760
      %5461 = vmatmul.mubr.f32.gmra.mrb[0].mxu0 %v5460
      %v5462 = vpop.f32.mrb[0].mxu0
      %v5463 = vadd.f32 0.0, %v5462
      %v5464 = vpop.f32.mrb[0].mxu0
      %5465 = vmatprep.mubr.f32.mxu0 0.0
      %v5466 = vand.u32 %v5274, 4294901760
      %v5467 = vsub.f32 %v5274, %v5466
      %v5468 = vand.u32 %v5467, 4294901760
      %v5469 = vsub.f32 %v5467, %v5468
      %v5470 = vand.u32 %v5469, 4294901760
      %5471 = vmatmul.mubr.f32.gmra.mrb[0].mxu0 %v5470
      %v5472 = vpop.f32.mrb[0].mxu0
      %v5473 = vadd.f32 0.0, %v5472
      %v5474 = vpop.f32.mrb[0].mxu0
      %5475 = vmatprep.mubr.f32.mxu0 0.0
      %v5476 = vand.u32 %v5276, 4294901760
      %v5477 = vsub.f32 %v5276, %v5476
      %v5478 = vand.u32 %v5477, 4294901760
      %v5479 = vsub.f32 %v5477, %v5478
      %v5480 = vand.u32 %v5479, 4294901760
      %5481 = vmatmul.mubr.f32.gmra.mrb[0].mxu0 %v5480
      %v5482 = vpop.f32.mrb[0].mxu0
      %v5483 = vadd.f32 0.0, %v5482
      %v5484 = vpop.f32.mrb[0].mxu0
      %5485 = vmatprep.mubr.f32.mxu0 0.0
      %v5486 = vand.u32 %v5278, 4294901760
      %v5487 = vsub.f32 %v5278, %v5486
      %v5488 = vand.u32 %v5487, 4294901760
      %v5489 = vsub.f32 %v5487, %v5488
      %v5490 = vand.u32 %v5489, 4294901760
      %5491 = vmatmul.mubr.f32.gmra.mrb[0].mxu0 %v5490
      %v5492 = vpop.f32.mrb[0].mxu0
      %v5493 = vadd.f32 0.0, %v5492
      %v5494 = vpop.f32.mrb[0].mxu0
      %5495 = vmatprep.mubr.f32.mxu0 0.0
      %v5496 = vand.u32 %v5280, 4294901760
      %v5497 = vsub.f32 %v5280, %v5496
      %v5498 = vand.u32 %v5497, 4294901760
      %v5499 = vsub.f32 %v5497, %v5498
      %v5500 = vand.u32 %v5499, 4294901760
      %5501 = vmatmul.mubr.f32.gmra.mrb[0].mxu0 %v5500
      %v5502 = vpop.f32.mrb[0].mxu0
      %v5503 = vadd.f32 0.0, %v5502
      %v5504 = vpop.f32.mrb[0].mxu0
      %5505 = vdwg.mxu0
      %5506 = vmatprep.subr.mxu0 0.0
      %v5507 = vand.u32 %v5298, 4294901760
      %v5508 = vsub.f32 %v5298, %v5507
      %v5509 = vand.u32 %v5508, 4294901760
      %v5510 = vsub.f32 %v5508, %v5509
      %v5511 = vand.u32 %v5510, 4294901760
      %5512 = vmatpush1.msra.mxu0 %v5511
      %5513 = vmatprep.subr.mxu0 0.0
      %v5514 = vand.u32 %v5300, 4294901760
      %v5515 = vsub.f32 %v5300, %v5514
      %v5516 = vand.u32 %v5515, 4294901760
      %v5517 = vsub.f32 %v5515, %v5516
      %v5518 = vand.u32 %v5517, 4294901760
      %5519 = vmatpush1.msra.mxu0 %v5518
      %5520 = vmatprep.subr.mxu0 0.0
      %v5521 = vand.u32 %v5302, 4294901760
      %v5522 = vsub.f32 %v5302, %v5521
      %v5523 = vand.u32 %v5522, 4294901760
      %v5524 = vsub.f32 %v5522, %v5523
      %v5525 = vand.u32 %v5524, 4294901760
      %5526 = vmatpush1.msra.mxu0 %v5525
      %5527 = vmatprep.subr.mxu0 0.0
      %v5528 = vand.u32 %v5304, 4294901760
      %v5529 = vsub.f32 %v5304, %v5528
      %v5530 = vand.u32 %v5529, 4294901760
      %v5531 = vsub.f32 %v5529, %v5530
      %v5532 = vand.u32 %v5531, 4294901760
      %5533 = vmatpush1.msra.mxu0 %v5532
      %5534 = vmatprep.subr.mxu0 0.0
      %v5535 = vand.u32 %v5306, 4294901760
      %v5536 = vsub.f32 %v5306, %v5535
      %v5537 = vand.u32 %v5536, 4294901760
      %v5538 = vsub.f32 %v5536, %v5537
      %v5539 = vand.u32 %v5538, 4294901760
      %5540 = vmatpush1.msra.mxu0 %v5539
      %5541 = vmatprep.subr.mxu0 0.0
      %v5542 = vand.u32 %v5308, 4294901760
      %v5543 = vsub.f32 %v5308, %v5542
      %v5544 = vand.u32 %v5543, 4294901760
      %v5545 = vsub.f32 %v5543, %v5544
      %v5546 = vand.u32 %v5545, 4294901760
      %5547 = vmatpush1.msra.mxu0 %v5546
      %5548 = vmatprep.subr.mxu0 0.0
      %v5549 = vand.u32 %v5310, 4294901760
      %v5550 = vsub.f32 %v5310, %v5549
      %v5551 = vand.u32 %v5550, 4294901760
      %v5552 = vsub.f32 %v5550, %v5551
      %v5553 = vand.u32 %v5552, 4294901760
      %5554 = vmatpush1.msra.mxu0 %v5553
      %5555 = vmatprep.subr.mxu0 0.0
      %v5556 = vand.u32 %v5312, 4294901760
      %v5557 = vsub.f32 %v5312, %v5556
      %v5558 = vand.u32 %v5557, 4294901760
      %v5559 = vsub.f32 %v5557, %v5558
      %v5560 = vand.u32 %v5559, 4294901760
      %5561 = vmatpush1.msra.mxu0 %v5560
      %5562 = vmatprep.subr.mxu0 0.0
      %v5563 = vand.u32 %v5314, 4294901760
      %v5564 = vsub.f32 %v5314, %v5563
      %v5565 = vand.u32 %v5564, 4294901760
      %v5566 = vsub.f32 %v5564, %v5565
      %v5567 = vand.u32 %v5566, 4294901760
      %5568 = vmatpush1.msra.mxu0 %v5567
      %5569 = vmatprep.subr.mxu0 0.0
      %v5570 = vand.u32 %v5316, 4294901760
      %v5571 = vsub.f32 %v5316, %v5570
      %v5572 = vand.u32 %v5571, 4294901760
      %v5573 = vsub.f32 %v5571, %v5572
      %v5574 = vand.u32 %v5573, 4294901760
      %5575 = vmatpush1.msra.mxu0 %v5574
      %5576 = vmatprep.subr.mxu0 0.0
      %v5577 = vand.u32 %v5318, 4294901760
      %v5578 = vsub.f32 %v5318, %v5577
      %v5579 = vand.u32 %v5578, 4294901760
      %v5580 = vsub.f32 %v5578, %v5579
      %v5581 = vand.u32 %v5580, 4294901760
      %5582 = vmatpush1.msra.mxu0 %v5581
      %5583 = vmatprep.subr.mxu0 0.0
      %v5584 = vand.u32 %v5320, 4294901760
      %v5585 = vsub.f32 %v5320, %v5584
      %v5586 = vand.u32 %v5585, 4294901760
      %v5587 = vsub.f32 %v5585, %v5586
      %v5588 = vand.u32 %v5587, 4294901760
      %5589 = vmatpush1.msra.mxu0 %v5588
      %5590 = vmatprep.subr.mxu0 0.0
      %v5591 = vand.u32 %v5322, 4294901760
      %v5592 = vsub.f32 %v5322, %v5591
      %v5593 = vand.u32 %v5592, 4294901760
      %v5594 = vsub.f32 %v5592, %v5593
      %v5595 = vand.u32 %v5594, 4294901760
      %5596 = vmatpush1.msra.mxu0 %v5595
      %5597 = vmatprep.subr.mxu0 0.0
      %v5598 = vand.u32 %v5324, 4294901760
      %v5599 = vsub.f32 %v5324, %v5598
      %v5600 = vand.u32 %v5599, 4294901760
      %v5601 = vsub.f32 %v5599, %v5600
      %v5602 = vand.u32 %v5601, 4294901760
      %5603 = vmatpush1.msra.mxu0 %v5602
      %5604 = vmatprep.subr.mxu0 0.0
      %v5605 = vand.u32 %v5326, 4294901760
      %v5606 = vsub.f32 %v5326, %v5605
      %v5607 = vand.u32 %v5606, 4294901760
      %v5608 = vsub.f32 %v5606, %v5607
      %v5609 = vand.u32 %v5608, 4294901760
      %5610 = vmatpush1.msra.mxu0 %v5609
      %5611 = vmatprep.subr.mxu0 0.0
      %v5612 = vand.u32 %v5328, 4294901760
      %v5613 = vsub.f32 %v5328, %v5612
      %v5614 = vand.u32 %v5613, 4294901760
      %v5615 = vsub.f32 %v5613, %v5614
      %v5616 = vand.u32 %v5615, 4294901760
      %5617 = vmatpush1.msra.mxu0 %v5616
      %5618 = vmatprep.subr.mxu0 0.0
      %5619 = vmatpush1.msra.mxu0 0.0
      %5620 = vmatprep.subr.mxu0 0.0
      %5621 = vmatpush1.msra.mxu0 0.0
      %5622 = vmatprep.subr.mxu0 0.0
      %5623 = vmatpush1.msra.mxu0 0.0
      %5624 = vmatprep.subr.mxu0 0.0
      %5625 = vmatpush1.msra.mxu0 0.0
      %5626 = vmatprep.subr.mxu0 0.0
      %5627 = vmatpush1.msra.mxu0 0.0
      %5628 = vmatprep.subr.mxu0 0.0
      %5629 = vmatpush1.msra.mxu0 0.0
      %5630 = vmatprep.subr.mxu0 0.0
      %5631 = vmatpush1.msra.mxu0 0.0
      %5632 = vmatprep.subr.mxu0 0.0
      %5633 = vmatpush1.msra.mxu0 0.0
      %5634 = vmatprep.subr.mxu0 0.0
      %5635 = vmatpush1.msra.mxu0 0.0
      %5636 = vmatprep.subr.mxu0 0.0
      %5637 = vmatpush1.msra.mxu0 0.0
      %5638 = vmatprep.subr.mxu0 0.0
      %5639 = vmatpush1.msra.mxu0 0.0
      %5640 = vmatprep.subr.mxu0 0.0
      %5641 = vmatpush1.msra.mxu0 0.0
      %5642 = vmatprep.subr.mxu0 0.0
      %5643 = vmatpush1.msra.mxu0 0.0
      %5644 = vmatprep.subr.mxu0 0.0
      %5645 = vmatpush1.msra.mxu0 0.0
      %5646 = vmatprep.subr.mxu0 0.0
      %5647 = vmatpush1.msra.mxu0 0.0
      %5648 = vmatprep.subr.mxu0 0.0
      %5649 = vmatpush1.msra.mxu0 0.0
      %5650 = vmatprep.mubr.f32.mxu0 0.0
      %v5651 = vand.u32 %v5266, 4294901760
      %5652 = vmatmul.mubr.f32.gmra.mrb[0].mxu0 %v5651
      %v5653 = vpop.f32.mrb[0].mxu0
      %v5654 = vadd.f32 %v5433, %v5653
      %v5655 = vpop.f32.mrb[0].mxu0
      %5656 = vmatprep.mubr.f32.mxu0 0.0
      %v5657 = vand.u32 %v5268, 4294901760
      %5658 = vmatmul.mubr.f32.gmra.mrb[0].mxu0 %v5657
      %v5659 = vpop.f32.mrb[0].mxu0
      %v5660 = vadd.f32 %v5443, %v5659
      %v5661 = vpop.f32.mrb[0].mxu0
      %5662 = vmatprep.mubr.f32.mxu0 0.0
      %v5663 = vand.u32 %v5270, 4294901760
      %5664 = vmatmul.mubr.f32.gmra.mrb[0].mxu0 %v5663
      %v5665 = vpop.f32.mrb[0].mxu0
      %v5666 = vadd.f32 %v5453, %v5665
      %v5667 = vpop.f32.mrb[0].mxu0
      %5668 = vmatprep.mubr.f32.mxu0 0.0
      %v5669 = vand.u32 %v5272, 4294901760
      %5670 = vmatmul.mubr.f32.gmra.mrb[0].mxu0 %v5669
      %v5671 = vpop.f32.mrb[0].mxu0
      %v5672 = vadd.f32 %v5463, %v5671
      %v5673 = vpop.f32.mrb[0].mxu0
      %5674 = vmatprep.mubr.f32.mxu0 0.0
      %v5675 = vand.u32 %v5274, 4294901760
      %5676 = vmatmul.mubr.f32.gmra.mrb[0].mxu0 %v5675
      %v5677 = vpop.f32.mrb[0].mxu0
      %v5678 = vadd.f32 %v5473, %v5677
      %v5679 = vpop.f32.mrb[0].mxu0
      %5680 = vmatprep.mubr.f32.mxu0 0.0
      %v5681 = vand.u32 %v5276, 4294901760
      %5682 = vmatmul.mubr.f32.gmra.mrb[0].mxu0 %v5681
      %v5683 = vpop.f32.mrb[0].mxu0
      %v5684 = vadd.f32 %v5483, %v5683
      %v5685 = vpop.f32.mrb[0].mxu0
      %5686 = vmatprep.mubr.f32.mxu0 0.0
      %v5687 = vand.u32 %v5278, 4294901760
      %5688 = vmatmul.mubr.f32.gmra.mrb[0].mxu0 %v5687
      %v5689 = vpop.f32.mrb[0].mxu0
      %v5690 = vadd.f32 %v5493, %v5689
      %v5691 = vpop.f32.mrb[0].mxu0
      %5692 = vmatprep.mubr.f32.mxu0 0.0
      %v5693 = vand.u32 %v5280, 4294901760
      %5694 = vmatmul.mubr.f32.gmra.mrb[0].mxu0 %v5693
      %v5695 = vpop.f32.mrb[0].mxu0
      %v5696 = vadd.f32 %v5503, %v5695
      %v5697 = vpop.f32.mrb[0].mxu0
      %5698 = vdwg.mxu0
      %5699 = vmatprep.subr.mxu0 0.0
      %v5700 = vand.u32 %v5298, 4294901760
      %v5701 = vsub.f32 %v5298, %v5700
      %5702 = vmatpush1.msra.mxu0 %v5701
      %5703 = vmatprep.subr.mxu0 0.0
      %v5704 = vand.u32 %v5300, 4294901760
      %v5705 = vsub.f32 %v5300, %v5704
      %5706 = vmatpush1.msra.mxu0 %v5705
      %5707 = vmatprep.subr.mxu0 0.0
      %v5708 = vand.u32 %v5302, 4294901760
      %v5709 = vsub.f32 %v5302, %v5708
      %5710 = vmatpush1.msra.mxu0 %v5709
      %5711 = vmatprep.subr.mxu0 0.0
      %v5712 = vand.u32 %v5304, 4294901760
      %v5713 = vsub.f32 %v5304, %v5712
      %5714 = vmatpush1.msra.mxu0 %v5713
      %5715 = vmatprep.subr.mxu0 0.0
      %v5716 = vand.u32 %v5306, 4294901760
      %v5717 = vsub.f32 %v5306, %v5716
      %5718 = vmatpush1.msra.mxu0 %v5717
      %5719 = vmatprep.subr.mxu0 0.0
      %v5720 = vand.u32 %v5308, 4294901760
      %v5721 = vsub.f32 %v5308, %v5720
      %5722 = vmatpush1.msra.mxu0 %v5721
      %5723 = vmatprep.subr.mxu0 0.0
      %v5724 = vand.u32 %v5310, 4294901760
      %v5725 = vsub.f32 %v5310, %v5724
      %5726 = vmatpush1.msra.mxu0 %v5725
      %5727 = vmatprep.subr.mxu0 0.0
      %v5728 = vand.u32 %v5312, 4294901760
      %v5729 = vsub.f32 %v5312, %v5728
      %5730 = vmatpush1.msra.mxu0 %v5729
      %5731 = vmatprep.subr.mxu0 0.0
      %v5732 = vand.u32 %v5314, 4294901760
      %v5733 = vsub.f32 %v5314, %v5732
      %5734 = vmatpush1.msra.mxu0 %v5733
      %5735 = vmatprep.subr.mxu0 0.0
      %v5736 = vand.u32 %v5316, 4294901760
      %v5737 = vsub.f32 %v5316, %v5736
      %5738 = vmatpush1.msra.mxu0 %v5737
      %5739 = vmatprep.subr.mxu0 0.0
      %v5740 = vand.u32 %v5318, 4294901760
      %v5741 = vsub.f32 %v5318, %v5740
      %5742 = vmatpush1.msra.mxu0 %v5741
      %5743 = vmatprep.subr.mxu0 0.0
      %v5744 = vand.u32 %v5320, 4294901760
      %v5745 = vsub.f32 %v5320, %v5744
      %5746 = vmatpush1.msra.mxu0 %v5745
      %5747 = vmatprep.subr.mxu0 0.0
      %v5748 = vand.u32 %v5322, 4294901760
      %v5749 = vsub.f32 %v5322, %v5748
      %5750 = vmatpush1.msra.mxu0 %v5749
      %5751 = vmatprep.subr.mxu0 0.0
      %v5752 = vand.u32 %v5324, 4294901760
      %v5753 = vsub.f32 %v5324, %v5752
      %5754 = vmatpush1.msra.mxu0 %v5753
      %5755 = vmatprep.subr.mxu0 0.0
      %v5756 = vand.u32 %v5326, 4294901760
      %v5757 = vsub.f32 %v5326, %v5756
      %5758 = vmatpush1.msra.mxu0 %v5757
      %5759 = vmatprep.subr.mxu0 0.0
      %v5760 = vand.u32 %v5328, 4294901760
      %v5761 = vsub.f32 %v5328, %v5760
      %5762 = vmatpush1.msra.mxu0 %v5761
      %5763 = vmatprep.subr.mxu0 0.0
      %5764 = vmatpush1.msra.mxu0 0.0
      %5765 = vmatprep.subr.mxu0 0.0
      %5766 = vmatpush1.msra.mxu0 0.0
      %5767 = vmatprep.subr.mxu0 0.0
      %5768 = vmatpush1.msra.mxu0 0.0
      %5769 = vmatprep.subr.mxu0 0.0
      %5770 = vmatpush1.msra.mxu0 0.0
      %5771 = vmatprep.subr.mxu0 0.0
      %5772 = vmatpush1.msra.mxu0 0.0
      %5773 = vmatprep.subr.mxu0 0.0
      %5774 = vmatpush1.msra.mxu0 0.0
      %5775 = vmatprep.subr.mxu0 0.0
      %5776 = vmatpush1.msra.mxu0 0.0
      %5777 = vmatprep.subr.mxu0 0.0
      %5778 = vmatpush1.msra.mxu0 0.0
      %5779 = vmatprep.subr.mxu0 0.0
      %5780 = vmatpush1.msra.mxu0 0.0
      %5781 = vmatprep.subr.mxu0 0.0
      %5782 = vmatpush1.msra.mxu0 0.0
      %5783 = vmatprep.subr.mxu0 0.0
      %5784 = vmatpush1.msra.mxu0 0.0
      %5785 = vmatprep.subr.mxu0 0.0
      %5786 = vmatpush1.msra.mxu0 0.0
      %5787 = vmatprep.subr.mxu0 0.0
      %5788 = vmatpush1.msra.mxu0 0.0
      %5789 = vmatprep.subr.mxu0 0.0
      %5790 = vmatpush1.msra.mxu0 0.0
      %5791 = vmatprep.subr.mxu0 0.0
      %5792 = vmatpush1.msra.mxu0 0.0
      %5793 = vmatprep.subr.mxu0 0.0
      %5794 = vmatpush1.msra.mxu0 0.0
      %5795 = vmatprep.mubr.f32.mxu0 0.0
      %v5796 = vand.u32 %v5266, 4294901760
      %v5797 = vsub.f32 %v5266, %v5796
      %5798 = vmatmul.mubr.f32.gmra.mrb[0].mxu0 %v5797
      %v5799 = vpop.f32.mrb[0].mxu0
      %v5800 = vadd.f32 %v5654, %v5799
      %v5801 = vpop.f32.mrb[0].mxu0
      %5802 = vmatprep.mubr.f32.mxu0 0.0
      %v5803 = vand.u32 %v5268, 4294901760
      %v5804 = vsub.f32 %v5268, %v5803
      %5805 = vmatmul.mubr.f32.gmra.mrb[0].mxu0 %v5804
      %v5806 = vpop.f32.mrb[0].mxu0
      %v5807 = vadd.f32 %v5660, %v5806
      %v5808 = vpop.f32.mrb[0].mxu0
      %5809 = vmatprep.mubr.f32.mxu0 0.0
      %v5810 = vand.u32 %v5270, 4294901760
      %v5811 = vsub.f32 %v5270, %v5810
      %5812 = vmatmul.mubr.f32.gmra.mrb[0].mxu0 %v5811
      %v5813 = vpop.f32.mrb[0].mxu0
      %v5814 = vadd.f32 %v5666, %v5813
      %v5815 = vpop.f32.mrb[0].mxu0
      %5816 = vmatprep.mubr.f32.mxu0 0.0
      %v5817 = vand.u32 %v5272, 4294901760
      %v5818 = vsub.f32 %v5272, %v5817
      %5819 = vmatmul.mubr.f32.gmra.mrb[0].mxu0 %v5818
      %v5820 = vpop.f32.mrb[0].mxu0
      %v5821 = vadd.f32 %v5672, %v5820
      %v5822 = vpop.f32.mrb[0].mxu0
      %5823 = vmatprep.mubr.f32.mxu0 0.0
      %v5824 = vand.u32 %v5274, 4294901760
      %v5825 = vsub.f32 %v5274, %v5824
      %5826 = vmatmul.mubr.f32.gmra.mrb[0].mxu0 %v5825
      %v5827 = vpop.f32.mrb[0].mxu0
      %v5828 = vadd.f32 %v5678, %v5827
      %v5829 = vpop.f32.mrb[0].mxu0
      %5830 = vmatprep.mubr.f32.mxu0 0.0
      %v5831 = vand.u32 %v5276, 4294901760
      %v5832 = vsub.f32 %v5276, %v5831
      %5833 = vmatmul.mubr.f32.gmra.mrb[0].mxu0 %v5832
      %v5834 = vpop.f32.mrb[0].mxu0
      %v5835 = vadd.f32 %v5684, %v5834
      %v5836 = vpop.f32.mrb[0].mxu0
      %5837 = vmatprep.mubr.f32.mxu0 0.0
      %v5838 = vand.u32 %v5278, 4294901760
      %v5839 = vsub.f32 %v5278, %v5838
      %5840 = vmatmul.mubr.f32.gmra.mrb[0].mxu0 %v5839
      %v5841 = vpop.f32.mrb[0].mxu0
      %v5842 = vadd.f32 %v5690, %v5841
      %v5843 = vpop.f32.mrb[0].mxu0
      %5844 = vmatprep.mubr.f32.mxu0 0.0
      %v5845 = vand.u32 %v5280, 4294901760
      %v5846 = vsub.f32 %v5280, %v5845
      %5847 = vmatmul.mubr.f32.gmra.mrb[0].mxu0 %v5846
      %v5848 = vpop.f32.mrb[0].mxu0
      %v5849 = vadd.f32 %v5696, %v5848
      %v5850 = vpop.f32.mrb[0].mxu0
      %5851 = vdwg.mxu0
      %5852 = vmatprep.subr.mxu0 0.0
      %v5853 = vand.u32 %v5298, 4294901760
      %5854 = vmatpush1.msra.mxu0 %v5853
      %5855 = vmatprep.subr.mxu0 0.0
      %v5856 = vand.u32 %v5300, 4294901760
      %5857 = vmatpush1.msra.mxu0 %v5856
      %5858 = vmatprep.subr.mxu0 0.0
      %v5859 = vand.u32 %v5302, 4294901760
      %5860 = vmatpush1.msra.mxu0 %v5859
      %5861 = vmatprep.subr.mxu0 0.0
      %v5862 = vand.u32 %v5304, 4294901760
      %5863 = vmatpush1.msra.mxu0 %v5862
      %5864 = vmatprep.subr.mxu0 0.0
      %v5865 = vand.u32 %v5306, 4294901760
      %5866 = vmatpush1.msra.mxu0 %v5865
      %5867 = vmatprep.subr.mxu0 0.0
      %v5868 = vand.u32 %v5308, 4294901760
      %5869 = vmatpush1.msra.mxu0 %v5868
      %5870 = vmatprep.subr.mxu0 0.0
      %v5871 = vand.u32 %v5310, 4294901760
      %5872 = vmatpush1.msra.mxu0 %v5871
      %5873 = vmatprep.subr.mxu0 0.0
      %v5874 = vand.u32 %v5312, 4294901760
      %5875 = vmatpush1.msra.mxu0 %v5874
      %5876 = vmatprep.subr.mxu0 0.0
      %v5877 = vand.u32 %v5314, 4294901760
      %5878 = vmatpush1.msra.mxu0 %v5877
      %5879 = vmatprep.subr.mxu0 0.0
      %v5880 = vand.u32 %v5316, 4294901760
      %5881 = vmatpush1.msra.mxu0 %v5880
      %5882 = vmatprep.subr.mxu0 0.0
      %v5883 = vand.u32 %v5318, 4294901760
      %5884 = vmatpush1.msra.mxu0 %v5883
      %5885 = vmatprep.subr.mxu0 0.0
      %v5886 = vand.u32 %v5320, 4294901760
      %5887 = vmatpush1.msra.mxu0 %v5886
      %5888 = vmatprep.subr.mxu0 0.0
      %v5889 = vand.u32 %v5322, 4294901760
      %5890 = vmatpush1.msra.mxu0 %v5889
      %5891 = vmatprep.subr.mxu0 0.0
      %v5892 = vand.u32 %v5324, 4294901760
      %5893 = vmatpush1.msra.mxu0 %v5892
      %5894 = vmatprep.subr.mxu0 0.0
      %v5895 = vand.u32 %v5326, 4294901760
      %5896 = vmatpush1.msra.mxu0 %v5895
      %5897 = vmatprep.subr.mxu0 0.0
      %v5898 = vand.u32 %v5328, 4294901760
      %5899 = vmatpush1.msra.mxu0 %v5898
      %5900 = vmatprep.subr.mxu0 0.0
      %5901 = vmatpush1.msra.mxu0 0.0
      %5902 = vmatprep.subr.mxu0 0.0
      %5903 = vmatpush1.msra.mxu0 0.0
      %5904 = vmatprep.subr.mxu0 0.0
      %5905 = vmatpush1.msra.mxu0 0.0
      %5906 = vmatprep.subr.mxu0 0.0
      %5907 = vmatpush1.msra.mxu0 0.0
      %5908 = vmatprep.subr.mxu0 0.0
      %5909 = vmatpush1.msra.mxu0 0.0
      %5910 = vmatprep.subr.mxu0 0.0
      %5911 = vmatpush1.msra.mxu0 0.0
      %5912 = vmatprep.subr.mxu0 0.0
      %5913 = vmatpush1.msra.mxu0 0.0
      %5914 = vmatprep.subr.mxu0 0.0
      %5915 = vmatpush1.msra.mxu0 0.0
      %5916 = vmatprep.subr.mxu0 0.0
      %5917 = vmatpush1.msra.mxu0 0.0
      %5918 = vmatprep.subr.mxu0 0.0
      %5919 = vmatpush1.msra.mxu0 0.0
      %5920 = vmatprep.subr.mxu0 0.0
      %5921 = vmatpush1.msra.mxu0 0.0
      %5922 = vmatprep.subr.mxu0 0.0
      %5923 = vmatpush1.msra.mxu0 0.0
      %5924 = vmatprep.subr.mxu0 0.0
      %5925 = vmatpush1.msra.mxu0 0.0
      %5926 = vmatprep.subr.mxu0 0.0
      %5927 = vmatpush1.msra.mxu0 0.0
      %5928 = vmatprep.subr.mxu0 0.0
      %5929 = vmatpush1.msra.mxu0 0.0
      %5930 = vmatprep.subr.mxu0 0.0
      %5931 = vmatpush1.msra.mxu0 0.0
      %5932 = vmatprep.mubr.f32.mxu0 0.0
      %v5933 = vand.u32 %v5266, 4294901760
      %v5934 = vsub.f32 %v5266, %v5933
      %v5935 = vand.u32 %v5934, 4294901760
      %5936 = vmatmul.mubr.f32.gmra.mrb[0].mxu0 %v5935
      %v5937 = vpop.f32.mrb[0].mxu0
      %v5938 = vadd.f32 %v5800, %v5937
      %v5939 = vpop.f32.mrb[0].mxu0
      %5940 = vmatprep.mubr.f32.mxu0 0.0
      %v5941 = vand.u32 %v5268, 4294901760
      %v5942 = vsub.f32 %v5268, %v5941
      %v5943 = vand.u32 %v5942, 4294901760
      %5944 = vmatmul.mubr.f32.gmra.mrb[0].mxu0 %v5943
      %v5945 = vpop.f32.mrb[0].mxu0
      %v5946 = vadd.f32 %v5807, %v5945
      %v5947 = vpop.f32.mrb[0].mxu0
      %5948 = vmatprep.mubr.f32.mxu0 0.0
      %v5949 = vand.u32 %v5270, 4294901760
      %v5950 = vsub.f32 %v5270, %v5949
      %v5951 = vand.u32 %v5950, 4294901760
      %5952 = vmatmul.mubr.f32.gmra.mrb[0].mxu0 %v5951
      %v5953 = vpop.f32.mrb[0].mxu0
      %v5954 = vadd.f32 %v5814, %v5953
      %v5955 = vpop.f32.mrb[0].mxu0
      %5956 = vmatprep.mubr.f32.mxu0 0.0
      %v5957 = vand.u32 %v5272, 4294901760
      %v5958 = vsub.f32 %v5272, %v5957
      %v5959 = vand.u32 %v5958, 4294901760
      %5960 = vmatmul.mubr.f32.gmra.mrb[0].mxu0 %v5959
      %v5961 = vpop.f32.mrb[0].mxu0
      %v5962 = vadd.f32 %v5821, %v5961
      %v5963 = vpop.f32.mrb[0].mxu0
      %5964 = vmatprep.mubr.f32.mxu0 0.0
      %v5965 = vand.u32 %v5274, 4294901760
      %v5966 = vsub.f32 %v5274, %v5965
      %v5967 = vand.u32 %v5966, 4294901760
      %5968 = vmatmul.mubr.f32.gmra.mrb[0].mxu0 %v5967
      %v5969 = vpop.f32.mrb[0].mxu0
      %v5970 = vadd.f32 %v5828, %v5969
      %v5971 = vpop.f32.mrb[0].mxu0
      %5972 = vmatprep.mubr.f32.mxu0 0.0
      %v5973 = vand.u32 %v5276, 4294901760
      %v5974 = vsub.f32 %v5276, %v5973
      %v5975 = vand.u32 %v5974, 4294901760
      %5976 = vmatmul.mubr.f32.gmra.mrb[0].mxu0 %v5975
      %v5977 = vpop.f32.mrb[0].mxu0
      %v5978 = vadd.f32 %v5835, %v5977
      %v5979 = vpop.f32.mrb[0].mxu0
      %5980 = vmatprep.mubr.f32.mxu0 0.0
      %v5981 = vand.u32 %v5278, 4294901760
      %v5982 = vsub.f32 %v5278, %v5981
      %v5983 = vand.u32 %v5982, 4294901760
      %5984 = vmatmul.mubr.f32.gmra.mrb[0].mxu0 %v5983
      %v5985 = vpop.f32.mrb[0].mxu0
      %v5986 = vadd.f32 %v5842, %v5985
      %v5987 = vpop.f32.mrb[0].mxu0
      %5988 = vmatprep.mubr.f32.mxu0 0.0
      %v5989 = vand.u32 %v5280, 4294901760
      %v5990 = vsub.f32 %v5280, %v5989
      %v5991 = vand.u32 %v5990, 4294901760
      %5992 = vmatmul.mubr.f32.gmra.mrb[0].mxu0 %v5991
      %v5993 = vpop.f32.mrb[0].mxu0
      %v5994 = vadd.f32 %v5849, %v5993
      %v5995 = vpop.f32.mrb[0].mxu0
      %5996 = vdwg.mxu0
      %5997 = vmatprep.subr.mxu0 0.0
      %v5998 = vand.u32 %v5298, 4294901760
      %v5999 = vsub.f32 %v5298, %v5998
      %v6000 = vand.u32 %v5999, 4294901760
      %6001 = vmatpush1.msra.mxu0 %v6000
      %6002 = vmatprep.subr.mxu0 0.0
      %v6003 = vand.u32 %v5300, 4294901760
      %v6004 = vsub.f32 %v5300, %v6003
      %v6005 = vand.u32 %v6004, 4294901760
      %6006 = vmatpush1.msra.mxu0 %v6005
      %6007 = vmatprep.subr.mxu0 0.0
      %v6008 = vand.u32 %v5302, 4294901760
      %v6009 = vsub.f32 %v5302, %v6008
      %v6010 = vand.u32 %v6009, 4294901760
      %6011 = vmatpush1.msra.mxu0 %v6010
      %6012 = vmatprep.subr.mxu0 0.0
      %v6013 = vand.u32 %v5304, 4294901760
      %v6014 = vsub.f32 %v5304, %v6013
      %v6015 = vand.u32 %v6014, 4294901760
      %6016 = vmatpush1.msra.mxu0 %v6015
      %6017 = vmatprep.subr.mxu0 0.0
      %v6018 = vand.u32 %v5306, 4294901760
      %v6019 = vsub.f32 %v5306, %v6018
      %v6020 = vand.u32 %v6019, 4294901760
      %6021 = vmatpush1.msra.mxu0 %v6020
      %6022 = vmatprep.subr.mxu0 0.0
      %v6023 = vand.u32 %v5308, 4294901760
      %v6024 = vsub.f32 %v5308, %v6023
      %v6025 = vand.u32 %v6024, 4294901760
      %6026 = vmatpush1.msra.mxu0 %v6025
      %6027 = vmatprep.subr.mxu0 0.0
      %v6028 = vand.u32 %v5310, 4294901760
      %v6029 = vsub.f32 %v5310, %v6028
      %v6030 = vand.u32 %v6029, 4294901760
      %6031 = vmatpush1.msra.mxu0 %v6030
      %6032 = vmatprep.subr.mxu0 0.0
      %v6033 = vand.u32 %v5312, 4294901760
      %v6034 = vsub.f32 %v5312, %v6033
      %v6035 = vand.u32 %v6034, 4294901760
      %6036 = vmatpush1.msra.mxu0 %v6035
      %6037 = vmatprep.subr.mxu0 0.0
      %v6038 = vand.u32 %v5314, 4294901760
      %v6039 = vsub.f32 %v5314, %v6038
      %v6040 = vand.u32 %v6039, 4294901760
      %6041 = vmatpush1.msra.mxu0 %v6040
      %6042 = vmatprep.subr.mxu0 0.0
      %v6043 = vand.u32 %v5316, 4294901760
      %v6044 = vsub.f32 %v5316, %v6043
      %v6045 = vand.u32 %v6044, 4294901760
      %6046 = vmatpush1.msra.mxu0 %v6045
      %6047 = vmatprep.subr.mxu0 0.0
      %v6048 = vand.u32 %v5318, 4294901760
      %v6049 = vsub.f32 %v5318, %v6048
      %v6050 = vand.u32 %v6049, 4294901760
      %6051 = vmatpush1.msra.mxu0 %v6050
      %6052 = vmatprep.subr.mxu0 0.0
      %v6053 = vand.u32 %v5320, 4294901760
      %v6054 = vsub.f32 %v5320, %v6053
      %v6055 = vand.u32 %v6054, 4294901760
      %6056 = vmatpush1.msra.mxu0 %v6055
      %6057 = vmatprep.subr.mxu0 0.0
      %v6058 = vand.u32 %v5322, 4294901760
      %v6059 = vsub.f32 %v5322, %v6058
      %v6060 = vand.u32 %v6059, 4294901760
      %6061 = vmatpush1.msra.mxu0 %v6060
      %6062 = vmatprep.subr.mxu0 0.0
      %v6063 = vand.u32 %v5324, 4294901760
      %v6064 = vsub.f32 %v5324, %v6063
      %v6065 = vand.u32 %v6064, 4294901760
      %6066 = vmatpush1.msra.mxu0 %v6065
      %6067 = vmatprep.subr.mxu0 0.0
      %v6068 = vand.u32 %v5326, 4294901760
      %v6069 = vsub.f32 %v5326, %v6068
      %v6070 = vand.u32 %v6069, 4294901760
      %6071 = vmatpush1.msra.mxu0 %v6070
      %6072 = vmatprep.subr.mxu0 0.0
      %v6073 = vand.u32 %v5328, 4294901760
      %v6074 = vsub.f32 %v5328, %v6073
      %v6075 = vand.u32 %v6074, 4294901760
      %6076 = vmatpush1.msra.mxu0 %v6075
      %6077 = vmatprep.subr.mxu0 0.0
      %6078 = vmatpush1.msra.mxu0 0.0
      %6079 = vmatprep.subr.mxu0 0.0
      %6080 = vmatpush1.msra.mxu0 0.0
      %6081 = vmatprep.subr.mxu0 0.0
      %6082 = vmatpush1.msra.mxu0 0.0
      %6083 = vmatprep.subr.mxu0 0.0
      %6084 = vmatpush1.msra.mxu0 0.0
      %6085 = vmatprep.subr.mxu0 0.0
      %6086 = vmatpush1.msra.mxu0 0.0
      %6087 = vmatprep.subr.mxu0 0.0
      %6088 = vmatpush1.msra.mxu0 0.0
      %6089 = vmatprep.subr.mxu0 0.0
      %6090 = vmatpush1.msra.mxu0 0.0
      %6091 = vmatprep.subr.mxu0 0.0
      %6092 = vmatpush1.msra.mxu0 0.0
      %6093 = vmatprep.subr.mxu0 0.0
      %6094 = vmatpush1.msra.mxu0 0.0
      %6095 = vmatprep.subr.mxu0 0.0
      %6096 = vmatpush1.msra.mxu0 0.0
      %6097 = vmatprep.subr.mxu0 0.0
      %6098 = vmatpush1.msra.mxu0 0.0
      %6099 = vmatprep.subr.mxu0 0.0
      %6100 = vmatpush1.msra.mxu0 0.0
      %6101 = vmatprep.subr.mxu0 0.0
      %6102 = vmatpush1.msra.mxu0 0.0
      %6103 = vmatprep.subr.mxu0 0.0
      %6104 = vmatpush1.msra.mxu0 0.0
      %6105 = vmatprep.subr.mxu0 0.0
      %6106 = vmatpush1.msra.mxu0 0.0
      %6107 = vmatprep.subr.mxu0 0.0
      %6108 = vmatpush1.msra.mxu0 0.0
      %6109 = vmatprep.mubr.f32.mxu0 0.0
      %v6110 = vand.u32 %v5266, 4294901760
      %6111 = vmatmul.mubr.f32.gmra.mrb[0].mxu0 %v6110
      %v6112 = vpop.f32.mrb[0].mxu0
      %v6113 = vadd.f32 %v5938, %v6112
      %v6114 = vpop.f32.mrb[0].mxu0
      %6115 = vmatprep.mubr.f32.mxu0 0.0
      %v6116 = vand.u32 %v5268, 4294901760
      %6117 = vmatmul.mubr.f32.gmra.mrb[0].mxu0 %v6116
      %v6118 = vpop.f32.mrb[0].mxu0
      %v6119 = vadd.f32 %v5946, %v6118
      %v6120 = vpop.f32.mrb[0].mxu0
      %6121 = vmatprep.mubr.f32.mxu0 0.0
      %v6122 = vand.u32 %v5270, 4294901760
      %6123 = vmatmul.mubr.f32.gmra.mrb[0].mxu0 %v6122
      %v6124 = vpop.f32.mrb[0].mxu0
      %v6125 = vadd.f32 %v5954, %v6124
      %v6126 = vpop.f32.mrb[0].mxu0
      %6127 = vmatprep.mubr.f32.mxu0 0.0
      %v6128 = vand.u32 %v5272, 4294901760
      %6129 = vmatmul.mubr.f32.gmra.mrb[0].mxu0 %v6128
      %v6130 = vpop.f32.mrb[0].mxu0
      %v6131 = vadd.f32 %v5962, %v6130
      %v6132 = vpop.f32.mrb[0].mxu0
      %6133 = vmatprep.mubr.f32.mxu0 0.0
      %v6134 = vand.u32 %v5274, 4294901760
      %6135 = vmatmul.mubr.f32.gmra.mrb[0].mxu0 %v6134
      %v6136 = vpop.f32.mrb[0].mxu0
      %v6137 = vadd.f32 %v5970, %v6136
      %v6138 = vpop.f32.mrb[0].mxu0
      %6139 = vmatprep.mubr.f32.mxu0 0.0
      %v6140 = vand.u32 %v5276, 4294901760
      %6141 = vmatmul.mubr.f32.gmra.mrb[0].mxu0 %v6140
      %v6142 = vpop.f32.mrb[0].mxu0
      %v6143 = vadd.f32 %v5978, %v6142
      %v6144 = vpop.f32.mrb[0].mxu0
      %6145 = vmatprep.mubr.f32.mxu0 0.0
      %v6146 = vand.u32 %v5278, 4294901760
      %6147 = vmatmul.mubr.f32.gmra.mrb[0].mxu0 %v6146
      %v6148 = vpop.f32.mrb[0].mxu0
      %v6149 = vadd.f32 %v5986, %v6148
      %v6150 = vpop.f32.mrb[0].mxu0
      %6151 = vmatprep.mubr.f32.mxu0 0.0
      %v6152 = vand.u32 %v5280, 4294901760
      %6153 = vmatmul.mubr.f32.gmra.mrb[0].mxu0 %v6152
      %v6154 = vpop.f32.mrb[0].mxu0
      %v6155 = vadd.f32 %v5994, %v6154
      %v6156 = vpop.f32.mrb[0].mxu0
      %6157 = vdwg.mxu0
      %6158 = vmatprep.subr.mxu0 0.0
      %v6159 = vand.u32 %v5298, 4294901760
      %6160 = vmatpush1.msra.mxu0 %v6159
      %6161 = vmatprep.subr.mxu0 0.0
      %v6162 = vand.u32 %v5300, 4294901760
      %6163 = vmatpush1.msra.mxu0 %v6162
      %6164 = vmatprep.subr.mxu0 0.0
      %v6165 = vand.u32 %v5302, 4294901760
      %6166 = vmatpush1.msra.mxu0 %v6165
      %6167 = vmatprep.subr.mxu0 0.0
      %v6168 = vand.u32 %v5304, 4294901760
      %6169 = vmatpush1.msra.mxu0 %v6168
      %6170 = vmatprep.subr.mxu0 0.0
      %v6171 = vand.u32 %v5306, 4294901760
      %6172 = vmatpush1.msra.mxu0 %v6171
      %6173 = vmatprep.subr.mxu0 0.0
      %v6174 = vand.u32 %v5308, 4294901760
      %6175 = vmatpush1.msra.mxu0 %v6174
      %6176 = vmatprep.subr.mxu0 0.0
      %v6177 = vand.u32 %v5310, 4294901760
      %6178 = vmatpush1.msra.mxu0 %v6177
      %6179 = vmatprep.subr.mxu0 0.0
      %v6180 = vand.u32 %v5312, 4294901760
      %6181 = vmatpush1.msra.mxu0 %v6180
      %6182 = vmatprep.subr.mxu0 0.0
      %v6183 = vand.u32 %v5314, 4294901760
      %6184 = vmatpush1.msra.mxu0 %v6183
      %6185 = vmatprep.subr.mxu0 0.0
      %v6186 = vand.u32 %v5316, 4294901760
      %6187 = vmatpush1.msra.mxu0 %v6186
      %6188 = vmatprep.subr.mxu0 0.0
      %v6189 = vand.u32 %v5318, 4294901760
      %6190 = vmatpush1.msra.mxu0 %v6189
      %6191 = vmatprep.subr.mxu0 0.0
      %v6192 = vand.u32 %v5320, 4294901760
      %6193 = vmatpush1.msra.mxu0 %v6192
      %6194 = vmatprep.subr.mxu0 0.0
      %v6195 = vand.u32 %v5322, 4294901760
      %6196 = vmatpush1.msra.mxu0 %v6195
      %6197 = vmatprep.subr.mxu0 0.0
      %v6198 = vand.u32 %v5324, 4294901760
      %6199 = vmatpush1.msra.mxu0 %v6198
      %6200 = vmatprep.subr.mxu0 0.0
      %v6201 = vand.u32 %v5326, 4294901760
      %6202 = vmatpush1.msra.mxu0 %v6201
      %6203 = vmatprep.subr.mxu0 0.0
      %v6204 = vand.u32 %v5328, 4294901760
      %6205 = vmatpush1.msra.mxu0 %v6204
      %6206 = vmatprep.subr.mxu0 0.0
      %6207 = vmatpush1.msra.mxu0 0.0
      %6208 = vmatprep.subr.mxu0 0.0
      %6209 = vmatpush1.msra.mxu0 0.0
      %6210 = vmatprep.subr.mxu0 0.0
      %6211 = vmatpush1.msra.mxu0 0.0
      %6212 = vmatprep.subr.mxu0 0.0
      %6213 = vmatpush1.msra.mxu0 0.0
      %6214 = vmatprep.subr.mxu0 0.0
      %6215 = vmatpush1.msra.mxu0 0.0
      %6216 = vmatprep.subr.mxu0 0.0
      %6217 = vmatpush1.msra.mxu0 0.0
      %6218 = vmatprep.subr.mxu0 0.0
      %6219 = vmatpush1.msra.mxu0 0.0
      %6220 = vmatprep.subr.mxu0 0.0
      %6221 = vmatpush1.msra.mxu0 0.0
      %6222 = vmatprep.subr.mxu0 0.0
      %6223 = vmatpush1.msra.mxu0 0.0
      %6224 = vmatprep.subr.mxu0 0.0
      %6225 = vmatpush1.msra.mxu0 0.0
      %6226 = vmatprep.subr.mxu0 0.0
      %6227 = vmatpush1.msra.mxu0 0.0
      %6228 = vmatprep.subr.mxu0 0.0
      %6229 = vmatpush1.msra.mxu0 0.0
      %6230 = vmatprep.subr.mxu0 0.0
      %6231 = vmatpush1.msra.mxu0 0.0
      %6232 = vmatprep.subr.mxu0 0.0
      %6233 = vmatpush1.msra.mxu0 0.0
      %6234 = vmatprep.subr.mxu0 0.0
      %6235 = vmatpush1.msra.mxu0 0.0
      %6236 = vmatprep.subr.mxu0 0.0
      %6237 = vmatpush1.msra.mxu0 0.0
      %6238 = vmatprep.mubr.f32.mxu0 0.0
      %v6239 = vand.u32 %v5266, 4294901760
      %6240 = vmatmul.mubr.f32.gmra.mrb[0].mxu0 %v6239
      %v6241 = vpop.f32.mrb[0].mxu0
      %v6242 = vadd.f32 %v6113, %v6241
      %v6243 = vpop.f32.mrb[0].mxu0
      %6244 = vmatprep.mubr.f32.mxu0 0.0
      %v6245 = vand.u32 %v5268, 4294901760
      %6246 = vmatmul.mubr.f32.gmra.mrb[0].mxu0 %v6245
      %v6247 = vpop.f32.mrb[0].mxu0
      %v6248 = vadd.f32 %v6119, %v6247
      %v6249 = vpop.f32.mrb[0].mxu0
      %6250 = vmatprep.mubr.f32.mxu0 0.0
      %v6251 = vand.u32 %v5270, 4294901760
      %6252 = vmatmul.mubr.f32.gmra.mrb[0].mxu0 %v6251
      %v6253 = vpop.f32.mrb[0].mxu0
      %v6254 = vadd.f32 %v6125, %v6253
      %v6255 = vpop.f32.mrb[0].mxu0
      %6256 = vmatprep.mubr.f32.mxu0 0.0
      %v6257 = vand.u32 %v5272, 4294901760
      %6258 = vmatmul.mubr.f32.gmra.mrb[0].mxu0 %v6257
      %v6259 = vpop.f32.mrb[0].mxu0
      %v6260 = vadd.f32 %v6131, %v6259
      %v6261 = vpop.f32.mrb[0].mxu0
      %6262 = vmatprep.mubr.f32.mxu0 0.0
      %v6263 = vand.u32 %v5274, 4294901760
      %6264 = vmatmul.mubr.f32.gmra.mrb[0].mxu0 %v6263
      %v6265 = vpop.f32.mrb[0].mxu0
      %v6266 = vadd.f32 %v6137, %v6265
      %v6267 = vpop.f32.mrb[0].mxu0
      %6268 = vmatprep.mubr.f32.mxu0 0.0
      %v6269 = vand.u32 %v5276, 4294901760
      %6270 = vmatmul.mubr.f32.gmra.mrb[0].mxu0 %v6269
      %v6271 = vpop.f32.mrb[0].mxu0
      %v6272 = vadd.f32 %v6143, %v6271
      %v6273 = vpop.f32.mrb[0].mxu0
      %6274 = vmatprep.mubr.f32.mxu0 0.0
      %v6275 = vand.u32 %v5278, 4294901760
      %6276 = vmatmul.mubr.f32.gmra.mrb[0].mxu0 %v6275
      %v6277 = vpop.f32.mrb[0].mxu0
      %v6278 = vadd.f32 %v6149, %v6277
      %v6279 = vpop.f32.mrb[0].mxu0
      %6280 = vmatprep.mubr.f32.mxu0 0.0
      %v6281 = vand.u32 %v5280, 4294901760
      %6282 = vmatmul.mubr.f32.gmra.mrb[0].mxu0 %v6281
      %v6283 = vpop.f32.mrb[0].mxu0
      %v6284 = vadd.f32 %v6155, %v6283
      %v6285 = vpop.f32.mrb[0].mxu0
      %6286 = vdwg.mxu0
      %v6287 = vrcp.pop %v5282
      %v6288 = vmul.f32 %v6242, %v6287
      %v6289 = vrcp.pop %v5284
      %v6290 = vmul.f32 %v6248, %v6289
      %v6291 = vrcp.pop %v5286
      %v6292 = vmul.f32 %v6254, %v6291
      %v6293 = vrcp.pop %v5288
      %v6294 = vmul.f32 %v6260, %v6293
      %v6295 = vrcp.pop %v5290
      %v6296 = vmul.f32 %v6266, %v6295
      %v6297 = vrcp.pop %v5292
      %v6298 = vmul.f32 %v6272, %v6297
      %v6299 = vrcp.pop %v5294
      %v6300 = vmul.f32 %v6278, %v6299
      %v6301 = vrcp.pop %v5296
      %v6302 = vmul.f32 %v6284, %v6301
      %6303 = vrot.lane.b32.xlu0 %v3956, 96
      %v6304 = vpop.permute.xlu0 %6303
      %v6306 = vadd.f32 %v6288, %v6304
      %v6307 = vadd.f32 %v6290, %v6304
      %v6308 = vadd.f32 %v6292, %v6304
      %v6309 = vadd.f32 %v6294, %v6304
      %v6310 = vadd.f32 %v6296, %v6304
      %v6311 = vadd.f32 %v6298, %v6304
      %v6312 = vadd.f32 %v6300, %v6304
      %v6313 = vadd.f32 %v6302, %v6304
      %6322 = vrot.lane.b32.xlu0 %v6306, 32
      %v6323 = vpop.permute.xlu0 %6322
      %6324 = vrot.lane.b32.xlu0 %v6307, 32
      %v6325 = vpop.permute.xlu0 %6324
      %6326 = vrot.lane.b32.xlu0 %v6308, 32
      %v6327 = vpop.permute.xlu0 %6326
      %6328 = vrot.lane.b32.xlu0 %v6309, 32
      %v6329 = vpop.permute.xlu0 %6328
      %6330 = vrot.lane.b32.xlu0 %v6310, 32
      %v6331 = vpop.permute.xlu0 %6330
      %6332 = vrot.lane.b32.xlu0 %v6311, 32
      %v6333 = vpop.permute.xlu0 %6332
      %6334 = vrot.lane.b32.xlu0 %v6312, 32
      %v6335 = vpop.permute.xlu0 %6334
      %6336 = vrot.lane.b32.xlu0 %v6313, 32
      %v6337 = vpop.permute.xlu0 %6336
      %vm6346 = vcmask 392448
      %6347 = vst.msk [vmem:[%s329] sm:$0xff] %vm6346, %v6323
      %6348 = vst.msk [vmem:[%s329 + $0x8] sm:$0xff] %vm6346, %v6325
      %6349 = vst.msk [vmem:[%s329 + $0x10] sm:$0xff] %vm6346, %v6327
      %6350 = vst.msk [vmem:[%s329 + $0x18] sm:$0xff] %vm6346, %v6329
      %6351 = vst.msk [vmem:[%s329 + $0x20] sm:$0xff] %vm6346, %v6331
      %6352 = vst.msk [vmem:[%s329 + $0x28] sm:$0xff] %vm6346, %v6333
      %6353 = vst.msk [vmem:[%s329 + $0x30] sm:$0xff] %vm6346, %v6335
      %6354 = vst.msk [vmem:[%s329 + $0x38] sm:$0xff] %vm6346, %v6337
      %6355 = vset.pattern.permute.xlu0 3
      %6356 = vperm.xlu0 %6355, %v2800
      %v6357 = vpop.permute.xlu0 %6356
      %6359 = vset.pattern.permute.xlu0 3
      %6360 = vperm.xlu0 %6359, %v2806
      %v6361 = vpop.permute.xlu0 %6360
      %6363 = vset.pattern.permute.xlu0 3
      %6364 = vperm.xlu0 %6363, %v2812
      %v6365 = vpop.permute.xlu0 %6364
      %6367 = vset.pattern.permute.xlu0 3
      %6368 = vperm.xlu0 %6367, %v2818
      %v6369 = vpop.permute.xlu0 %6368
      %6371 = vset.pattern.permute.xlu0 3
      %6372 = vperm.xlu0 %6371, %v2824
      %v6373 = vpop.permute.xlu0 %6372
      %6375 = vset.pattern.permute.xlu0 3
      %6376 = vperm.xlu0 %6375, %v2830
      %v6377 = vpop.permute.xlu0 %6376
      %6379 = vset.pattern.permute.xlu0 3
      %6380 = vperm.xlu0 %6379, %v2836
      %v6381 = vpop.permute.xlu0 %6380
      %6383 = vset.pattern.permute.xlu0 3
      %6384 = vperm.xlu0 %6383, %v2842
      %v6385 = vpop.permute.xlu0 %6384
      %v6387 = vlaneseq
      %v6388 = vshrl.u32 %v6387, 7
      %v6389 = vsub.s32 3, %v6388
      %v6390 = vrot.slane %v2020, %v6389
      %v6391 = vadd.f32 %v6357, %v6390
      %v6392 = vadd.f32 %v6361, %v6390
      %v6393 = vadd.f32 %v6365, %v6390
      %v6394 = vadd.f32 %v6369, %v6390
      %v6395 = vadd.f32 %v6373, %v6390
      %v6396 = vadd.f32 %v6377, %v6390
      %v6397 = vadd.f32 %v6381, %v6390
      %v6398 = vadd.f32 %v6385, %v6390
      %v6399 = vmul.f32 %v6391, 0.2
      %v6400 = vmul.f32 %v6392, 0.2
      %v6401 = vmul.f32 %v6393, 0.2
      %v6402 = vmul.f32 %v6394, 0.2
      %v6403 = vmul.f32 %v6395, 0.2
      %v6404 = vmul.f32 %v6396, 0.2
      %v6405 = vmul.f32 %v6397, 0.2
      %v6406 = vmul.f32 %v6398, 0.2
      %v6407 = vmax.f32 %v6391, %v6399
      %v6408 = vmax.f32 %v6392, %v6400
      %v6409 = vmax.f32 %v6393, %v6401
      %v6410 = vmax.f32 %v6394, %v6402
      %v6411 = vmax.f32 %v6395, %v6403
      %v6412 = vmax.f32 %v6396, %v6404
      %v6413 = vmax.f32 %v6397, %v6405
      %v6414 = vmax.f32 %v6398, %v6406
      %v6415 = vadd.f32 %v6407, %v2853
      %v6416 = vadd.f32 %v6408, %v2854
      %v6417 = vadd.f32 %v6409, %v2855
      %v6418 = vadd.f32 %v6410, %v2856
      %v6419 = vadd.f32 %v6411, %v2857
      %v6420 = vadd.f32 %v6412, %v2858
      %v6421 = vadd.f32 %v6413, %v2859
      %v6422 = vadd.f32 %v6414, %v2860
      %6423 = vmax.xlane.f32.xlu0 %v6415
      %v6424 = vpop.xlane.xlu0 %6423
      %6425 = vmax.xlane.f32.xlu0 %v6416
      %v6426 = vpop.xlane.xlu0 %6425
      %6427 = vmax.xlane.f32.xlu0 %v6417
      %v6428 = vpop.xlane.xlu0 %6427
      %6429 = vmax.xlane.f32.xlu0 %v6418
      %v6430 = vpop.xlane.xlu0 %6429
      %6431 = vmax.xlane.f32.xlu0 %v6419
      %v6432 = vpop.xlane.xlu0 %6431
      %6433 = vmax.xlane.f32.xlu0 %v6420
      %v6434 = vpop.xlane.xlu0 %6433
      %6435 = vmax.xlane.f32.xlu0 %v6421
      %v6436 = vpop.xlane.xlu0 %6435
      %6437 = vmax.xlane.f32.xlu0 %v6422
      %v6438 = vpop.xlane.xlu0 %6437
      %v6439 = vsub.f32 %v6415, %v6424
      %v6440 = vsub.f32 %v6416, %v6426
      %v6441 = vsub.f32 %v6417, %v6428
      %v6442 = vsub.f32 %v6418, %v6430
      %v6443 = vsub.f32 %v6419, %v6432
      %v6444 = vsub.f32 %v6420, %v6434
      %v6445 = vsub.f32 %v6421, %v6436
      %v6446 = vsub.f32 %v6422, %v6438
      %v6447 = vmul.f32 %v6439, 1.442695
      %v6448 = vpow.pop %v6447
      %v6449 = vmul.f32 %v6440, 1.442695
      %v6450 = vpow.pop %v6449
      %v6451 = vmul.f32 %v6441, 1.442695
      %v6452 = vpow.pop %v6451
      %v6453 = vmul.f32 %v6442, 1.442695
      %v6454 = vpow.pop %v6453
      %v6455 = vmul.f32 %v6443, 1.442695
      %v6456 = vpow.pop %v6455
      %v6457 = vmul.f32 %v6444, 1.442695
      %v6458 = vpow.pop %v6457
      %v6459 = vmul.f32 %v6445, 1.442695
      %v6460 = vpow.pop %v6459
      %v6461 = vmul.f32 %v6446, 1.442695
      %v6462 = vpow.pop %v6461
      %6463 = vadd.xlane.f32.xlu0 %v6448
      %v6464 = vpop.xlane.xlu0 %6463
      %6465 = vadd.xlane.f32.xlu0 %v6450
      %v6466 = vpop.xlane.xlu0 %6465
      %6467 = vadd.xlane.f32.xlu0 %v6452
      %v6468 = vpop.xlane.xlu0 %6467
      %6469 = vadd.xlane.f32.xlu0 %v6454
      %v6470 = vpop.xlane.xlu0 %6469
      %6471 = vadd.xlane.f32.xlu0 %v6456
      %v6472 = vpop.xlane.xlu0 %6471
      %6473 = vadd.xlane.f32.xlu0 %v6458
      %v6474 = vpop.xlane.xlu0 %6473
      %6475 = vadd.xlane.f32.xlu0 %v6460
      %v6476 = vpop.xlane.xlu0 %6475
      %6477 = vadd.xlane.f32.xlu0 %v6462
      %v6478 = vpop.xlane.xlu0 %6477
      %6479 = vrot.lane.b32.xlu0 %v1437, 80
      %v6480 = vpop.permute.xlu0 %6479
      %6481 = vrot.lane.b32.xlu0 %v1443, 80
      %v6482 = vpop.permute.xlu0 %6481
      %6483 = vrot.lane.b32.xlu0 %v1449, 80
      %v6484 = vpop.permute.xlu0 %6483
      %6485 = vrot.lane.b32.xlu0 %v1455, 80
      %v6486 = vpop.permute.xlu0 %6485
      %6487 = vrot.lane.b32.xlu0 %v1461, 80
      %v6488 = vpop.permute.xlu0 %6487
      %6489 = vrot.lane.b32.xlu0 %v1467, 80
      %v6490 = vpop.permute.xlu0 %6489
      %6491 = vrot.lane.b32.xlu0 %v1473, 80
      %v6492 = vpop.permute.xlu0 %6491
      %6493 = vrot.lane.b32.xlu0 %v1479, 80
      %v6494 = vpop.permute.xlu0 %6493
      %6495 = vrot.lane.b32.xlu0 %v1485, 80
      %v6496 = vpop.permute.xlu0 %6495
      %6497 = vrot.lane.b32.xlu0 %v1491, 80
      %v6498 = vpop.permute.xlu0 %6497
      %6499 = vrot.lane.b32.xlu0 %v1497, 80
      %v6500 = vpop.permute.xlu0 %6499
      %6501 = vrot.lane.b32.xlu0 %v1503, 80
      %v6502 = vpop.permute.xlu0 %6501
      %6503 = vrot.lane.b32.xlu0 %v1509, 80
      %v6504 = vpop.permute.xlu0 %6503
      %6505 = vrot.lane.b32.xlu0 %v1515, 80
      %v6506 = vpop.permute.xlu0 %6505
      %6507 = vrot.lane.b32.xlu0 %v1521, 80
      %v6508 = vpop.permute.xlu0 %6507
      %6509 = vrot.lane.b32.xlu0 %v1527, 80
      %v6510 = vpop.permute.xlu0 %6509
      %6527 = vmatprep.subr.mxu0 0.0
      %v6528 = vand.u32 %v6480, 4294901760
      %6529 = vmatpush1.msra.mxu0 %v6528
      %6530 = vmatprep.subr.mxu0 0.0
      %v6531 = vand.u32 %v6482, 4294901760
      %6532 = vmatpush1.msra.mxu0 %v6531
      %6533 = vmatprep.subr.mxu0 0.0
      %v6534 = vand.u32 %v6484, 4294901760
      %6535 = vmatpush1.msra.mxu0 %v6534
      %6536 = vmatprep.subr.mxu0 0.0
      %v6537 = vand.u32 %v6486, 4294901760
      %6538 = vmatpush1.msra.mxu0 %v6537
      %6539 = vmatprep.subr.mxu0 0.0
      %v6540 = vand.u32 %v6488, 4294901760
      %6541 = vmatpush1.msra.mxu0 %v6540
      %6542 = vmatprep.subr.mxu0 0.0
      %v6543 = vand.u32 %v6490, 4294901760
      %6544 = vmatpush1.msra.mxu0 %v6543
      %6545 = vmatprep.subr.mxu0 0.0
      %v6546 = vand.u32 %v6492, 4294901760
      %6547 = vmatpush1.msra.mxu0 %v6546
      %6548 = vmatprep.subr.mxu0 0.0
      %v6549 = vand.u32 %v6494, 4294901760
      %6550 = vmatpush1.msra.mxu0 %v6549
      %6551 = vmatprep.subr.mxu0 0.0
      %v6552 = vand.u32 %v6496, 4294901760
      %6553 = vmatpush1.msra.mxu0 %v6552
      %6554 = vmatprep.subr.mxu0 0.0
      %v6555 = vand.u32 %v6498, 4294901760
      %6556 = vmatpush1.msra.mxu0 %v6555
      %6557 = vmatprep.subr.mxu0 0.0
      %v6558 = vand.u32 %v6500, 4294901760
      %6559 = vmatpush1.msra.mxu0 %v6558
      %6560 = vmatprep.subr.mxu0 0.0
      %v6561 = vand.u32 %v6502, 4294901760
      %6562 = vmatpush1.msra.mxu0 %v6561
      %6563 = vmatprep.subr.mxu0 0.0
      %v6564 = vand.u32 %v6504, 4294901760
      %6565 = vmatpush1.msra.mxu0 %v6564
      %6566 = vmatprep.subr.mxu0 0.0
      %v6567 = vand.u32 %v6506, 4294901760
      %6568 = vmatpush1.msra.mxu0 %v6567
      %6569 = vmatprep.subr.mxu0 0.0
      %v6570 = vand.u32 %v6508, 4294901760
      %6571 = vmatpush1.msra.mxu0 %v6570
      %6572 = vmatprep.subr.mxu0 0.0
      %v6573 = vand.u32 %v6510, 4294901760
      %6574 = vmatpush1.msra.mxu0 %v6573
      %6575 = vmatprep.subr.mxu0 0.0
      %6576 = vmatpush1.msra.mxu0 0.0
      %6577 = vmatprep.subr.mxu0 0.0
      %6578 = vmatpush1.msra.mxu0 0.0
      %6579 = vmatprep.subr.mxu0 0.0
      %6580 = vmatpush1.msra.mxu0 0.0
      %6581 = vmatprep.subr.mxu0 0.0
      %6582 = vmatpush1.msra.mxu0 0.0
      %6583 = vmatprep.subr.mxu0 0.0
      %6584 = vmatpush1.msra.mxu0 0.0
      %6585 = vmatprep.subr.mxu0 0.0
      %6586 = vmatpush1.msra.mxu0 0.0
      %6587 = vmatprep.subr.mxu0 0.0
      %6588 = vmatpush1.msra.mxu0 0.0
      %6589 = vmatprep.subr.mxu0 0.0
      %6590 = vmatpush1.msra.mxu0 0.0
      %6591 = vmatprep.subr.mxu0 0.0
      %6592 = vmatpush1.msra.mxu0 0.0
      %6593 = vmatprep.subr.mxu0 0.0
      %6594 = vmatpush1.msra.mxu0 0.0
      %6595 = vmatprep.subr.mxu0 0.0
      %6596 = vmatpush1.msra.mxu0 0.0
      %6597 = vmatprep.subr.mxu0 0.0
      %6598 = vmatpush1.msra.mxu0 0.0
      %6599 = vmatprep.subr.mxu0 0.0
      %6600 = vmatpush1.msra.mxu0 0.0
      %6601 = vmatprep.subr.mxu0 0.0
      %6602 = vmatpush1.msra.mxu0 0.0
      %6603 = vmatprep.subr.mxu0 0.0
      %6604 = vmatpush1.msra.mxu0 0.0
      %6605 = vmatprep.subr.mxu0 0.0
      %6606 = vmatpush1.msra.mxu0 0.0
      %6607 = vmatprep.mubr.f32.mxu0 0.0
      %v6608 = vand.u32 %v6448, 4294901760
      %v6609 = vsub.f32 %v6448, %v6608
      %v6610 = vand.u32 %v6609, 4294901760
      %v6611 = vsub.f32 %v6609, %v6610
      %v6612 = vand.u32 %v6611, 4294901760
      %6613 = vmatmul.mubr.f32.gmra.mrb[0].mxu0 %v6612
      %v6614 = vpop.f32.mrb[0].mxu0
      %v6615 = vadd.f32 0.0, %v6614
      %v6616 = vpop.f32.mrb[0].mxu0
      %6617 = vmatprep.mubr.f32.mxu0 0.0
      %v6618 = vand.u32 %v6450, 4294901760
      %v6619 = vsub.f32 %v6450, %v6618
      %v6620 = vand.u32 %v6619, 4294901760
      %v6621 = vsub.f32 %v6619, %v6620
      %v6622 = vand.u32 %v6621, 4294901760
      %6623 = vmatmul.mubr.f32.gmra.mrb[0].mxu0 %v6622
      %v6624 = vpop.f32.mrb[0].mxu0
      %v6625 = vadd.f32 0.0, %v6624
      %v6626 = vpop.f32.mrb[0].mxu0
      %6627 = vmatprep.mubr.f32.mxu0 0.0
      %v6628 = vand.u32 %v6452, 4294901760
      %v6629 = vsub.f32 %v6452, %v6628
      %v6630 = vand.u32 %v6629, 4294901760
      %v6631 = vsub.f32 %v6629, %v6630
      %v6632 = vand.u32 %v6631, 4294901760
      %6633 = vmatmul.mubr.f32.gmra.mrb[0].mxu0 %v6632
      %v6634 = vpop.f32.mrb[0].mxu0
      %v6635 = vadd.f32 0.0, %v6634
      %v6636 = vpop.f32.mrb[0].mxu0
      %6637 = vmatprep.mubr.f32.mxu0 0.0
      %v6638 = vand.u32 %v6454, 4294901760
      %v6639 = vsub.f32 %v6454, %v6638
      %v6640 = vand.u32 %v6639, 4294901760
      %v6641 = vsub.f32 %v6639, %v6640
      %v6642 = vand.u32 %v6641, 4294901760
      %6643 = vmatmul.mubr.f32.gmra.mrb[0].mxu0 %v6642
      %v6644 = vpop.f32.mrb[0].mxu0
      %v6645 = vadd.f32 0.0, %v6644
      %v6646 = vpop.f32.mrb[0].mxu0
      %6647 = vmatprep.mubr.f32.mxu0 0.0
      %v6648 = vand.u32 %v6456, 4294901760
      %v6649 = vsub.f32 %v6456, %v6648
      %v6650 = vand.u32 %v6649, 4294901760
      %v6651 = vsub.f32 %v6649, %v6650
      %v6652 = vand.u32 %v6651, 4294901760
      %6653 = vmatmul.mubr.f32.gmra.mrb[0].mxu0 %v6652
      %v6654 = vpop.f32.mrb[0].mxu0
      %v6655 = vadd.f32 0.0, %v6654
      %v6656 = vpop.f32.mrb[0].mxu0
      %6657 = vmatprep.mubr.f32.mxu0 0.0
      %v6658 = vand.u32 %v6458, 4294901760
      %v6659 = vsub.f32 %v6458, %v6658
      %v6660 = vand.u32 %v6659, 4294901760
      %v6661 = vsub.f32 %v6659, %v6660
      %v6662 = vand.u32 %v6661, 4294901760
      %6663 = vmatmul.mubr.f32.gmra.mrb[0].mxu0 %v6662
      %v6664 = vpop.f32.mrb[0].mxu0
      %v6665 = vadd.f32 0.0, %v6664
      %v6666 = vpop.f32.mrb[0].mxu0
      %6667 = vmatprep.mubr.f32.mxu0 0.0
      %v6668 = vand.u32 %v6460, 4294901760
      %v6669 = vsub.f32 %v6460, %v6668
      %v6670 = vand.u32 %v6669, 4294901760
      %v6671 = vsub.f32 %v6669, %v6670
      %v6672 = vand.u32 %v6671, 4294901760
      %6673 = vmatmul.mubr.f32.gmra.mrb[0].mxu0 %v6672
      %v6674 = vpop.f32.mrb[0].mxu0
      %v6675 = vadd.f32 0.0, %v6674
      %v6676 = vpop.f32.mrb[0].mxu0
      %6677 = vmatprep.mubr.f32.mxu0 0.0
      %v6678 = vand.u32 %v6462, 4294901760
      %v6679 = vsub.f32 %v6462, %v6678
      %v6680 = vand.u32 %v6679, 4294901760
      %v6681 = vsub.f32 %v6679, %v6680
      %v6682 = vand.u32 %v6681, 4294901760
      %6683 = vmatmul.mubr.f32.gmra.mrb[0].mxu0 %v6682
      %v6684 = vpop.f32.mrb[0].mxu0
      %v6685 = vadd.f32 0.0, %v6684
      %v6686 = vpop.f32.mrb[0].mxu0
      %6687 = vdwg.mxu0
      %6688 = vmatprep.subr.mxu0 0.0
      %v6689 = vand.u32 %v6480, 4294901760
      %v6690 = vsub.f32 %v6480, %v6689
      %v6691 = vand.u32 %v6690, 4294901760
      %v6692 = vsub.f32 %v6690, %v6691
      %v6693 = vand.u32 %v6692, 4294901760
      %6694 = vmatpush1.msra.mxu0 %v6693
      %6695 = vmatprep.subr.mxu0 0.0
      %v6696 = vand.u32 %v6482, 4294901760
      %v6697 = vsub.f32 %v6482, %v6696
      %v6698 = vand.u32 %v6697, 4294901760
      %v6699 = vsub.f32 %v6697, %v6698
      %v6700 = vand.u32 %v6699, 4294901760
      %6701 = vmatpush1.msra.mxu0 %v6700
      %6702 = vmatprep.subr.mxu0 0.0
      %v6703 = vand.u32 %v6484, 4294901760
      %v6704 = vsub.f32 %v6484, %v6703
      %v6705 = vand.u32 %v6704, 4294901760
      %v6706 = vsub.f32 %v6704, %v6705
      %v6707 = vand.u32 %v6706, 4294901760
      %6708 = vmatpush1.msra.mxu0 %v6707
      %6709 = vmatprep.subr.mxu0 0.0
      %v6710 = vand.u32 %v6486, 4294901760
      %v6711 = vsub.f32 %v6486, %v6710
      %v6712 = vand.u32 %v6711, 4294901760
      %v6713 = vsub.f32 %v6711, %v6712
      %v6714 = vand.u32 %v6713, 4294901760
      %6715 = vmatpush1.msra.mxu0 %v6714
      %6716 = vmatprep.subr.mxu0 0.0
      %v6717 = vand.u32 %v6488, 4294901760
      %v6718 = vsub.f32 %v6488, %v6717
      %v6719 = vand.u32 %v6718, 4294901760
      %v6720 = vsub.f32 %v6718, %v6719
      %v6721 = vand.u32 %v6720, 4294901760
      %6722 = vmatpush1.msra.mxu0 %v6721
      %6723 = vmatprep.subr.mxu0 0.0
      %v6724 = vand.u32 %v6490, 4294901760
      %v6725 = vsub.f32 %v6490, %v6724
      %v6726 = vand.u32 %v6725, 4294901760
      %v6727 = vsub.f32 %v6725, %v6726
      %v6728 = vand.u32 %v6727, 4294901760
      %6729 = vmatpush1.msra.mxu0 %v6728
      %6730 = vmatprep.subr.mxu0 0.0
      %v6731 = vand.u32 %v6492, 4294901760
      %v6732 = vsub.f32 %v6492, %v6731
      %v6733 = vand.u32 %v6732, 4294901760
      %v6734 = vsub.f32 %v6732, %v6733
      %v6735 = vand.u32 %v6734, 4294901760
      %6736 = vmatpush1.msra.mxu0 %v6735
      %6737 = vmatprep.subr.mxu0 0.0
      %v6738 = vand.u32 %v6494, 4294901760
      %v6739 = vsub.f32 %v6494, %v6738
      %v6740 = vand.u32 %v6739, 4294901760
      %v6741 = vsub.f32 %v6739, %v6740
      %v6742 = vand.u32 %v6741, 4294901760
      %6743 = vmatpush1.msra.mxu0 %v6742
      %6744 = vmatprep.subr.mxu0 0.0
      %v6745 = vand.u32 %v6496, 4294901760
      %v6746 = vsub.f32 %v6496, %v6745
      %v6747 = vand.u32 %v6746, 4294901760
      %v6748 = vsub.f32 %v6746, %v6747
      %v6749 = vand.u32 %v6748, 4294901760
      %6750 = vmatpush1.msra.mxu0 %v6749
      %6751 = vmatprep.subr.mxu0 0.0
      %v6752 = vand.u32 %v6498, 4294901760
      %v6753 = vsub.f32 %v6498, %v6752
      %v6754 = vand.u32 %v6753, 4294901760
      %v6755 = vsub.f32 %v6753, %v6754
      %v6756 = vand.u32 %v6755, 4294901760
      %6757 = vmatpush1.msra.mxu0 %v6756
      %6758 = vmatprep.subr.mxu0 0.0
      %v6759 = vand.u32 %v6500, 4294901760
      %v6760 = vsub.f32 %v6500, %v6759
      %v6761 = vand.u32 %v6760, 4294901760
      %v6762 = vsub.f32 %v6760, %v6761
      %v6763 = vand.u32 %v6762, 4294901760
      %6764 = vmatpush1.msra.mxu0 %v6763
      %6765 = vmatprep.subr.mxu0 0.0
      %v6766 = vand.u32 %v6502, 4294901760
      %v6767 = vsub.f32 %v6502, %v6766
      %v6768 = vand.u32 %v6767, 4294901760
      %v6769 = vsub.f32 %v6767, %v6768
      %v6770 = vand.u32 %v6769, 4294901760
      %6771 = vmatpush1.msra.mxu0 %v6770
      %6772 = vmatprep.subr.mxu0 0.0
      %v6773 = vand.u32 %v6504, 4294901760
      %v6774 = vsub.f32 %v6504, %v6773
      %v6775 = vand.u32 %v6774, 4294901760
      %v6776 = vsub.f32 %v6774, %v6775
      %v6777 = vand.u32 %v6776, 4294901760
      %6778 = vmatpush1.msra.mxu0 %v6777
      %6779 = vmatprep.subr.mxu0 0.0
      %v6780 = vand.u32 %v6506, 4294901760
      %v6781 = vsub.f32 %v6506, %v6780
      %v6782 = vand.u32 %v6781, 4294901760
      %v6783 = vsub.f32 %v6781, %v6782
      %v6784 = vand.u32 %v6783, 4294901760
      %6785 = vmatpush1.msra.mxu0 %v6784
      %6786 = vmatprep.subr.mxu0 0.0
      %v6787 = vand.u32 %v6508, 4294901760
      %v6788 = vsub.f32 %v6508, %v6787
      %v6789 = vand.u32 %v6788, 4294901760
      %v6790 = vsub.f32 %v6788, %v6789
      %v6791 = vand.u32 %v6790, 4294901760
      %6792 = vmatpush1.msra.mxu0 %v6791
      %6793 = vmatprep.subr.mxu0 0.0
      %v6794 = vand.u32 %v6510, 4294901760
      %v6795 = vsub.f32 %v6510, %v6794
      %v6796 = vand.u32 %v6795, 4294901760
      %v6797 = vsub.f32 %v6795, %v6796
      %v6798 = vand.u32 %v6797, 4294901760
      %6799 = vmatpush1.msra.mxu0 %v6798
      %6800 = vmatprep.subr.mxu0 0.0
      %6801 = vmatpush1.msra.mxu0 0.0
      %6802 = vmatprep.subr.mxu0 0.0
      %6803 = vmatpush1.msra.mxu0 0.0
      %6804 = vmatprep.subr.mxu0 0.0
      %6805 = vmatpush1.msra.mxu0 0.0
      %6806 = vmatprep.subr.mxu0 0.0
      %6807 = vmatpush1.msra.mxu0 0.0
      %6808 = vmatprep.subr.mxu0 0.0
      %6809 = vmatpush1.msra.mxu0 0.0
      %6810 = vmatprep.subr.mxu0 0.0
      %6811 = vmatpush1.msra.mxu0 0.0
      %6812 = vmatprep.subr.mxu0 0.0
      %6813 = vmatpush1.msra.mxu0 0.0
      %6814 = vmatprep.subr.mxu0 0.0
      %6815 = vmatpush1.msra.mxu0 0.0
      %6816 = vmatprep.subr.mxu0 0.0
      %6817 = vmatpush1.msra.mxu0 0.0
      %6818 = vmatprep.subr.mxu0 0.0
      %6819 = vmatpush1.msra.mxu0 0.0
      %6820 = vmatprep.subr.mxu0 0.0
      %6821 = vmatpush1.msra.mxu0 0.0
      %6822 = vmatprep.subr.mxu0 0.0
      %6823 = vmatpush1.msra.mxu0 0.0
      %6824 = vmatprep.subr.mxu0 0.0
      %6825 = vmatpush1.msra.mxu0 0.0
      %6826 = vmatprep.subr.mxu0 0.0
      %6827 = vmatpush1.msra.mxu0 0.0
      %6828 = vmatprep.subr.mxu0 0.0
      %6829 = vmatpush1.msra.mxu0 0.0
      %6830 = vmatprep.subr.mxu0 0.0
      %6831 = vmatpush1.msra.mxu0 0.0
      %6832 = vmatprep.mubr.f32.mxu0 0.0
      %v6833 = vand.u32 %v6448, 4294901760
      %6834 = vmatmul.mubr.f32.gmra.mrb[0].mxu0 %v6833
      %v6835 = vpop.f32.mrb[0].mxu0
      %v6836 = vadd.f32 %v6615, %v6835
      %v6837 = vpop.f32.mrb[0].mxu0
      %6838 = vmatprep.mubr.f32.mxu0 0.0
      %v6839 = vand.u32 %v6450, 4294901760
      %6840 = vmatmul.mubr.f32.gmra.mrb[0].mxu0 %v6839
      %v6841 = vpop.f32.mrb[0].mxu0
      %v6842 = vadd.f32 %v6625, %v6841
      %v6843 = vpop.f32.mrb[0].mxu0
      %6844 = vmatprep.mubr.f32.mxu0 0.0
      %v6845 = vand.u32 %v6452, 4294901760
      %6846 = vmatmul.mubr.f32.gmra.mrb[0].mxu0 %v6845
      %v6847 = vpop.f32.mrb[0].mxu0
      %v6848 = vadd.f32 %v6635, %v6847
      %v6849 = vpop.f32.mrb[0].mxu0
      %6850 = vmatprep.mubr.f32.mxu0 0.0
      %v6851 = vand.u32 %v6454, 4294901760
      %6852 = vmatmul.mubr.f32.gmra.mrb[0].mxu0 %v6851
      %v6853 = vpop.f32.mrb[0].mxu0
      %v6854 = vadd.f32 %v6645, %v6853
      %v6855 = vpop.f32.mrb[0].mxu0
      %6856 = vmatprep.mubr.f32.mxu0 0.0
      %v6857 = vand.u32 %v6456, 4294901760
      %6858 = vmatmul.mubr.f32.gmra.mrb[0].mxu0 %v6857
      %v6859 = vpop.f32.mrb[0].mxu0
      %v6860 = vadd.f32 %v6655, %v6859
      %v6861 = vpop.f32.mrb[0].mxu0
      %6862 = vmatprep.mubr.f32.mxu0 0.0
      %v6863 = vand.u32 %v6458, 4294901760
      %6864 = vmatmul.mubr.f32.gmra.mrb[0].mxu0 %v6863
      %v6865 = vpop.f32.mrb[0].mxu0
      %v6866 = vadd.f32 %v6665, %v6865
      %v6867 = vpop.f32.mrb[0].mxu0
      %6868 = vmatprep.mubr.f32.mxu0 0.0
      %v6869 = vand.u32 %v6460, 4294901760
      %6870 = vmatmul.mubr.f32.gmra.mrb[0].mxu0 %v6869
      %v6871 = vpop.f32.mrb[0].mxu0
      %v6872 = vadd.f32 %v6675, %v6871
      %v6873 = vpop.f32.mrb[0].mxu0
      %6874 = vmatprep.mubr.f32.mxu0 0.0
      %v6875 = vand.u32 %v6462, 4294901760
      %6876 = vmatmul.mubr.f32.gmra.mrb[0].mxu0 %v6875
      %v6877 = vpop.f32.mrb[0].mxu0
      %v6878 = vadd.f32 %v6685, %v6877
      %v6879 = vpop.f32.mrb[0].mxu0
      %6880 = vdwg.mxu0
      %6881 = vmatprep.subr.mxu0 0.0
      %v6882 = vand.u32 %v6480, 4294901760
      %v6883 = vsub.f32 %v6480, %v6882
      %6884 = vmatpush1.msra.mxu0 %v6883
      %6885 = vmatprep.subr.mxu0 0.0
      %v6886 = vand.u32 %v6482, 4294901760
      %v6887 = vsub.f32 %v6482, %v6886
      %6888 = vmatpush1.msra.mxu0 %v6887
      %6889 = vmatprep.subr.mxu0 0.0
      %v6890 = vand.u32 %v6484, 4294901760
      %v6891 = vsub.f32 %v6484, %v6890
      %6892 = vmatpush1.msra.mxu0 %v6891
      %6893 = vmatprep.subr.mxu0 0.0
      %v6894 = vand.u32 %v6486, 4294901760
      %v6895 = vsub.f32 %v6486, %v6894
      %6896 = vmatpush1.msra.mxu0 %v6895
      %6897 = vmatprep.subr.mxu0 0.0
      %v6898 = vand.u32 %v6488, 4294901760
      %v6899 = vsub.f32 %v6488, %v6898
      %6900 = vmatpush1.msra.mxu0 %v6899
      %6901 = vmatprep.subr.mxu0 0.0
      %v6902 = vand.u32 %v6490, 4294901760
      %v6903 = vsub.f32 %v6490, %v6902
      %6904 = vmatpush1.msra.mxu0 %v6903
      %6905 = vmatprep.subr.mxu0 0.0
      %v6906 = vand.u32 %v6492, 4294901760
      %v6907 = vsub.f32 %v6492, %v6906
      %6908 = vmatpush1.msra.mxu0 %v6907
      %6909 = vmatprep.subr.mxu0 0.0
      %v6910 = vand.u32 %v6494, 4294901760
      %v6911 = vsub.f32 %v6494, %v6910
      %6912 = vmatpush1.msra.mxu0 %v6911
      %6913 = vmatprep.subr.mxu0 0.0
      %v6914 = vand.u32 %v6496, 4294901760
      %v6915 = vsub.f32 %v6496, %v6914
      %6916 = vmatpush1.msra.mxu0 %v6915
      %6917 = vmatprep.subr.mxu0 0.0
      %v6918 = vand.u32 %v6498, 4294901760
      %v6919 = vsub.f32 %v6498, %v6918
      %6920 = vmatpush1.msra.mxu0 %v6919
      %6921 = vmatprep.subr.mxu0 0.0
      %v6922 = vand.u32 %v6500, 4294901760
      %v6923 = vsub.f32 %v6500, %v6922
      %6924 = vmatpush1.msra.mxu0 %v6923
      %6925 = vmatprep.subr.mxu0 0.0
      %v6926 = vand.u32 %v6502, 4294901760
      %v6927 = vsub.f32 %v6502, %v6926
      %6928 = vmatpush1.msra.mxu0 %v6927
      %6929 = vmatprep.subr.mxu0 0.0
      %v6930 = vand.u32 %v6504, 4294901760
      %v6931 = vsub.f32 %v6504, %v6930
      %6932 = vmatpush1.msra.mxu0 %v6931
      %6933 = vmatprep.subr.mxu0 0.0
      %v6934 = vand.u32 %v6506, 4294901760
      %v6935 = vsub.f32 %v6506, %v6934
      %6936 = vmatpush1.msra.mxu0 %v6935
      %6937 = vmatprep.subr.mxu0 0.0
      %v6938 = vand.u32 %v6508, 4294901760
      %v6939 = vsub.f32 %v6508, %v6938
      %6940 = vmatpush1.msra.mxu0 %v6939
      %6941 = vmatprep.subr.mxu0 0.0
      %v6942 = vand.u32 %v6510, 4294901760
      %v6943 = vsub.f32 %v6510, %v6942
      %6944 = vmatpush1.msra.mxu0 %v6943
      %6945 = vmatprep.subr.mxu0 0.0
      %6946 = vmatpush1.msra.mxu0 0.0
      %6947 = vmatprep.subr.mxu0 0.0
      %6948 = vmatpush1.msra.mxu0 0.0
      %6949 = vmatprep.subr.mxu0 0.0
      %6950 = vmatpush1.msra.mxu0 0.0
      %6951 = vmatprep.subr.mxu0 0.0
      %6952 = vmatpush1.msra.mxu0 0.0
      %6953 = vmatprep.subr.mxu0 0.0
      %6954 = vmatpush1.msra.mxu0 0.0
      %6955 = vmatprep.subr.mxu0 0.0
      %6956 = vmatpush1.msra.mxu0 0.0
      %6957 = vmatprep.subr.mxu0 0.0
      %6958 = vmatpush1.msra.mxu0 0.0
      %6959 = vmatprep.subr.mxu0 0.0
      %6960 = vmatpush1.msra.mxu0 0.0
      %6961 = vmatprep.subr.mxu0 0.0
      %6962 = vmatpush1.msra.mxu0 0.0
      %6963 = vmatprep.subr.mxu0 0.0
      %6964 = vmatpush1.msra.mxu0 0.0
      %6965 = vmatprep.subr.mxu0 0.0
      %6966 = vmatpush1.msra.mxu0 0.0
      %6967 = vmatprep.subr.mxu0 0.0
      %6968 = vmatpush1.msra.mxu0 0.0
      %6969 = vmatprep.subr.mxu0 0.0
      %6970 = vmatpush1.msra.mxu0 0.0
      %6971 = vmatprep.subr.mxu0 0.0
      %6972 = vmatpush1.msra.mxu0 0.0
      %6973 = vmatprep.subr.mxu0 0.0
      %6974 = vmatpush1.msra.mxu0 0.0
      %6975 = vmatprep.subr.mxu0 0.0
      %6976 = vmatpush1.msra.mxu0 0.0
      %6977 = vmatprep.mubr.f32.mxu0 0.0
      %v6978 = vand.u32 %v6448, 4294901760
      %v6979 = vsub.f32 %v6448, %v6978
      %6980 = vmatmul.mubr.f32.gmra.mrb[0].mxu0 %v6979
      %v6981 = vpop.f32.mrb[0].mxu0
      %v6982 = vadd.f32 %v6836, %v6981
      %v6983 = vpop.f32.mrb[0].mxu0
      %6984 = vmatprep.mubr.f32.mxu0 0.0
      %v6985 = vand.u32 %v6450, 4294901760
      %v6986 = vsub.f32 %v6450, %v6985
      %6987 = vmatmul.mubr.f32.gmra.mrb[0].mxu0 %v6986
      %v6988 = vpop.f32.mrb[0].mxu0
      %v6989 = vadd.f32 %v6842, %v6988
      %v6990 = vpop.f32.mrb[0].mxu0
      %6991 = vmatprep.mubr.f32.mxu0 0.0
      %v6992 = vand.u32 %v6452, 4294901760
      %v6993 = vsub.f32 %v6452, %v6992
      %6994 = vmatmul.mubr.f32.gmra.mrb[0].mxu0 %v6993
      %v6995 = vpop.f32.mrb[0].mxu0
      %v6996 = vadd.f32 %v6848, %v6995
      %v6997 = vpop.f32.mrb[0].mxu0
      %6998 = vmatprep.mubr.f32.mxu0 0.0
      %v6999 = vand.u32 %v6454, 4294901760
      %v7000 = vsub.f32 %v6454, %v6999
      %7001 = vmatmul.mubr.f32.gmra.mrb[0].mxu0 %v7000
      %v7002 = vpop.f32.mrb[0].mxu0
      %v7003 = vadd.f32 %v6854, %v7002
      %v7004 = vpop.f32.mrb[0].mxu0
      %7005 = vmatprep.mubr.f32.mxu0 0.0
      %v7006 = vand.u32 %v6456, 4294901760
      %v7007 = vsub.f32 %v6456, %v7006
      %7008 = vmatmul.mubr.f32.gmra.mrb[0].mxu0 %v7007
      %v7009 = vpop.f32.mrb[0].mxu0
      %v7010 = vadd.f32 %v6860, %v7009
      %v7011 = vpop.f32.mrb[0].mxu0
      %7012 = vmatprep.mubr.f32.mxu0 0.0
      %v7013 = vand.u32 %v6458, 4294901760
      %v7014 = vsub.f32 %v6458, %v7013
      %7015 = vmatmul.mubr.f32.gmra.mrb[0].mxu0 %v7014
      %v7016 = vpop.f32.mrb[0].mxu0
      %v7017 = vadd.f32 %v6866, %v7016
      %v7018 = vpop.f32.mrb[0].mxu0
      %7019 = vmatprep.mubr.f32.mxu0 0.0
      %v7020 = vand.u32 %v6460, 4294901760
      %v7021 = vsub.f32 %v6460, %v7020
      %7022 = vmatmul.mubr.f32.gmra.mrb[0].mxu0 %v7021
      %v7023 = vpop.f32.mrb[0].mxu0
      %v7024 = vadd.f32 %v6872, %v7023
      %v7025 = vpop.f32.mrb[0].mxu0
      %7026 = vmatprep.mubr.f32.mxu0 0.0
      %v7027 = vand.u32 %v6462, 4294901760
      %v7028 = vsub.f32 %v6462, %v7027
      %7029 = vmatmul.mubr.f32.gmra.mrb[0].mxu0 %v7028
      %v7030 = vpop.f32.mrb[0].mxu0
      %v7031 = vadd.f32 %v6878, %v7030
      %v7032 = vpop.f32.mrb[0].mxu0
      %7033 = vdwg.mxu0
      %7034 = vmatprep.subr.mxu0 0.0
      %v7035 = vand.u32 %v6480, 4294901760
      %7036 = vmatpush1.msra.mxu0 %v7035
      %7037 = vmatprep.subr.mxu0 0.0
      %v7038 = vand.u32 %v6482, 4294901760
      %7039 = vmatpush1.msra.mxu0 %v7038
      %7040 = vmatprep.subr.mxu0 0.0
      %v7041 = vand.u32 %v6484, 4294901760
      %7042 = vmatpush1.msra.mxu0 %v7041
      %7043 = vmatprep.subr.mxu0 0.0
      %v7044 = vand.u32 %v6486, 4294901760
      %7045 = vmatpush1.msra.mxu0 %v7044
      %7046 = vmatprep.subr.mxu0 0.0
      %v7047 = vand.u32 %v6488, 4294901760
      %7048 = vmatpush1.msra.mxu0 %v7047
      %7049 = vmatprep.subr.mxu0 0.0
      %v7050 = vand.u32 %v6490, 4294901760
      %7051 = vmatpush1.msra.mxu0 %v7050
      %7052 = vmatprep.subr.mxu0 0.0
      %v7053 = vand.u32 %v6492, 4294901760
      %7054 = vmatpush1.msra.mxu0 %v7053
      %7055 = vmatprep.subr.mxu0 0.0
      %v7056 = vand.u32 %v6494, 4294901760
      %7057 = vmatpush1.msra.mxu0 %v7056
      %7058 = vmatprep.subr.mxu0 0.0
      %v7059 = vand.u32 %v6496, 4294901760
      %7060 = vmatpush1.msra.mxu0 %v7059
      %7061 = vmatprep.subr.mxu0 0.0
      %v7062 = vand.u32 %v6498, 4294901760
      %7063 = vmatpush1.msra.mxu0 %v7062
      %7064 = vmatprep.subr.mxu0 0.0
      %v7065 = vand.u32 %v6500, 4294901760
      %7066 = vmatpush1.msra.mxu0 %v7065
      %7067 = vmatprep.subr.mxu0 0.0
      %v7068 = vand.u32 %v6502, 4294901760
      %7069 = vmatpush1.msra.mxu0 %v7068
      %7070 = vmatprep.subr.mxu0 0.0
      %v7071 = vand.u32 %v6504, 4294901760
      %7072 = vmatpush1.msra.mxu0 %v7071
      %7073 = vmatprep.subr.mxu0 0.0
      %v7074 = vand.u32 %v6506, 4294901760
      %7075 = vmatpush1.msra.mxu0 %v7074
      %7076 = vmatprep.subr.mxu0 0.0
      %v7077 = vand.u32 %v6508, 4294901760
      %7078 = vmatpush1.msra.mxu0 %v7077
      %7079 = vmatprep.subr.mxu0 0.0
      %v7080 = vand.u32 %v6510, 4294901760
      %7081 = vmatpush1.msra.mxu0 %v7080
      %7082 = vmatprep.subr.mxu0 0.0
      %7083 = vmatpush1.msra.mxu0 0.0
      %7084 = vmatprep.subr.mxu0 0.0
      %7085 = vmatpush1.msra.mxu0 0.0
      %7086 = vmatprep.subr.mxu0 0.0
      %7087 = vmatpush1.msra.mxu0 0.0
      %7088 = vmatprep.subr.mxu0 0.0
      %7089 = vmatpush1.msra.mxu0 0.0
      %7090 = vmatprep.subr.mxu0 0.0
      %7091 = vmatpush1.msra.mxu0 0.0
      %7092 = vmatprep.subr.mxu0 0.0
      %7093 = vmatpush1.msra.mxu0 0.0
      %7094 = vmatprep.subr.mxu0 0.0
      %7095 = vmatpush1.msra.mxu0 0.0
      %7096 = vmatprep.subr.mxu0 0.0
      %7097 = vmatpush1.msra.mxu0 0.0
      %7098 = vmatprep.subr.mxu0 0.0
      %7099 = vmatpush1.msra.mxu0 0.0
      %7100 = vmatprep.subr.mxu0 0.0
      %7101 = vmatpush1.msra.mxu0 0.0
      %7102 = vmatprep.subr.mxu0 0.0
      %7103 = vmatpush1.msra.mxu0 0.0
      %7104 = vmatprep.subr.mxu0 0.0
      %7105 = vmatpush1.msra.mxu0 0.0
      %7106 = vmatprep.subr.mxu0 0.0
      %7107 = vmatpush1.msra.mxu0 0.0
      %7108 = vmatprep.subr.mxu0 0.0
      %7109 = vmatpush1.msra.mxu0 0.0
      %7110 = vmatprep.subr.mxu0 0.0
      %7111 = vmatpush1.msra.mxu0 0.0
      %7112 = vmatprep.subr.mxu0 0.0
      %7113 = vmatpush1.msra.mxu0 0.0
      %7114 = vmatprep.mubr.f32.mxu0 0.0
      %v7115 = vand.u32 %v6448, 4294901760
      %v7116 = vsub.f32 %v6448, %v7115
      %v7117 = vand.u32 %v7116, 4294901760
      %7118 = vmatmul.mubr.f32.gmra.mrb[0].mxu0 %v7117
      %v7119 = vpop.f32.mrb[0].mxu0
      %v7120 = vadd.f32 %v6982, %v7119
      %v7121 = vpop.f32.mrb[0].mxu0
      %7122 = vmatprep.mubr.f32.mxu0 0.0
      %v7123 = vand.u32 %v6450, 4294901760
      %v7124 = vsub.f32 %v6450, %v7123
      %v7125 = vand.u32 %v7124, 4294901760
      %7126 = vmatmul.mubr.f32.gmra.mrb[0].mxu0 %v7125
      %v7127 = vpop.f32.mrb[0].mxu0
      %v7128 = vadd.f32 %v6989, %v7127
      %v7129 = vpop.f32.mrb[0].mxu0
      %7130 = vmatprep.mubr.f32.mxu0 0.0
      %v7131 = vand.u32 %v6452, 4294901760
      %v7132 = vsub.f32 %v6452, %v7131
      %v7133 = vand.u32 %v7132, 4294901760
      %7134 = vmatmul.mubr.f32.gmra.mrb[0].mxu0 %v7133
      %v7135 = vpop.f32.mrb[0].mxu0
      %v7136 = vadd.f32 %v6996, %v7135
      %v7137 = vpop.f32.mrb[0].mxu0
      %7138 = vmatprep.mubr.f32.mxu0 0.0
      %v7139 = vand.u32 %v6454, 4294901760
      %v7140 = vsub.f32 %v6454, %v7139
      %v7141 = vand.u32 %v7140, 4294901760
      %7142 = vmatmul.mubr.f32.gmra.mrb[0].mxu0 %v7141
      %v7143 = vpop.f32.mrb[0].mxu0
      %v7144 = vadd.f32 %v7003, %v7143
      %v7145 = vpop.f32.mrb[0].mxu0
      %7146 = vmatprep.mubr.f32.mxu0 0.0
      %v7147 = vand.u32 %v6456, 4294901760
      %v7148 = vsub.f32 %v6456, %v7147
      %v7149 = vand.u32 %v7148, 4294901760
      %7150 = vmatmul.mubr.f32.gmra.mrb[0].mxu0 %v7149
      %v7151 = vpop.f32.mrb[0].mxu0
      %v7152 = vadd.f32 %v7010, %v7151
      %v7153 = vpop.f32.mrb[0].mxu0
      %7154 = vmatprep.mubr.f32.mxu0 0.0
      %v7155 = vand.u32 %v6458, 4294901760
      %v7156 = vsub.f32 %v6458, %v7155
      %v7157 = vand.u32 %v7156, 4294901760
      %7158 = vmatmul.mubr.f32.gmra.mrb[0].mxu0 %v7157
      %v7159 = vpop.f32.mrb[0].mxu0
      %v7160 = vadd.f32 %v7017, %v7159
      %v7161 = vpop.f32.mrb[0].mxu0
      %7162 = vmatprep.mubr.f32.mxu0 0.0
      %v7163 = vand.u32 %v6460, 4294901760
      %v7164 = vsub.f32 %v6460, %v7163
      %v7165 = vand.u32 %v7164, 4294901760
      %7166 = vmatmul.mubr.f32.gmra.mrb[0].mxu0 %v7165
      %v7167 = vpop.f32.mrb[0].mxu0
      %v7168 = vadd.f32 %v7024, %v7167
      %v7169 = vpop.f32.mrb[0].mxu0
      %7170 = vmatprep.mubr.f32.mxu0 0.0
      %v7171 = vand.u32 %v6462, 4294901760
      %v7172 = vsub.f32 %v6462, %v7171
      %v7173 = vand.u32 %v7172, 4294901760
      %7174 = vmatmul.mubr.f32.gmra.mrb[0].mxu0 %v7173
      %v7175 = vpop.f32.mrb[0].mxu0
      %v7176 = vadd.f32 %v7031, %v7175
      %v7177 = vpop.f32.mrb[0].mxu0
      %7178 = vdwg.mxu0
      %7179 = vmatprep.subr.mxu0 0.0
      %v7180 = vand.u32 %v6480, 4294901760
      %v7181 = vsub.f32 %v6480, %v7180
      %v7182 = vand.u32 %v7181, 4294901760
      %7183 = vmatpush1.msra.mxu0 %v7182
      %7184 = vmatprep.subr.mxu0 0.0
      %v7185 = vand.u32 %v6482, 4294901760
      %v7186 = vsub.f32 %v6482, %v7185
      %v7187 = vand.u32 %v7186, 4294901760
      %7188 = vmatpush1.msra.mxu0 %v7187
      %7189 = vmatprep.subr.mxu0 0.0
      %v7190 = vand.u32 %v6484, 4294901760
      %v7191 = vsub.f32 %v6484, %v7190
      %v7192 = vand.u32 %v7191, 4294901760
      %7193 = vmatpush1.msra.mxu0 %v7192
      %7194 = vmatprep.subr.mxu0 0.0
      %v7195 = vand.u32 %v6486, 4294901760
      %v7196 = vsub.f32 %v6486, %v7195
      %v7197 = vand.u32 %v7196, 4294901760
      %7198 = vmatpush1.msra.mxu0 %v7197
      %7199 = vmatprep.subr.mxu0 0.0
      %v7200 = vand.u32 %v6488, 4294901760
      %v7201 = vsub.f32 %v6488, %v7200
      %v7202 = vand.u32 %v7201, 4294901760
      %7203 = vmatpush1.msra.mxu0 %v7202
      %7204 = vmatprep.subr.mxu0 0.0
      %v7205 = vand.u32 %v6490, 4294901760
      %v7206 = vsub.f32 %v6490, %v7205
      %v7207 = vand.u32 %v7206, 4294901760
      %7208 = vmatpush1.msra.mxu0 %v7207
      %7209 = vmatprep.subr.mxu0 0.0
      %v7210 = vand.u32 %v6492, 4294901760
      %v7211 = vsub.f32 %v6492, %v7210
      %v7212 = vand.u32 %v7211, 4294901760
      %7213 = vmatpush1.msra.mxu0 %v7212
      %7214 = vmatprep.subr.mxu0 0.0
      %v7215 = vand.u32 %v6494, 4294901760
      %v7216 = vsub.f32 %v6494, %v7215
      %v7217 = vand.u32 %v7216, 4294901760
      %7218 = vmatpush1.msra.mxu0 %v7217
      %7219 = vmatprep.subr.mxu0 0.0
      %v7220 = vand.u32 %v6496, 4294901760
      %v7221 = vsub.f32 %v6496, %v7220
      %v7222 = vand.u32 %v7221, 4294901760
      %7223 = vmatpush1.msra.mxu0 %v7222
      %7224 = vmatprep.subr.mxu0 0.0
      %v7225 = vand.u32 %v6498, 4294901760
      %v7226 = vsub.f32 %v6498, %v7225
      %v7227 = vand.u32 %v7226, 4294901760
      %7228 = vmatpush1.msra.mxu0 %v7227
      %7229 = vmatprep.subr.mxu0 0.0
      %v7230 = vand.u32 %v6500, 4294901760
      %v7231 = vsub.f32 %v6500, %v7230
      %v7232 = vand.u32 %v7231, 4294901760
      %7233 = vmatpush1.msra.mxu0 %v7232
      %7234 = vmatprep.subr.mxu0 0.0
      %v7235 = vand.u32 %v6502, 4294901760
      %v7236 = vsub.f32 %v6502, %v7235
      %v7237 = vand.u32 %v7236, 4294901760
      %7238 = vmatpush1.msra.mxu0 %v7237
      %7239 = vmatprep.subr.mxu0 0.0
      %v7240 = vand.u32 %v6504, 4294901760
      %v7241 = vsub.f32 %v6504, %v7240
      %v7242 = vand.u32 %v7241, 4294901760
      %7243 = vmatpush1.msra.mxu0 %v7242
      %7244 = vmatprep.subr.mxu0 0.0
      %v7245 = vand.u32 %v6506, 4294901760
      %v7246 = vsub.f32 %v6506, %v7245
      %v7247 = vand.u32 %v7246, 4294901760
      %7248 = vmatpush1.msra.mxu0 %v7247
      %7249 = vmatprep.subr.mxu0 0.0
      %v7250 = vand.u32 %v6508, 4294901760
      %v7251 = vsub.f32 %v6508, %v7250
      %v7252 = vand.u32 %v7251, 4294901760
      %7253 = vmatpush1.msra.mxu0 %v7252
      %7254 = vmatprep.subr.mxu0 0.0
      %v7255 = vand.u32 %v6510, 4294901760
      %v7256 = vsub.f32 %v6510, %v7255
      %v7257 = vand.u32 %v7256, 4294901760
      %7258 = vmatpush1.msra.mxu0 %v7257
      %7259 = vmatprep.subr.mxu0 0.0
      %7260 = vmatpush1.msra.mxu0 0.0
      %7261 = vmatprep.subr.mxu0 0.0
      %7262 = vmatpush1.msra.mxu0 0.0
      %7263 = vmatprep.subr.mxu0 0.0
      %7264 = vmatpush1.msra.mxu0 0.0
      %7265 = vmatprep.subr.mxu0 0.0
      %7266 = vmatpush1.msra.mxu0 0.0
      %7267 = vmatprep.subr.mxu0 0.0
      %7268 = vmatpush1.msra.mxu0 0.0
      %7269 = vmatprep.subr.mxu0 0.0
      %7270 = vmatpush1.msra.mxu0 0.0
      %7271 = vmatprep.subr.mxu0 0.0
      %7272 = vmatpush1.msra.mxu0 0.0
      %7273 = vmatprep.subr.mxu0 0.0
      %7274 = vmatpush1.msra.mxu0 0.0
      %7275 = vmatprep.subr.mxu0 0.0
      %7276 = vmatpush1.msra.mxu0 0.0
      %7277 = vmatprep.subr.mxu0 0.0
      %7278 = vmatpush1.msra.mxu0 0.0
      %7279 = vmatprep.subr.mxu0 0.0
      %7280 = vmatpush1.msra.mxu0 0.0
      %7281 = vmatprep.subr.mxu0 0.0
      %7282 = vmatpush1.msra.mxu0 0.0
      %7283 = vmatprep.subr.mxu0 0.0
      %7284 = vmatpush1.msra.mxu0 0.0
      %7285 = vmatprep.subr.mxu0 0.0
      %7286 = vmatpush1.msra.mxu0 0.0
      %7287 = vmatprep.subr.mxu0 0.0
      %7288 = vmatpush1.msra.mxu0 0.0
      %7289 = vmatprep.subr.mxu0 0.0
      %7290 = vmatpush1.msra.mxu0 0.0
      %7291 = vmatprep.mubr.f32.mxu0 0.0
      %v7292 = vand.u32 %v6448, 4294901760
      %7293 = vmatmul.mubr.f32.gmra.mrb[0].mxu0 %v7292
      %v7294 = vpop.f32.mrb[0].mxu0
      %v7295 = vadd.f32 %v7120, %v7294
      %v7296 = vpop.f32.mrb[0].mxu0
      %7297 = vmatprep.mubr.f32.mxu0 0.0
      %v7298 = vand.u32 %v6450, 4294901760
      %7299 = vmatmul.mubr.f32.gmra.mrb[0].mxu0 %v7298
      %v7300 = vpop.f32.mrb[0].mxu0
      %v7301 = vadd.f32 %v7128, %v7300
      %v7302 = vpop.f32.mrb[0].mxu0
      %7303 = vmatprep.mubr.f32.mxu0 0.0
      %v7304 = vand.u32 %v6452, 4294901760
      %7305 = vmatmul.mubr.f32.gmra.mrb[0].mxu0 %v7304
      %v7306 = vpop.f32.mrb[0].mxu0
      %v7307 = vadd.f32 %v7136, %v7306
      %v7308 = vpop.f32.mrb[0].mxu0
      %7309 = vmatprep.mubr.f32.mxu0 0.0
      %v7310 = vand.u32 %v6454, 4294901760
      %7311 = vmatmul.mubr.f32.gmra.mrb[0].mxu0 %v7310
      %v7312 = vpop.f32.mrb[0].mxu0
      %v7313 = vadd.f32 %v7144, %v7312
      %v7314 = vpop.f32.mrb[0].mxu0
      %7315 = vmatprep.mubr.f32.mxu0 0.0
      %v7316 = vand.u32 %v6456, 4294901760
      %7317 = vmatmul.mubr.f32.gmra.mrb[0].mxu0 %v7316
      %v7318 = vpop.f32.mrb[0].mxu0
      %v7319 = vadd.f32 %v7152, %v7318
      %v7320 = vpop.f32.mrb[0].mxu0
      %7321 = vmatprep.mubr.f32.mxu0 0.0
      %v7322 = vand.u32 %v6458, 4294901760
      %7323 = vmatmul.mubr.f32.gmra.mrb[0].mxu0 %v7322
      %v7324 = vpop.f32.mrb[0].mxu0
      %v7325 = vadd.f32 %v7160, %v7324
      %v7326 = vpop.f32.mrb[0].mxu0
      %7327 = vmatprep.mubr.f32.mxu0 0.0
      %v7328 = vand.u32 %v6460, 4294901760
      %7329 = vmatmul.mubr.f32.gmra.mrb[0].mxu0 %v7328
      %v7330 = vpop.f32.mrb[0].mxu0
      %v7331 = vadd.f32 %v7168, %v7330
      %v7332 = vpop.f32.mrb[0].mxu0
      %7333 = vmatprep.mubr.f32.mxu0 0.0
      %v7334 = vand.u32 %v6462, 4294901760
      %7335 = vmatmul.mubr.f32.gmra.mrb[0].mxu0 %v7334
      %v7336 = vpop.f32.mrb[0].mxu0
      %v7337 = vadd.f32 %v7176, %v7336
      %v7338 = vpop.f32.mrb[0].mxu0
      %7339 = vdwg.mxu0
      %7340 = vmatprep.subr.mxu0 0.0
      %v7341 = vand.u32 %v6480, 4294901760
      %7342 = vmatpush1.msra.mxu0 %v7341
      %7343 = vmatprep.subr.mxu0 0.0
      %v7344 = vand.u32 %v6482, 4294901760
      %7345 = vmatpush1.msra.mxu0 %v7344
      %7346 = vmatprep.subr.mxu0 0.0
      %v7347 = vand.u32 %v6484, 4294901760
      %7348 = vmatpush1.msra.mxu0 %v7347
      %7349 = vmatprep.subr.mxu0 0.0
      %v7350 = vand.u32 %v6486, 4294901760
      %7351 = vmatpush1.msra.mxu0 %v7350
      %7352 = vmatprep.subr.mxu0 0.0
      %v7353 = vand.u32 %v6488, 4294901760
      %7354 = vmatpush1.msra.mxu0 %v7353
      %7355 = vmatprep.subr.mxu0 0.0
      %v7356 = vand.u32 %v6490, 4294901760
      %7357 = vmatpush1.msra.mxu0 %v7356
      %7358 = vmatprep.subr.mxu0 0.0
      %v7359 = vand.u32 %v6492, 4294901760
      %7360 = vmatpush1.msra.mxu0 %v7359
      %7361 = vmatprep.subr.mxu0 0.0
      %v7362 = vand.u32 %v6494, 4294901760
      %7363 = vmatpush1.msra.mxu0 %v7362
      %7364 = vmatprep.subr.mxu0 0.0
      %v7365 = vand.u32 %v6496, 4294901760
      %7366 = vmatpush1.msra.mxu0 %v7365
      %7367 = vmatprep.subr.mxu0 0.0
      %v7368 = vand.u32 %v6498, 4294901760
      %7369 = vmatpush1.msra.mxu0 %v7368
      %7370 = vmatprep.subr.mxu0 0.0
      %v7371 = vand.u32 %v6500, 4294901760
      %7372 = vmatpush1.msra.mxu0 %v7371
      %7373 = vmatprep.subr.mxu0 0.0
      %v7374 = vand.u32 %v6502, 4294901760
      %7375 = vmatpush1.msra.mxu0 %v7374
      %7376 = vmatprep.subr.mxu0 0.0
      %v7377 = vand.u32 %v6504, 4294901760
      %7378 = vmatpush1.msra.mxu0 %v7377
      %7379 = vmatprep.subr.mxu0 0.0
      %v7380 = vand.u32 %v6506, 4294901760
      %7381 = vmatpush1.msra.mxu0 %v7380
      %7382 = vmatprep.subr.mxu0 0.0
      %v7383 = vand.u32 %v6508, 4294901760
      %7384 = vmatpush1.msra.mxu0 %v7383
      %7385 = vmatprep.subr.mxu0 0.0
      %v7386 = vand.u32 %v6510, 4294901760
      %7387 = vmatpush1.msra.mxu0 %v7386
      %7388 = vmatprep.subr.mxu0 0.0
      %7389 = vmatpush1.msra.mxu0 0.0
      %7390 = vmatprep.subr.mxu0 0.0
      %7391 = vmatpush1.msra.mxu0 0.0
      %7392 = vmatprep.subr.mxu0 0.0
      %7393 = vmatpush1.msra.mxu0 0.0
      %7394 = vmatprep.subr.mxu0 0.0
      %7395 = vmatpush1.msra.mxu0 0.0
      %7396 = vmatprep.subr.mxu0 0.0
      %7397 = vmatpush1.msra.mxu0 0.0
      %7398 = vmatprep.subr.mxu0 0.0
      %7399 = vmatpush1.msra.mxu0 0.0
      %7400 = vmatprep.subr.mxu0 0.0
      %7401 = vmatpush1.msra.mxu0 0.0
      %7402 = vmatprep.subr.mxu0 0.0
      %7403 = vmatpush1.msra.mxu0 0.0
      %7404 = vmatprep.subr.mxu0 0.0
      %7405 = vmatpush1.msra.mxu0 0.0
      %7406 = vmatprep.subr.mxu0 0.0
      %7407 = vmatpush1.msra.mxu0 0.0
      %7408 = vmatprep.subr.mxu0 0.0
      %7409 = vmatpush1.msra.mxu0 0.0
      %7410 = vmatprep.subr.mxu0 0.0
      %7411 = vmatpush1.msra.mxu0 0.0
      %7412 = vmatprep.subr.mxu0 0.0
      %7413 = vmatpush1.msra.mxu0 0.0
      %7414 = vmatprep.subr.mxu0 0.0
      %7415 = vmatpush1.msra.mxu0 0.0
      %7416 = vmatprep.subr.mxu0 0.0
      %7417 = vmatpush1.msra.mxu0 0.0
      %7418 = vmatprep.subr.mxu0 0.0
      %7419 = vmatpush1.msra.mxu0 0.0
      %7420 = vmatprep.mubr.f32.mxu0 0.0
      %v7421 = vand.u32 %v6448, 4294901760
      %7422 = vmatmul.mubr.f32.gmra.mrb[0].mxu0 %v7421
      %v7423 = vpop.f32.mrb[0].mxu0
      %v7424 = vadd.f32 %v7295, %v7423
      %v7425 = vpop.f32.mrb[0].mxu0
      %7426 = vmatprep.mubr.f32.mxu0 0.0
      %v7427 = vand.u32 %v6450, 4294901760
      %7428 = vmatmul.mubr.f32.gmra.mrb[0].mxu0 %v7427
      %v7429 = vpop.f32.mrb[0].mxu0
      %v7430 = vadd.f32 %v7301, %v7429
      %v7431 = vpop.f32.mrb[0].mxu0
      %7432 = vmatprep.mubr.f32.mxu0 0.0
      %v7433 = vand.u32 %v6452, 4294901760
      %7434 = vmatmul.mubr.f32.gmra.mrb[0].mxu0 %v7433
      %v7435 = vpop.f32.mrb[0].mxu0
      %v7436 = vadd.f32 %v7307, %v7435
      %v7437 = vpop.f32.mrb[0].mxu0
      %7438 = vmatprep.mubr.f32.mxu0 0.0
      %v7439 = vand.u32 %v6454, 4294901760
      %7440 = vmatmul.mubr.f32.gmra.mrb[0].mxu0 %v7439
      %v7441 = vpop.f32.mrb[0].mxu0
      %v7442 = vadd.f32 %v7313, %v7441
      %v7443 = vpop.f32.mrb[0].mxu0
      %7444 = vmatprep.mubr.f32.mxu0 0.0
      %v7445 = vand.u32 %v6456, 4294901760
      %7446 = vmatmul.mubr.f32.gmra.mrb[0].mxu0 %v7445
      %v7447 = vpop.f32.mrb[0].mxu0
      %v7448 = vadd.f32 %v7319, %v7447
      %v7449 = vpop.f32.mrb[0].mxu0
      %7450 = vmatprep.mubr.f32.mxu0 0.0
      %v7451 = vand.u32 %v6458, 4294901760
      %7452 = vmatmul.mubr.f32.gmra.mrb[0].mxu0 %v7451
      %v7453 = vpop.f32.mrb[0].mxu0
      %v7454 = vadd.f32 %v7325, %v7453
      %v7455 = vpop.f32.mrb[0].mxu0
      %7456 = vmatprep.mubr.f32.mxu0 0.0
      %v7457 = vand.u32 %v6460, 4294901760
      %7458 = vmatmul.mubr.f32.gmra.mrb[0].mxu0 %v7457
      %v7459 = vpop.f32.mrb[0].mxu0
      %v7460 = vadd.f32 %v7331, %v7459
      %v7461 = vpop.f32.mrb[0].mxu0
      %7462 = vmatprep.mubr.f32.mxu0 0.0
      %v7463 = vand.u32 %v6462, 4294901760
      %7464 = vmatmul.mubr.f32.gmra.mrb[0].mxu0 %v7463
      %v7465 = vpop.f32.mrb[0].mxu0
      %v7466 = vadd.f32 %v7337, %v7465
      %v7467 = vpop.f32.mrb[0].mxu0
      %7468 = vdwg.mxu0
      %v7469 = vrcp.pop %v6464
      %v7470 = vmul.f32 %v7424, %v7469
      %v7471 = vrcp.pop %v6466
      %v7472 = vmul.f32 %v7430, %v7471
      %v7473 = vrcp.pop %v6468
      %v7474 = vmul.f32 %v7436, %v7473
      %v7475 = vrcp.pop %v6470
      %v7476 = vmul.f32 %v7442, %v7475
      %v7477 = vrcp.pop %v6472
      %v7478 = vmul.f32 %v7448, %v7477
      %v7479 = vrcp.pop %v6474
      %v7480 = vmul.f32 %v7454, %v7479
      %v7481 = vrcp.pop %v6476
      %v7482 = vmul.f32 %v7460, %v7481
      %v7483 = vrcp.pop %v6478
      %v7484 = vmul.f32 %v7466, %v7483
      %7485 = vrot.lane.b32.xlu0 %v3956, 80
      %v7486 = vpop.permute.xlu0 %7485
      %v7488 = vadd.f32 %v7470, %v7486
      %v7489 = vadd.f32 %v7472, %v7486
      %v7490 = vadd.f32 %v7474, %v7486
      %v7491 = vadd.f32 %v7476, %v7486
      %v7492 = vadd.f32 %v7478, %v7486
      %v7493 = vadd.f32 %v7480, %v7486
      %v7494 = vadd.f32 %v7482, %v7486
      %v7495 = vadd.f32 %v7484, %v7486
      %7504 = vrot.lane.b32.xlu0 %v7488, 48
      %v7505 = vpop.permute.xlu0 %7504
      %7506 = vrot.lane.b32.xlu0 %v7489, 48
      %v7507 = vpop.permute.xlu0 %7506
      %7508 = vrot.lane.b32.xlu0 %v7490, 48
      %v7509 = vpop.permute.xlu0 %7508
      %7510 = vrot.lane.b32.xlu0 %v7491, 48
      %v7511 = vpop.permute.xlu0 %7510
      %7512 = vrot.lane.b32.xlu0 %v7492, 48
      %v7513 = vpop.permute.xlu0 %7512
      %7514 = vrot.lane.b32.xlu0 %v7493, 48
      %v7515 = vpop.permute.xlu0 %7514
      %7516 = vrot.lane.b32.xlu0 %v7494, 48
      %v7517 = vpop.permute.xlu0 %7516
      %7518 = vrot.lane.b32.xlu0 %v7495, 48
      %v7519 = vpop.permute.xlu0 %7518
      %vm7528 = vcmask 523648
      %7529 = vst.msk [vmem:[%s329] sm:$0xff] %vm7528, %v7505
      %7530 = vst.msk [vmem:[%s329 + $0x8] sm:$0xff] %vm7528, %v7507
      %7531 = vst.msk [vmem:[%s329 + $0x10] sm:$0xff] %vm7528, %v7509
      %7532 = vst.msk [vmem:[%s329 + $0x18] sm:$0xff] %vm7528, %v7511
      %7533 = vst.msk [vmem:[%s329 + $0x20] sm:$0xff] %vm7528, %v7513
      %7534 = vst.msk [vmem:[%s329 + $0x28] sm:$0xff] %vm7528, %v7515
      %7535 = vst.msk [vmem:[%s329 + $0x30] sm:$0xff] %vm7528, %v7517
      %7536 = vst.msk [vmem:[%s329 + $0x38] sm:$0xff] %vm7528, %v7519
      %s7537 = smul.u32 8, %s19
      %p7538 = scmp.lt.s32.totalorder %s7537, 15
      %s7539 = scalar_select %p7538, %s7537, 15
      %s7540 = smul.addr %s7539, 8
      %s7541 = scalar_lea.vmem %s8, %s7540
      // Predicated region
      $region53: #{tpu_custom_call.1} parent=51 // pred_check
        %p7542 = pneg %p215
      $region54: #{tpu_custom_call.1} parent=51 // pred_check_branch
        %7544 = sbr.rel (%p7542) target = $region56
      $region55: #{tpu_custom_call.1} parent=51 // pred_region
        %s7545 = smul.u32 8, %s19
      $region56: #{tpu_custom_call.1} parent=51 // pred_fallthru
        _
    $region52: #{tpu_custom_call.1} parent=5 // pred_fallthru
      _
    %p7546 = scmp.le.s32.totalorder 2, %s14
    // Predicated region
    $region57: #{tpu_custom_call.1} parent=5 // pred_check
      %p7547 = pneg %p7546
    $region58: #{tpu_custom_call.1} parent=5 // pred_check_branch
      %7549 = sbr.rel (%p7547) target = $region60
    $region59: #{tpu_custom_call.1} parent=5 // pred_region
      %s7550 = ssub.s32 %s14, 2
      // Predicated region
      $region61: #{tpu_custom_call.1} parent=59 // pred_check
        %p7551 = pneg %p221
      $region62: #{tpu_custom_call.1} parent=59 // pred_check_branch
        %7553 = sbr.rel (%p7551) target = $region64
      $region63: #{tpu_custom_call.1} parent=59 // pred_region
        %s7554 = smul.u32 8, %s20
        %p7555 = scmp.lt.s32.totalorder %s7554, 15
        %s7556 = scalar_select %p7555, %s7554, 15
        %s7557 = smul.addr %s7556, 8
        %s7558 = scalar_lea.vmem %s8, %s7557
      $region64: #{tpu_custom_call.1} parent=59 // pred_fallthru
        _
    $region60: #{tpu_custom_call.1} parent=5 // pred_fallthru
      _
  $region6: #{tpu_custom_call.1} parent=0 // loop_footer
    %s18 = sadd.s32 1, %s14
  $region7: #{tpu_custom_call.1} parent=0 // loop_footer_branch
    %13 = sbr.rel target = $region3
  $region8: #{tpu_custom_call.1} parent=0 // loop_exit
    _

</llo_original>
